<compile_context>
chip_gen: v7x
topology: tpu7x:2x2x1
jax: 0.10.0
libtpu: 0.0.40
codegen_flags: <defaults>
</compile_context>

<pallas_src>
import functools

import jax
import jax.numpy as jnp
import numpy as np
from jax.experimental import pallas as pl
from jax.experimental.pallas import tpu as pltpu

LANE = 128
SUBLANE = 8


def _rup(n, m):
    return ((n + m - 1) // m) * m


def _pad2(w, rows, cols):
    return jnp.pad(w, ((0, rows - w.shape[0]), (0, cols - w.shape[1])))


# ---------------------------------------------------------------------------
# Single fused kernel: per-chunk input projection + GRU recurrence + KV hops
# ---------------------------------------------------------------------------
def gru_kv_kernel(x_ref, lens_ref, wih_ref, bih_ref, whh_ref, bhh_ref,
                  cw_ref, r1w_ref, bw_ref, keyT_ref, keyt_ref, keytT_ref,
                  mw_ref, out_ref, h_scratch, gi_scratch,
                  *, tc, hops, n_mem, mxu_dtype):
    c = pl.program_id(0)
    bp, cp = h_scratch.shape           # padded batch, padded CELL
    mp = out_ref.shape[1]              # padded memory slots

    @pl.when(c == 0)
    def _():
        h_scratch[...] = jnp.zeros_like(h_scratch)

    # --- Chunked input projection: ONE (tc*B, F) x (F, 3*CELL) MXU matmul for the
    #     whole chunk, f32 accumulation, parked in VMEM scratch (bounds live ranges).
    gi_scratch[...] = (
        jnp.dot(x_ref[...], wih_ref[...], preferred_element_type=jnp.float32)
        + bih_ref[...])

    lens = lens_ref[...]               # (BP, 1) int32, tiny, resident

    # --- Fully unrolled chunk recurrence (static slices into gi_scratch). ---
    h = h_scratch[...]
    for j in range(tc):
        t = c * tc + j                                       # global timestep
        gi = gi_scratch[pl.ds(j * bp, bp), :]                # (BP, 3*CP)
        # Single fused hidden matmul; W_hh loaded per step (short live range).
        hh = (jnp.dot(h.astype(mxu_dtype), whh_ref[...],
                      preferred_element_type=jnp.float32) + bhh_ref[...])
        r = jax.nn.sigmoid(gi[:, :cp] + hh[:, :cp])
        z = jax.nn.sigmoid(gi[:, cp:2 * cp] + hh[:, cp:2 * cp])
        n = jnp.tanh(gi[:, 2 * cp:] + r * hh[:, 2 * cp:])
        h_new = (1.0 - z) * n + z * h
        # pack_padded_sequence final-hidden semantics: freeze h once t >= len[b].
        h = jnp.where(t < lens, h_new, h)
    h_scratch[...] = h

    @pl.when(c == pl.num_programs(0) - 1)
    def _():
        # --- fused KV-memory epilogue (runs once, on the final time chunk) ---
        q = h_scratch[...]                       # (BP, CP)
        # TODO(synk): train-mode dropout on q (eval mode: identity)
        keyT = keyT_ref[...]                     # (BP, E2P, MP)  pre-transposed
        keyt = keyt_ref[...]                     # (BP, MP, EP)
        keytT = keytT_ref[...]                   # (BP, EP, MP)   pre-transposed
        mw = mw_ref[...]                         # (BP, MP)

        if n_mem < mp:                           # static: mask padded memory slots
            slot_ok = jax.lax.broadcasted_iota(jnp.int32, (bp, mp), 1) < n_mem
        else:
            slot_ok = None

        for _ in range(hops):
            q_last = jnp.dot(q.astype(mxu_dtype), cw_ref[...],
                             preferred_element_type=jnp.float32)       # (BP, E2P)
            dotted = jnp.einsum(
                "bqe,bem->bqm", q_last[:, None, :].astype(mxu_dtype), keyT,
                preferred_element_type=jnp.float32)[:, 0, :]           # (BP, MP)
            if slot_ok is not None:
                dotted = jnp.where(slot_ok, dotted, -1e30)
            mx = jnp.max(dotted, axis=1, keepdims=True)
            ex = jnp.exp(dotted - mx)
            denom = jnp.sum(ex, axis=1, keepdims=True)
            probs = ex * pl.reciprocal(denom, approx=True) * mw        # (BP, MP)
            o_k = jnp.einsum(
                "bqm,bme->bqe", probs[:, None, :].astype(mxu_dtype), keyt,
                preferred_element_type=jnp.float32)[:, 0, :]           # (BP, EP)
            q = q + jnp.dot(o_k.astype(mxu_dtype), r1w_ref[...],
                            preferred_element_type=jnp.float32)

        temp1 = jnp.dot(q.astype(mxu_dtype), bw_ref[...],
                        preferred_element_type=jnp.float32)            # (BP, EP)
        prob_mem = jnp.einsum(
            "bqe,bem->bqm", temp1[:, None, :].astype(mxu_dtype), keytT,
            preferred_element_type=jnp.float32)[:, 0, :]               # (BP, MP)
        out_ref[...] = jax.nn.sigmoid(prob_mem) * mw


def gru_kv_fused(x2d, lens_col, w_ih, b_ih, w_hh, b_hh, C_w, R1_w, B_w,
                 key_T, keyt, keyt_T, mem_w, *, hops, tc, n_mem, mxu_dtype):
    rows, fp = x2d.shape
    bp = lens_col.shape[0]
    cp, cp3 = w_hh.shape
    e2p = C_w.shape[1]
    ep = R1_w.shape[0]
    mp = mem_w.shape[1]
    n_chunks = rows // (tc * bp)

    def const(shape):
        nd = len(shape)
        return pl.BlockSpec(shape, lambda c, _nd=nd: (0,) * _nd)

    return pl.pallas_call(
        functools.partial(gru_kv_kernel, tc=tc, hops=hops, n_mem=n_mem,
                          mxu_dtype=mxu_dtype),
        out_shape=jax.ShapeDtypeStruct((bp, mp), jnp.float32),
        grid_spec=pltpu.PrefetchScalarGridSpec(
            num_scalar_prefetch=0,
            grid=(n_chunks,),
            in_specs=[pl.BlockSpec((tc * bp, fp), lambda c: (c, 0)),   # x chunk
                      const((bp, 1)),                                  # lens
                      const((fp, cp3)), const((1, cp3)),               # W_ih, b_ih
                      const((cp, cp3)), const((1, cp3)),               # W_hh, b_hh
                      const((cp, e2p)), const((ep, cp)), const((cp, ep)),
                      const((bp, e2p, mp)),                            # key^T
                      const((bp, mp, ep)),                             # key_target
                      const((bp, ep, mp)),                             # key_target^T
                      const((bp, mp))],                                # mem_weights
            out_specs=pl.BlockSpec((bp, mp), lambda c: (0, 0)),
            scratch_shapes=[pltpu.VMEM((bp, cp), jnp.float32),
                            pltpu.VMEM((tc * bp, cp3), jnp.float32)],
        ),
        compiler_params=pltpu.CompilerParams(
            dimension_semantics=("arbitrary",),
            vmem_limit_bytes=32 * 1024 * 1024),
    )(x2d, lens_col, w_ih, b_ih, w_hh, b_hh, C_w, R1_w, B_w,
      key_T, keyt, keyt_T, mem_w)


# ---------------------------------------------------------------------------
# Full forward (glue in plain JAX: embedding gather, concat, pad, transpose)
# ---------------------------------------------------------------------------
def kvmemory_forward(params, enc_w2v, w2v_lens, enc_kb_emb,
                     key_emb, key_target_emb, mem_weights, hops,
                     time_block=16, mxu_dtype=jnp.float32):
    embed_q = jnp.take(params["embed_A"], enc_w2v, axis=0)       # (T, B, H)
    x = jnp.concatenate([embed_q, enc_kb_emb], axis=2)           # (T, B, F)
    T, B, F = x.shape
    CELL = params["w_hh_r"].shape[0]
    E = params["R1_w"].shape[0]
    E2 = params["C_w"].shape[1]
    M = mem_weights.shape[1]

    cp, ep, e2p, mp, fp = (_rup(CELL, LANE), _rup(E, LANE), _rup(E2, LANE),
                           _rup(M, LANE), _rup(F, LANE))
    bp = _rup(B, SUBLANE)
    tc = time_block
    t_pad = _rup(T, tc)

    # --- pad + pack inputs (lane-dense last dims, zero padding) ---
    x_p = jnp.pad(x, ((0, t_pad - T), (0, bp - B), (0, fp - F)))
    x2d = x_p.reshape(t_pad * bp, fp).astype(mxu_dtype)          # row = t*bp + b

    def fuse(names, rows, cols):                                 # gate order r, z, n
        return jnp.concatenate([_pad2(params[k], rows, cols) for k in names], axis=1)

    w_ih = fuse(("w_ih_r", "w_ih_z", "w_ih_n"), fp, cp).astype(mxu_dtype)
    b_ih = fuse(("b_ih_r", "b_ih_z", "b_ih_n"), 1, cp)
    w_hh = fuse(("w_hh_r", "w_hh_z", "w_hh_n"), cp, cp).astype(mxu_dtype)
    b_hh = fuse(("b_hh_r", "b_hh_z", "b_hh_n"), 1, cp)
    C_w = _pad2(params["C_w"], cp, e2p).astype(mxu_dtype)
    R1_w = _pad2(params["R1_w"], ep, cp).astype(mxu_dtype)
    B_w = _pad2(params["B_w"], cp, ep).astype(mxu_dtype)

    key_p = jnp.pad(key_emb, ((0, bp - B), (0, mp - M), (0, e2p - E2)))
    keyt_p = jnp.pad(key_target_emb, ((0, bp - B), (0, mp - M), (0, ep - E)))
    key_T = jnp.transpose(key_p, (0, 2, 1)).astype(mxu_dtype)    # (BP, E2P, MP)
    keyt_T = jnp.transpose(keyt_p, (0, 2, 1)).astype(mxu_dtype)  # (BP, EP, MP)
    keyt = keyt_p.astype(mxu_dtype)                              # (BP, MP, EP)
    mem_w = jnp.pad(mem_weights, ((0, bp - B), (0, mp - M)))
    lens_col = jnp.pad(w2v_lens.astype(jnp.int32), (0, bp - B)).reshape(bp, 1)

    out = gru_kv_fused(x2d, lens_col, w_ih, b_ih, w_hh, b_hh,
                       C_w, R1_w, B_w, key_T, keyt, keyt_T, mem_w,
                       hops=hops, tc=tc, n_mem=M, mxu_dtype=mxu_dtype)
    return out[:B, :M]


# ---------------------------------------------------------------------------
# Pure-JAX reference for correctness check
# ---------------------------------------------------------------------------
def kvmemory_reference(params, enc_w2v, w2v_lens, enc_kb_emb,
                       key_emb, key_target_emb, mem_weights, hops):
    embed_q = jnp.take(params["embed_A"], enc_w2v, axis=0)
    x = jnp.concatenate([embed_q, enc_kb_emb], axis=2)
    seq_len, batch, _ = x.shape
    cell = params["w_hh_r"].shape[0]
    mask = (jnp.arange(seq_len)[:, None] < w2v_lens[None, :]
            ).astype(jnp.float32)[:, :, None]

    def step(h, inp):
        x_t, m_t = inp
        gr = x_t @ params["w_ih_r"] + params["b_ih_r"]
        gz = x_t @ params["w_ih_z"] + params["b_ih_z"]
        gn = x_t @ params["w_ih_n"] + params["b_ih_n"]
        hr = h @ params["w_hh_r"] + params["b_hh_r"]
        hz = h @ params["w_hh_z"] + params["b_hh_z"]
        hn = h @ params["w_hh_n"] + params["b_hh_n"]
        r = jax.nn.sigmoid(gr + hr)
        z = jax.nn.sigmoid(gz + hz)
        n = jnp.tanh(gn + r * hn)
        h_new = (1.0 - z) * n + z * h
        return m_t * h_new + (1.0 - m_t) * h, None

    q, _ = jax.lax.scan(step, jnp.zeros((batch, cell), jnp.float32), (x, mask))

    for _ in range(hops):
        q_last = q @ params["C_w"]
        dotted = jnp.einsum("be,bme->bm", q_last, key_emb)
        probs = jax.nn.softmax(dotted, axis=1) * mem_weights
        o_k = jnp.einsum("bm,bme->be", probs, key_target_emb)
        q = q + o_k @ params["R1_w"]
    temp1 = q @ params["B_w"]
    prob_mem = jnp.einsum("be,bme->bm", temp1, key_target_emb)
    return jax.nn.sigmoid(prob_mem) * mem_weights


# ---------------------------------------------------------------------------
if __name__ == "__main__":
    # small, consistent config (scaled-down from the original 400/300/100/10)
    V, H, E, CELL, M, HOPS = 64, 32, 16, 64, 8, 1
    T, B = 16, 8

    key = jax.random.PRNGKey(0)
    ks = jax.random.split(key, 24)
    s = 0.1

    def rn(k, shape):
        return jax.random.normal(k, shape, jnp.float32) * s

    params = {
        "embed_A": rn(ks[0], (V, H)),
        # GRU input-to-hidden, per gate, stored as (in_features, CELL) = torch W_g.T
        "w_ih_r": rn(ks[1], (H + E, CELL)),
        "w_ih_z": rn(ks[2], (H + E, CELL)),
        "w_ih_n": rn(ks[3], (H + E, CELL)),
        "b_ih_r": rn(ks[4], (1, CELL)),
        "b_ih_z": rn(ks[5], (1, CELL)),
        "b_ih_n": rn(ks[6], (1, CELL)),
        # GRU hidden-to-hidden, per gate
        "w_hh_r": rn(ks[7], (CELL, CELL)),
        "w_hh_z": rn(ks[8], (CELL, CELL)),
        "w_hh_n": rn(ks[9], (CELL, CELL)),
        "b_hh_r": rn(ks[10], (1, CELL)),
        "b_hh_z": rn(ks[11], (1, CELL)),
        "b_hh_n": rn(ks[12], (1, CELL)),
        # Linear layers stored as (in_features, out_features) = torch W.T
        "C_w": rn(ks[13], (CELL, 2 * E)),
        "R1_w": rn(ks[14], (E, CELL)),
        "B_w": rn(ks[15], (CELL, E)),
    }

    enc_w2v = jax.random.randint(ks[16], (T, B), 0, V, dtype=jnp.int32)
    enc_kb_emb = jax.random.normal(ks[17], (T, B, E), jnp.float32)
    w2v_lens = jnp.array([16, 9, 13, 5, 16, 11, 3, 8], dtype=jnp.int32)
    key_emb = jax.random.normal(ks[18], (B, M, 2 * E), jnp.float32)
    key_target_emb = jax.random.normal(ks[19], (B, M, E), jnp.float32)
    mem_weights = (jax.random.uniform(ks[20], (B, M)) > 0.3).astype(jnp.float32)

    # f32 MXU operands here so the small-shape correctness check stays tight;
    # pass mxu_dtype=jnp.bfloat16 on v6e/v7x production runs for full MXU rate.
    out = kvmemory_forward(params, enc_w2v, w2v_lens, enc_kb_emb,
                           key_emb, key_target_emb, mem_weights, HOPS,
                           time_block=16, mxu_dtype=jnp.float32)
    out = jax.block_until_ready(out)

    ref = kvmemory_reference(params, enc_w2v, w2v_lens, enc_kb_emb,
                             key_emb, key_target_emb, mem_weights, HOPS)
    # tolerance 1e-3: pl.reciprocal(approx=True) in the in-kernel softmax is an
    # EUP approximation (~1e-4-level relative error propagated to the output).
    np.testing.assert_allclose(np.asarray(out), np.asarray(ref),
                               rtol=1e-3, atol=1e-3)
    print("KERNEL_OK")
</pallas_src>

<mosaic_0001>
module attributes {stable_mosaic.version = 11 : i64} {
  func.func @gru_kv_kernel(%arg0: i32, %arg1: memref<128x128xf32, #tpu.memory_space<vmem>>, %arg2: memref<8x1xi32, #tpu.memory_space<vmem>>, %arg3: memref<128x384xf32, #tpu.memory_space<vmem>>, %arg4: memref<1x384xf32, #tpu.memory_space<vmem>>, %arg5: memref<128x384xf32, #tpu.memory_space<vmem>>, %arg6: memref<1x384xf32, #tpu.memory_space<vmem>>, %arg7: memref<128x128xf32, #tpu.memory_space<vmem>>, %arg8: memref<128x128xf32, #tpu.memory_space<vmem>>, %arg9: memref<128x128xf32, #tpu.memory_space<vmem>>, %arg10: memref<8x128x128xf32, #tpu.memory_space<vmem>>, %arg11: memref<8x128x128xf32, #tpu.memory_space<vmem>>, %arg12: memref<8x128x128xf32, #tpu.memory_space<vmem>>, %arg13: memref<8x128xf32, #tpu.memory_space<vmem>>, %arg14: memref<8x128xf32, #tpu.memory_space<vmem>>, %arg15: memref<8x128xf32, #tpu.memory_space<vmem>>, %arg16: memref<128x384xf32, #tpu.memory_space<vmem>>) attributes {dimension_semantics = [#tpu.dimension_semantics<arbitrary>], iteration_bounds = array<i64: 1>, scalar_prefetch = 0 : i64, scratch_operands = 2 : i64, tpu.core_type = #tpu.core_type<tc>, window_params = [{transform_indices = @transform_0, window_bounds = array<i64: 128, 128>}, {pipeline_mode = #tpu.pipeline_mode<synchronous>, transform_indices = @transform_1, window_bounds = array<i64: 8, 1>}, {pipeline_mode = #tpu.pipeline_mode<synchronous>, transform_indices = @transform_2, window_bounds = array<i64: 128, 384>}, {pipeline_mode = #tpu.pipeline_mode<synchronous>, transform_indices = @transform_3, window_bounds = array<i64: 1, 384>}, {pipeline_mode = #tpu.pipeline_mode<synchronous>, transform_indices = @transform_4, window_bounds = array<i64: 128, 384>}, {pipeline_mode = #tpu.pipeline_mode<synchronous>, transform_indices = @transform_5, window_bounds = array<i64: 1, 384>}, {pipeline_mode = #tpu.pipeline_mode<synchronous>, transform_indices = @transform_6, window_bounds = array<i64: 128, 128>}, {pipeline_mode = #tpu.pipeline_mode<synchronous>, transform_indices = @transform_7, window_bounds = array<i64: 128, 128>}, {pipeline_mode = #tpu.pipeline_mode<synchronous>, transform_indices = @transform_8, window_bounds = array<i64: 128, 128>}, {pipeline_mode = #tpu.pipeline_mode<synchronous>, transform_indices = @transform_9, window_bounds = array<i64: 8, 128, 128>}, {pipeline_mode = #tpu.pipeline_mode<synchronous>, transform_indices = @transform_10, window_bounds = array<i64: 8, 128, 128>}, {pipeline_mode = #tpu.pipeline_mode<synchronous>, transform_indices = @transform_11, window_bounds = array<i64: 8, 128, 128>}, {pipeline_mode = #tpu.pipeline_mode<synchronous>, transform_indices = @transform_12, window_bounds = array<i64: 8, 128>}, {pipeline_mode = #tpu.pipeline_mode<synchronous>, transform_indices = @transform_13, window_bounds = array<i64: 8, 128>}]} {
    %c0_i32 = arith.constant 0 : i32
    %0 = arith.cmpi eq, %arg0, %c0_i32 : i32
    %1 = arith.extui %0 : i1 to i32
    %c0_i32_0 = arith.constant 0 : i32
    %2 = arith.cmpi ne, %1, %c0_i32_0 : i32
    scf.if %2 {
      %cst_177 = arith.constant 0.000000e+00 : f32
      %640 = vector.broadcast %cst_177 : f32 to vector<8x128xf32>
      %c0_178 = arith.constant 0 : index
      %c0_179 = arith.constant 0 : index
      %641 = vector.load %arg15[%c0_178, %c0_179] : memref<8x128xf32, #tpu.memory_space<vmem>>, vector<8x128xf32>
      tpu.vector_store %arg15[%c0_178, %c0_179], %640 {strides = array<i32>} : memref<8x128xf32, #tpu.memory_space<vmem>>, vector<8x128xf32>,
    } else {
    }
    %c0 = arith.constant 0 : index
    %c0_1 = arith.constant 0 : index
    %3 = vector.load %arg1[%c0, %c0_1] : memref<128x128xf32, #tpu.memory_space<vmem>>, vector<128x128xf32>
    %c0_2 = arith.constant 0 : index
    %c0_3 = arith.constant 0 : index
    %4 = vector.load %arg3[%c0_2, %c0_3] : memref<128x384xf32, #tpu.memory_space<vmem>>, vector<128x384xf32>
    %cst = arith.constant dense<0.000000e+00> : vector<128x384xf32>
    %5 = tpu.matmul %3, %4, %cst {dimension_numbers = #tpu.dot_dimension_numbers<[1], [0], [0], [1], [0, 0, 1, 1], [], []>} : vector<128x128xf32>, vector<128x384xf32>, vector<128x384xf32> -> vector<128x384xf32>
    %c0_4 = arith.constant 0 : index
    %c0_5 = arith.constant 0 : index
    %6 = vector.load %arg4[%c0_4, %c0_5] : memref<1x384xf32, #tpu.memory_space<vmem>>, vector<1x384xf32>
    %7 = vector.broadcast %6 : vector<1x384xf32> to vector<128x384xf32>
    %8 = arith.addf %5, %7 : vector<128x384xf32>
    %c0_6 = arith.constant 0 : index
    %c0_7 = arith.constant 0 : index
    %9 = vector.load %arg16[%c0_6, %c0_7] : memref<128x384xf32, #tpu.memory_space<vmem>>, vector<128x384xf32>
    tpu.vector_store %arg16[%c0_6, %c0_7], %8 {strides = array<i32>} : memref<128x384xf32, #tpu.memory_space<vmem>>, vector<128x384xf32>,
    %c0_8 = arith.constant 0 : index
    %c0_9 = arith.constant 0 : index
    %10 = vector.load %arg2[%c0_8, %c0_9] : memref<8x1xi32, #tpu.memory_space<vmem>>, vector<8x1xi32>
    %c0_10 = arith.constant 0 : index
    %c0_11 = arith.constant 0 : index
    %11 = vector.load %arg15[%c0_10, %c0_11] : memref<8x128xf32, #tpu.memory_space<vmem>>, vector<8x128xf32>
    %c16_i32 = arith.constant 16 : i32
    %12 = arith.muli %arg0, %c16_i32 : i32
    %c0_i32_12 = arith.constant 0 : i32
    %13 = arith.addi %12, %c0_i32_12 : i32
    %c0_13 = arith.constant 0 : index
    %c0_14 = arith.constant 0 : index
    %14 = vector.load %arg16[%c0_13, %c0_14] : memref<128x384xf32, #tpu.memory_space<vmem>>, vector<8x384xf32>
    %c0_15 = arith.constant 0 : index
    %c0_16 = arith.constant 0 : index
    %15 = vector.load %arg5[%c0_15, %c0_16] : memref<128x384xf32, #tpu.memory_space<vmem>>, vector<128x384xf32>
    %cst_17 = arith.constant dense<0.000000e+00> : vector<8x384xf32>
    %16 = tpu.matmul %11, %15, %cst_17 {dimension_numbers = #tpu.dot_dimension_numbers<[1], [0], [0], [1], [0, 0, 1, 1], [], []>} : vector<8x128xf32>, vector<128x384xf32>, vector<8x384xf32> -> vector<8x384xf32>
    %c0_18 = arith.constant 0 : index
    %c0_19 = arith.constant 0 : index
    %17 = vector.load %arg6[%c0_18, %c0_19] : memref<1x384xf32, #tpu.memory_space<vmem>>, vector<1x384xf32>
    %18 = vector.broadcast %17 : vector<1x384xf32> to vector<8x384xf32>
    %19 = arith.addf %16, %18 : vector<8x384xf32>
    %20 = vector.extract_strided_slice %14 {offsets = [0, 0], sizes = [8, 128], strides = [1, 1]} : vector<8x384xf32> to vector<8x128xf32>
    %21 = vector.extract_strided_slice %19 {offsets = [0, 0], sizes = [8, 128], strides = [1, 1]} : vector<8x384xf32> to vector<8x128xf32>
    %22 = arith.addf %20, %21 : vector<8x128xf32>
    %23 = arith.negf %22 : vector<8x128xf32>
    %24 = math.exp %23 : vector<8x128xf32>
    %cst_20 = arith.constant 1.000000e+00 : f32
    %25 = vector.broadcast %cst_20 : f32 to vector<8x128xf32>
    %26 = arith.addf %25, %24 : vector<8x128xf32>
    %27 = arith.divf %25, %26 : vector<8x128xf32>
    %28 = vector.extract_strided_slice %14 {offsets = [0, 128], sizes = [8, 128], strides = [1, 1]} : vector<8x384xf32> to vector<8x128xf32>
    %29 = vector.extract_strided_slice %19 {offsets = [0, 128], sizes = [8, 128], strides = [1, 1]} : vector<8x384xf32> to vector<8x128xf32>
    %30 = arith.addf %28, %29 : vector<8x128xf32>
    %31 = arith.negf %30 : vector<8x128xf32>
    %32 = math.exp %31 : vector<8x128xf32>
    %cst_21 = arith.constant 1.000000e+00 : f32
    %33 = vector.broadcast %cst_21 : f32 to vector<8x128xf32>
    %34 = arith.addf %33, %32 : vector<8x128xf32>
    %35 = arith.divf %33, %34 : vector<8x128xf32>
    %36 = vector.extract_strided_slice %14 {offsets = [0, 256], sizes = [8, 128], strides = [1, 1]} : vector<8x384xf32> to vector<8x128xf32>
    %37 = vector.extract_strided_slice %19 {offsets = [0, 256], sizes = [8, 128], strides = [1, 1]} : vector<8x384xf32> to vector<8x128xf32>
    %38 = arith.mulf %27, %37 : vector<8x128xf32>
    %39 = arith.addf %36, %38 : vector<8x128xf32>
    %40 = math.tanh %39 : vector<8x128xf32>
    %cst_22 = arith.constant 1.000000e+00 : f32
    %41 = vector.broadcast %cst_22 : f32 to vector<8x128xf32>
    %42 = arith.subf %41, %35 : vector<8x128xf32>
    %43 = arith.mulf %42, %40 : vector<8x128xf32>
    %44 = arith.mulf %35, %11 : vector<8x128xf32>
    %45 = arith.addf %43, %44 : vector<8x128xf32>
    %46 = vector.broadcast %13 : i32 to vector<8x1xi32>
    %47 = arith.cmpi slt, %46, %10 : vector<8x1xi32>
    %48 = vector.shape_cast %47 : vector<8x1xi1> to vector<8x1xi1>
    %49 = vector.broadcast %48 : vector<8x1xi1> to vector<8x128xi1>
    %50 = arith.select %49, %45, %11 : vector<8x128xi1>, vector<8x128xf32>
    %c16_i32_23 = arith.constant 16 : i32
    %51 = arith.muli %arg0, %c16_i32_23 : i32
    %c1_i32 = arith.constant 1 : i32
    %52 = arith.addi %51, %c1_i32 : i32
    %c8 = arith.constant 8 : index
    %c0_24 = arith.constant 0 : index
    %53 = vector.load %arg16[%c8, %c0_24] : memref<128x384xf32, #tpu.memory_space<vmem>>, vector<8x384xf32>
    %c0_25 = arith.constant 0 : index
    %c0_26 = arith.constant 0 : index
    %54 = vector.load %arg5[%c0_25, %c0_26] : memref<128x384xf32, #tpu.memory_space<vmem>>, vector<128x384xf32>
    %cst_27 = arith.constant dense<0.000000e+00> : vector<8x384xf32>
    %55 = tpu.matmul %50, %54, %cst_27 {dimension_numbers = #tpu.dot_dimension_numbers<[1], [0], [0], [1], [0, 0, 1, 1], [], []>} : vector<8x128xf32>, vector<128x384xf32>, vector<8x384xf32> -> vector<8x384xf32>
    %c0_28 = arith.constant 0 : index
    %c0_29 = arith.constant 0 : index
    %56 = vector.load %arg6[%c0_28, %c0_29] : memref<1x384xf32, #tpu.memory_space<vmem>>, vector<1x384xf32>
    %57 = vector.broadcast %56 : vector<1x384xf32> to vector<8x384xf32>
    %58 = arith.addf %55, %57 : vector<8x384xf32>
    %59 = vector.extract_strided_slice %53 {offsets = [0, 0], sizes = [8, 128], strides = [1, 1]} : vector<8x384xf32> to vector<8x128xf32>
    %60 = vector.extract_strided_slice %58 {offsets = [0, 0], sizes = [8, 128], strides = [1, 1]} : vector<8x384xf32> to vector<8x128xf32>
    %61 = arith.addf %59, %60 : vector<8x128xf32>
    %62 = arith.negf %61 : vector<8x128xf32>
    %63 = math.exp %62 : vector<8x128xf32>
    %cst_30 = arith.constant 1.000000e+00 : f32
    %64 = vector.broadcast %cst_30 : f32 to vector<8x128xf32>
    %65 = arith.addf %64, %63 : vector<8x128xf32>
    %66 = arith.divf %64, %65 : vector<8x128xf32>
    %67 = vector.extract_strided_slice %53 {offsets = [0, 128], sizes = [8, 128], strides = [1, 1]} : vector<8x384xf32> to vector<8x128xf32>
    %68 = vector.extract_strided_slice %58 {offsets = [0, 128], sizes = [8, 128], strides = [1, 1]} : vector<8x384xf32> to vector<8x128xf32>
    %69 = arith.addf %67, %68 : vector<8x128xf32>
    %70 = arith.negf %69 : vector<8x128xf32>
    %71 = math.exp %70 : vector<8x128xf32>
    %cst_31 = arith.constant 1.000000e+00 : f32
    %72 = vector.broadcast %cst_31 : f32 to vector<8x128xf32>
    %73 = arith.addf %72, %71 : vector<8x128xf32>
    %74 = arith.divf %72, %73 : vector<8x128xf32>
    %75 = vector.extract_strided_slice %53 {offsets = [0, 256], sizes = [8, 128], strides = [1, 1]} : vector<8x384xf32> to vector<8x128xf32>
    %76 = vector.extract_strided_slice %58 {offsets = [0, 256], sizes = [8, 128], strides = [1, 1]} : vector<8x384xf32> to vector<8x128xf32>
    %77 = arith.mulf %66, %76 : vector<8x128xf32>
    %78 = arith.addf %75, %77 : vector<8x128xf32>
    %79 = math.tanh %78 : vector<8x128xf32>
    %cst_32 = arith.constant 1.000000e+00 : f32
    %80 = vector.broadcast %cst_32 : f32 to vector<8x128xf32>
    %81 = arith.subf %80, %74 : vector<8x128xf32>
    %82 = arith.mulf %81, %79 : vector<8x128xf32>
    %83 = arith.mulf %74, %50 : vector<8x128xf32>
    %84 = arith.addf %82, %83 : vector<8x128xf32>
    %85 = vector.broadcast %52 : i32 to vector<8x1xi32>
    %86 = arith.cmpi slt, %85, %10 : vector<8x1xi32>
    %87 = vector.shape_cast %86 : vector<8x1xi1> to vector<8x1xi1>
    %88 = vector.broadcast %87 : vector<8x1xi1> to vector<8x128xi1>
    %89 = arith.select %88, %84, %50 : vector<8x128xi1>, vector<8x128xf32>
    %c16_i32_33 = arith.constant 16 : i32
    %90 = arith.muli %arg0, %c16_i32_33 : i32
    %c2_i32 = arith.constant 2 : i32
    %91 = arith.addi %90, %c2_i32 : i32
    %c16 = arith.constant 16 : index
    %c0_34 = arith.constant 0 : index
    %92 = vector.load %arg16[%c16, %c0_34] : memref<128x384xf32, #tpu.memory_space<vmem>>, vector<8x384xf32>
    %c0_35 = arith.constant 0 : index
    %c0_36 = arith.constant 0 : index
    %93 = vector.load %arg5[%c0_35, %c0_36] : memref<128x384xf32, #tpu.memory_space<vmem>>, vector<128x384xf32>
    %cst_37 = arith.constant dense<0.000000e+00> : vector<8x384xf32>
    %94 = tpu.matmul %89, %93, %cst_37 {dimension_numbers = #tpu.dot_dimension_numbers<[1], [0], [0], [1], [0, 0, 1, 1], [], []>} : vector<8x128xf32>, vector<128x384xf32>, vector<8x384xf32> -> vector<8x384xf32>
    %c0_38 = arith.constant 0 : index
    %c0_39 = arith.constant 0 : index
    %95 = vector.load %arg6[%c0_38, %c0_39] : memref<1x384xf32, #tpu.memory_space<vmem>>, vector<1x384xf32>
    %96 = vector.broadcast %95 : vector<1x384xf32> to vector<8x384xf32>
    %97 = arith.addf %94, %96 : vector<8x384xf32>
    %98 = vector.extract_strided_slice %92 {offsets = [0, 0], sizes = [8, 128], strides = [1, 1]} : vector<8x384xf32> to vector<8x128xf32>
    %99 = vector.extract_strided_slice %97 {offsets = [0, 0], sizes = [8, 128], strides = [1, 1]} : vector<8x384xf32> to vector<8x128xf32>
    %100 = arith.addf %98, %99 : vector<8x128xf32>
    %101 = arith.negf %100 : vector<8x128xf32>
    %102 = math.exp %101 : vector<8x128xf32>
    %cst_40 = arith.constant 1.000000e+00 : f32
    %103 = vector.broadcast %cst_40 : f32 to vector<8x128xf32>
    %104 = arith.addf %103, %102 : vector<8x128xf32>
    %105 = arith.divf %103, %104 : vector<8x128xf32>
    %106 = vector.extract_strided_slice %92 {offsets = [0, 128], sizes = [8, 128], strides = [1, 1]} : vector<8x384xf32> to vector<8x128xf32>
    %107 = vector.extract_strided_slice %97 {offsets = [0, 128], sizes = [8, 128], strides = [1, 1]} : vector<8x384xf32> to vector<8x128xf32>
    %108 = arith.addf %106, %107 : vector<8x128xf32>
    %109 = arith.negf %108 : vector<8x128xf32>
    %110 = math.exp %109 : vector<8x128xf32>
    %cst_41 = arith.constant 1.000000e+00 : f32
    %111 = vector.broadcast %cst_41 : f32 to vector<8x128xf32>
    %112 = arith.addf %111, %110 : vector<8x128xf32>
    %113 = arith.divf %111, %112 : vector<8x128xf32>
    %114 = vector.extract_strided_slice %92 {offsets = [0, 256], sizes = [8, 128], strides = [1, 1]} : vector<8x384xf32> to vector<8x128xf32>
    %115 = vector.extract_strided_slice %97 {offsets = [0, 256], sizes = [8, 128], strides = [1, 1]} : vector<8x384xf32> to vector<8x128xf32>
    %116 = arith.mulf %105, %115 : vector<8x128xf32>
    %117 = arith.addf %114, %116 : vector<8x128xf32>
    %118 = math.tanh %117 : vector<8x128xf32>
    %cst_42 = arith.constant 1.000000e+00 : f32
    %119 = vector.broadcast %cst_42 : f32 to vector<8x128xf32>
    %120 = arith.subf %119, %113 : vector<8x128xf32>
    %121 = arith.mulf %120, %118 : vector<8x128xf32>
    %122 = arith.mulf %113, %89 : vector<8x128xf32>
    %123 = arith.addf %121, %122 : vector<8x128xf32>
    %124 = vector.broadcast %91 : i32 to vector<8x1xi32>
    %125 = arith.cmpi slt, %124, %10 : vector<8x1xi32>
    %126 = vector.shape_cast %125 : vector<8x1xi1> to vector<8x1xi1>
    %127 = vector.broadcast %126 : vector<8x1xi1> to vector<8x128xi1>
    %128 = arith.select %127, %123, %89 : vector<8x128xi1>, vector<8x128xf32>
    %c16_i32_43 = arith.constant 16 : i32
    %129 = arith.muli %arg0, %c16_i32_43 : i32
    %c3_i32 = arith.constant 3 : i32
    %130 = arith.addi %129, %c3_i32 : i32
    %c24 = arith.constant 24 : index
    %c0_44 = arith.constant 0 : index
    %131 = vector.load %arg16[%c24, %c0_44] : memref<128x384xf32, #tpu.memory_space<vmem>>, vector<8x384xf32>
    %c0_45 = arith.constant 0 : index
    %c0_46 = arith.constant 0 : index
    %132 = vector.load %arg5[%c0_45, %c0_46] : memref<128x384xf32, #tpu.memory_space<vmem>>, vector<128x384xf32>
    %cst_47 = arith.constant dense<0.000000e+00> : vector<8x384xf32>
    %133 = tpu.matmul %128, %132, %cst_47 {dimension_numbers = #tpu.dot_dimension_numbers<[1], [0], [0], [1], [0, 0, 1, 1], [], []>} : vector<8x128xf32>, vector<128x384xf32>, vector<8x384xf32> -> vector<8x384xf32>
    %c0_48 = arith.constant 0 : index
    %c0_49 = arith.constant 0 : index
    %134 = vector.load %arg6[%c0_48, %c0_49] : memref<1x384xf32, #tpu.memory_space<vmem>>, vector<1x384xf32>
    %135 = vector.broadcast %134 : vector<1x384xf32> to vector<8x384xf32>
    %136 = arith.addf %133, %135 : vector<8x384xf32>
    %137 = vector.extract_strided_slice %131 {offsets = [0, 0], sizes = [8, 128], strides = [1, 1]} : vector<8x384xf32> to vector<8x128xf32>
    %138 = vector.extract_strided_slice %136 {offsets = [0, 0], sizes = [8, 128], strides = [1, 1]} : vector<8x384xf32> to vector<8x128xf32>
    %139 = arith.addf %137, %138 : vector<8x128xf32>
    %140 = arith.negf %139 : vector<8x128xf32>
    %141 = math.exp %140 : vector<8x128xf32>
    %cst_50 = arith.constant 1.000000e+00 : f32
    %142 = vector.broadcast %cst_50 : f32 to vector<8x128xf32>
    %143 = arith.addf %142, %141 : vector<8x128xf32>
    %144 = arith.divf %142, %143 : vector<8x128xf32>
    %145 = vector.extract_strided_slice %131 {offsets = [0, 128], sizes = [8, 128], strides = [1, 1]} : vector<8x384xf32> to vector<8x128xf32>
    %146 = vector.extract_strided_slice %136 {offsets = [0, 128], sizes = [8, 128], strides = [1, 1]} : vector<8x384xf32> to vector<8x128xf32>
    %147 = arith.addf %145, %146 : vector<8x128xf32>
    %148 = arith.negf %147 : vector<8x128xf32>
    %149 = math.exp %148 : vector<8x128xf32>
    %cst_51 = arith.constant 1.000000e+00 : f32
    %150 = vector.broadcast %cst_51 : f32 to vector<8x128xf32>
    %151 = arith.addf %150, %149 : vector<8x128xf32>
    %152 = arith.divf %150, %151 : vector<8x128xf32>
    %153 = vector.extract_strided_slice %131 {offsets = [0, 256], sizes = [8, 128], strides = [1, 1]} : vector<8x384xf32> to vector<8x128xf32>
    %154 = vector.extract_strided_slice %136 {offsets = [0, 256], sizes = [8, 128], strides = [1, 1]} : vector<8x384xf32> to vector<8x128xf32>
    %155 = arith.mulf %144, %154 : vector<8x128xf32>
    %156 = arith.addf %153, %155 : vector<8x128xf32>
    %157 = math.tanh %156 : vector<8x128xf32>
    %cst_52 = arith.constant 1.000000e+00 : f32
    %158 = vector.broadcast %cst_52 : f32 to vector<8x128xf32>
    %159 = arith.subf %158, %152 : vector<8x128xf32>
    %160 = arith.mulf %159, %157 : vector<8x128xf32>
    %161 = arith.mulf %152, %128 : vector<8x128xf32>
    %162 = arith.addf %160, %161 : vector<8x128xf32>
    %163 = vector.broadcast %130 : i32 to vector<8x1xi32>
    %164 = arith.cmpi slt, %163, %10 : vector<8x1xi32>
    %165 = vector.shape_cast %164 : vector<8x1xi1> to vector<8x1xi1>
    %166 = vector.broadcast %165 : vector<8x1xi1> to vector<8x128xi1>
    %167 = arith.select %166, %162, %128 : vector<8x128xi1>, vector<8x128xf32>
    %c16_i32_53 = arith.constant 16 : i32
    %168 = arith.muli %arg0, %c16_i32_53 : i32
    %c4_i32 = arith.constant 4 : i32
    %169 = arith.addi %168, %c4_i32 : i32
    %c32 = arith.constant 32 : index
    %c0_54 = arith.constant 0 : index
    %170 = vector.load %arg16[%c32, %c0_54] : memref<128x384xf32, #tpu.memory_space<vmem>>, vector<8x384xf32>
    %c0_55 = arith.constant 0 : index
    %c0_56 = arith.constant 0 : index
    %171 = vector.load %arg5[%c0_55, %c0_56] : memref<128x384xf32, #tpu.memory_space<vmem>>, vector<128x384xf32>
    %cst_57 = arith.constant dense<0.000000e+00> : vector<8x384xf32>
    %172 = tpu.matmul %167, %171, %cst_57 {dimension_numbers = #tpu.dot_dimension_numbers<[1], [0], [0], [1], [0, 0, 1, 1], [], []>} : vector<8x128xf32>, vector<128x384xf32>, vector<8x384xf32> -> vector<8x384xf32>
    %c0_58 = arith.constant 0 : index
    %c0_59 = arith.constant 0 : index
    %173 = vector.load %arg6[%c0_58, %c0_59] : memref<1x384xf32, #tpu.memory_space<vmem>>, vector<1x384xf32>
    %174 = vector.broadcast %173 : vector<1x384xf32> to vector<8x384xf32>
    %175 = arith.addf %172, %174 : vector<8x384xf32>
    %176 = vector.extract_strided_slice %170 {offsets = [0, 0], sizes = [8, 128], strides = [1, 1]} : vector<8x384xf32> to vector<8x128xf32>
    %177 = vector.extract_strided_slice %175 {offsets = [0, 0], sizes = [8, 128], strides = [1, 1]} : vector<8x384xf32> to vector<8x128xf32>
    %178 = arith.addf %176, %177 : vector<8x128xf32>
    %179 = arith.negf %178 : vector<8x128xf32>
    %180 = math.exp %179 : vector<8x128xf32>
    %cst_60 = arith.constant 1.000000e+00 : f32
    %181 = vector.broadcast %cst_60 : f32 to vector<8x128xf32>
    %182 = arith.addf %181, %180 : vector<8x128xf32>
    %183 = arith.divf %181, %182 : vector<8x128xf32>
    %184 = vector.extract_strided_slice %170 {offsets = [0, 128], sizes = [8, 128], strides = [1, 1]} : vector<8x384xf32> to vector<8x128xf32>
    %185 = vector.extract_strided_slice %175 {offsets = [0, 128], sizes = [8, 128], strides = [1, 1]} : vector<8x384xf32> to vector<8x128xf32>
    %186 = arith.addf %184, %185 : vector<8x128xf32>
    %187 = arith.negf %186 : vector<8x128xf32>
    %188 = math.exp %187 : vector<8x128xf32>
    %cst_61 = arith.constant 1.000000e+00 : f32
    %189 = vector.broadcast %cst_61 : f32 to vector<8x128xf32>
    %190 = arith.addf %189, %188 : vector<8x128xf32>
    %191 = arith.divf %189, %190 : vector<8x128xf32>
    %192 = vector.extract_strided_slice %170 {offsets = [0, 256], sizes = [8, 128], strides = [1, 1]} : vector<8x384xf32> to vector<8x128xf32>
    %193 = vector.extract_strided_slice %175 {offsets = [0, 256], sizes = [8, 128], strides = [1, 1]} : vector<8x384xf32> to vector<8x128xf32>
    %194 = arith.mulf %183, %193 : vector<8x128xf32>
    %195 = arith.addf %192, %194 : vector<8x128xf32>
    %196 = math.tanh %195 : vector<8x128xf32>
    %cst_62 = arith.constant 1.000000e+00 : f32
    %197 = vector.broadcast %cst_62 : f32 to vector<8x128xf32>
    %198 = arith.subf %197, %191 : vector<8x128xf32>
    %199 = arith.mulf %198, %196 : vector<8x128xf32>
    %200 = arith.mulf %191, %167 : vector<8x128xf32>
    %201 = arith.addf %199, %200 : vector<8x128xf32>
    %202 = vector.broadcast %169 : i32 to vector<8x1xi32>
    %203 = arith.cmpi slt, %202, %10 : vector<8x1xi32>
    %204 = vector.shape_cast %203 : vector<8x1xi1> to vector<8x1xi1>
    %205 = vector.broadcast %204 : vector<8x1xi1> to vector<8x128xi1>
    %206 = arith.select %205, %201, %167 : vector<8x128xi1>, vector<8x128xf32>
    %c16_i32_63 = arith.constant 16 : i32
    %207 = arith.muli %arg0, %c16_i32_63 : i32
    %c5_i32 = arith.constant 5 : i32
    %208 = arith.addi %207, %c5_i32 : i32
    %c40 = arith.constant 40 : index
    %c0_64 = arith.constant 0 : index
    %209 = vector.load %arg16[%c40, %c0_64] : memref<128x384xf32, #tpu.memory_space<vmem>>, vector<8x384xf32>
    %c0_65 = arith.constant 0 : index
    %c0_66 = arith.constant 0 : index
    %210 = vector.load %arg5[%c0_65, %c0_66] : memref<128x384xf32, #tpu.memory_space<vmem>>, vector<128x384xf32>
    %cst_67 = arith.constant dense<0.000000e+00> : vector<8x384xf32>
    %211 = tpu.matmul %206, %210, %cst_67 {dimension_numbers = #tpu.dot_dimension_numbers<[1], [0], [0], [1], [0, 0, 1, 1], [], []>} : vector<8x128xf32>, vector<128x384xf32>, vector<8x384xf32> -> vector<8x384xf32>
    %c0_68 = arith.constant 0 : index
    %c0_69 = arith.constant 0 : index
    %212 = vector.load %arg6[%c0_68, %c0_69] : memref<1x384xf32, #tpu.memory_space<vmem>>, vector<1x384xf32>
    %213 = vector.broadcast %212 : vector<1x384xf32> to vector<8x384xf32>
    %214 = arith.addf %211, %213 : vector<8x384xf32>
    %215 = vector.extract_strided_slice %209 {offsets = [0, 0], sizes = [8, 128], strides = [1, 1]} : vector<8x384xf32> to vector<8x128xf32>
    %216 = vector.extract_strided_slice %214 {offsets = [0, 0], sizes = [8, 128], strides = [1, 1]} : vector<8x384xf32> to vector<8x128xf32>
    %217 = arith.addf %215, %216 : vector<8x128xf32>
    %218 = arith.negf %217 : vector<8x128xf32>
    %219 = math.exp %218 : vector<8x128xf32>
    %cst_70 = arith.constant 1.000000e+00 : f32
    %220 = vector.broadcast %cst_70 : f32 to vector<8x128xf32>
    %221 = arith.addf %220, %219 : vector<8x128xf32>
    %222 = arith.divf %220, %221 : vector<8x128xf32>
    %223 = vector.extract_strided_slice %209 {offsets = [0, 128], sizes = [8, 128], strides = [1, 1]} : vector<8x384xf32> to vector<8x128xf32>
    %224 = vector.extract_strided_slice %214 {offsets = [0, 128], sizes = [8, 128], strides = [1, 1]} : vector<8x384xf32> to vector<8x128xf32>
    %225 = arith.addf %223, %224 : vector<8x128xf32>
    %226 = arith.negf %225 : vector<8x128xf32>
    %227 = math.exp %226 : vector<8x128xf32>
    %cst_71 = arith.constant 1.000000e+00 : f32
    %228 = vector.broadcast %cst_71 : f32 to vector<8x128xf32>
    %229 = arith.addf %228, %227 : vector<8x128xf32>
    %230 = arith.divf %228, %229 : vector<8x128xf32>
    %231 = vector.extract_strided_slice %209 {offsets = [0, 256], sizes = [8, 128], strides = [1, 1]} : vector<8x384xf32> to vector<8x128xf32>
    %232 = vector.extract_strided_slice %214 {offsets = [0, 256], sizes = [8, 128], strides = [1, 1]} : vector<8x384xf32> to vector<8x128xf32>
    %233 = arith.mulf %222, %232 : vector<8x128xf32>
    %234 = arith.addf %231, %233 : vector<8x128xf32>
    %235 = math.tanh %234 : vector<8x128xf32>
    %cst_72 = arith.constant 1.000000e+00 : f32
    %236 = vector.broadcast %cst_72 : f32 to vector<8x128xf32>
    %237 = arith.subf %236, %230 : vector<8x128xf32>
    %238 = arith.mulf %237, %235 : vector<8x128xf32>
    %239 = arith.mulf %230, %206 : vector<8x128xf32>
    %240 = arith.addf %238, %239 : vector<8x128xf32>
    %241 = vector.broadcast %208 : i32 to vector<8x1xi32>
    %242 = arith.cmpi slt, %241, %10 : vector<8x1xi32>
    %243 = vector.shape_cast %242 : vector<8x1xi1> to vector<8x1xi1>
    %244 = vector.broadcast %243 : vector<8x1xi1> to vector<8x128xi1>
    %245 = arith.select %244, %240, %206 : vector<8x128xi1>, vector<8x128xf32>
    %c16_i32_73 = arith.constant 16 : i32
    %246 = arith.muli %arg0, %c16_i32_73 : i32
    %c6_i32 = arith.constant 6 : i32
    %247 = arith.addi %246, %c6_i32 : i32
    %c48 = arith.constant 48 : index
    %c0_74 = arith.constant 0 : index
    %248 = vector.load %arg16[%c48, %c0_74] : memref<128x384xf32, #tpu.memory_space<vmem>>, vector<8x384xf32>
    %c0_75 = arith.constant 0 : index
    %c0_76 = arith.constant 0 : index
    %249 = vector.load %arg5[%c0_75, %c0_76] : memref<128x384xf32, #tpu.memory_space<vmem>>, vector<128x384xf32>
    %cst_77 = arith.constant dense<0.000000e+00> : vector<8x384xf32>
    %250 = tpu.matmul %245, %249, %cst_77 {dimension_numbers = #tpu.dot_dimension_numbers<[1], [0], [0], [1], [0, 0, 1, 1], [], []>} : vector<8x128xf32>, vector<128x384xf32>, vector<8x384xf32> -> vector<8x384xf32>
    %c0_78 = arith.constant 0 : index
    %c0_79 = arith.constant 0 : index
    %251 = vector.load %arg6[%c0_78, %c0_79] : memref<1x384xf32, #tpu.memory_space<vmem>>, vector<1x384xf32>
    %252 = vector.broadcast %251 : vector<1x384xf32> to vector<8x384xf32>
    %253 = arith.addf %250, %252 : vector<8x384xf32>
    %254 = vector.extract_strided_slice %248 {offsets = [0, 0], sizes = [8, 128], strides = [1, 1]} : vector<8x384xf32> to vector<8x128xf32>
    %255 = vector.extract_strided_slice %253 {offsets = [0, 0], sizes = [8, 128], strides = [1, 1]} : vector<8x384xf32> to vector<8x128xf32>
    %256 = arith.addf %254, %255 : vector<8x128xf32>
    %257 = arith.negf %256 : vector<8x128xf32>
    %258 = math.exp %257 : vector<8x128xf32>
    %cst_80 = arith.constant 1.000000e+00 : f32
    %259 = vector.broadcast %cst_80 : f32 to vector<8x128xf32>
    %260 = arith.addf %259, %258 : vector<8x128xf32>
    %261 = arith.divf %259, %260 : vector<8x128xf32>
    %262 = vector.extract_strided_slice %248 {offsets = [0, 128], sizes = [8, 128], strides = [1, 1]} : vector<8x384xf32> to vector<8x128xf32>
    %263 = vector.extract_strided_slice %253 {offsets = [0, 128], sizes = [8, 128], strides = [1, 1]} : vector<8x384xf32> to vector<8x128xf32>
    %264 = arith.addf %262, %263 : vector<8x128xf32>
    %265 = arith.negf %264 : vector<8x128xf32>
    %266 = math.exp %265 : vector<8x128xf32>
    %cst_81 = arith.constant 1.000000e+00 : f32
    %267 = vector.broadcast %cst_81 : f32 to vector<8x128xf32>
    %268 = arith.addf %267, %266 : vector<8x128xf32>
    %269 = arith.divf %267, %268 : vector<8x128xf32>
    %270 = vector.extract_strided_slice %248 {offsets = [0, 256], sizes = [8, 128], strides = [1, 1]} : vector<8x384xf32> to vector<8x128xf32>
    %271 = vector.extract_strided_slice %253 {offsets = [0, 256], sizes = [8, 128], strides = [1, 1]} : vector<8x384xf32> to vector<8x128xf32>
    %272 = arith.mulf %261, %271 : vector<8x128xf32>
    %273 = arith.addf %270, %272 : vector<8x128xf32>
    %274 = math.tanh %273 : vector<8x128xf32>
    %cst_82 = arith.constant 1.000000e+00 : f32
    %275 = vector.broadcast %cst_82 : f32 to vector<8x128xf32>
    %276 = arith.subf %275, %269 : vector<8x128xf32>
    %277 = arith.mulf %276, %274 : vector<8x128xf32>
    %278 = arith.mulf %269, %245 : vector<8x128xf32>
    %279 = arith.addf %277, %278 : vector<8x128xf32>
    %280 = vector.broadcast %247 : i32 to vector<8x1xi32>
    %281 = arith.cmpi slt, %280, %10 : vector<8x1xi32>
    %282 = vector.shape_cast %281 : vector<8x1xi1> to vector<8x1xi1>
    %283 = vector.broadcast %282 : vector<8x1xi1> to vector<8x128xi1>
    %284 = arith.select %283, %279, %245 : vector<8x128xi1>, vector<8x128xf32>
    %c16_i32_83 = arith.constant 16 : i32
    %285 = arith.muli %arg0, %c16_i32_83 : i32
    %c7_i32 = arith.constant 7 : i32
    %286 = arith.addi %285, %c7_i32 : i32
    %c56 = arith.constant 56 : index
    %c0_84 = arith.constant 0 : index
    %287 = vector.load %arg16[%c56, %c0_84] : memref<128x384xf32, #tpu.memory_space<vmem>>, vector<8x384xf32>
    %c0_85 = arith.constant 0 : index
    %c0_86 = arith.constant 0 : index
    %288 = vector.load %arg5[%c0_85, %c0_86] : memref<128x384xf32, #tpu.memory_space<vmem>>, vector<128x384xf32>
    %cst_87 = arith.constant dense<0.000000e+00> : vector<8x384xf32>
    %289 = tpu.matmul %284, %288, %cst_87 {dimension_numbers = #tpu.dot_dimension_numbers<[1], [0], [0], [1], [0, 0, 1, 1], [], []>} : vector<8x128xf32>, vector<128x384xf32>, vector<8x384xf32> -> vector<8x384xf32>
    %c0_88 = arith.constant 0 : index
    %c0_89 = arith.constant 0 : index
    %290 = vector.load %arg6[%c0_88, %c0_89] : memref<1x384xf32, #tpu.memory_space<vmem>>, vector<1x384xf32>
    %291 = vector.broadcast %290 : vector<1x384xf32> to vector<8x384xf32>
    %292 = arith.addf %289, %291 : vector<8x384xf32>
    %293 = vector.extract_strided_slice %287 {offsets = [0, 0], sizes = [8, 128], strides = [1, 1]} : vector<8x384xf32> to vector<8x128xf32>
    %294 = vector.extract_strided_slice %292 {offsets = [0, 0], sizes = [8, 128], strides = [1, 1]} : vector<8x384xf32> to vector<8x128xf32>
    %295 = arith.addf %293, %294 : vector<8x128xf32>
    %296 = arith.negf %295 : vector<8x128xf32>
    %297 = math.exp %296 : vector<8x128xf32>
    %cst_90 = arith.constant 1.000000e+00 : f32
    %298 = vector.broadcast %cst_90 : f32 to vector<8x128xf32>
    %299 = arith.addf %298, %297 : vector<8x128xf32>
    %300 = arith.divf %298, %299 : vector<8x128xf32>
    %301 = vector.extract_strided_slice %287 {offsets = [0, 128], sizes = [8, 128], strides = [1, 1]} : vector<8x384xf32> to vector<8x128xf32>
    %302 = vector.extract_strided_slice %292 {offsets = [0, 128], sizes = [8, 128], strides = [1, 1]} : vector<8x384xf32> to vector<8x128xf32>
    %303 = arith.addf %301, %302 : vector<8x128xf32>
    %304 = arith.negf %303 : vector<8x128xf32>
    %305 = math.exp %304 : vector<8x128xf32>
    %cst_91 = arith.constant 1.000000e+00 : f32
    %306 = vector.broadcast %cst_91 : f32 to vector<8x128xf32>
    %307 = arith.addf %306, %305 : vector<8x128xf32>
    %308 = arith.divf %306, %307 : vector<8x128xf32>
    %309 = vector.extract_strided_slice %287 {offsets = [0, 256], sizes = [8, 128], strides = [1, 1]} : vector<8x384xf32> to vector<8x128xf32>
    %310 = vector.extract_strided_slice %292 {offsets = [0, 256], sizes = [8, 128], strides = [1, 1]} : vector<8x384xf32> to vector<8x128xf32>
    %311 = arith.mulf %300, %310 : vector<8x128xf32>
    %312 = arith.addf %309, %311 : vector<8x128xf32>
    %313 = math.tanh %312 : vector<8x128xf32>
    %cst_92 = arith.constant 1.000000e+00 : f32
    %314 = vector.broadcast %cst_92 : f32 to vector<8x128xf32>
    %315 = arith.subf %314, %308 : vector<8x128xf32>
    %316 = arith.mulf %315, %313 : vector<8x128xf32>
    %317 = arith.mulf %308, %284 : vector<8x128xf32>
    %318 = arith.addf %316, %317 : vector<8x128xf32>
    %319 = vector.broadcast %286 : i32 to vector<8x1xi32>
    %320 = arith.cmpi slt, %319, %10 : vector<8x1xi32>
    %321 = vector.shape_cast %320 : vector<8x1xi1> to vector<8x1xi1>
    %322 = vector.broadcast %321 : vector<8x1xi1> to vector<8x128xi1>
    %323 = arith.select %322, %318, %284 : vector<8x128xi1>, vector<8x128xf32>
    %c16_i32_93 = arith.constant 16 : i32
    %324 = arith.muli %arg0, %c16_i32_93 : i32
    %c8_i32 = arith.constant 8 : i32
    %325 = arith.addi %324, %c8_i32 : i32
    %c64 = arith.constant 64 : index
    %c0_94 = arith.constant 0 : index
    %326 = vector.load %arg16[%c64, %c0_94] : memref<128x384xf32, #tpu.memory_space<vmem>>, vector<8x384xf32>
    %c0_95 = arith.constant 0 : index
    %c0_96 = arith.constant 0 : index
    %327 = vector.load %arg5[%c0_95, %c0_96] : memref<128x384xf32, #tpu.memory_space<vmem>>, vector<128x384xf32>
    %cst_97 = arith.constant dense<0.000000e+00> : vector<8x384xf32>
    %328 = tpu.matmul %323, %327, %cst_97 {dimension_numbers = #tpu.dot_dimension_numbers<[1], [0], [0], [1], [0, 0, 1, 1], [], []>} : vector<8x128xf32>, vector<128x384xf32>, vector<8x384xf32> -> vector<8x384xf32>
    %c0_98 = arith.constant 0 : index
    %c0_99 = arith.constant 0 : index
    %329 = vector.load %arg6[%c0_98, %c0_99] : memref<1x384xf32, #tpu.memory_space<vmem>>, vector<1x384xf32>
    %330 = vector.broadcast %329 : vector<1x384xf32> to vector<8x384xf32>
    %331 = arith.addf %328, %330 : vector<8x384xf32>
    %332 = vector.extract_strided_slice %326 {offsets = [0, 0], sizes = [8, 128], strides = [1, 1]} : vector<8x384xf32> to vector<8x128xf32>
    %333 = vector.extract_strided_slice %331 {offsets = [0, 0], sizes = [8, 128], strides = [1, 1]} : vector<8x384xf32> to vector<8x128xf32>
    %334 = arith.addf %332, %333 : vector<8x128xf32>
    %335 = arith.negf %334 : vector<8x128xf32>
    %336 = math.exp %335 : vector<8x128xf32>
    %cst_100 = arith.constant 1.000000e+00 : f32
    %337 = vector.broadcast %cst_100 : f32 to vector<8x128xf32>
    %338 = arith.addf %337, %336 : vector<8x128xf32>
    %339 = arith.divf %337, %338 : vector<8x128xf32>
    %340 = vector.extract_strided_slice %326 {offsets = [0, 128], sizes = [8, 128], strides = [1, 1]} : vector<8x384xf32> to vector<8x128xf32>
    %341 = vector.extract_strided_slice %331 {offsets = [0, 128], sizes = [8, 128], strides = [1, 1]} : vector<8x384xf32> to vector<8x128xf32>
    %342 = arith.addf %340, %341 : vector<8x128xf32>
    %343 = arith.negf %342 : vector<8x128xf32>
    %344 = math.exp %343 : vector<8x128xf32>
    %cst_101 = arith.constant 1.000000e+00 : f32
    %345 = vector.broadcast %cst_101 : f32 to vector<8x128xf32>
    %346 = arith.addf %345, %344 : vector<8x128xf32>
    %347 = arith.divf %345, %346 : vector<8x128xf32>
    %348 = vector.extract_strided_slice %326 {offsets = [0, 256], sizes = [8, 128], strides = [1, 1]} : vector<8x384xf32> to vector<8x128xf32>
    %349 = vector.extract_strided_slice %331 {offsets = [0, 256], sizes = [8, 128], strides = [1, 1]} : vector<8x384xf32> to vector<8x128xf32>
    %350 = arith.mulf %339, %349 : vector<8x128xf32>
    %351 = arith.addf %348, %350 : vector<8x128xf32>
    %352 = math.tanh %351 : vector<8x128xf32>
    %cst_102 = arith.constant 1.000000e+00 : f32
    %353 = vector.broadcast %cst_102 : f32 to vector<8x128xf32>
    %354 = arith.subf %353, %347 : vector<8x128xf32>
    %355 = arith.mulf %354, %352 : vector<8x128xf32>
    %356 = arith.mulf %347, %323 : vector<8x128xf32>
    %357 = arith.addf %355, %356 : vector<8x128xf32>
    %358 = vector.broadcast %325 : i32 to vector<8x1xi32>
    %359 = arith.cmpi slt, %358, %10 : vector<8x1xi32>
    %360 = vector.shape_cast %359 : vector<8x1xi1> to vector<8x1xi1>
    %361 = vector.broadcast %360 : vector<8x1xi1> to vector<8x128xi1>
    %362 = arith.select %361, %357, %323 : vector<8x128xi1>, vector<8x128xf32>
    %c16_i32_103 = arith.constant 16 : i32
    %363 = arith.muli %arg0, %c16_i32_103 : i32
    %c9_i32 = arith.constant 9 : i32
    %364 = arith.addi %363, %c9_i32 : i32
    %c72 = arith.constant 72 : index
    %c0_104 = arith.constant 0 : index
    %365 = vector.load %arg16[%c72, %c0_104] : memref<128x384xf32, #tpu.memory_space<vmem>>, vector<8x384xf32>
    %c0_105 = arith.constant 0 : index
    %c0_106 = arith.constant 0 : index
    %366 = vector.load %arg5[%c0_105, %c0_106] : memref<128x384xf32, #tpu.memory_space<vmem>>, vector<128x384xf32>
    %cst_107 = arith.constant dense<0.000000e+00> : vector<8x384xf32>
    %367 = tpu.matmul %362, %366, %cst_107 {dimension_numbers = #tpu.dot_dimension_numbers<[1], [0], [0], [1], [0, 0, 1, 1], [], []>} : vector<8x128xf32>, vector<128x384xf32>, vector<8x384xf32> -> vector<8x384xf32>
    %c0_108 = arith.constant 0 : index
    %c0_109 = arith.constant 0 : index
    %368 = vector.load %arg6[%c0_108, %c0_109] : memref<1x384xf32, #tpu.memory_space<vmem>>, vector<1x384xf32>
    %369 = vector.broadcast %368 : vector<1x384xf32> to vector<8x384xf32>
    %370 = arith.addf %367, %369 : vector<8x384xf32>
    %371 = vector.extract_strided_slice %365 {offsets = [0, 0], sizes = [8, 128], strides = [1, 1]} : vector<8x384xf32> to vector<8x128xf32>
    %372 = vector.extract_strided_slice %370 {offsets = [0, 0], sizes = [8, 128], strides = [1, 1]} : vector<8x384xf32> to vector<8x128xf32>
    %373 = arith.addf %371, %372 : vector<8x128xf32>
    %374 = arith.negf %373 : vector<8x128xf32>
    %375 = math.exp %374 : vector<8x128xf32>
    %cst_110 = arith.constant 1.000000e+00 : f32
    %376 = vector.broadcast %cst_110 : f32 to vector<8x128xf32>
    %377 = arith.addf %376, %375 : vector<8x128xf32>
    %378 = arith.divf %376, %377 : vector<8x128xf32>
    %379 = vector.extract_strided_slice %365 {offsets = [0, 128], sizes = [8, 128], strides = [1, 1]} : vector<8x384xf32> to vector<8x128xf32>
    %380 = vector.extract_strided_slice %370 {offsets = [0, 128], sizes = [8, 128], strides = [1, 1]} : vector<8x384xf32> to vector<8x128xf32>
    %381 = arith.addf %379, %380 : vector<8x128xf32>
    %382 = arith.negf %381 : vector<8x128xf32>
    %383 = math.exp %382 : vector<8x128xf32>
    %cst_111 = arith.constant 1.000000e+00 : f32
    %384 = vector.broadcast %cst_111 : f32 to vector<8x128xf32>
    %385 = arith.addf %384, %383 : vector<8x128xf32>
    %386 = arith.divf %384, %385 : vector<8x128xf32>
    %387 = vector.extract_strided_slice %365 {offsets = [0, 256], sizes = [8, 128], strides = [1, 1]} : vector<8x384xf32> to vector<8x128xf32>
    %388 = vector.extract_strided_slice %370 {offsets = [0, 256], sizes = [8, 128], strides = [1, 1]} : vector<8x384xf32> to vector<8x128xf32>
    %389 = arith.mulf %378, %388 : vector<8x128xf32>
    %390 = arith.addf %387, %389 : vector<8x128xf32>
    %391 = math.tanh %390 : vector<8x128xf32>
    %cst_112 = arith.constant 1.000000e+00 : f32
    %392 = vector.broadcast %cst_112 : f32 to vector<8x128xf32>
    %393 = arith.subf %392, %386 : vector<8x128xf32>
    %394 = arith.mulf %393, %391 : vector<8x128xf32>
    %395 = arith.mulf %386, %362 : vector<8x128xf32>
    %396 = arith.addf %394, %395 : vector<8x128xf32>
    %397 = vector.broadcast %364 : i32 to vector<8x1xi32>
    %398 = arith.cmpi slt, %397, %10 : vector<8x1xi32>
    %399 = vector.shape_cast %398 : vector<8x1xi1> to vector<8x1xi1>
    %400 = vector.broadcast %399 : vector<8x1xi1> to vector<8x128xi1>
    %401 = arith.select %400, %396, %362 : vector<8x128xi1>, vector<8x128xf32>
    %c16_i32_113 = arith.constant 16 : i32
    %402 = arith.muli %arg0, %c16_i32_113 : i32
    %c10_i32 = arith.constant 10 : i32
    %403 = arith.addi %402, %c10_i32 : i32
    %c80 = arith.constant 80 : index
    %c0_114 = arith.constant 0 : index
    %404 = vector.load %arg16[%c80, %c0_114] : memref<128x384xf32, #tpu.memory_space<vmem>>, vector<8x384xf32>
    %c0_115 = arith.constant 0 : index
    %c0_116 = arith.constant 0 : index
    %405 = vector.load %arg5[%c0_115, %c0_116] : memref<128x384xf32, #tpu.memory_space<vmem>>, vector<128x384xf32>
    %cst_117 = arith.constant dense<0.000000e+00> : vector<8x384xf32>
    %406 = tpu.matmul %401, %405, %cst_117 {dimension_numbers = #tpu.dot_dimension_numbers<[1], [0], [0], [1], [0, 0, 1, 1], [], []>} : vector<8x128xf32>, vector<128x384xf32>, vector<8x384xf32> -> vector<8x384xf32>
    %c0_118 = arith.constant 0 : index
    %c0_119 = arith.constant 0 : index
    %407 = vector.load %arg6[%c0_118, %c0_119] : memref<1x384xf32, #tpu.memory_space<vmem>>, vector<1x384xf32>
    %408 = vector.broadcast %407 : vector<1x384xf32> to vector<8x384xf32>
    %409 = arith.addf %406, %408 : vector<8x384xf32>
    %410 = vector.extract_strided_slice %404 {offsets = [0, 0], sizes = [8, 128], strides = [1, 1]} : vector<8x384xf32> to vector<8x128xf32>
    %411 = vector.extract_strided_slice %409 {offsets = [0, 0], sizes = [8, 128], strides = [1, 1]} : vector<8x384xf32> to vector<8x128xf32>
    %412 = arith.addf %410, %411 : vector<8x128xf32>
    %413 = arith.negf %412 : vector<8x128xf32>
    %414 = math.exp %413 : vector<8x128xf32>
    %cst_120 = arith.constant 1.000000e+00 : f32
    %415 = vector.broadcast %cst_120 : f32 to vector<8x128xf32>
    %416 = arith.addf %415, %414 : vector<8x128xf32>
    %417 = arith.divf %415, %416 : vector<8x128xf32>
    %418 = vector.extract_strided_slice %404 {offsets = [0, 128], sizes = [8, 128], strides = [1, 1]} : vector<8x384xf32> to vector<8x128xf32>
    %419 = vector.extract_strided_slice %409 {offsets = [0, 128], sizes = [8, 128], strides = [1, 1]} : vector<8x384xf32> to vector<8x128xf32>
    %420 = arith.addf %418, %419 : vector<8x128xf32>
    %421 = arith.negf %420 : vector<8x128xf32>
    %422 = math.exp %421 : vector<8x128xf32>
    %cst_121 = arith.constant 1.000000e+00 : f32
    %423 = vector.broadcast %cst_121 : f32 to vector<8x128xf32>
    %424 = arith.addf %423, %422 : vector<8x128xf32>
    %425 = arith.divf %423, %424 : vector<8x128xf32>
    %426 = vector.extract_strided_slice %404 {offsets = [0, 256], sizes = [8, 128], strides = [1, 1]} : vector<8x384xf32> to vector<8x128xf32>
    %427 = vector.extract_strided_slice %409 {offsets = [0, 256], sizes = [8, 128], strides = [1, 1]} : vector<8x384xf32> to vector<8x128xf32>
    %428 = arith.mulf %417, %427 : vector<8x128xf32>
    %429 = arith.addf %426, %428 : vector<8x128xf32>
    %430 = math.tanh %429 : vector<8x128xf32>
    %cst_122 = arith.constant 1.000000e+00 : f32
    %431 = vector.broadcast %cst_122 : f32 to vector<8x128xf32>
    %432 = arith.subf %431, %425 : vector<8x128xf32>
    %433 = arith.mulf %432, %430 : vector<8x128xf32>
    %434 = arith.mulf %425, %401 : vector<8x128xf32>
    %435 = arith.addf %433, %434 : vector<8x128xf32>
    %436 = vector.broadcast %403 : i32 to vector<8x1xi32>
    %437 = arith.cmpi slt, %436, %10 : vector<8x1xi32>
    %438 = vector.shape_cast %437 : vector<8x1xi1> to vector<8x1xi1>
    %439 = vector.broadcast %438 : vector<8x1xi1> to vector<8x128xi1>
    %440 = arith.select %439, %435, %401 : vector<8x128xi1>, vector<8x128xf32>
    %c16_i32_123 = arith.constant 16 : i32
    %441 = arith.muli %arg0, %c16_i32_123 : i32
    %c11_i32 = arith.constant 11 : i32
    %442 = arith.addi %441, %c11_i32 : i32
    %c88 = arith.constant 88 : index
    %c0_124 = arith.constant 0 : index
    %443 = vector.load %arg16[%c88, %c0_124] : memref<128x384xf32, #tpu.memory_space<vmem>>, vector<8x384xf32>
    %c0_125 = arith.constant 0 : index
    %c0_126 = arith.constant 0 : index
    %444 = vector.load %arg5[%c0_125, %c0_126] : memref<128x384xf32, #tpu.memory_space<vmem>>, vector<128x384xf32>
    %cst_127 = arith.constant dense<0.000000e+00> : vector<8x384xf32>
    %445 = tpu.matmul %440, %444, %cst_127 {dimension_numbers = #tpu.dot_dimension_numbers<[1], [0], [0], [1], [0, 0, 1, 1], [], []>} : vector<8x128xf32>, vector<128x384xf32>, vector<8x384xf32> -> vector<8x384xf32>
    %c0_128 = arith.constant 0 : index
    %c0_129 = arith.constant 0 : index
    %446 = vector.load %arg6[%c0_128, %c0_129] : memref<1x384xf32, #tpu.memory_space<vmem>>, vector<1x384xf32>
    %447 = vector.broadcast %446 : vector<1x384xf32> to vector<8x384xf32>
    %448 = arith.addf %445, %447 : vector<8x384xf32>
    %449 = vector.extract_strided_slice %443 {offsets = [0, 0], sizes = [8, 128], strides = [1, 1]} : vector<8x384xf32> to vector<8x128xf32>
    %450 = vector.extract_strided_slice %448 {offsets = [0, 0], sizes = [8, 128], strides = [1, 1]} : vector<8x384xf32> to vector<8x128xf32>
    %451 = arith.addf %449, %450 : vector<8x128xf32>
    %452 = arith.negf %451 : vector<8x128xf32>
    %453 = math.exp %452 : vector<8x128xf32>
    %cst_130 = arith.constant 1.000000e+00 : f32
    %454 = vector.broadcast %cst_130 : f32 to vector<8x128xf32>
    %455 = arith.addf %454, %453 : vector<8x128xf32>
    %456 = arith.divf %454, %455 : vector<8x128xf32>
    %457 = vector.extract_strided_slice %443 {offsets = [0, 128], sizes = [8, 128], strides = [1, 1]} : vector<8x384xf32> to vector<8x128xf32>
    %458 = vector.extract_strided_slice %448 {offsets = [0, 128], sizes = [8, 128], strides = [1, 1]} : vector<8x384xf32> to vector<8x128xf32>
    %459 = arith.addf %457, %458 : vector<8x128xf32>
    %460 = arith.negf %459 : vector<8x128xf32>
    %461 = math.exp %460 : vector<8x128xf32>
    %cst_131 = arith.constant 1.000000e+00 : f32
    %462 = vector.broadcast %cst_131 : f32 to vector<8x128xf32>
    %463 = arith.addf %462, %461 : vector<8x128xf32>
    %464 = arith.divf %462, %463 : vector<8x128xf32>
    %465 = vector.extract_strided_slice %443 {offsets = [0, 256], sizes = [8, 128], strides = [1, 1]} : vector<8x384xf32> to vector<8x128xf32>
    %466 = vector.extract_strided_slice %448 {offsets = [0, 256], sizes = [8, 128], strides = [1, 1]} : vector<8x384xf32> to vector<8x128xf32>
    %467 = arith.mulf %456, %466 : vector<8x128xf32>
    %468 = arith.addf %465, %467 : vector<8x128xf32>
    %469 = math.tanh %468 : vector<8x128xf32>
    %cst_132 = arith.constant 1.000000e+00 : f32
    %470 = vector.broadcast %cst_132 : f32 to vector<8x128xf32>
    %471 = arith.subf %470, %464 : vector<8x128xf32>
    %472 = arith.mulf %471, %469 : vector<8x128xf32>
    %473 = arith.mulf %464, %440 : vector<8x128xf32>
    %474 = arith.addf %472, %473 : vector<8x128xf32>
    %475 = vector.broadcast %442 : i32 to vector<8x1xi32>
    %476 = arith.cmpi slt, %475, %10 : vector<8x1xi32>
    %477 = vector.shape_cast %476 : vector<8x1xi1> to vector<8x1xi1>
    %478 = vector.broadcast %477 : vector<8x1xi1> to vector<8x128xi1>
    %479 = arith.select %478, %474, %440 : vector<8x128xi1>, vector<8x128xf32>
    %c16_i32_133 = arith.constant 16 : i32
    %480 = arith.muli %arg0, %c16_i32_133 : i32
    %c12_i32 = arith.constant 12 : i32
    %481 = arith.addi %480, %c12_i32 : i32
    %c96 = arith.constant 96 : index
    %c0_134 = arith.constant 0 : index
    %482 = vector.load %arg16[%c96, %c0_134] : memref<128x384xf32, #tpu.memory_space<vmem>>, vector<8x384xf32>
    %c0_135 = arith.constant 0 : index
    %c0_136 = arith.constant 0 : index
    %483 = vector.load %arg5[%c0_135, %c0_136] : memref<128x384xf32, #tpu.memory_space<vmem>>, vector<128x384xf32>
    %cst_137 = arith.constant dense<0.000000e+00> : vector<8x384xf32>
    %484 = tpu.matmul %479, %483, %cst_137 {dimension_numbers = #tpu.dot_dimension_numbers<[1], [0], [0], [1], [0, 0, 1, 1], [], []>} : vector<8x128xf32>, vector<128x384xf32>, vector<8x384xf32> -> vector<8x384xf32>
    %c0_138 = arith.constant 0 : index
    %c0_139 = arith.constant 0 : index
    %485 = vector.load %arg6[%c0_138, %c0_139] : memref<1x384xf32, #tpu.memory_space<vmem>>, vector<1x384xf32>
    %486 = vector.broadcast %485 : vector<1x384xf32> to vector<8x384xf32>
    %487 = arith.addf %484, %486 : vector<8x384xf32>
    %488 = vector.extract_strided_slice %482 {offsets = [0, 0], sizes = [8, 128], strides = [1, 1]} : vector<8x384xf32> to vector<8x128xf32>
    %489 = vector.extract_strided_slice %487 {offsets = [0, 0], sizes = [8, 128], strides = [1, 1]} : vector<8x384xf32> to vector<8x128xf32>
    %490 = arith.addf %488, %489 : vector<8x128xf32>
    %491 = arith.negf %490 : vector<8x128xf32>
    %492 = math.exp %491 : vector<8x128xf32>
    %cst_140 = arith.constant 1.000000e+00 : f32
    %493 = vector.broadcast %cst_140 : f32 to vector<8x128xf32>
    %494 = arith.addf %493, %492 : vector<8x128xf32>
    %495 = arith.divf %493, %494 : vector<8x128xf32>
    %496 = vector.extract_strided_slice %482 {offsets = [0, 128], sizes = [8, 128], strides = [1, 1]} : vector<8x384xf32> to vector<8x128xf32>
    %497 = vector.extract_strided_slice %487 {offsets = [0, 128], sizes = [8, 128], strides = [1, 1]} : vector<8x384xf32> to vector<8x128xf32>
    %498 = arith.addf %496, %497 : vector<8x128xf32>
    %499 = arith.negf %498 : vector<8x128xf32>
    %500 = math.exp %499 : vector<8x128xf32>
    %cst_141 = arith.constant 1.000000e+00 : f32
    %501 = vector.broadcast %cst_141 : f32 to vector<8x128xf32>
    %502 = arith.addf %501, %500 : vector<8x128xf32>
    %503 = arith.divf %501, %502 : vector<8x128xf32>
    %504 = vector.extract_strided_slice %482 {offsets = [0, 256], sizes = [8, 128], strides = [1, 1]} : vector<8x384xf32> to vector<8x128xf32>
    %505 = vector.extract_strided_slice %487 {offsets = [0, 256], sizes = [8, 128], strides = [1, 1]} : vector<8x384xf32> to vector<8x128xf32>
    %506 = arith.mulf %495, %505 : vector<8x128xf32>
    %507 = arith.addf %504, %506 : vector<8x128xf32>
    %508 = math.tanh %507 : vector<8x128xf32>
    %cst_142 = arith.constant 1.000000e+00 : f32
    %509 = vector.broadcast %cst_142 : f32 to vector<8x128xf32>
    %510 = arith.subf %509, %503 : vector<8x128xf32>
    %511 = arith.mulf %510, %508 : vector<8x128xf32>
    %512 = arith.mulf %503, %479 : vector<8x128xf32>
    %513 = arith.addf %511, %512 : vector<8x128xf32>
    %514 = vector.broadcast %481 : i32 to vector<8x1xi32>
    %515 = arith.cmpi slt, %514, %10 : vector<8x1xi32>
    %516 = vector.shape_cast %515 : vector<8x1xi1> to vector<8x1xi1>
    %517 = vector.broadcast %516 : vector<8x1xi1> to vector<8x128xi1>
    %518 = arith.select %517, %513, %479 : vector<8x128xi1>, vector<8x128xf32>
    %c16_i32_143 = arith.constant 16 : i32
    %519 = arith.muli %arg0, %c16_i32_143 : i32
    %c13_i32 = arith.constant 13 : i32
    %520 = arith.addi %519, %c13_i32 : i32
    %c104 = arith.constant 104 : index
    %c0_144 = arith.constant 0 : index
    %521 = vector.load %arg16[%c104, %c0_144] : memref<128x384xf32, #tpu.memory_space<vmem>>, vector<8x384xf32>
    %c0_145 = arith.constant 0 : index
    %c0_146 = arith.constant 0 : index
    %522 = vector.load %arg5[%c0_145, %c0_146] : memref<128x384xf32, #tpu.memory_space<vmem>>, vector<128x384xf32>
    %cst_147 = arith.constant dense<0.000000e+00> : vector<8x384xf32>
    %523 = tpu.matmul %518, %522, %cst_147 {dimension_numbers = #tpu.dot_dimension_numbers<[1], [0], [0], [1], [0, 0, 1, 1], [], []>} : vector<8x128xf32>, vector<128x384xf32>, vector<8x384xf32> -> vector<8x384xf32>
    %c0_148 = arith.constant 0 : index
    %c0_149 = arith.constant 0 : index
    %524 = vector.load %arg6[%c0_148, %c0_149] : memref<1x384xf32, #tpu.memory_space<vmem>>, vector<1x384xf32>
    %525 = vector.broadcast %524 : vector<1x384xf32> to vector<8x384xf32>
    %526 = arith.addf %523, %525 : vector<8x384xf32>
    %527 = vector.extract_strided_slice %521 {offsets = [0, 0], sizes = [8, 128], strides = [1, 1]} : vector<8x384xf32> to vector<8x128xf32>
    %528 = vector.extract_strided_slice %526 {offsets = [0, 0], sizes = [8, 128], strides = [1, 1]} : vector<8x384xf32> to vector<8x128xf32>
    %529 = arith.addf %527, %528 : vector<8x128xf32>
    %530 = arith.negf %529 : vector<8x128xf32>
    %531 = math.exp %530 : vector<8x128xf32>
    %cst_150 = arith.constant 1.000000e+00 : f32
    %532 = vector.broadcast %cst_150 : f32 to vector<8x128xf32>
    %533 = arith.addf %532, %531 : vector<8x128xf32>
    %534 = arith.divf %532, %533 : vector<8x128xf32>
    %535 = vector.extract_strided_slice %521 {offsets = [0, 128], sizes = [8, 128], strides = [1, 1]} : vector<8x384xf32> to vector<8x128xf32>
    %536 = vector.extract_strided_slice %526 {offsets = [0, 128], sizes = [8, 128], strides = [1, 1]} : vector<8x384xf32> to vector<8x128xf32>
    %537 = arith.addf %535, %536 : vector<8x128xf32>
    %538 = arith.negf %537 : vector<8x128xf32>
    %539 = math.exp %538 : vector<8x128xf32>
    %cst_151 = arith.constant 1.000000e+00 : f32
    %540 = vector.broadcast %cst_151 : f32 to vector<8x128xf32>
    %541 = arith.addf %540, %539 : vector<8x128xf32>
    %542 = arith.divf %540, %541 : vector<8x128xf32>
    %543 = vector.extract_strided_slice %521 {offsets = [0, 256], sizes = [8, 128], strides = [1, 1]} : vector<8x384xf32> to vector<8x128xf32>
    %544 = vector.extract_strided_slice %526 {offsets = [0, 256], sizes = [8, 128], strides = [1, 1]} : vector<8x384xf32> to vector<8x128xf32>
    %545 = arith.mulf %534, %544 : vector<8x128xf32>
    %546 = arith.addf %543, %545 : vector<8x128xf32>
    %547 = math.tanh %546 : vector<8x128xf32>
    %cst_152 = arith.constant 1.000000e+00 : f32
    %548 = vector.broadcast %cst_152 : f32 to vector<8x128xf32>
    %549 = arith.subf %548, %542 : vector<8x128xf32>
    %550 = arith.mulf %549, %547 : vector<8x128xf32>
    %551 = arith.mulf %542, %518 : vector<8x128xf32>
    %552 = arith.addf %550, %551 : vector<8x128xf32>
    %553 = vector.broadcast %520 : i32 to vector<8x1xi32>
    %554 = arith.cmpi slt, %553, %10 : vector<8x1xi32>
    %555 = vector.shape_cast %554 : vector<8x1xi1> to vector<8x1xi1>
    %556 = vector.broadcast %555 : vector<8x1xi1> to vector<8x128xi1>
    %557 = arith.select %556, %552, %518 : vector<8x128xi1>, vector<8x128xf32>
    %c16_i32_153 = arith.constant 16 : i32
    %558 = arith.muli %arg0, %c16_i32_153 : i32
    %c14_i32 = arith.constant 14 : i32
    %559 = arith.addi %558, %c14_i32 : i32
    %c112 = arith.constant 112 : index
    %c0_154 = arith.constant 0 : index
    %560 = vector.load %arg16[%c112, %c0_154] : memref<128x384xf32, #tpu.memory_space<vmem>>, vector<8x384xf32>
    %c0_155 = arith.constant 0 : index
    %c0_156 = arith.constant 0 : index
    %561 = vector.load %arg5[%c0_155, %c0_156] : memref<128x384xf32, #tpu.memory_space<vmem>>, vector<128x384xf32>
    %cst_157 = arith.constant dense<0.000000e+00> : vector<8x384xf32>
    %562 = tpu.matmul %557, %561, %cst_157 {dimension_numbers = #tpu.dot_dimension_numbers<[1], [0], [0], [1], [0, 0, 1, 1], [], []>} : vector<8x128xf32>, vector<128x384xf32>, vector<8x384xf32> -> vector<8x384xf32>
    %c0_158 = arith.constant 0 : index
    %c0_159 = arith.constant 0 : index
    %563 = vector.load %arg6[%c0_158, %c0_159] : memref<1x384xf32, #tpu.memory_space<vmem>>, vector<1x384xf32>
    %564 = vector.broadcast %563 : vector<1x384xf32> to vector<8x384xf32>
    %565 = arith.addf %562, %564 : vector<8x384xf32>
    %566 = vector.extract_strided_slice %560 {offsets = [0, 0], sizes = [8, 128], strides = [1, 1]} : vector<8x384xf32> to vector<8x128xf32>
    %567 = vector.extract_strided_slice %565 {offsets = [0, 0], sizes = [8, 128], strides = [1, 1]} : vector<8x384xf32> to vector<8x128xf32>
    %568 = arith.addf %566, %567 : vector<8x128xf32>
    %569 = arith.negf %568 : vector<8x128xf32>
    %570 = math.exp %569 : vector<8x128xf32>
    %cst_160 = arith.constant 1.000000e+00 : f32
    %571 = vector.broadcast %cst_160 : f32 to vector<8x128xf32>
    %572 = arith.addf %571, %570 : vector<8x128xf32>
    %573 = arith.divf %571, %572 : vector<8x128xf32>
    %574 = vector.extract_strided_slice %560 {offsets = [0, 128], sizes = [8, 128], strides = [1, 1]} : vector<8x384xf32> to vector<8x128xf32>
    %575 = vector.extract_strided_slice %565 {offsets = [0, 128], sizes = [8, 128], strides = [1, 1]} : vector<8x384xf32> to vector<8x128xf32>
    %576 = arith.addf %574, %575 : vector<8x128xf32>
    %577 = arith.negf %576 : vector<8x128xf32>
    %578 = math.exp %577 : vector<8x128xf32>
    %cst_161 = arith.constant 1.000000e+00 : f32
    %579 = vector.broadcast %cst_161 : f32 to vector<8x128xf32>
    %580 = arith.addf %579, %578 : vector<8x128xf32>
    %581 = arith.divf %579, %580 : vector<8x128xf32>
    %582 = vector.extract_strided_slice %560 {offsets = [0, 256], sizes = [8, 128], strides = [1, 1]} : vector<8x384xf32> to vector<8x128xf32>
    %583 = vector.extract_strided_slice %565 {offsets = [0, 256], sizes = [8, 128], strides = [1, 1]} : vector<8x384xf32> to vector<8x128xf32>
    %584 = arith.mulf %573, %583 : vector<8x128xf32>
    %585 = arith.addf %582, %584 : vector<8x128xf32>
    %586 = math.tanh %585 : vector<8x128xf32>
    %cst_162 = arith.constant 1.000000e+00 : f32
    %587 = vector.broadcast %cst_162 : f32 to vector<8x128xf32>
    %588 = arith.subf %587, %581 : vector<8x128xf32>
    %589 = arith.mulf %588, %586 : vector<8x128xf32>
    %590 = arith.mulf %581, %557 : vector<8x128xf32>
    %591 = arith.addf %589, %590 : vector<8x128xf32>
    %592 = vector.broadcast %559 : i32 to vector<8x1xi32>
    %593 = arith.cmpi slt, %592, %10 : vector<8x1xi32>
    %594 = vector.shape_cast %593 : vector<8x1xi1> to vector<8x1xi1>
    %595 = vector.broadcast %594 : vector<8x1xi1> to vector<8x128xi1>
    %596 = arith.select %595, %591, %557 : vector<8x128xi1>, vector<8x128xf32>
    %c16_i32_163 = arith.constant 16 : i32
    %597 = arith.muli %arg0, %c16_i32_163 : i32
    %c15_i32 = arith.constant 15 : i32
    %598 = arith.addi %597, %c15_i32 : i32
    %c120 = arith.constant 120 : index
    %c0_164 = arith.constant 0 : index
    %599 = vector.load %arg16[%c120, %c0_164] : memref<128x384xf32, #tpu.memory_space<vmem>>, vector<8x384xf32>
    %c0_165 = arith.constant 0 : index
    %c0_166 = arith.constant 0 : index
    %600 = vector.load %arg5[%c0_165, %c0_166] : memref<128x384xf32, #tpu.memory_space<vmem>>, vector<128x384xf32>
    %cst_167 = arith.constant dense<0.000000e+00> : vector<8x384xf32>
    %601 = tpu.matmul %596, %600, %cst_167 {dimension_numbers = #tpu.dot_dimension_numbers<[1], [0], [0], [1], [0, 0, 1, 1], [], []>} : vector<8x128xf32>, vector<128x384xf32>, vector<8x384xf32> -> vector<8x384xf32>
    %c0_168 = arith.constant 0 : index
    %c0_169 = arith.constant 0 : index
    %602 = vector.load %arg6[%c0_168, %c0_169] : memref<1x384xf32, #tpu.memory_space<vmem>>, vector<1x384xf32>
    %603 = vector.broadcast %602 : vector<1x384xf32> to vector<8x384xf32>
    %604 = arith.addf %601, %603 : vector<8x384xf32>
    %605 = vector.extract_strided_slice %599 {offsets = [0, 0], sizes = [8, 128], strides = [1, 1]} : vector<8x384xf32> to vector<8x128xf32>
    %606 = vector.extract_strided_slice %604 {offsets = [0, 0], sizes = [8, 128], strides = [1, 1]} : vector<8x384xf32> to vector<8x128xf32>
    %607 = arith.addf %605, %606 : vector<8x128xf32>
    %608 = arith.negf %607 : vector<8x128xf32>
    %609 = math.exp %608 : vector<8x128xf32>
    %cst_170 = arith.constant 1.000000e+00 : f32
    %610 = vector.broadcast %cst_170 : f32 to vector<8x128xf32>
    %611 = arith.addf %610, %609 : vector<8x128xf32>
    %612 = arith.divf %610, %611 : vector<8x128xf32>
    %613 = vector.extract_strided_slice %599 {offsets = [0, 128], sizes = [8, 128], strides = [1, 1]} : vector<8x384xf32> to vector<8x128xf32>
    %614 = vector.extract_strided_slice %604 {offsets = [0, 128], sizes = [8, 128], strides = [1, 1]} : vector<8x384xf32> to vector<8x128xf32>
    %615 = arith.addf %613, %614 : vector<8x128xf32>
    %616 = arith.negf %615 : vector<8x128xf32>
    %617 = math.exp %616 : vector<8x128xf32>
    %cst_171 = arith.constant 1.000000e+00 : f32
    %618 = vector.broadcast %cst_171 : f32 to vector<8x128xf32>
    %619 = arith.addf %618, %617 : vector<8x128xf32>
    %620 = arith.divf %618, %619 : vector<8x128xf32>
    %621 = vector.extract_strided_slice %599 {offsets = [0, 256], sizes = [8, 128], strides = [1, 1]} : vector<8x384xf32> to vector<8x128xf32>
    %622 = vector.extract_strided_slice %604 {offsets = [0, 256], sizes = [8, 128], strides = [1, 1]} : vector<8x384xf32> to vector<8x128xf32>
    %623 = arith.mulf %612, %622 : vector<8x128xf32>
    %624 = arith.addf %621, %623 : vector<8x128xf32>
    %625 = math.tanh %624 : vector<8x128xf32>
    %cst_172 = arith.constant 1.000000e+00 : f32
    %626 = vector.broadcast %cst_172 : f32 to vector<8x128xf32>
    %627 = arith.subf %626, %620 : vector<8x128xf32>
    %628 = arith.mulf %627, %625 : vector<8x128xf32>
    %629 = arith.mulf %620, %596 : vector<8x128xf32>
    %630 = arith.addf %628, %629 : vector<8x128xf32>
    %631 = vector.broadcast %598 : i32 to vector<8x1xi32>
    %632 = arith.cmpi slt, %631, %10 : vector<8x1xi32>
    %633 = vector.shape_cast %632 : vector<8x1xi1> to vector<8x1xi1>
    %634 = vector.broadcast %633 : vector<8x1xi1> to vector<8x128xi1>
    %635 = arith.select %634, %630, %596 : vector<8x128xi1>, vector<8x128xf32>
    %c0_173 = arith.constant 0 : index
    %c0_174 = arith.constant 0 : index
    %636 = vector.load %arg15[%c0_173, %c0_174] : memref<8x128xf32, #tpu.memory_space<vmem>>, vector<8x128xf32>
    tpu.vector_store %arg15[%c0_173, %c0_174], %635 {strides = array<i32>} : memref<8x128xf32, #tpu.memory_space<vmem>>, vector<8x128xf32>,
    %c0_i32_175 = arith.constant 0 : i32
    %637 = arith.cmpi eq, %arg0, %c0_i32_175 : i32
    %638 = arith.extui %637 : i1 to i32
    %c0_i32_176 = arith.constant 0 : i32
    %639 = arith.cmpi ne, %638, %c0_i32_176 : i32
    scf.if %639 {
      %c0_177 = arith.constant 0 : index
      %c0_178 = arith.constant 0 : index
      %640 = vector.load %arg15[%c0_177, %c0_178] : memref<8x128xf32, #tpu.memory_space<vmem>>, vector<8x128xf32>
      %c0_179 = arith.constant 0 : index
      %c0_180 = arith.constant 0 : index
      %c0_181 = arith.constant 0 : index
      %641 = vector.load %arg10[%c0_179, %c0_180, %c0_181] : memref<8x128x128xf32, #tpu.memory_space<vmem>>, vector<8x128x128xf32>
      %c0_182 = arith.constant 0 : index
      %c0_183 = arith.constant 0 : index
      %c0_184 = arith.constant 0 : index
      %642 = vector.load %arg11[%c0_182, %c0_183, %c0_184] : memref<8x128x128xf32, #tpu.memory_space<vmem>>, vector<8x128x128xf32>
      %c0_185 = arith.constant 0 : index
      %c0_186 = arith.constant 0 : index
      %c0_187 = arith.constant 0 : index
      %643 = vector.load %arg12[%c0_185, %c0_186, %c0_187] : memref<8x128x128xf32, #tpu.memory_space<vmem>>, vector<8x128x128xf32>
      %c0_188 = arith.constant 0 : index
      %c0_189 = arith.constant 0 : index
      %644 = vector.load %arg13[%c0_188, %c0_189] : memref<8x128xf32, #tpu.memory_space<vmem>>, vector<8x128xf32>
      %645 = tpu.iota {dimensions = array<i32: 1>} : vector<8x128xi32>
      %c8_i32_190 = arith.constant 8 : i32
      %646 = vector.broadcast %c8_i32_190 : i32 to vector<8x128xi32>
      %647 = arith.cmpi slt, %645, %646 : vector<8x128xi32>
      %c0_191 = arith.constant 0 : index
      %c0_192 = arith.constant 0 : index
      %648 = vector.load %arg7[%c0_191, %c0_192] : memref<128x128xf32, #tpu.memory_space<vmem>>, vector<128x128xf32>
      %cst_193 = arith.constant dense<0.000000e+00> : vector<8x128xf32>
      %649 = tpu.matmul %640, %648, %cst_193 {dimension_numbers = #tpu.dot_dimension_numbers<[1], [0], [0], [1], [0, 0, 1, 1], [], []>} : vector<8x128xf32>, vector<128x128xf32>, vector<8x128xf32> -> vector<8x128xf32>
      %650 = vector.shape_cast %649 : vector<8x128xf32> to vector<8x1x128xf32>
      "tpu.trace_start"() <{level = 10 : i32, message = "bqe,bem->bqm"}> : () -> ()
      %cst_194 = arith.constant dense<0.000000e+00> : vector<8x1x128xf32>
      %651 = tpu.matmul %650, %641, %cst_194 {dimension_numbers = #tpu.dot_dimension_numbers<[2], [1], [1], [2], [0, 0, 0, 1, 1, 2], [0], [0]>} : vector<8x1x128xf32>, vector<8x128x128xf32>, vector<8x1x128xf32> -> vector<8x1x128xf32>
      "tpu.trace_stop"() : () -> ()
      %652 = vector.shape_cast %651 : vector<8x1x128xf32> to vector<8x128xf32>
      %cst_195 = arith.constant -1.000000e+30 : f32
      %653 = vector.broadcast %cst_195 : f32 to vector<8x128xf32>
      %654 = arith.select %647, %652, %653 : vector<8x128xi1>, vector<8x128xf32>
      %cst_196 = arith.constant dense<0xFF800000> : vector<8xf32>
      %655 = vector.multi_reduction <maximumf>, %654, %cst_196 [1] : vector<8x128xf32> to vector<8xf32>
      %656 = vector.shape_cast %655 : vector<8xf32> to vector<8x1xf32>
      %657 = vector.broadcast %656 : vector<8x1xf32> to vector<8x128xf32>
      %658 = arith.subf %654, %657 : vector<8x128xf32>
      %659 = math.exp %658 : vector<8x128xf32>
      %cst_197 = arith.constant dense<0.000000e+00> : vector<8xf32>
      %660 = vector.multi_reduction <add>, %659, %cst_197 [1] : vector<8x128xf32> to vector<8xf32>
      %661 = vector.shape_cast %660 : vector<8xf32> to vector<8x1xf32>
      %662 = tpu.reciprocal %661 {approx = true} : vector<8x1xf32> -> vector<8x1xf32>
      %663 = vector.broadcast %662 : vector<8x1xf32> to vector<8x128xf32>
      %664 = arith.mulf %659, %663 : vector<8x128xf32>
      %665 = arith.mulf %664, %644 : vector<8x128xf32>
      %666 = vector.shape_cast %665 : vector<8x128xf32> to vector<8x1x128xf32>
      "tpu.trace_start"() <{level = 10 : i32, message = "bqm,bme->bqe"}> : () -> ()
      %cst_198 = arith.constant dense<0.000000e+00> : vector<8x1x128xf32>
      %667 = tpu.matmul %666, %642, %cst_198 {dimension_numbers = #tpu.dot_dimension_numbers<[2], [1], [1], [2], [0, 0, 0, 1, 1, 2], [0], [0]>} : vector<8x1x128xf32>, vector<8x128x128xf32>, vector<8x1x128xf32> -> vector<8x1x128xf32>
      "tpu.trace_stop"() : () -> ()
      %668 = vector.shape_cast %667 : vector<8x1x128xf32> to vector<8x128xf32>
      %c0_199 = arith.constant 0 : index
      %c0_200 = arith.constant 0 : index
      %669 = vector.load %arg8[%c0_199, %c0_200] : memref<128x128xf32, #tpu.memory_space<vmem>>, vector<128x128xf32>
      %cst_201 = arith.constant dense<0.000000e+00> : vector<8x128xf32>
      %670 = tpu.matmul %668, %669, %cst_201 {dimension_numbers = #tpu.dot_dimension_numbers<[1], [0], [0], [1], [0, 0, 1, 1], [], []>} : vector<8x128xf32>, vector<128x128xf32>, vector<8x128xf32> -> vector<8x128xf32>
      %671 = arith.addf %640, %670 : vector<8x128xf32>
      %c0_202 = arith.constant 0 : index
      %c0_203 = arith.constant 0 : index
      %672 = vector.load %arg9[%c0_202, %c0_203] : memref<128x128xf32, #tpu.memory_space<vmem>>, vector<128x128xf32>
      %cst_204 = arith.constant dense<0.000000e+00> : vector<8x128xf32>
      %673 = tpu.matmul %671, %672, %cst_204 {dimension_numbers = #tpu.dot_dimension_numbers<[1], [0], [0], [1], [0, 0, 1, 1], [], []>} : vector<8x128xf32>, vector<128x128xf32>, vector<8x128xf32> -> vector<8x128xf32>
      %674 = vector.shape_cast %673 : vector<8x128xf32> to vector<8x1x128xf32>
      "tpu.trace_start"() <{level = 10 : i32, message = "bqe,bem->bqm"}> : () -> ()
      %cst_205 = arith.constant dense<0.000000e+00> : vector<8x1x128xf32>
      %675 = tpu.matmul %674, %643, %cst_205 {dimension_numbers = #tpu.dot_dimension_numbers<[2], [1], [1], [2], [0, 0, 0, 1, 1, 2], [0], [0]>} : vector<8x1x128xf32>, vector<8x128x128xf32>, vector<8x1x128xf32> -> vector<8x1x128xf32>
      "tpu.trace_stop"() : () -> ()
      %676 = vector.shape_cast %675 : vector<8x1x128xf32> to vector<8x128xf32>
      %677 = arith.negf %676 : vector<8x128xf32>
      %678 = math.exp %677 : vector<8x128xf32>
      %cst_206 = arith.constant 1.000000e+00 : f32
      %679 = vector.broadcast %cst_206 : f32 to vector<8x128xf32>
      %680 = arith.addf %679, %678 : vector<8x128xf32>
      %681 = arith.divf %679, %680 : vector<8x128xf32>
      %682 = arith.mulf %681, %644 : vector<8x128xf32>
      %c0_207 = arith.constant 0 : index
      %c0_208 = arith.constant 0 : index
      %683 = vector.load %arg14[%c0_207, %c0_208] : memref<8x128xf32, #tpu.memory_space<vmem>>, vector<8x128xf32>
      tpu.vector_store %arg14[%c0_207, %c0_208], %682 {strides = array<i32>} : memref<8x128xf32, #tpu.memory_space<vmem>>, vector<8x128xf32>,
    } else {
    }
    return
  }
  func.func @transform_0(%arg0: i32) -> (i32, i32) {
    %c0_i32 = arith.constant 0 : i32
    %c0_i32_0 = arith.constant 0 : i32
    return %arg0, %c0_i32 : i32, i32
  }
  func.func @transform_1(%arg0: i32) -> (i32, i32) {
    %c0_i32 = arith.constant 0 : i32
    %c0_i32_0 = arith.constant 0 : i32
    %c0_i32_1 = arith.constant 0 : i32
    return %c0_i32, %c0_i32_0 : i32, i32
  }
  func.func @transform_2(%arg0: i32) -> (i32, i32) {
    %c0_i32 = arith.constant 0 : i32
    %c0_i32_0 = arith.constant 0 : i32
    %c0_i32_1 = arith.constant 0 : i32
    return %c0_i32, %c0_i32_0 : i32, i32
  }
  func.func @transform_3(%arg0: i32) -> (i32, i32) {
    %c0_i32 = arith.constant 0 : i32
    %c0_i32_0 = arith.constant 0 : i32
    %c0_i32_1 = arith.constant 0 : i32
    return %c0_i32, %c0_i32_0 : i32, i32
  }
  func.func @transform_4(%arg0: i32) -> (i32, i32) {
    %c0_i32 = arith.constant 0 : i32
    %c0_i32_0 = arith.constant 0 : i32
    %c0_i32_1 = arith.constant 0 : i32
    return %c0_i32, %c0_i32_0 : i32, i32
  }
  func.func @transform_5(%arg0: i32) -> (i32, i32) {
    %c0_i32 = arith.constant 0 : i32
    %c0_i32_0 = arith.constant 0 : i32
    %c0_i32_1 = arith.constant 0 : i32
    return %c0_i32, %c0_i32_0 : i32, i32
  }
  func.func @transform_6(%arg0: i32) -> (i32, i32) {
    %c0_i32 = arith.constant 0 : i32
    %c0_i32_0 = arith.constant 0 : i32
    %c0_i32_1 = arith.constant 0 : i32
    return %c0_i32, %c0_i32_0 : i32, i32
  }
  func.func @transform_7(%arg0: i32) -> (i32, i32) {
    %c0_i32 = arith.constant 0 : i32
    %c0_i32_0 = arith.constant 0 : i32
    %c0_i32_1 = arith.constant 0 : i32
    return %c0_i32, %c0_i32_0 : i32, i32
  }
  func.func @transform_8(%arg0: i32) -> (i32, i32) {
    %c0_i32 = arith.constant 0 : i32
    %c0_i32_0 = arith.constant 0 : i32
    %c0_i32_1 = arith.constant 0 : i32
    return %c0_i32, %c0_i32_0 : i32, i32
  }
  func.func @transform_9(%arg0: i32) -> (i32, i32, i32) {
    %c0_i32 = arith.constant 0 : i32
    %c0_i32_0 = arith.constant 0 : i32
    %c0_i32_1 = arith.constant 0 : i32
    %c0_i32_2 = arith.constant 0 : i32
    return %c0_i32, %c0_i32_0, %c0_i32_1 : i32, i32, i32
  }
  func.func @transform_10(%arg0: i32) -> (i32, i32, i32) {
    %c0_i32 = arith.constant 0 : i32
    %c0_i32_0 = arith.constant 0 : i32
    %c0_i32_1 = arith.constant 0 : i32
    %c0_i32_2 = arith.constant 0 : i32
    return %c0_i32, %c0_i32_0, %c0_i32_1 : i32, i32, i32
  }
  func.func @transform_11(%arg0: i32) -> (i32, i32, i32) {
    %c0_i32 = arith.constant 0 : i32
    %c0_i32_0 = arith.constant 0 : i32
    %c0_i32_1 = arith.constant 0 : i32
    %c0_i32_2 = arith.constant 0 : i32
    return %c0_i32, %c0_i32_0, %c0_i32_1 : i32, i32, i32
  }
  func.func @transform_12(%arg0: i32) -> (i32, i32) {
    %c0_i32 = arith.constant 0 : i32
    %c0_i32_0 = arith.constant 0 : i32
    %c0_i32_1 = arith.constant 0 : i32
    return %c0_i32, %c0_i32_0 : i32, i32
  }
  func.func @transform_13(%arg0: i32) -> (i32, i32) {
    %c0_i32 = arith.constant 0 : i32
    %c0_i32_0 = arith.constant 0 : i32
    %c0_i32_1 = arith.constant 0 : i32
    return %c0_i32, %c0_i32_0 : i32, i32
  }
}

</mosaic_0001>

<llo_original>
// kernel: tpu_custom_call.1
$region0: #{tpu_custom_call.1}
  #allocation0 [shape = 'u32[]', space=smem, size = 0x4, offset = 0x4, fixed_abs, tag = 'smem constant byte address 0x4 - core index']
  #allocation1 [shape = 'u32[144,128]{1,0:T(1,128)}', space=vmem, size = 0x12000, scoped, tag = 'internal scratch']
  #allocation2 [shape = 'f32[8,128]{1,0:T(8,128)}', space=vmem, size = 0x1000, scoped, tag = 'scratch operand']
  #allocation3 [shape = 'f32[128,384]{1,0:T(8,128)}', space=vmem, size = 0x30000, scoped, tag = 'scratch operand']
  %s0 = inlined_call_operand.hbm [shape: f32[128,128], index: 0, kind: input, shape index: {}]
  %s1 = inlined_call_operand.vmem [shape: s32[8,1], index: 1, kind: input, shape index: {}]
  %s2 = inlined_call_operand.hbm [shape: f32[128,384], index: 2, kind: input, shape index: {}]
  %s3 = inlined_call_operand.vmem [shape: f32[1,384], index: 3, kind: input, shape index: {}]
  %s4 = inlined_call_operand.hbm [shape: f32[128,384], index: 4, kind: input, shape index: {}]
  %s5 = inlined_call_operand.vmem [shape: f32[1,384], index: 5, kind: input, shape index: {}]
  %s6 = inlined_call_operand.hbm [shape: f32[128,128], index: 6, kind: input, shape index: {}]
  %s7 = inlined_call_operand.hbm [shape: f32[128,128], index: 7, kind: input, shape index: {}]
  %s8 = inlined_call_operand.hbm [shape: f32[128,128], index: 8, kind: input, shape index: {}]
  %s9 = inlined_call_operand.hbm [shape: f32[8,128,128], index: 9, kind: input, shape index: {}]
  %s10 = inlined_call_operand.hbm [shape: f32[8,128,128], index: 10, kind: input, shape index: {}]
  %s11 = inlined_call_operand.hbm [shape: f32[8,128,128], index: 11, kind: input, shape index: {}]
  %s12 = inlined_call_operand.vmem [shape: f32[8,128], index: 12, kind: input, shape index: {}]
  %s13 = inlined_call_operand.hbm [shape: f32[8,128], index: 13, kind: output, shape index: {}]
  %s14 = sld [smem:[#allocation0]]
  $region106: #{tpu_custom_call.1} parent=0
    _
  %s16 = ssub.s32 1, %s14
  %s17 = scalar_select 0, %s16, %s14
  $region1: #{tpu_custom_call.1} parent=0
    #allocation4 [shape = 'u8[65536]{0}', space=vmem, size = 0x10000, scoped, tag = 'input window, operand 0, single buffered']
    #allocation5 [shape = 's32[1]{0}', space=sflag, size = 0x4, scoped, tag = 'scoped memory for tpu_custom_call.1']
    #allocation6 [shape = 's32[1]{0}', space=sflag, size = 0x4, scoped, tag = 'scoped memory for tpu_custom_call.1']
    #allocation7 [shape = 'u8[196608]{0}', space=vmem, size = 0x30000, scoped, tag = 'input window, operand 2, single buffered']
    #allocation8 [shape = 's32[1]{0}', space=sflag, size = 0x4, scoped, tag = 'scoped memory for tpu_custom_call.1']
    #allocation9 [shape = 'u8[196608]{0}', space=vmem, size = 0x30000, scoped, tag = 'input window, operand 4, single buffered']
    #allocation10 [shape = 'u8[65536]{0}', space=vmem, size = 0x10000, scoped, tag = 'input window, operand 6, single buffered']
    #allocation11 [shape = 's32[1]{0}', space=sflag, size = 0x4, scoped, tag = 'scoped memory for tpu_custom_call.1']
    #allocation12 [shape = 'u8[65536]{0}', space=vmem, size = 0x10000, scoped, tag = 'input window, operand 7, single buffered']
    #allocation13 [shape = 'u8[65536]{0}', space=vmem, size = 0x10000, scoped, tag = 'input window, operand 8, single buffered']
    #allocation14 [shape = 's32[1]{0}', space=sflag, size = 0x4, scoped, tag = 'scoped memory for tpu_custom_call.1']
    #allocation15 [shape = 'u8[524288]{0}', space=vmem, size = 0x80000, scoped, tag = 'input window, operand 9, single buffered']
    #allocation16 [shape = 'u8[524288]{0}', space=vmem, size = 0x80000, scoped, tag = 'input window, operand 10, single buffered']
    #allocation17 [shape = 's32[1]{0}', space=sflag, size = 0x4, scoped, tag = 'scoped memory for tpu_custom_call.1']
    #allocation18 [shape = 'u8[524288]{0}', space=vmem, size = 0x80000, scoped, tag = 'input window, operand 11, single buffered']
    #allocation19 [shape = 'u8[4096]{0}', space=vmem, size = 0x1000, scoped, tag = 'output window, operand 0, single buffered']
    %18 = vsyncpa [#allocation5], 0
    %19 = vsyncpa [#allocation8], 0
    %20 = vsyncpa [#allocation11], 0
    %21 = vsyncpa [#allocation14], 0
    %22 = vsyncpa [#allocation17], 0
    %23 = vsyncpa [#allocation6], 0
    // Predicated region
    $region2: #{tpu_custom_call.1} parent=1 // pred_check
      _
    $region3: #{tpu_custom_call.1} parent=1 // pred_check_branch
      %25 = sbr.rel (0) target = $region5
    $region4: #{tpu_custom_call.1} parent=1 // pred_region
      %s27 = ssub.s32 2048, 2048
      %28 = vsyncadd [#allocation5], %s27
      %s29 = sshll.u32 [#allocation4], 4
      %s30 = int_to_ptr.vmem [resolvable:$true] %s29
      %35 = dma.hbm_to_vmem [thread:$0]  %s0, 2048, %s30, [#allocation5], 128, 128, 8
    $region5: #{tpu_custom_call.1} parent=1 // pred_fallthru
      _
    // Predicated region
    $region6: #{tpu_custom_call.1} parent=1 // pred_check
      _
    $region7: #{tpu_custom_call.1} parent=1 // pred_check_branch
      %37 = sbr.rel (0) target = $region9
    $region8: #{tpu_custom_call.1} parent=1 // pred_region
      _
    $region9: #{tpu_custom_call.1} parent=1 // pred_fallthru
      _
    // Predicated region
    $region10: #{tpu_custom_call.1} parent=1 // pred_check
      _
    $region11: #{tpu_custom_call.1} parent=1 // pred_check_branch
      %39 = sbr.rel (0) target = $region13
    $region12: #{tpu_custom_call.1} parent=1 // pred_region
      %s41 = ssub.s32 6144, 6144
      %42 = vsyncadd [#allocation8], %s41
      %s43 = sshll.u32 [#allocation7], 4
      %s44 = int_to_ptr.vmem [resolvable:$true] %s43
      %49 = dma.hbm_to_vmem [thread:$0]  %s2, 6144, %s44, [#allocation8], 384, 384, 24
    $region13: #{tpu_custom_call.1} parent=1 // pred_fallthru
      _
    // Predicated region
    $region14: #{tpu_custom_call.1} parent=1 // pred_check
      _
    $region15: #{tpu_custom_call.1} parent=1 // pred_check_branch
      %51 = sbr.rel (0) target = $region17
    $region16: #{tpu_custom_call.1} parent=1 // pred_region
      _
    $region17: #{tpu_custom_call.1} parent=1 // pred_fallthru
      _
    // Predicated region
    $region18: #{tpu_custom_call.1} parent=1 // pred_check
      _
    $region19: #{tpu_custom_call.1} parent=1 // pred_check_branch
      %53 = sbr.rel (0) target = $region21
    $region20: #{tpu_custom_call.1} parent=1 // pred_region
      %s55 = ssub.s32 6144, 6144
      %56 = vsyncadd [#allocation8], %s55
      %s57 = sshll.u32 [#allocation9], 4
      %s58 = int_to_ptr.vmem [resolvable:$true] %s57
      %63 = dma.hbm_to_vmem [thread:$0]  %s4, 6144, %s58, [#allocation8], 384, 384, 24
    $region21: #{tpu_custom_call.1} parent=1 // pred_fallthru
      _
    // Predicated region
    $region22: #{tpu_custom_call.1} parent=1 // pred_check
      _
    $region23: #{tpu_custom_call.1} parent=1 // pred_check_branch
      %65 = sbr.rel (0) target = $region25
    $region24: #{tpu_custom_call.1} parent=1 // pred_region
      _
    $region25: #{tpu_custom_call.1} parent=1 // pred_fallthru
      _
    // Predicated region
    $region26: #{tpu_custom_call.1} parent=1 // pred_check
      _
    $region27: #{tpu_custom_call.1} parent=1 // pred_check_branch
      %67 = sbr.rel (0) target = $region29
    $region28: #{tpu_custom_call.1} parent=1 // pred_region
      %s69 = ssub.s32 2048, 2048
      %70 = vsyncadd [#allocation11], %s69
      %s71 = sshll.u32 [#allocation10], 4
      %s72 = int_to_ptr.vmem [resolvable:$true] %s71
      %77 = dma.hbm_to_vmem [thread:$0]  %s6, 2048, %s72, [#allocation11], 128, 128, 8
    $region29: #{tpu_custom_call.1} parent=1 // pred_fallthru
      _
    // Predicated region
    $region30: #{tpu_custom_call.1} parent=1 // pred_check
      _
    $region31: #{tpu_custom_call.1} parent=1 // pred_check_branch
      %79 = sbr.rel (0) target = $region33
    $region32: #{tpu_custom_call.1} parent=1 // pred_region
      %s81 = ssub.s32 2048, 2048
      %82 = vsyncadd [#allocation11], %s81
      %s83 = sshll.u32 [#allocation12], 4
      %s84 = int_to_ptr.vmem [resolvable:$true] %s83
      %89 = dma.hbm_to_vmem [thread:$0]  %s7, 2048, %s84, [#allocation11], 128, 128, 8
    $region33: #{tpu_custom_call.1} parent=1 // pred_fallthru
      _
    // Predicated region
    $region34: #{tpu_custom_call.1} parent=1 // pred_check
      _
    $region35: #{tpu_custom_call.1} parent=1 // pred_check_branch
      %91 = sbr.rel (0) target = $region37
    $region36: #{tpu_custom_call.1} parent=1 // pred_region
      %s93 = ssub.s32 2048, 2048
      %94 = vsyncadd [#allocation14], %s93
      %s95 = sshll.u32 [#allocation13], 4
      %s96 = int_to_ptr.vmem [resolvable:$true] %s95
      %101 = dma.hbm_to_vmem [thread:$0]  %s8, 2048, %s96, [#allocation14], 128, 128, 8
    $region37: #{tpu_custom_call.1} parent=1 // pred_fallthru
      _
    // Predicated region
    $region38: #{tpu_custom_call.1} parent=1 // pred_check
      _
    $region39: #{tpu_custom_call.1} parent=1 // pred_check_branch
      %103 = sbr.rel (0) target = $region41
    $region40: #{tpu_custom_call.1} parent=1 // pred_region
      %s105 = ssub.s32 16384, 16384
      %106 = vsyncadd [#allocation14], %s105
      %s107 = sshll.u32 [#allocation15], 4
      %s108 = int_to_ptr.vmem [resolvable:$true] %s107
      %113 = dma.hbm_to_vmem [thread:$0]  %s9, 16384, %s108, [#allocation14], 128, 128, 8
    $region41: #{tpu_custom_call.1} parent=1 // pred_fallthru
      _
    // Predicated region
    $region42: #{tpu_custom_call.1} parent=1 // pred_check
      _
    $region43: #{tpu_custom_call.1} parent=1 // pred_check_branch
      %115 = sbr.rel (0) target = $region45
    $region44: #{tpu_custom_call.1} parent=1 // pred_region
      %s117 = ssub.s32 16384, 16384
      %118 = vsyncadd [#allocation17], %s117
      %s119 = sshll.u32 [#allocation16], 4
      %s120 = int_to_ptr.vmem [resolvable:$true] %s119
      %125 = dma.hbm_to_vmem [thread:$0]  %s10, 16384, %s120, [#allocation17], 128, 128, 8
    $region45: #{tpu_custom_call.1} parent=1 // pred_fallthru
      _
    // Predicated region
    $region46: #{tpu_custom_call.1} parent=1 // pred_check
      _
    $region47: #{tpu_custom_call.1} parent=1 // pred_check_branch
      %127 = sbr.rel (0) target = $region49
    $region48: #{tpu_custom_call.1} parent=1 // pred_region
      %s129 = ssub.s32 16384, 16384
      %130 = vsyncadd [#allocation17], %s129
      %s131 = sshll.u32 [#allocation18], 4
      %s132 = int_to_ptr.vmem [resolvable:$true] %s131
      %137 = dma.hbm_to_vmem [thread:$0]  %s11, 16384, %s132, [#allocation17], 128, 128, 8
    $region49: #{tpu_custom_call.1} parent=1 // pred_fallthru
      _
    // Predicated region
    $region50: #{tpu_custom_call.1} parent=1 // pred_check
      _
    $region51: #{tpu_custom_call.1} parent=1 // pred_check_branch
      %139 = sbr.rel (0) target = $region53
    $region52: #{tpu_custom_call.1} parent=1 // pred_region
      _
    $region53: #{tpu_custom_call.1} parent=1 // pred_fallthru
      _
    // Predicated region
    $region54: #{tpu_custom_call.1} parent=1 // pred_check
      _
    $region55: #{tpu_custom_call.1} parent=1 // pred_check_branch
      %141 = sbr.rel (0) target = $region57
    $region56: #{tpu_custom_call.1} parent=1 // pred_region
      %142 = dma.done [#allocation5], 2048
    $region57: #{tpu_custom_call.1} parent=1 // pred_fallthru
      _
    // Predicated region
    $region58: #{tpu_custom_call.1} parent=1 // pred_check
      _
    $region59: #{tpu_custom_call.1} parent=1 // pred_check_branch
      %144 = sbr.rel (0) target = $region61
    $region60: #{tpu_custom_call.1} parent=1 // pred_region
      %145 = dma.done [#allocation8], 6144
    $region61: #{tpu_custom_call.1} parent=1 // pred_fallthru
      _
    // Predicated region
    $region62: #{tpu_custom_call.1} parent=1 // pred_check
      _
    $region63: #{tpu_custom_call.1} parent=1 // pred_check_branch
      %147 = sbr.rel (0) target = $region65
    $region64: #{tpu_custom_call.1} parent=1 // pred_region
      %148 = dma.done [#allocation8], 6144
    $region65: #{tpu_custom_call.1} parent=1 // pred_fallthru
      _
    // Predicated region
    $region66: #{tpu_custom_call.1} parent=1 // pred_check
      _
    $region67: #{tpu_custom_call.1} parent=1 // pred_check_branch
      %150 = sbr.rel (0) target = $region69
    $region68: #{tpu_custom_call.1} parent=1 // pred_region
      %151 = dma.done [#allocation11], 2048
    $region69: #{tpu_custom_call.1} parent=1 // pred_fallthru
      _
    // Predicated region
    $region70: #{tpu_custom_call.1} parent=1 // pred_check
      _
    $region71: #{tpu_custom_call.1} parent=1 // pred_check_branch
      %153 = sbr.rel (0) target = $region73
    $region72: #{tpu_custom_call.1} parent=1 // pred_region
      %154 = dma.done [#allocation11], 2048
    $region73: #{tpu_custom_call.1} parent=1 // pred_fallthru
      _
    // Predicated region
    $region74: #{tpu_custom_call.1} parent=1 // pred_check
      _
    $region75: #{tpu_custom_call.1} parent=1 // pred_check_branch
      %156 = sbr.rel (0) target = $region77
    $region76: #{tpu_custom_call.1} parent=1 // pred_region
      %157 = dma.done [#allocation14], 2048
    $region77: #{tpu_custom_call.1} parent=1 // pred_fallthru
      _
    // Predicated region
    $region78: #{tpu_custom_call.1} parent=1 // pred_check
      _
    $region79: #{tpu_custom_call.1} parent=1 // pred_check_branch
      %159 = sbr.rel (0) target = $region81
    $region80: #{tpu_custom_call.1} parent=1 // pred_region
      %160 = dma.done [#allocation14], 16384
    $region81: #{tpu_custom_call.1} parent=1 // pred_fallthru
      _
    // Predicated region
    $region82: #{tpu_custom_call.1} parent=1 // pred_check
      _
    $region83: #{tpu_custom_call.1} parent=1 // pred_check_branch
      %162 = sbr.rel (0) target = $region85
    $region84: #{tpu_custom_call.1} parent=1 // pred_region
      %163 = dma.done [#allocation17], 16384
    $region85: #{tpu_custom_call.1} parent=1 // pred_fallthru
      _
    // Predicated region
    $region86: #{tpu_custom_call.1} parent=1 // pred_check
      _
    $region87: #{tpu_custom_call.1} parent=1 // pred_check_branch
      %165 = sbr.rel (0) target = $region89
    $region88: #{tpu_custom_call.1} parent=1 // pred_region
      %166 = dma.done [#allocation17], 16384
    $region89: #{tpu_custom_call.1} parent=1 // pred_fallthru
      _
    %p167 = scmp.eq.s32.totalorder 0, 0
    // Predicated region
    $region90: #{tpu_custom_call.1} parent=1 // pred_check
      %p168 = pneg %p167
    $region91: #{tpu_custom_call.1} parent=1 // pred_check_branch
      %170 = sbr.rel (%p168) target = $region93
    $region92: #{tpu_custom_call.1} parent=1 // pred_region
      %171 = vst [vmem:[#allocation2] sm:$0xff] 0.0
    $region93: #{tpu_custom_call.1} parent=1 // pred_fallthru
      _
    %v172 = vld [vmem:[#allocation4] sm:$0xff]
    %v173 = vld [vmem:[#allocation4 + $0x8] sm:$0xff]
    %v174 = vld [vmem:[#allocation4 + $0x10] sm:$0xff]
    %v175 = vld [vmem:[#allocation4 + $0x18] sm:$0xff]
    %v176 = vld [vmem:[#allocation4 + $0x20] sm:$0xff]
    %v177 = vld [vmem:[#allocation4 + $0x28] sm:$0xff]
    %v178 = vld [vmem:[#allocation4 + $0x30] sm:$0xff]
    %v179 = vld [vmem:[#allocation4 + $0x38] sm:$0xff]
    %v180 = vld [vmem:[#allocation4 + $0x40] sm:$0xff]
    %v181 = vld [vmem:[#allocation4 + $0x48] sm:$0xff]
    %v182 = vld [vmem:[#allocation4 + $0x50] sm:$0xff]
    %v183 = vld [vmem:[#allocation4 + $0x58] sm:$0xff]
    %v184 = vld [vmem:[#allocation4 + $0x60] sm:$0xff]
    %v185 = vld [vmem:[#allocation4 + $0x68] sm:$0xff]
    %v186 = vld [vmem:[#allocation4 + $0x70] sm:$0xff]
    %v187 = vld [vmem:[#allocation4 + $0x78] sm:$0xff]
    %v188 = vld [vmem:[#allocation7] sm:$0xff]
    %v189 = vld [vmem:[#allocation7 + $0x8] sm:$0xff]
    %v190 = vld [vmem:[#allocation7 + $0x10] sm:$0xff]
    %v191 = vld [vmem:[#allocation7 + $0x18] sm:$0xff]
    %v192 = vld [vmem:[#allocation7 + $0x20] sm:$0xff]
    %v193 = vld [vmem:[#allocation7 + $0x28] sm:$0xff]
    %v194 = vld [vmem:[#allocation7 + $0x30] sm:$0xff]
    %v195 = vld [vmem:[#allocation7 + $0x38] sm:$0xff]
    %v196 = vld [vmem:[#allocation7 + $0x40] sm:$0xff]
    %v197 = vld [vmem:[#allocation7 + $0x48] sm:$0xff]
    %v198 = vld [vmem:[#allocation7 + $0x50] sm:$0xff]
    %v199 = vld [vmem:[#allocation7 + $0x58] sm:$0xff]
    %v200 = vld [vmem:[#allocation7 + $0x60] sm:$0xff]
    %v201 = vld [vmem:[#allocation7 + $0x68] sm:$0xff]
    %v202 = vld [vmem:[#allocation7 + $0x70] sm:$0xff]
    %v203 = vld [vmem:[#allocation7 + $0x78] sm:$0xff]
    %v204 = vld [vmem:[#allocation7 + $0x80] sm:$0xff]
    %v205 = vld [vmem:[#allocation7 + $0x88] sm:$0xff]
    %v206 = vld [vmem:[#allocation7 + $0x90] sm:$0xff]
    %v207 = vld [vmem:[#allocation7 + $0x98] sm:$0xff]
    %v208 = vld [vmem:[#allocation7 + $0xa0] sm:$0xff]
    %v209 = vld [vmem:[#allocation7 + $0xa8] sm:$0xff]
    %v210 = vld [vmem:[#allocation7 + $0xb0] sm:$0xff]
    %v211 = vld [vmem:[#allocation7 + $0xb8] sm:$0xff]
    %v212 = vld [vmem:[#allocation7 + $0xc0] sm:$0xff]
    %v213 = vld [vmem:[#allocation7 + $0xc8] sm:$0xff]
    %v214 = vld [vmem:[#allocation7 + $0xd0] sm:$0xff]
    %v215 = vld [vmem:[#allocation7 + $0xd8] sm:$0xff]
    %v216 = vld [vmem:[#allocation7 + $0xe0] sm:$0xff]
    %v217 = vld [vmem:[#allocation7 + $0xe8] sm:$0xff]
    %v218 = vld [vmem:[#allocation7 + $0xf0] sm:$0xff]
    %v219 = vld [vmem:[#allocation7 + $0xf8] sm:$0xff]
    %v220 = vld [vmem:[#allocation7 + $0x100] sm:$0xff]
    %v221 = vld [vmem:[#allocation7 + $0x108] sm:$0xff]
    %v222 = vld [vmem:[#allocation7 + $0x110] sm:$0xff]
    %v223 = vld [vmem:[#allocation7 + $0x118] sm:$0xff]
    %v224 = vld [vmem:[#allocation7 + $0x120] sm:$0xff]
    %v225 = vld [vmem:[#allocation7 + $0x128] sm:$0xff]
    %v226 = vld [vmem:[#allocation7 + $0x130] sm:$0xff]
    %v227 = vld [vmem:[#allocation7 + $0x138] sm:$0xff]
    %v228 = vld [vmem:[#allocation7 + $0x140] sm:$0xff]
    %v229 = vld [vmem:[#allocation7 + $0x148] sm:$0xff]
    %v230 = vld [vmem:[#allocation7 + $0x150] sm:$0xff]
    %v231 = vld [vmem:[#allocation7 + $0x158] sm:$0xff]
    %v232 = vld [vmem:[#allocation7 + $0x160] sm:$0xff]
    %v233 = vld [vmem:[#allocation7 + $0x168] sm:$0xff]
    %v234 = vld [vmem:[#allocation7 + $0x170] sm:$0xff]
    %v235 = vld [vmem:[#allocation7 + $0x178] sm:$0xff]
    %v236 = vld [vmem:[%s3] sm:$0x7]
    %v238 = vlaneseq
    %v239 = vshrl.u32 %v238, 7
    %v240 = vsub.s32 0, %v239
    %v241 = vrot.slane %v236, %v240
    %v242 = vlaneseq
    %v243 = vshrl.u32 %v242, 7
    %v244 = vsub.s32 1, %v243
    %v245 = vrot.slane %v236, %v244
    %v246 = vlaneseq
    %v247 = vshrl.u32 %v246, 7
    %v248 = vsub.s32 2, %v247
    %v249 = vrot.slane %v236, %v248
    %253 = vmatprep.subr.mxu0 %v189
    %254 = vmatpush1.msra.mxu0 %v188
    %255 = vmatprep.subr.mxu0 %v192
    %256 = vmatpush1.msra.mxu0 %v191
    %257 = vmatprep.subr.mxu0 %v195
    %258 = vmatpush1.msra.mxu0 %v194
    %259 = vmatprep.subr.mxu0 %v198
    %260 = vmatpush1.msra.mxu0 %v197
    %261 = vmatprep.subr.mxu0 %v201
    %262 = vmatpush1.msra.mxu0 %v200
    %263 = vmatprep.subr.mxu0 %v204
    %264 = vmatpush1.msra.mxu0 %v203
    %265 = vmatprep.subr.mxu0 %v207
    %266 = vmatpush1.msra.mxu0 %v206
    %267 = vmatprep.subr.mxu0 %v210
    %268 = vmatpush1.msra.mxu0 %v209
    %269 = vmatprep.subr.mxu0 %v213
    %270 = vmatpush1.msra.mxu0 %v212
    %271 = vmatprep.subr.mxu0 %v216
    %272 = vmatpush1.msra.mxu0 %v215
    %273 = vmatprep.subr.mxu0 %v219
    %274 = vmatpush1.msra.mxu0 %v218
    %275 = vmatprep.subr.mxu0 %v222
    %276 = vmatpush1.msra.mxu0 %v221
    %277 = vmatprep.subr.mxu0 %v225
    %278 = vmatpush1.msra.mxu0 %v224
    %279 = vmatprep.subr.mxu0 %v228
    %280 = vmatpush1.msra.mxu0 %v227
    %281 = vmatprep.subr.mxu0 %v231
    %282 = vmatpush1.msra.mxu0 %v230
    %283 = vmatprep.subr.mxu0 %v234
    %284 = vmatpush1.msra.mxu0 %v233
    %285 = vmatprep.subr.mxu0 0.0
    %286 = vmatpush1.msra.mxu0 0.0
    %287 = vmatprep.subr.mxu0 0.0
    %288 = vmatpush1.msra.mxu0 0.0
    %289 = vmatprep.subr.mxu0 0.0
    %290 = vmatpush1.msra.mxu0 0.0
    %291 = vmatprep.subr.mxu0 0.0
    %292 = vmatpush1.msra.mxu0 0.0
    %293 = vmatprep.subr.mxu0 0.0
    %294 = vmatpush1.msra.mxu0 0.0
    %295 = vmatprep.subr.mxu0 0.0
    %296 = vmatpush1.msra.mxu0 0.0
    %297 = vmatprep.subr.mxu0 0.0
    %298 = vmatpush1.msra.mxu0 0.0
    %299 = vmatprep.subr.mxu0 0.0
    %300 = vmatpush1.msra.mxu0 0.0
    %301 = vmatprep.subr.mxu0 0.0
    %302 = vmatpush1.msra.mxu0 0.0
    %303 = vmatprep.subr.mxu0 0.0
    %304 = vmatpush1.msra.mxu0 0.0
    %305 = vmatprep.subr.mxu0 0.0
    %306 = vmatpush1.msra.mxu0 0.0
    %307 = vmatprep.subr.mxu0 0.0
    %308 = vmatpush1.msra.mxu0 0.0
    %309 = vmatprep.subr.mxu0 0.0
    %310 = vmatpush1.msra.mxu0 0.0
    %311 = vmatprep.subr.mxu0 0.0
    %312 = vmatpush1.msra.mxu0 0.0
    %313 = vmatprep.subr.mxu0 0.0
    %314 = vmatpush1.msra.mxu0 0.0
    %315 = vmatprep.subr.mxu0 0.0
    %316 = vmatpush1.msra.mxu0 0.0
    %317 = vmatprep.mubr.f32.mxu0 0.0
    %318 = vmatmul.mubr.f32.gmra.mrb[0].mxu0 %v172
    %v319 = vpop.f32.mrb[0].mxu0
    %v320 = vadd.f32 %v241, %v319
    %v321 = vpop.f32.mrb[0].mxu0
    %v322 = vadd.f32 %v245, %v321
    %323 = vmatprep.mubr.f32.mxu0 0.0
    %324 = vmatmul.mubr.f32.gmra.mrb[0].mxu0 %v173
    %v325 = vpop.f32.mrb[0].mxu0
    %v326 = vadd.f32 %v241, %v325
    %v327 = vpop.f32.mrb[0].mxu0
    %v328 = vadd.f32 %v245, %v327
    %329 = vmatprep.mubr.f32.mxu0 0.0
    %330 = vmatmul.mubr.f32.gmra.mrb[0].mxu0 %v174
    %v331 = vpop.f32.mrb[0].mxu0
    %v332 = vadd.f32 %v241, %v331
    %v333 = vpop.f32.mrb[0].mxu0
    %v334 = vadd.f32 %v245, %v333
    %335 = vmatprep.mubr.f32.mxu0 0.0
    %336 = vmatmul.mubr.f32.gmra.mrb[0].mxu0 %v175
    %v337 = vpop.f32.mrb[0].mxu0
    %v338 = vadd.f32 %v241, %v337
    %v339 = vpop.f32.mrb[0].mxu0
    %v340 = vadd.f32 %v245, %v339
    %341 = vmatprep.mubr.f32.mxu0 0.0
    %342 = vmatmul.mubr.f32.gmra.mrb[0].mxu0 %v176
    %v343 = vpop.f32.mrb[0].mxu0
    %v344 = vadd.f32 %v241, %v343
    %v345 = vpop.f32.mrb[0].mxu0
    %v346 = vadd.f32 %v245, %v345
    %347 = vmatprep.mubr.f32.mxu0 0.0
    %348 = vmatmul.mubr.f32.gmra.mrb[0].mxu0 %v177
    %v349 = vpop.f32.mrb[0].mxu0
    %v350 = vadd.f32 %v241, %v349
    %v351 = vpop.f32.mrb[0].mxu0
    %v352 = vadd.f32 %v245, %v351
    %353 = vmatprep.mubr.f32.mxu0 0.0
    %354 = vmatmul.mubr.f32.gmra.mrb[0].mxu0 %v178
    %v355 = vpop.f32.mrb[0].mxu0
    %v356 = vadd.f32 %v241, %v355
    %v357 = vpop.f32.mrb[0].mxu0
    %v358 = vadd.f32 %v245, %v357
    %359 = vmatprep.mubr.f32.mxu0 0.0
    %360 = vmatmul.mubr.f32.gmra.mrb[0].mxu0 %v179
    %v361 = vpop.f32.mrb[0].mxu0
    %v362 = vadd.f32 %v241, %v361
    %v363 = vpop.f32.mrb[0].mxu0
    %v364 = vadd.f32 %v245, %v363
    %365 = vmatprep.mubr.f32.mxu0 0.0
    %366 = vmatmul.mubr.f32.gmra.mrb[0].mxu0 %v180
    %v367 = vpop.f32.mrb[0].mxu0
    %v368 = vadd.f32 %v241, %v367
    %v369 = vpop.f32.mrb[0].mxu0
    %v370 = vadd.f32 %v245, %v369
    %371 = vmatprep.mubr.f32.mxu0 0.0
    %372 = vmatmul.mubr.f32.gmra.mrb[0].mxu0 %v181
    %v373 = vpop.f32.mrb[0].mxu0
    %v374 = vadd.f32 %v241, %v373
    %v375 = vpop.f32.mrb[0].mxu0
    %v376 = vadd.f32 %v245, %v375
    %377 = vmatprep.mubr.f32.mxu0 0.0
    %378 = vmatmul.mubr.f32.gmra.mrb[0].mxu0 %v182
    %v379 = vpop.f32.mrb[0].mxu0
    %v380 = vadd.f32 %v241, %v379
    %v381 = vpop.f32.mrb[0].mxu0
    %v382 = vadd.f32 %v245, %v381
    %383 = vmatprep.mubr.f32.mxu0 0.0
    %384 = vmatmul.mubr.f32.gmra.mrb[0].mxu0 %v183
    %v385 = vpop.f32.mrb[0].mxu0
    %v386 = vadd.f32 %v241, %v385
    %v387 = vpop.f32.mrb[0].mxu0
    %v388 = vadd.f32 %v245, %v387
    %389 = vmatprep.mubr.f32.mxu0 0.0
    %390 = vmatmul.mubr.f32.gmra.mrb[0].mxu0 %v184
    %v391 = vpop.f32.mrb[0].mxu0
    %v392 = vadd.f32 %v241, %v391
    %v393 = vpop.f32.mrb[0].mxu0
    %v394 = vadd.f32 %v245, %v393
    %395 = vmatprep.mubr.f32.mxu0 0.0
    %396 = vmatmul.mubr.f32.gmra.mrb[0].mxu0 %v185
    %v397 = vpop.f32.mrb[0].mxu0
    %v398 = vadd.f32 %v241, %v397
    %v399 = vpop.f32.mrb[0].mxu0
    %v400 = vadd.f32 %v245, %v399
    %401 = vmatprep.mubr.f32.mxu0 0.0
    %402 = vmatmul.mubr.f32.gmra.mrb[0].mxu0 %v186
    %v403 = vpop.f32.mrb[0].mxu0
    %v404 = vadd.f32 %v241, %v403
    %v405 = vpop.f32.mrb[0].mxu0
    %v406 = vadd.f32 %v245, %v405
    %407 = vmatprep.mubr.f32.mxu0 0.0
    %408 = vmatmul.mubr.f32.gmra.mrb[0].mxu0 %v187
    %v409 = vpop.f32.mrb[0].mxu0
    %v410 = vadd.f32 %v241, %v409
    %v411 = vpop.f32.mrb[0].mxu0
    %v412 = vadd.f32 %v245, %v411
    %413 = vdwg.mxu0
    %414 = vmatprep.subr.mxu0 0.0
    %415 = vmatpush1.msra.mxu0 %v190
    %416 = vmatprep.subr.mxu0 0.0
    %417 = vmatpush1.msra.mxu0 %v193
    %418 = vmatprep.subr.mxu0 0.0
    %419 = vmatpush1.msra.mxu0 %v196
    %420 = vmatprep.subr.mxu0 0.0
    %421 = vmatpush1.msra.mxu0 %v199
    %422 = vmatprep.subr.mxu0 0.0
    %423 = vmatpush1.msra.mxu0 %v202
    %424 = vmatprep.subr.mxu0 0.0
    %425 = vmatpush1.msra.mxu0 %v205
    %426 = vmatprep.subr.mxu0 0.0
    %427 = vmatpush1.msra.mxu0 %v208
    %428 = vmatprep.subr.mxu0 0.0
    %429 = vmatpush1.msra.mxu0 %v211
    %430 = vmatprep.subr.mxu0 0.0
    %431 = vmatpush1.msra.mxu0 %v214
    %432 = vmatprep.subr.mxu0 0.0
    %433 = vmatpush1.msra.mxu0 %v217
    %434 = vmatprep.subr.mxu0 0.0
    %435 = vmatpush1.msra.mxu0 %v220
    %436 = vmatprep.subr.mxu0 0.0
    %437 = vmatpush1.msra.mxu0 %v223
    %438 = vmatprep.subr.mxu0 0.0
    %439 = vmatpush1.msra.mxu0 %v226
    %440 = vmatprep.subr.mxu0 0.0
    %441 = vmatpush1.msra.mxu0 %v229
    %442 = vmatprep.subr.mxu0 0.0
    %443 = vmatpush1.msra.mxu0 %v232
    %444 = vmatprep.subr.mxu0 0.0
    %445 = vmatpush1.msra.mxu0 %v235
    %446 = vmatprep.subr.mxu0 0.0
    %447 = vmatpush1.msra.mxu0 0.0
    %448 = vmatprep.subr.mxu0 0.0
    %449 = vmatpush1.msra.mxu0 0.0
    %450 = vmatprep.subr.mxu0 0.0
    %451 = vmatpush1.msra.mxu0 0.0
    %452 = vmatprep.subr.mxu0 0.0
    %453 = vmatpush1.msra.mxu0 0.0
    %454 = vmatprep.subr.mxu0 0.0
    %455 = vmatpush1.msra.mxu0 0.0
    %456 = vmatprep.subr.mxu0 0.0
    %457 = vmatpush1.msra.mxu0 0.0
    %458 = vmatprep.subr.mxu0 0.0
    %459 = vmatpush1.msra.mxu0 0.0
    %460 = vmatprep.subr.mxu0 0.0
    %461 = vmatpush1.msra.mxu0 0.0
    %462 = vmatprep.subr.mxu0 0.0
    %463 = vmatpush1.msra.mxu0 0.0
    %464 = vmatprep.subr.mxu0 0.0
    %465 = vmatpush1.msra.mxu0 0.0
    %466 = vmatprep.subr.mxu0 0.0
    %467 = vmatpush1.msra.mxu0 0.0
    %468 = vmatprep.subr.mxu0 0.0
    %469 = vmatpush1.msra.mxu0 0.0
    %470 = vmatprep.subr.mxu0 0.0
    %471 = vmatpush1.msra.mxu0 0.0
    %472 = vmatprep.subr.mxu0 0.0
    %473 = vmatpush1.msra.mxu0 0.0
    %474 = vmatprep.subr.mxu0 0.0
    %475 = vmatpush1.msra.mxu0 0.0
    %476 = vmatprep.subr.mxu0 0.0
    %477 = vmatpush1.msra.mxu0 0.0
    %478 = vmatprep.mubr.f32.mxu0 0.0
    %479 = vmatmul.mubr.f32.gmra.mrb[0].mxu0 %v172
    %v480 = vpop.f32.mrb[0].mxu0
    %v481 = vadd.f32 %v249, %v480
    %v482 = vpop.f32.mrb[0].mxu0
    %483 = vmatprep.mubr.f32.mxu0 0.0
    %484 = vmatmul.mubr.f32.gmra.mrb[0].mxu0 %v173
    %v485 = vpop.f32.mrb[0].mxu0
    %v486 = vadd.f32 %v249, %v485
    %v487 = vpop.f32.mrb[0].mxu0
    %488 = vmatprep.mubr.f32.mxu0 0.0
    %489 = vmatmul.mubr.f32.gmra.mrb[0].mxu0 %v174
    %v490 = vpop.f32.mrb[0].mxu0
    %v491 = vadd.f32 %v249, %v490
    %v492 = vpop.f32.mrb[0].mxu0
    %493 = vmatprep.mubr.f32.mxu0 0.0
    %494 = vmatmul.mubr.f32.gmra.mrb[0].mxu0 %v175
    %v495 = vpop.f32.mrb[0].mxu0
    %v496 = vadd.f32 %v249, %v495
    %v497 = vpop.f32.mrb[0].mxu0
    %498 = vmatprep.mubr.f32.mxu0 0.0
    %499 = vmatmul.mubr.f32.gmra.mrb[0].mxu0 %v176
    %v500 = vpop.f32.mrb[0].mxu0
    %v501 = vadd.f32 %v249, %v500
    %v502 = vpop.f32.mrb[0].mxu0
    %503 = vmatprep.mubr.f32.mxu0 0.0
    %504 = vmatmul.mubr.f32.gmra.mrb[0].mxu0 %v177
    %v505 = vpop.f32.mrb[0].mxu0
    %v506 = vadd.f32 %v249, %v505
    %v507 = vpop.f32.mrb[0].mxu0
    %508 = vmatprep.mubr.f32.mxu0 0.0
    %509 = vmatmul.mubr.f32.gmra.mrb[0].mxu0 %v178
    %v510 = vpop.f32.mrb[0].mxu0
    %v511 = vadd.f32 %v249, %v510
    %v512 = vpop.f32.mrb[0].mxu0
    %513 = vmatprep.mubr.f32.mxu0 0.0
    %514 = vmatmul.mubr.f32.gmra.mrb[0].mxu0 %v179
    %v515 = vpop.f32.mrb[0].mxu0
    %v516 = vadd.f32 %v249, %v515
    %v517 = vpop.f32.mrb[0].mxu0
    %518 = vmatprep.mubr.f32.mxu0 0.0
    %519 = vmatmul.mubr.f32.gmra.mrb[0].mxu0 %v180
    %v520 = vpop.f32.mrb[0].mxu0
    %v521 = vadd.f32 %v249, %v520
    %v522 = vpop.f32.mrb[0].mxu0
    %523 = vmatprep.mubr.f32.mxu0 0.0
    %524 = vmatmul.mubr.f32.gmra.mrb[0].mxu0 %v181
    %v525 = vpop.f32.mrb[0].mxu0
    %v526 = vadd.f32 %v249, %v525
    %v527 = vpop.f32.mrb[0].mxu0
    %528 = vmatprep.mubr.f32.mxu0 0.0
    %529 = vmatmul.mubr.f32.gmra.mrb[0].mxu0 %v182
    %v530 = vpop.f32.mrb[0].mxu0
    %v531 = vadd.f32 %v249, %v530
    %v532 = vpop.f32.mrb[0].mxu0
    %533 = vmatprep.mubr.f32.mxu0 0.0
    %534 = vmatmul.mubr.f32.gmra.mrb[0].mxu0 %v183
    %v535 = vpop.f32.mrb[0].mxu0
    %v536 = vadd.f32 %v249, %v535
    %v537 = vpop.f32.mrb[0].mxu0
    %538 = vmatprep.mubr.f32.mxu0 0.0
    %539 = vmatmul.mubr.f32.gmra.mrb[0].mxu0 %v184
    %v540 = vpop.f32.mrb[0].mxu0
    %v541 = vadd.f32 %v249, %v540
    %v542 = vpop.f32.mrb[0].mxu0
    %543 = vmatprep.mubr.f32.mxu0 0.0
    %544 = vmatmul.mubr.f32.gmra.mrb[0].mxu0 %v185
    %v545 = vpop.f32.mrb[0].mxu0
    %v546 = vadd.f32 %v249, %v545
    %v547 = vpop.f32.mrb[0].mxu0
    %548 = vmatprep.mubr.f32.mxu0 0.0
    %549 = vmatmul.mubr.f32.gmra.mrb[0].mxu0 %v186
    %v550 = vpop.f32.mrb[0].mxu0
    %v551 = vadd.f32 %v249, %v550
    %v552 = vpop.f32.mrb[0].mxu0
    %553 = vmatprep.mubr.f32.mxu0 0.0
    %554 = vmatmul.mubr.f32.gmra.mrb[0].mxu0 %v187
    %v555 = vpop.f32.mrb[0].mxu0
    %v556 = vadd.f32 %v249, %v555
    %v557 = vpop.f32.mrb[0].mxu0
    %558 = vdwg.mxu0
    %559 = vst [vmem:[#allocation3] sm:$0xff] %v320
    %560 = vst [vmem:[#allocation3 + $0x8] sm:$0xff] %v322
    %561 = vst [vmem:[#allocation3 + $0x10] sm:$0xff] %v481
    %562 = vst [vmem:[#allocation3 + $0x18] sm:$0xff] %v326
    %563 = vst [vmem:[#allocation3 + $0x20] sm:$0xff] %v328
    %564 = vst [vmem:[#allocation3 + $0x28] sm:$0xff] %v486
    %565 = vst [vmem:[#allocation3 + $0x30] sm:$0xff] %v332
    %566 = vst [vmem:[#allocation3 + $0x38] sm:$0xff] %v334
    %567 = vst [vmem:[#allocation3 + $0x40] sm:$0xff] %v491
    %568 = vst [vmem:[#allocation3 + $0x48] sm:$0xff] %v338
    %569 = vst [vmem:[#allocation3 + $0x50] sm:$0xff] %v340
    %570 = vst [vmem:[#allocation3 + $0x58] sm:$0xff] %v496
    %571 = vst [vmem:[#allocation3 + $0x60] sm:$0xff] %v344
    %572 = vst [vmem:[#allocation3 + $0x68] sm:$0xff] %v346
    %573 = vst [vmem:[#allocation3 + $0x70] sm:$0xff] %v501
    %574 = vst [vmem:[#allocation3 + $0x78] sm:$0xff] %v350
    %575 = vst [vmem:[#allocation3 + $0x80] sm:$0xff] %v352
    %576 = vst [vmem:[#allocation3 + $0x88] sm:$0xff] %v506
    %577 = vst [vmem:[#allocation3 + $0x90] sm:$0xff] %v356
    %578 = vst [vmem:[#allocation3 + $0x98] sm:$0xff] %v358
    %579 = vst [vmem:[#allocation3 + $0xa0] sm:$0xff] %v511
    %580 = vst [vmem:[#allocation3 + $0xa8] sm:$0xff] %v362
    %581 = vst [vmem:[#allocation3 + $0xb0] sm:$0xff] %v364
    %582 = vst [vmem:[#allocation3 + $0xb8] sm:$0xff] %v516
    %583 = vst [vmem:[#allocation3 + $0xc0] sm:$0xff] %v368
    %584 = vst [vmem:[#allocation3 + $0xc8] sm:$0xff] %v370
    %585 = vst [vmem:[#allocation3 + $0xd0] sm:$0xff] %v521
    %586 = vst [vmem:[#allocation3 + $0xd8] sm:$0xff] %v374
    %587 = vst [vmem:[#allocation3 + $0xe0] sm:$0xff] %v376
    %588 = vst [vmem:[#allocation3 + $0xe8] sm:$0xff] %v526
    %589 = vst [vmem:[#allocation3 + $0xf0] sm:$0xff] %v380
    %590 = vst [vmem:[#allocation3 + $0xf8] sm:$0xff] %v382
    %591 = vst [vmem:[#allocation3 + $0x100] sm:$0xff] %v531
    %592 = vst [vmem:[#allocation3 + $0x108] sm:$0xff] %v386
    %593 = vst [vmem:[#allocation3 + $0x110] sm:$0xff] %v388
    %594 = vst [vmem:[#allocation3 + $0x118] sm:$0xff] %v536
    %595 = vst [vmem:[#allocation3 + $0x120] sm:$0xff] %v392
    %596 = vst [vmem:[#allocation3 + $0x128] sm:$0xff] %v394
    %597 = vst [vmem:[#allocation3 + $0x130] sm:$0xff] %v541
    %598 = vst [vmem:[#allocation3 + $0x138] sm:$0xff] %v398
    %599 = vst [vmem:[#allocation3 + $0x140] sm:$0xff] %v400
    %600 = vst [vmem:[#allocation3 + $0x148] sm:$0xff] %v546
    %601 = vst [vmem:[#allocation3 + $0x150] sm:$0xff] %v404
    %602 = vst [vmem:[#allocation3 + $0x158] sm:$0xff] %v406
    %603 = vst [vmem:[#allocation3 + $0x160] sm:$0xff] %v551
    %604 = vst [vmem:[#allocation3 + $0x168] sm:$0xff] %v410
    %605 = vst [vmem:[#allocation3 + $0x170] sm:$0xff] %v412
    %606 = vst [vmem:[#allocation3 + $0x178] sm:$0xff] %v556
    %v607 = vld [vmem:[%s1] sm:$0xff]
    %v608 = vld [vmem:[#allocation2] sm:$0xff]
    %s609 = smul.u32 0, 16
    %v610 = vld [vmem:[#allocation3] sm:$0xff]
    %v611 = vld [vmem:[#allocation3 + $0x8] sm:$0xff]
    %v612 = vld [vmem:[#allocation3 + $0x10] sm:$0xff]
    %v613 = vld [vmem:[#allocation9] sm:$0xff]
    %v614 = vld [vmem:[#allocation9 + $0x8] sm:$0xff]
    %v615 = vld [vmem:[#allocation9 + $0x10] sm:$0xff]
    %v616 = vld [vmem:[#allocation9 + $0x18] sm:$0xff]
    %v617 = vld [vmem:[#allocation9 + $0x20] sm:$0xff]
    %v618 = vld [vmem:[#allocation9 + $0x28] sm:$0xff]
    %v619 = vld [vmem:[#allocation9 + $0x30] sm:$0xff]
    %v620 = vld [vmem:[#allocation9 + $0x38] sm:$0xff]
    %v621 = vld [vmem:[#allocation9 + $0x40] sm:$0xff]
    %v622 = vld [vmem:[#allocation9 + $0x48] sm:$0xff]
    %v623 = vld [vmem:[#allocation9 + $0x50] sm:$0xff]
    %v624 = vld [vmem:[#allocation9 + $0x58] sm:$0xff]
    %v625 = vld [vmem:[#allocation9 + $0x60] sm:$0xff]
    %v626 = vld [vmem:[#allocation9 + $0x68] sm:$0xff]
    %v627 = vld [vmem:[#allocation9 + $0x70] sm:$0xff]
    %v628 = vld [vmem:[#allocation9 + $0x78] sm:$0xff]
    %v629 = vld [vmem:[#allocation9 + $0x80] sm:$0xff]
    %v630 = vld [vmem:[#allocation9 + $0x88] sm:$0xff]
    %v631 = vld [vmem:[#allocation9 + $0x90] sm:$0xff]
    %v632 = vld [vmem:[#allocation9 + $0x98] sm:$0xff]
    %v633 = vld [vmem:[#allocation9 + $0xa0] sm:$0xff]
    %v634 = vld [vmem:[#allocation9 + $0xa8] sm:$0xff]
    %v635 = vld [vmem:[#allocation9 + $0xb0] sm:$0xff]
    %v636 = vld [vmem:[#allocation9 + $0xb8] sm:$0xff]
    %v637 = vld [vmem:[#allocation9 + $0xc0] sm:$0xff]
    %v638 = vld [vmem:[#allocation9 + $0xc8] sm:$0xff]
    %v639 = vld [vmem:[#allocation9 + $0xd0] sm:$0xff]
    %v640 = vld [vmem:[#allocation9 + $0xd8] sm:$0xff]
    %v641 = vld [vmem:[#allocation9 + $0xe0] sm:$0xff]
    %v642 = vld [vmem:[#allocation9 + $0xe8] sm:$0xff]
    %v643 = vld [vmem:[#allocation9 + $0xf0] sm:$0xff]
    %v644 = vld [vmem:[#allocation9 + $0xf8] sm:$0xff]
    %v645 = vld [vmem:[#allocation9 + $0x100] sm:$0xff]
    %v646 = vld [vmem:[#allocation9 + $0x108] sm:$0xff]
    %v647 = vld [vmem:[#allocation9 + $0x110] sm:$0xff]
    %v648 = vld [vmem:[#allocation9 + $0x118] sm:$0xff]
    %v649 = vld [vmem:[#allocation9 + $0x120] sm:$0xff]
    %v650 = vld [vmem:[#allocation9 + $0x128] sm:$0xff]
    %v651 = vld [vmem:[#allocation9 + $0x130] sm:$0xff]
    %v652 = vld [vmem:[#allocation9 + $0x138] sm:$0xff]
    %v653 = vld [vmem:[#allocation9 + $0x140] sm:$0xff]
    %v654 = vld [vmem:[#allocation9 + $0x148] sm:$0xff]
    %v655 = vld [vmem:[#allocation9 + $0x150] sm:$0xff]
    %v656 = vld [vmem:[#allocation9 + $0x158] sm:$0xff]
    %v657 = vld [vmem:[#allocation9 + $0x160] sm:$0xff]
    %v658 = vld [vmem:[#allocation9 + $0x168] sm:$0xff]
    %v659 = vld [vmem:[#allocation9 + $0x170] sm:$0xff]
    %v660 = vld [vmem:[#allocation9 + $0x178] sm:$0xff]
    %v661 = vld [vmem:[%s5] sm:$0x7]
    %v663 = vlaneseq
    %v664 = vshrl.u32 %v663, 7
    %v665 = vsub.s32 0, %v664
    %v666 = vrot.slane %v661, %v665
    %v667 = vlaneseq
    %v668 = vshrl.u32 %v667, 7
    %v669 = vsub.s32 1, %v668
    %v670 = vrot.slane %v661, %v669
    %v671 = vlaneseq
    %v672 = vshrl.u32 %v671, 7
    %v673 = vsub.s32 2, %v672
    %v674 = vrot.slane %v661, %v673
    %678 = vmatprep.subr.mxu0 %v614
    %679 = vmatpush1.msra.mxu0 %v613
    %680 = vmatprep.subr.mxu0 %v617
    %681 = vmatpush1.msra.mxu0 %v616
    %682 = vmatprep.subr.mxu0 %v620
    %683 = vmatpush1.msra.mxu0 %v619
    %684 = vmatprep.subr.mxu0 %v623
    %685 = vmatpush1.msra.mxu0 %v622
    %686 = vmatprep.subr.mxu0 %v626
    %687 = vmatpush1.msra.mxu0 %v625
    %688 = vmatprep.subr.mxu0 %v629
    %689 = vmatpush1.msra.mxu0 %v628
    %690 = vmatprep.subr.mxu0 %v632
    %691 = vmatpush1.msra.mxu0 %v631
    %692 = vmatprep.subr.mxu0 %v635
    %693 = vmatpush1.msra.mxu0 %v634
    %694 = vmatprep.subr.mxu0 %v638
    %695 = vmatpush1.msra.mxu0 %v637
    %696 = vmatprep.subr.mxu0 %v641
    %697 = vmatpush1.msra.mxu0 %v640
    %698 = vmatprep.subr.mxu0 %v644
    %699 = vmatpush1.msra.mxu0 %v643
    %700 = vmatprep.subr.mxu0 %v647
    %701 = vmatpush1.msra.mxu0 %v646
    %702 = vmatprep.subr.mxu0 %v650
    %703 = vmatpush1.msra.mxu0 %v649
    %704 = vmatprep.subr.mxu0 %v653
    %705 = vmatpush1.msra.mxu0 %v652
    %706 = vmatprep.subr.mxu0 %v656
    %707 = vmatpush1.msra.mxu0 %v655
    %708 = vmatprep.subr.mxu0 %v659
    %709 = vmatpush1.msra.mxu0 %v658
    %710 = vmatprep.subr.mxu0 0.0
    %711 = vmatpush1.msra.mxu0 0.0
    %712 = vmatprep.subr.mxu0 0.0
    %713 = vmatpush1.msra.mxu0 0.0
    %714 = vmatprep.subr.mxu0 0.0
    %715 = vmatpush1.msra.mxu0 0.0
    %716 = vmatprep.subr.mxu0 0.0
    %717 = vmatpush1.msra.mxu0 0.0
    %718 = vmatprep.subr.mxu0 0.0
    %719 = vmatpush1.msra.mxu0 0.0
    %720 = vmatprep.subr.mxu0 0.0
    %721 = vmatpush1.msra.mxu0 0.0
    %722 = vmatprep.subr.mxu0 0.0
    %723 = vmatpush1.msra.mxu0 0.0
    %724 = vmatprep.subr.mxu0 0.0
    %725 = vmatpush1.msra.mxu0 0.0
    %726 = vmatprep.subr.mxu0 0.0
    %727 = vmatpush1.msra.mxu0 0.0
    %728 = vmatprep.subr.mxu0 0.0
    %729 = vmatpush1.msra.mxu0 0.0
    %730 = vmatprep.subr.mxu0 0.0
    %731 = vmatpush1.msra.mxu0 0.0
    %732 = vmatprep.subr.mxu0 0.0
    %733 = vmatpush1.msra.mxu0 0.0
    %734 = vmatprep.subr.mxu0 0.0
    %735 = vmatpush1.msra.mxu0 0.0
    %736 = vmatprep.subr.mxu0 0.0
    %737 = vmatpush1.msra.mxu0 0.0
    %738 = vmatprep.subr.mxu0 0.0
    %739 = vmatpush1.msra.mxu0 0.0
    %740 = vmatprep.subr.mxu0 0.0
    %741 = vmatpush1.msra.mxu0 0.0
    %742 = vmatprep.mubr.f32.mxu0 0.0
    %743 = vmatmul.mubr.f32.gmra.mrb[0].mxu0 %v608
    %v744 = vpop.f32.mrb[0].mxu0
    %v745 = vadd.f32 %v666, %v744
    %v746 = vpop.f32.mrb[0].mxu0
    %v747 = vadd.f32 %v670, %v746
    %748 = vdwg.mxu0
    %749 = vmatprep.subr.mxu0 0.0
    %750 = vmatpush1.msra.mxu0 %v615
    %751 = vmatprep.subr.mxu0 0.0
    %752 = vmatpush1.msra.mxu0 %v618
    %753 = vmatprep.subr.mxu0 0.0
    %754 = vmatpush1.msra.mxu0 %v621
    %755 = vmatprep.subr.mxu0 0.0
    %756 = vmatpush1.msra.mxu0 %v624
    %757 = vmatprep.subr.mxu0 0.0
    %758 = vmatpush1.msra.mxu0 %v627
    %759 = vmatprep.subr.mxu0 0.0
    %760 = vmatpush1.msra.mxu0 %v630
    %761 = vmatprep.subr.mxu0 0.0
    %762 = vmatpush1.msra.mxu0 %v633
    %763 = vmatprep.subr.mxu0 0.0
    %764 = vmatpush1.msra.mxu0 %v636
    %765 = vmatprep.subr.mxu0 0.0
    %766 = vmatpush1.msra.mxu0 %v639
    %767 = vmatprep.subr.mxu0 0.0
    %768 = vmatpush1.msra.mxu0 %v642
    %769 = vmatprep.subr.mxu0 0.0
    %770 = vmatpush1.msra.mxu0 %v645
    %771 = vmatprep.subr.mxu0 0.0
    %772 = vmatpush1.msra.mxu0 %v648
    %773 = vmatprep.subr.mxu0 0.0
    %774 = vmatpush1.msra.mxu0 %v651
    %775 = vmatprep.subr.mxu0 0.0
    %776 = vmatpush1.msra.mxu0 %v654
    %777 = vmatprep.subr.mxu0 0.0
    %778 = vmatpush1.msra.mxu0 %v657
    %779 = vmatprep.subr.mxu0 0.0
    %780 = vmatpush1.msra.mxu0 %v660
    %781 = vmatprep.subr.mxu0 0.0
    %782 = vmatpush1.msra.mxu0 0.0
    %783 = vmatprep.subr.mxu0 0.0
    %784 = vmatpush1.msra.mxu0 0.0
    %785 = vmatprep.subr.mxu0 0.0
    %786 = vmatpush1.msra.mxu0 0.0
    %787 = vmatprep.subr.mxu0 0.0
    %788 = vmatpush1.msra.mxu0 0.0
    %789 = vmatprep.subr.mxu0 0.0
    %790 = vmatpush1.msra.mxu0 0.0
    %791 = vmatprep.subr.mxu0 0.0
    %792 = vmatpush1.msra.mxu0 0.0
    %793 = vmatprep.subr.mxu0 0.0
    %794 = vmatpush1.msra.mxu0 0.0
    %795 = vmatprep.subr.mxu0 0.0
    %796 = vmatpush1.msra.mxu0 0.0
    %797 = vmatprep.subr.mxu0 0.0
    %798 = vmatpush1.msra.mxu0 0.0
    %799 = vmatprep.subr.mxu0 0.0
    %800 = vmatpush1.msra.mxu0 0.0
    %801 = vmatprep.subr.mxu0 0.0
    %802 = vmatpush1.msra.mxu0 0.0
    %803 = vmatprep.subr.mxu0 0.0
    %804 = vmatpush1.msra.mxu0 0.0
    %805 = vmatprep.subr.mxu0 0.0
    %806 = vmatpush1.msra.mxu0 0.0
    %807 = vmatprep.subr.mxu0 0.0
    %808 = vmatpush1.msra.mxu0 0.0
    %809 = vmatprep.subr.mxu0 0.0
    %810 = vmatpush1.msra.mxu0 0.0
    %811 = vmatprep.subr.mxu0 0.0
    %812 = vmatpush1.msra.mxu0 0.0
    %813 = vmatprep.mubr.f32.mxu0 0.0
    %814 = vmatmul.mubr.f32.gmra.mrb[0].mxu0 %v608
    %v815 = vpop.f32.mrb[0].mxu0
    %v816 = vadd.f32 %v674, %v815
    %v817 = vpop.f32.mrb[0].mxu0
    %818 = vdwg.mxu0
    %v819 = vadd.f32 %v610, %v745
    %v820 = vxor.u32 %v819, 2147483648
    %v821 = vmul.f32 %v820, 1.442695
    %v822 = vpow.pop %v821
    %v823 = vadd.f32 %v822, 1.0
    %v824 = vrcp.pop %v823
    %v825 = vmul.f32 1.0, %v824
    %v826 = vadd.f32 %v611, %v747
    %v827 = vxor.u32 %v826, 2147483648
    %v828 = vmul.f32 %v827, 1.442695
    %v829 = vpow.pop %v828
    %v830 = vadd.f32 %v829, 1.0
    %v831 = vrcp.pop %v830
    %v832 = vmul.f32 1.0, %v831
    %v833 = vmul.f32 %v825, %v816
    %v834 = vadd.f32 %v612, %v833
    %v835 = vtanh.pop %v834
    %v836 = vsub.f32 1.0, %v832
    %v837 = vmul.f32 %v836, %v835
    %v838 = vmul.f32 %v832, %v608
    %v839 = vadd.f32 %v837, %v838
    %v840 = vstv %s609
    %vm841 = vcmp.lt.s32.totalorder %v840, %v607
    %v842 = vsel %vm841, 1, 0
    %843 = vset.pattern.permute.xlu0 0
    %844 = vperm.xlu0 %843, %v842
    %v845 = vpop.permute.xlu0 %844
    %vm846 = vcmp.eq.s32.totalorder %v845, 1
    %v847 = vsel %vm846, %v839, %v608
    %s848 = sadd.s32 %s609, 1
    %v849 = vld [vmem:[#allocation3 + $0x18] sm:$0xff]
    %v850 = vld [vmem:[#allocation3 + $0x20] sm:$0xff]
    %v851 = vld [vmem:[#allocation3 + $0x28] sm:$0xff]
    %852 = vmatprep.subr.mxu0 %v614
    %853 = vmatpush1.msra.mxu0 %v613
    %854 = vmatprep.subr.mxu0 %v617
    %855 = vmatpush1.msra.mxu0 %v616
    %856 = vmatprep.subr.mxu0 %v620
    %857 = vmatpush1.msra.mxu0 %v619
    %858 = vmatprep.subr.mxu0 %v623
    %859 = vmatpush1.msra.mxu0 %v622
    %860 = vmatprep.subr.mxu0 %v626
    %861 = vmatpush1.msra.mxu0 %v625
    %862 = vmatprep.subr.mxu0 %v629
    %863 = vmatpush1.msra.mxu0 %v628
    %864 = vmatprep.subr.mxu0 %v632
    %865 = vmatpush1.msra.mxu0 %v631
    %866 = vmatprep.subr.mxu0 %v635
    %867 = vmatpush1.msra.mxu0 %v634
    %868 = vmatprep.subr.mxu0 %v638
    %869 = vmatpush1.msra.mxu0 %v637
    %870 = vmatprep.subr.mxu0 %v641
    %871 = vmatpush1.msra.mxu0 %v640
    %872 = vmatprep.subr.mxu0 %v644
    %873 = vmatpush1.msra.mxu0 %v643
    %874 = vmatprep.subr.mxu0 %v647
    %875 = vmatpush1.msra.mxu0 %v646
    %876 = vmatprep.subr.mxu0 %v650
    %877 = vmatpush1.msra.mxu0 %v649
    %878 = vmatprep.subr.mxu0 %v653
    %879 = vmatpush1.msra.mxu0 %v652
    %880 = vmatprep.subr.mxu0 %v656
    %881 = vmatpush1.msra.mxu0 %v655
    %882 = vmatprep.subr.mxu0 %v659
    %883 = vmatpush1.msra.mxu0 %v658
    %884 = vmatprep.subr.mxu0 0.0
    %885 = vmatpush1.msra.mxu0 0.0
    %886 = vmatprep.subr.mxu0 0.0
    %887 = vmatpush1.msra.mxu0 0.0
    %888 = vmatprep.subr.mxu0 0.0
    %889 = vmatpush1.msra.mxu0 0.0
    %890 = vmatprep.subr.mxu0 0.0
    %891 = vmatpush1.msra.mxu0 0.0
    %892 = vmatprep.subr.mxu0 0.0
    %893 = vmatpush1.msra.mxu0 0.0
    %894 = vmatprep.subr.mxu0 0.0
    %895 = vmatpush1.msra.mxu0 0.0
    %896 = vmatprep.subr.mxu0 0.0
    %897 = vmatpush1.msra.mxu0 0.0
    %898 = vmatprep.subr.mxu0 0.0
    %899 = vmatpush1.msra.mxu0 0.0
    %900 = vmatprep.subr.mxu0 0.0
    %901 = vmatpush1.msra.mxu0 0.0
    %902 = vmatprep.subr.mxu0 0.0
    %903 = vmatpush1.msra.mxu0 0.0
    %904 = vmatprep.subr.mxu0 0.0
    %905 = vmatpush1.msra.mxu0 0.0
    %906 = vmatprep.subr.mxu0 0.0
    %907 = vmatpush1.msra.mxu0 0.0
    %908 = vmatprep.subr.mxu0 0.0
    %909 = vmatpush1.msra.mxu0 0.0
    %910 = vmatprep.subr.mxu0 0.0
    %911 = vmatpush1.msra.mxu0 0.0
    %912 = vmatprep.subr.mxu0 0.0
    %913 = vmatpush1.msra.mxu0 0.0
    %914 = vmatprep.subr.mxu0 0.0
    %915 = vmatpush1.msra.mxu0 0.0
    %916 = vmatprep.mubr.f32.mxu0 0.0
    %917 = vmatmul.mubr.f32.gmra.mrb[0].mxu0 %v847
    %v918 = vpop.f32.mrb[0].mxu0
    %v919 = vadd.f32 %v666, %v918
    %v920 = vpop.f32.mrb[0].mxu0
    %v921 = vadd.f32 %v670, %v920
    %922 = vdwg.mxu0
    %923 = vmatprep.subr.mxu0 0.0
    %924 = vmatpush1.msra.mxu0 %v615
    %925 = vmatprep.subr.mxu0 0.0
    %926 = vmatpush1.msra.mxu0 %v618
    %927 = vmatprep.subr.mxu0 0.0
    %928 = vmatpush1.msra.mxu0 %v621
    %929 = vmatprep.subr.mxu0 0.0
    %930 = vmatpush1.msra.mxu0 %v624
    %931 = vmatprep.subr.mxu0 0.0
    %932 = vmatpush1.msra.mxu0 %v627
    %933 = vmatprep.subr.mxu0 0.0
    %934 = vmatpush1.msra.mxu0 %v630
    %935 = vmatprep.subr.mxu0 0.0
    %936 = vmatpush1.msra.mxu0 %v633
    %937 = vmatprep.subr.mxu0 0.0
    %938 = vmatpush1.msra.mxu0 %v636
    %939 = vmatprep.subr.mxu0 0.0
    %940 = vmatpush1.msra.mxu0 %v639
    %941 = vmatprep.subr.mxu0 0.0
    %942 = vmatpush1.msra.mxu0 %v642
    %943 = vmatprep.subr.mxu0 0.0
    %944 = vmatpush1.msra.mxu0 %v645
    %945 = vmatprep.subr.mxu0 0.0
    %946 = vmatpush1.msra.mxu0 %v648
    %947 = vmatprep.subr.mxu0 0.0
    %948 = vmatpush1.msra.mxu0 %v651
    %949 = vmatprep.subr.mxu0 0.0
    %950 = vmatpush1.msra.mxu0 %v654
    %951 = vmatprep.subr.mxu0 0.0
    %952 = vmatpush1.msra.mxu0 %v657
    %953 = vmatprep.subr.mxu0 0.0
    %954 = vmatpush1.msra.mxu0 %v660
    %955 = vmatprep.subr.mxu0 0.0
    %956 = vmatpush1.msra.mxu0 0.0
    %957 = vmatprep.subr.mxu0 0.0
    %958 = vmatpush1.msra.mxu0 0.0
    %959 = vmatprep.subr.mxu0 0.0
    %960 = vmatpush1.msra.mxu0 0.0
    %961 = vmatprep.subr.mxu0 0.0
    %962 = vmatpush1.msra.mxu0 0.0
    %963 = vmatprep.subr.mxu0 0.0
    %964 = vmatpush1.msra.mxu0 0.0
    %965 = vmatprep.subr.mxu0 0.0
    %966 = vmatpush1.msra.mxu0 0.0
    %967 = vmatprep.subr.mxu0 0.0
    %968 = vmatpush1.msra.mxu0 0.0
    %969 = vmatprep.subr.mxu0 0.0
    %970 = vmatpush1.msra.mxu0 0.0
    %971 = vmatprep.subr.mxu0 0.0
    %972 = vmatpush1.msra.mxu0 0.0
    %973 = vmatprep.subr.mxu0 0.0
    %974 = vmatpush1.msra.mxu0 0.0
    %975 = vmatprep.subr.mxu0 0.0
    %976 = vmatpush1.msra.mxu0 0.0
    %977 = vmatprep.subr.mxu0 0.0
    %978 = vmatpush1.msra.mxu0 0.0
    %979 = vmatprep.subr.mxu0 0.0
    %980 = vmatpush1.msra.mxu0 0.0
    %981 = vmatprep.subr.mxu0 0.0
    %982 = vmatpush1.msra.mxu0 0.0
    %983 = vmatprep.subr.mxu0 0.0
    %984 = vmatpush1.msra.mxu0 0.0
    %985 = vmatprep.subr.mxu0 0.0
    %986 = vmatpush1.msra.mxu0 0.0
    %987 = vmatprep.mubr.f32.mxu0 0.0
    %988 = vmatmul.mubr.f32.gmra.mrb[0].mxu0 %v847
    %v989 = vpop.f32.mrb[0].mxu0
    %v990 = vadd.f32 %v674, %v989
    %v991 = vpop.f32.mrb[0].mxu0
    %992 = vdwg.mxu0
    %v993 = vadd.f32 %v849, %v919
    %v994 = vxor.u32 %v993, 2147483648
    %v995 = vmul.f32 %v994, 1.442695
    %v996 = vpow.pop %v995
    %v997 = vadd.f32 %v996, 1.0
    %v998 = vrcp.pop %v997
    %v999 = vmul.f32 1.0, %v998
    %v1000 = vadd.f32 %v850, %v921
    %v1001 = vxor.u32 %v1000, 2147483648
    %v1002 = vmul.f32 %v1001, 1.442695
    %v1003 = vpow.pop %v1002
    %v1004 = vadd.f32 %v1003, 1.0
    %v1005 = vrcp.pop %v1004
    %v1006 = vmul.f32 1.0, %v1005
    %v1007 = vmul.f32 %v999, %v990
    %v1008 = vadd.f32 %v851, %v1007
    %v1009 = vtanh.pop %v1008
    %v1010 = vsub.f32 1.0, %v1006
    %v1011 = vmul.f32 %v1010, %v1009
    %v1012 = vmul.f32 %v1006, %v847
    %v1013 = vadd.f32 %v1011, %v1012
    %v1014 = vstv %s848
    %vm1015 = vcmp.lt.s32.totalorder %v1014, %v607
    %v1016 = vsel %vm1015, 1, 0
    %1017 = vset.pattern.permute.xlu0 0
    %1018 = vperm.xlu0 %1017, %v1016
    %v1019 = vpop.permute.xlu0 %1018
    %vm1020 = vcmp.eq.s32.totalorder %v1019, 1
    %v1021 = vsel %vm1020, %v1013, %v847
    %s1022 = sadd.s32 %s609, 2
    %v1023 = vld [vmem:[#allocation3 + $0x30] sm:$0xff]
    %v1024 = vld [vmem:[#allocation3 + $0x38] sm:$0xff]
    %v1025 = vld [vmem:[#allocation3 + $0x40] sm:$0xff]
    %1026 = vmatprep.subr.mxu0 %v614
    %1027 = vmatpush1.msra.mxu0 %v613
    %1028 = vmatprep.subr.mxu0 %v617
    %1029 = vmatpush1.msra.mxu0 %v616
    %1030 = vmatprep.subr.mxu0 %v620
    %1031 = vmatpush1.msra.mxu0 %v619
    %1032 = vmatprep.subr.mxu0 %v623
    %1033 = vmatpush1.msra.mxu0 %v622
    %1034 = vmatprep.subr.mxu0 %v626
    %1035 = vmatpush1.msra.mxu0 %v625
    %1036 = vmatprep.subr.mxu0 %v629
    %1037 = vmatpush1.msra.mxu0 %v628
    %1038 = vmatprep.subr.mxu0 %v632
    %1039 = vmatpush1.msra.mxu0 %v631
    %1040 = vmatprep.subr.mxu0 %v635
    %1041 = vmatpush1.msra.mxu0 %v634
    %1042 = vmatprep.subr.mxu0 %v638
    %1043 = vmatpush1.msra.mxu0 %v637
    %1044 = vmatprep.subr.mxu0 %v641
    %1045 = vmatpush1.msra.mxu0 %v640
    %1046 = vmatprep.subr.mxu0 %v644
    %1047 = vmatpush1.msra.mxu0 %v643
    %1048 = vmatprep.subr.mxu0 %v647
    %1049 = vmatpush1.msra.mxu0 %v646
    %1050 = vmatprep.subr.mxu0 %v650
    %1051 = vmatpush1.msra.mxu0 %v649
    %1052 = vmatprep.subr.mxu0 %v653
    %1053 = vmatpush1.msra.mxu0 %v652
    %1054 = vmatprep.subr.mxu0 %v656
    %1055 = vmatpush1.msra.mxu0 %v655
    %1056 = vmatprep.subr.mxu0 %v659
    %1057 = vmatpush1.msra.mxu0 %v658
    %1058 = vmatprep.subr.mxu0 0.0
    %1059 = vmatpush1.msra.mxu0 0.0
    %1060 = vmatprep.subr.mxu0 0.0
    %1061 = vmatpush1.msra.mxu0 0.0
    %1062 = vmatprep.subr.mxu0 0.0
    %1063 = vmatpush1.msra.mxu0 0.0
    %1064 = vmatprep.subr.mxu0 0.0
    %1065 = vmatpush1.msra.mxu0 0.0
    %1066 = vmatprep.subr.mxu0 0.0
    %1067 = vmatpush1.msra.mxu0 0.0
    %1068 = vmatprep.subr.mxu0 0.0
    %1069 = vmatpush1.msra.mxu0 0.0
    %1070 = vmatprep.subr.mxu0 0.0
    %1071 = vmatpush1.msra.mxu0 0.0
    %1072 = vmatprep.subr.mxu0 0.0
    %1073 = vmatpush1.msra.mxu0 0.0
    %1074 = vmatprep.subr.mxu0 0.0
    %1075 = vmatpush1.msra.mxu0 0.0
    %1076 = vmatprep.subr.mxu0 0.0
    %1077 = vmatpush1.msra.mxu0 0.0
    %1078 = vmatprep.subr.mxu0 0.0
    %1079 = vmatpush1.msra.mxu0 0.0
    %1080 = vmatprep.subr.mxu0 0.0
    %1081 = vmatpush1.msra.mxu0 0.0
    %1082 = vmatprep.subr.mxu0 0.0
    %1083 = vmatpush1.msra.mxu0 0.0
    %1084 = vmatprep.subr.mxu0 0.0
    %1085 = vmatpush1.msra.mxu0 0.0
    %1086 = vmatprep.subr.mxu0 0.0
    %1087 = vmatpush1.msra.mxu0 0.0
    %1088 = vmatprep.subr.mxu0 0.0
    %1089 = vmatpush1.msra.mxu0 0.0
    %1090 = vmatprep.mubr.f32.mxu0 0.0
    %1091 = vmatmul.mubr.f32.gmra.mrb[0].mxu0 %v1021
    %v1092 = vpop.f32.mrb[0].mxu0
    %v1093 = vadd.f32 %v666, %v1092
    %v1094 = vpop.f32.mrb[0].mxu0
    %v1095 = vadd.f32 %v670, %v1094
    %1096 = vdwg.mxu0
    %1097 = vmatprep.subr.mxu0 0.0
    %1098 = vmatpush1.msra.mxu0 %v615
    %1099 = vmatprep.subr.mxu0 0.0
    %1100 = vmatpush1.msra.mxu0 %v618
    %1101 = vmatprep.subr.mxu0 0.0
    %1102 = vmatpush1.msra.mxu0 %v621
    %1103 = vmatprep.subr.mxu0 0.0
    %1104 = vmatpush1.msra.mxu0 %v624
    %1105 = vmatprep.subr.mxu0 0.0
    %1106 = vmatpush1.msra.mxu0 %v627
    %1107 = vmatprep.subr.mxu0 0.0
    %1108 = vmatpush1.msra.mxu0 %v630
    %1109 = vmatprep.subr.mxu0 0.0
    %1110 = vmatpush1.msra.mxu0 %v633
    %1111 = vmatprep.subr.mxu0 0.0
    %1112 = vmatpush1.msra.mxu0 %v636
    %1113 = vmatprep.subr.mxu0 0.0
    %1114 = vmatpush1.msra.mxu0 %v639
    %1115 = vmatprep.subr.mxu0 0.0
    %1116 = vmatpush1.msra.mxu0 %v642
    %1117 = vmatprep.subr.mxu0 0.0
    %1118 = vmatpush1.msra.mxu0 %v645
    %1119 = vmatprep.subr.mxu0 0.0
    %1120 = vmatpush1.msra.mxu0 %v648
    %1121 = vmatprep.subr.mxu0 0.0
    %1122 = vmatpush1.msra.mxu0 %v651
    %1123 = vmatprep.subr.mxu0 0.0
    %1124 = vmatpush1.msra.mxu0 %v654
    %1125 = vmatprep.subr.mxu0 0.0
    %1126 = vmatpush1.msra.mxu0 %v657
    %1127 = vmatprep.subr.mxu0 0.0
    %1128 = vmatpush1.msra.mxu0 %v660
    %1129 = vmatprep.subr.mxu0 0.0
    %1130 = vmatpush1.msra.mxu0 0.0
    %1131 = vmatprep.subr.mxu0 0.0
    %1132 = vmatpush1.msra.mxu0 0.0
    %1133 = vmatprep.subr.mxu0 0.0
    %1134 = vmatpush1.msra.mxu0 0.0
    %1135 = vmatprep.subr.mxu0 0.0
    %1136 = vmatpush1.msra.mxu0 0.0
    %1137 = vmatprep.subr.mxu0 0.0
    %1138 = vmatpush1.msra.mxu0 0.0
    %1139 = vmatprep.subr.mxu0 0.0
    %1140 = vmatpush1.msra.mxu0 0.0
    %1141 = vmatprep.subr.mxu0 0.0
    %1142 = vmatpush1.msra.mxu0 0.0
    %1143 = vmatprep.subr.mxu0 0.0
    %1144 = vmatpush1.msra.mxu0 0.0
    %1145 = vmatprep.subr.mxu0 0.0
    %1146 = vmatpush1.msra.mxu0 0.0
    %1147 = vmatprep.subr.mxu0 0.0
    %1148 = vmatpush1.msra.mxu0 0.0
    %1149 = vmatprep.subr.mxu0 0.0
    %1150 = vmatpush1.msra.mxu0 0.0
    %1151 = vmatprep.subr.mxu0 0.0
    %1152 = vmatpush1.msra.mxu0 0.0
    %1153 = vmatprep.subr.mxu0 0.0
    %1154 = vmatpush1.msra.mxu0 0.0
    %1155 = vmatprep.subr.mxu0 0.0
    %1156 = vmatpush1.msra.mxu0 0.0
    %1157 = vmatprep.subr.mxu0 0.0
    %1158 = vmatpush1.msra.mxu0 0.0
    %1159 = vmatprep.subr.mxu0 0.0
    %1160 = vmatpush1.msra.mxu0 0.0
    %1161 = vmatprep.mubr.f32.mxu0 0.0
    %1162 = vmatmul.mubr.f32.gmra.mrb[0].mxu0 %v1021
    %v1163 = vpop.f32.mrb[0].mxu0
    %v1164 = vadd.f32 %v674, %v1163
    %v1165 = vpop.f32.mrb[0].mxu0
    %1166 = vdwg.mxu0
    %v1167 = vadd.f32 %v1023, %v1093
    %v1168 = vxor.u32 %v1167, 2147483648
    %v1169 = vmul.f32 %v1168, 1.442695
    %v1170 = vpow.pop %v1169
    %v1171 = vadd.f32 %v1170, 1.0
    %v1172 = vrcp.pop %v1171
    %v1173 = vmul.f32 1.0, %v1172
    %v1174 = vadd.f32 %v1024, %v1095
    %v1175 = vxor.u32 %v1174, 2147483648
    %v1176 = vmul.f32 %v1175, 1.442695
    %v1177 = vpow.pop %v1176
    %v1178 = vadd.f32 %v1177, 1.0
    %v1179 = vrcp.pop %v1178
    %v1180 = vmul.f32 1.0, %v1179
    %v1181 = vmul.f32 %v1173, %v1164
    %v1182 = vadd.f32 %v1025, %v1181
    %v1183 = vtanh.pop %v1182
    %v1184 = vsub.f32 1.0, %v1180
    %v1185 = vmul.f32 %v1184, %v1183
    %v1186 = vmul.f32 %v1180, %v1021
    %v1187 = vadd.f32 %v1185, %v1186
    %v1188 = vstv %s1022
    %vm1189 = vcmp.lt.s32.totalorder %v1188, %v607
    %v1190 = vsel %vm1189, 1, 0
    %1191 = vset.pattern.permute.xlu0 0
    %1192 = vperm.xlu0 %1191, %v1190
    %v1193 = vpop.permute.xlu0 %1192
    %vm1194 = vcmp.eq.s32.totalorder %v1193, 1
    %v1195 = vsel %vm1194, %v1187, %v1021
    %s1196 = sadd.s32 %s609, 3
    %v1197 = vld [vmem:[#allocation3 + $0x48] sm:$0xff]
    %v1198 = vld [vmem:[#allocation3 + $0x50] sm:$0xff]
    %v1199 = vld [vmem:[#allocation3 + $0x58] sm:$0xff]
    %1200 = vmatprep.subr.mxu0 %v614
    %1201 = vmatpush1.msra.mxu0 %v613
    %1202 = vmatprep.subr.mxu0 %v617
    %1203 = vmatpush1.msra.mxu0 %v616
    %1204 = vmatprep.subr.mxu0 %v620
    %1205 = vmatpush1.msra.mxu0 %v619
    %1206 = vmatprep.subr.mxu0 %v623
    %1207 = vmatpush1.msra.mxu0 %v622
    %1208 = vmatprep.subr.mxu0 %v626
    %1209 = vmatpush1.msra.mxu0 %v625
    %1210 = vmatprep.subr.mxu0 %v629
    %1211 = vmatpush1.msra.mxu0 %v628
    %1212 = vmatprep.subr.mxu0 %v632
    %1213 = vmatpush1.msra.mxu0 %v631
    %1214 = vmatprep.subr.mxu0 %v635
    %1215 = vmatpush1.msra.mxu0 %v634
    %1216 = vmatprep.subr.mxu0 %v638
    %1217 = vmatpush1.msra.mxu0 %v637
    %1218 = vmatprep.subr.mxu0 %v641
    %1219 = vmatpush1.msra.mxu0 %v640
    %1220 = vmatprep.subr.mxu0 %v644
    %1221 = vmatpush1.msra.mxu0 %v643
    %1222 = vmatprep.subr.mxu0 %v647
    %1223 = vmatpush1.msra.mxu0 %v646
    %1224 = vmatprep.subr.mxu0 %v650
    %1225 = vmatpush1.msra.mxu0 %v649
    %1226 = vmatprep.subr.mxu0 %v653
    %1227 = vmatpush1.msra.mxu0 %v652
    %1228 = vmatprep.subr.mxu0 %v656
    %1229 = vmatpush1.msra.mxu0 %v655
    %1230 = vmatprep.subr.mxu0 %v659
    %1231 = vmatpush1.msra.mxu0 %v658
    %1232 = vmatprep.subr.mxu0 0.0
    %1233 = vmatpush1.msra.mxu0 0.0
    %1234 = vmatprep.subr.mxu0 0.0
    %1235 = vmatpush1.msra.mxu0 0.0
    %1236 = vmatprep.subr.mxu0 0.0
    %1237 = vmatpush1.msra.mxu0 0.0
    %1238 = vmatprep.subr.mxu0 0.0
    %1239 = vmatpush1.msra.mxu0 0.0
    %1240 = vmatprep.subr.mxu0 0.0
    %1241 = vmatpush1.msra.mxu0 0.0
    %1242 = vmatprep.subr.mxu0 0.0
    %1243 = vmatpush1.msra.mxu0 0.0
    %1244 = vmatprep.subr.mxu0 0.0
    %1245 = vmatpush1.msra.mxu0 0.0
    %1246 = vmatprep.subr.mxu0 0.0
    %1247 = vmatpush1.msra.mxu0 0.0
    %1248 = vmatprep.subr.mxu0 0.0
    %1249 = vmatpush1.msra.mxu0 0.0
    %1250 = vmatprep.subr.mxu0 0.0
    %1251 = vmatpush1.msra.mxu0 0.0
    %1252 = vmatprep.subr.mxu0 0.0
    %1253 = vmatpush1.msra.mxu0 0.0
    %1254 = vmatprep.subr.mxu0 0.0
    %1255 = vmatpush1.msra.mxu0 0.0
    %1256 = vmatprep.subr.mxu0 0.0
    %1257 = vmatpush1.msra.mxu0 0.0
    %1258 = vmatprep.subr.mxu0 0.0
    %1259 = vmatpush1.msra.mxu0 0.0
    %1260 = vmatprep.subr.mxu0 0.0
    %1261 = vmatpush1.msra.mxu0 0.0
    %1262 = vmatprep.subr.mxu0 0.0
    %1263 = vmatpush1.msra.mxu0 0.0
    %1264 = vmatprep.mubr.f32.mxu0 0.0
    %1265 = vmatmul.mubr.f32.gmra.mrb[0].mxu0 %v1195
    %v1266 = vpop.f32.mrb[0].mxu0
    %v1267 = vadd.f32 %v666, %v1266
    %v1268 = vpop.f32.mrb[0].mxu0
    %v1269 = vadd.f32 %v670, %v1268
    %1270 = vdwg.mxu0
    %1271 = vmatprep.subr.mxu0 0.0
    %1272 = vmatpush1.msra.mxu0 %v615
    %1273 = vmatprep.subr.mxu0 0.0
    %1274 = vmatpush1.msra.mxu0 %v618
    %1275 = vmatprep.subr.mxu0 0.0
    %1276 = vmatpush1.msra.mxu0 %v621
    %1277 = vmatprep.subr.mxu0 0.0
    %1278 = vmatpush1.msra.mxu0 %v624
    %1279 = vmatprep.subr.mxu0 0.0
    %1280 = vmatpush1.msra.mxu0 %v627
    %1281 = vmatprep.subr.mxu0 0.0
    %1282 = vmatpush1.msra.mxu0 %v630
    %1283 = vmatprep.subr.mxu0 0.0
    %1284 = vmatpush1.msra.mxu0 %v633
    %1285 = vmatprep.subr.mxu0 0.0
    %1286 = vmatpush1.msra.mxu0 %v636
    %1287 = vmatprep.subr.mxu0 0.0
    %1288 = vmatpush1.msra.mxu0 %v639
    %1289 = vmatprep.subr.mxu0 0.0
    %1290 = vmatpush1.msra.mxu0 %v642
    %1291 = vmatprep.subr.mxu0 0.0
    %1292 = vmatpush1.msra.mxu0 %v645
    %1293 = vmatprep.subr.mxu0 0.0
    %1294 = vmatpush1.msra.mxu0 %v648
    %1295 = vmatprep.subr.mxu0 0.0
    %1296 = vmatpush1.msra.mxu0 %v651
    %1297 = vmatprep.subr.mxu0 0.0
    %1298 = vmatpush1.msra.mxu0 %v654
    %1299 = vmatprep.subr.mxu0 0.0
    %1300 = vmatpush1.msra.mxu0 %v657
    %1301 = vmatprep.subr.mxu0 0.0
    %1302 = vmatpush1.msra.mxu0 %v660
    %1303 = vmatprep.subr.mxu0 0.0
    %1304 = vmatpush1.msra.mxu0 0.0
    %1305 = vmatprep.subr.mxu0 0.0
    %1306 = vmatpush1.msra.mxu0 0.0
    %1307 = vmatprep.subr.mxu0 0.0
    %1308 = vmatpush1.msra.mxu0 0.0
    %1309 = vmatprep.subr.mxu0 0.0
    %1310 = vmatpush1.msra.mxu0 0.0
    %1311 = vmatprep.subr.mxu0 0.0
    %1312 = vmatpush1.msra.mxu0 0.0
    %1313 = vmatprep.subr.mxu0 0.0
    %1314 = vmatpush1.msra.mxu0 0.0
    %1315 = vmatprep.subr.mxu0 0.0
    %1316 = vmatpush1.msra.mxu0 0.0
    %1317 = vmatprep.subr.mxu0 0.0
    %1318 = vmatpush1.msra.mxu0 0.0
    %1319 = vmatprep.subr.mxu0 0.0
    %1320 = vmatpush1.msra.mxu0 0.0
    %1321 = vmatprep.subr.mxu0 0.0
    %1322 = vmatpush1.msra.mxu0 0.0
    %1323 = vmatprep.subr.mxu0 0.0
    %1324 = vmatpush1.msra.mxu0 0.0
    %1325 = vmatprep.subr.mxu0 0.0
    %1326 = vmatpush1.msra.mxu0 0.0
    %1327 = vmatprep.subr.mxu0 0.0
    %1328 = vmatpush1.msra.mxu0 0.0
    %1329 = vmatprep.subr.mxu0 0.0
    %1330 = vmatpush1.msra.mxu0 0.0
    %1331 = vmatprep.subr.mxu0 0.0
    %1332 = vmatpush1.msra.mxu0 0.0
    %1333 = vmatprep.subr.mxu0 0.0
    %1334 = vmatpush1.msra.mxu0 0.0
    %1335 = vmatprep.mubr.f32.mxu0 0.0
    %1336 = vmatmul.mubr.f32.gmra.mrb[0].mxu0 %v1195
    %v1337 = vpop.f32.mrb[0].mxu0
    %v1338 = vadd.f32 %v674, %v1337
    %v1339 = vpop.f32.mrb[0].mxu0
    %1340 = vdwg.mxu0
    %v1341 = vadd.f32 %v1197, %v1267
    %v1342 = vxor.u32 %v1341, 2147483648
    %v1343 = vmul.f32 %v1342, 1.442695
    %v1344 = vpow.pop %v1343
    %v1345 = vadd.f32 %v1344, 1.0
    %v1346 = vrcp.pop %v1345
    %v1347 = vmul.f32 1.0, %v1346
    %v1348 = vadd.f32 %v1198, %v1269
    %v1349 = vxor.u32 %v1348, 2147483648
    %v1350 = vmul.f32 %v1349, 1.442695
    %v1351 = vpow.pop %v1350
    %v1352 = vadd.f32 %v1351, 1.0
    %v1353 = vrcp.pop %v1352
    %v1354 = vmul.f32 1.0, %v1353
    %v1355 = vmul.f32 %v1347, %v1338
    %v1356 = vadd.f32 %v1199, %v1355
    %v1357 = vtanh.pop %v1356
    %v1358 = vsub.f32 1.0, %v1354
    %v1359 = vmul.f32 %v1358, %v1357
    %v1360 = vmul.f32 %v1354, %v1195
    %v1361 = vadd.f32 %v1359, %v1360
    %v1362 = vstv %s1196
    %vm1363 = vcmp.lt.s32.totalorder %v1362, %v607
    %v1364 = vsel %vm1363, 1, 0
    %1365 = vset.pattern.permute.xlu0 0
    %1366 = vperm.xlu0 %1365, %v1364
    %v1367 = vpop.permute.xlu0 %1366
    %vm1368 = vcmp.eq.s32.totalorder %v1367, 1
    %v1369 = vsel %vm1368, %v1361, %v1195
    %s1370 = sadd.s32 %s609, 4
    %v1371 = vld [vmem:[#allocation3 + $0x60] sm:$0xff]
    %v1372 = vld [vmem:[#allocation3 + $0x68] sm:$0xff]
    %v1373 = vld [vmem:[#allocation3 + $0x70] sm:$0xff]
    %1374 = vmatprep.subr.mxu0 %v614
    %1375 = vmatpush1.msra.mxu0 %v613
    %1376 = vmatprep.subr.mxu0 %v617
    %1377 = vmatpush1.msra.mxu0 %v616
    %1378 = vmatprep.subr.mxu0 %v620
    %1379 = vmatpush1.msra.mxu0 %v619
    %1380 = vmatprep.subr.mxu0 %v623
    %1381 = vmatpush1.msra.mxu0 %v622
    %1382 = vmatprep.subr.mxu0 %v626
    %1383 = vmatpush1.msra.mxu0 %v625
    %1384 = vmatprep.subr.mxu0 %v629
    %1385 = vmatpush1.msra.mxu0 %v628
    %1386 = vmatprep.subr.mxu0 %v632
    %1387 = vmatpush1.msra.mxu0 %v631
    %1388 = vmatprep.subr.mxu0 %v635
    %1389 = vmatpush1.msra.mxu0 %v634
    %1390 = vmatprep.subr.mxu0 %v638
    %1391 = vmatpush1.msra.mxu0 %v637
    %1392 = vmatprep.subr.mxu0 %v641
    %1393 = vmatpush1.msra.mxu0 %v640
    %1394 = vmatprep.subr.mxu0 %v644
    %1395 = vmatpush1.msra.mxu0 %v643
    %1396 = vmatprep.subr.mxu0 %v647
    %1397 = vmatpush1.msra.mxu0 %v646
    %1398 = vmatprep.subr.mxu0 %v650
    %1399 = vmatpush1.msra.mxu0 %v649
    %1400 = vmatprep.subr.mxu0 %v653
    %1401 = vmatpush1.msra.mxu0 %v652
    %1402 = vmatprep.subr.mxu0 %v656
    %1403 = vmatpush1.msra.mxu0 %v655
    %1404 = vmatprep.subr.mxu0 %v659
    %1405 = vmatpush1.msra.mxu0 %v658
    %1406 = vmatprep.subr.mxu0 0.0
    %1407 = vmatpush1.msra.mxu0 0.0
    %1408 = vmatprep.subr.mxu0 0.0
    %1409 = vmatpush1.msra.mxu0 0.0
    %1410 = vmatprep.subr.mxu0 0.0
    %1411 = vmatpush1.msra.mxu0 0.0
    %1412 = vmatprep.subr.mxu0 0.0
    %1413 = vmatpush1.msra.mxu0 0.0
    %1414 = vmatprep.subr.mxu0 0.0
    %1415 = vmatpush1.msra.mxu0 0.0
    %1416 = vmatprep.subr.mxu0 0.0
    %1417 = vmatpush1.msra.mxu0 0.0
    %1418 = vmatprep.subr.mxu0 0.0
    %1419 = vmatpush1.msra.mxu0 0.0
    %1420 = vmatprep.subr.mxu0 0.0
    %1421 = vmatpush1.msra.mxu0 0.0
    %1422 = vmatprep.subr.mxu0 0.0
    %1423 = vmatpush1.msra.mxu0 0.0
    %1424 = vmatprep.subr.mxu0 0.0
    %1425 = vmatpush1.msra.mxu0 0.0
    %1426 = vmatprep.subr.mxu0 0.0
    %1427 = vmatpush1.msra.mxu0 0.0
    %1428 = vmatprep.subr.mxu0 0.0
    %1429 = vmatpush1.msra.mxu0 0.0
    %1430 = vmatprep.subr.mxu0 0.0
    %1431 = vmatpush1.msra.mxu0 0.0
    %1432 = vmatprep.subr.mxu0 0.0
    %1433 = vmatpush1.msra.mxu0 0.0
    %1434 = vmatprep.subr.mxu0 0.0
    %1435 = vmatpush1.msra.mxu0 0.0
    %1436 = vmatprep.subr.mxu0 0.0
    %1437 = vmatpush1.msra.mxu0 0.0
    %1438 = vmatprep.mubr.f32.mxu0 0.0
    %1439 = vmatmul.mubr.f32.gmra.mrb[0].mxu0 %v1369
    %v1440 = vpop.f32.mrb[0].mxu0
    %v1441 = vadd.f32 %v666, %v1440
    %v1442 = vpop.f32.mrb[0].mxu0
    %v1443 = vadd.f32 %v670, %v1442
    %1444 = vdwg.mxu0
    %1445 = vmatprep.subr.mxu0 0.0
    %1446 = vmatpush1.msra.mxu0 %v615
    %1447 = vmatprep.subr.mxu0 0.0
    %1448 = vmatpush1.msra.mxu0 %v618
    %1449 = vmatprep.subr.mxu0 0.0
    %1450 = vmatpush1.msra.mxu0 %v621
    %1451 = vmatprep.subr.mxu0 0.0
    %1452 = vmatpush1.msra.mxu0 %v624
    %1453 = vmatprep.subr.mxu0 0.0
    %1454 = vmatpush1.msra.mxu0 %v627
    %1455 = vmatprep.subr.mxu0 0.0
    %1456 = vmatpush1.msra.mxu0 %v630
    %1457 = vmatprep.subr.mxu0 0.0
    %1458 = vmatpush1.msra.mxu0 %v633
    %1459 = vmatprep.subr.mxu0 0.0
    %1460 = vmatpush1.msra.mxu0 %v636
    %1461 = vmatprep.subr.mxu0 0.0
    %1462 = vmatpush1.msra.mxu0 %v639
    %1463 = vmatprep.subr.mxu0 0.0
    %1464 = vmatpush1.msra.mxu0 %v642
    %1465 = vmatprep.subr.mxu0 0.0
    %1466 = vmatpush1.msra.mxu0 %v645
    %1467 = vmatprep.subr.mxu0 0.0
    %1468 = vmatpush1.msra.mxu0 %v648
    %1469 = vmatprep.subr.mxu0 0.0
    %1470 = vmatpush1.msra.mxu0 %v651
    %1471 = vmatprep.subr.mxu0 0.0
    %1472 = vmatpush1.msra.mxu0 %v654
    %1473 = vmatprep.subr.mxu0 0.0
    %1474 = vmatpush1.msra.mxu0 %v657
    %1475 = vmatprep.subr.mxu0 0.0
    %1476 = vmatpush1.msra.mxu0 %v660
    %1477 = vmatprep.subr.mxu0 0.0
    %1478 = vmatpush1.msra.mxu0 0.0
    %1479 = vmatprep.subr.mxu0 0.0
    %1480 = vmatpush1.msra.mxu0 0.0
    %1481 = vmatprep.subr.mxu0 0.0
    %1482 = vmatpush1.msra.mxu0 0.0
    %1483 = vmatprep.subr.mxu0 0.0
    %1484 = vmatpush1.msra.mxu0 0.0
    %1485 = vmatprep.subr.mxu0 0.0
    %1486 = vmatpush1.msra.mxu0 0.0
    %1487 = vmatprep.subr.mxu0 0.0
    %1488 = vmatpush1.msra.mxu0 0.0
    %1489 = vmatprep.subr.mxu0 0.0
    %1490 = vmatpush1.msra.mxu0 0.0
    %1491 = vmatprep.subr.mxu0 0.0
    %1492 = vmatpush1.msra.mxu0 0.0
    %1493 = vmatprep.subr.mxu0 0.0
    %1494 = vmatpush1.msra.mxu0 0.0
    %1495 = vmatprep.subr.mxu0 0.0
    %1496 = vmatpush1.msra.mxu0 0.0
    %1497 = vmatprep.subr.mxu0 0.0
    %1498 = vmatpush1.msra.mxu0 0.0
    %1499 = vmatprep.subr.mxu0 0.0
    %1500 = vmatpush1.msra.mxu0 0.0
    %1501 = vmatprep.subr.mxu0 0.0
    %1502 = vmatpush1.msra.mxu0 0.0
    %1503 = vmatprep.subr.mxu0 0.0
    %1504 = vmatpush1.msra.mxu0 0.0
    %1505 = vmatprep.subr.mxu0 0.0
    %1506 = vmatpush1.msra.mxu0 0.0
    %1507 = vmatprep.subr.mxu0 0.0
    %1508 = vmatpush1.msra.mxu0 0.0
    %1509 = vmatprep.mubr.f32.mxu0 0.0
    %1510 = vmatmul.mubr.f32.gmra.mrb[0].mxu0 %v1369
    %v1511 = vpop.f32.mrb[0].mxu0
    %v1512 = vadd.f32 %v674, %v1511
    %v1513 = vpop.f32.mrb[0].mxu0
    %1514 = vdwg.mxu0
    %v1515 = vadd.f32 %v1371, %v1441
    %v1516 = vxor.u32 %v1515, 2147483648
    %v1517 = vmul.f32 %v1516, 1.442695
    %v1518 = vpow.pop %v1517
    %v1519 = vadd.f32 %v1518, 1.0
    %v1520 = vrcp.pop %v1519
    %v1521 = vmul.f32 1.0, %v1520
    %v1522 = vadd.f32 %v1372, %v1443
    %v1523 = vxor.u32 %v1522, 2147483648
    %v1524 = vmul.f32 %v1523, 1.442695
    %v1525 = vpow.pop %v1524
    %v1526 = vadd.f32 %v1525, 1.0
    %v1527 = vrcp.pop %v1526
    %v1528 = vmul.f32 1.0, %v1527
    %v1529 = vmul.f32 %v1521, %v1512
    %v1530 = vadd.f32 %v1373, %v1529
    %v1531 = vtanh.pop %v1530
    %v1532 = vsub.f32 1.0, %v1528
    %v1533 = vmul.f32 %v1532, %v1531
    %v1534 = vmul.f32 %v1528, %v1369
    %v1535 = vadd.f32 %v1533, %v1534
    %v1536 = vstv %s1370
    %vm1537 = vcmp.lt.s32.totalorder %v1536, %v607
    %v1538 = vsel %vm1537, 1, 0
    %1539 = vset.pattern.permute.xlu0 0
    %1540 = vperm.xlu0 %1539, %v1538
    %v1541 = vpop.permute.xlu0 %1540
    %vm1542 = vcmp.eq.s32.totalorder %v1541, 1
    %v1543 = vsel %vm1542, %v1535, %v1369
    %s1544 = sadd.s32 %s609, 5
    %v1545 = vld [vmem:[#allocation3 + $0x78] sm:$0xff]
    %v1546 = vld [vmem:[#allocation3 + $0x80] sm:$0xff]
    %v1547 = vld [vmem:[#allocation3 + $0x88] sm:$0xff]
    %1548 = vmatprep.subr.mxu0 %v614
    %1549 = vmatpush1.msra.mxu0 %v613
    %1550 = vmatprep.subr.mxu0 %v617
    %1551 = vmatpush1.msra.mxu0 %v616
    %1552 = vmatprep.subr.mxu0 %v620
    %1553 = vmatpush1.msra.mxu0 %v619
    %1554 = vmatprep.subr.mxu0 %v623
    %1555 = vmatpush1.msra.mxu0 %v622
    %1556 = vmatprep.subr.mxu0 %v626
    %1557 = vmatpush1.msra.mxu0 %v625
    %1558 = vmatprep.subr.mxu0 %v629
    %1559 = vmatpush1.msra.mxu0 %v628
    %1560 = vmatprep.subr.mxu0 %v632
    %1561 = vmatpush1.msra.mxu0 %v631
    %1562 = vmatprep.subr.mxu0 %v635
    %1563 = vmatpush1.msra.mxu0 %v634
    %1564 = vmatprep.subr.mxu0 %v638
    %1565 = vmatpush1.msra.mxu0 %v637
    %1566 = vmatprep.subr.mxu0 %v641
    %1567 = vmatpush1.msra.mxu0 %v640
    %1568 = vmatprep.subr.mxu0 %v644
    %1569 = vmatpush1.msra.mxu0 %v643
    %1570 = vmatprep.subr.mxu0 %v647
    %1571 = vmatpush1.msra.mxu0 %v646
    %1572 = vmatprep.subr.mxu0 %v650
    %1573 = vmatpush1.msra.mxu0 %v649
    %1574 = vmatprep.subr.mxu0 %v653
    %1575 = vmatpush1.msra.mxu0 %v652
    %1576 = vmatprep.subr.mxu0 %v656
    %1577 = vmatpush1.msra.mxu0 %v655
    %1578 = vmatprep.subr.mxu0 %v659
    %1579 = vmatpush1.msra.mxu0 %v658
    %1580 = vmatprep.subr.mxu0 0.0
    %1581 = vmatpush1.msra.mxu0 0.0
    %1582 = vmatprep.subr.mxu0 0.0
    %1583 = vmatpush1.msra.mxu0 0.0
    %1584 = vmatprep.subr.mxu0 0.0
    %1585 = vmatpush1.msra.mxu0 0.0
    %1586 = vmatprep.subr.mxu0 0.0
    %1587 = vmatpush1.msra.mxu0 0.0
    %1588 = vmatprep.subr.mxu0 0.0
    %1589 = vmatpush1.msra.mxu0 0.0
    %1590 = vmatprep.subr.mxu0 0.0
    %1591 = vmatpush1.msra.mxu0 0.0
    %1592 = vmatprep.subr.mxu0 0.0
    %1593 = vmatpush1.msra.mxu0 0.0
    %1594 = vmatprep.subr.mxu0 0.0
    %1595 = vmatpush1.msra.mxu0 0.0
    %1596 = vmatprep.subr.mxu0 0.0
    %1597 = vmatpush1.msra.mxu0 0.0
    %1598 = vmatprep.subr.mxu0 0.0
    %1599 = vmatpush1.msra.mxu0 0.0
    %1600 = vmatprep.subr.mxu0 0.0
    %1601 = vmatpush1.msra.mxu0 0.0
    %1602 = vmatprep.subr.mxu0 0.0
    %1603 = vmatpush1.msra.mxu0 0.0
    %1604 = vmatprep.subr.mxu0 0.0
    %1605 = vmatpush1.msra.mxu0 0.0
    %1606 = vmatprep.subr.mxu0 0.0
    %1607 = vmatpush1.msra.mxu0 0.0
    %1608 = vmatprep.subr.mxu0 0.0
    %1609 = vmatpush1.msra.mxu0 0.0
    %1610 = vmatprep.subr.mxu0 0.0
    %1611 = vmatpush1.msra.mxu0 0.0
    %1612 = vmatprep.mubr.f32.mxu0 0.0
    %1613 = vmatmul.mubr.f32.gmra.mrb[0].mxu0 %v1543
    %v1614 = vpop.f32.mrb[0].mxu0
    %v1615 = vadd.f32 %v666, %v1614
    %v1616 = vpop.f32.mrb[0].mxu0
    %v1617 = vadd.f32 %v670, %v1616
    %1618 = vdwg.mxu0
    %1619 = vmatprep.subr.mxu0 0.0
    %1620 = vmatpush1.msra.mxu0 %v615
    %1621 = vmatprep.subr.mxu0 0.0
    %1622 = vmatpush1.msra.mxu0 %v618
    %1623 = vmatprep.subr.mxu0 0.0
    %1624 = vmatpush1.msra.mxu0 %v621
    %1625 = vmatprep.subr.mxu0 0.0
    %1626 = vmatpush1.msra.mxu0 %v624
    %1627 = vmatprep.subr.mxu0 0.0
    %1628 = vmatpush1.msra.mxu0 %v627
    %1629 = vmatprep.subr.mxu0 0.0
    %1630 = vmatpush1.msra.mxu0 %v630
    %1631 = vmatprep.subr.mxu0 0.0
    %1632 = vmatpush1.msra.mxu0 %v633
    %1633 = vmatprep.subr.mxu0 0.0
    %1634 = vmatpush1.msra.mxu0 %v636
    %1635 = vmatprep.subr.mxu0 0.0
    %1636 = vmatpush1.msra.mxu0 %v639
    %1637 = vmatprep.subr.mxu0 0.0
    %1638 = vmatpush1.msra.mxu0 %v642
    %1639 = vmatprep.subr.mxu0 0.0
    %1640 = vmatpush1.msra.mxu0 %v645
    %1641 = vmatprep.subr.mxu0 0.0
    %1642 = vmatpush1.msra.mxu0 %v648
    %1643 = vmatprep.subr.mxu0 0.0
    %1644 = vmatpush1.msra.mxu0 %v651
    %1645 = vmatprep.subr.mxu0 0.0
    %1646 = vmatpush1.msra.mxu0 %v654
    %1647 = vmatprep.subr.mxu0 0.0
    %1648 = vmatpush1.msra.mxu0 %v657
    %1649 = vmatprep.subr.mxu0 0.0
    %1650 = vmatpush1.msra.mxu0 %v660
    %1651 = vmatprep.subr.mxu0 0.0
    %1652 = vmatpush1.msra.mxu0 0.0
    %1653 = vmatprep.subr.mxu0 0.0
    %1654 = vmatpush1.msra.mxu0 0.0
    %1655 = vmatprep.subr.mxu0 0.0
    %1656 = vmatpush1.msra.mxu0 0.0
    %1657 = vmatprep.subr.mxu0 0.0
    %1658 = vmatpush1.msra.mxu0 0.0
    %1659 = vmatprep.subr.mxu0 0.0
    %1660 = vmatpush1.msra.mxu0 0.0
    %1661 = vmatprep.subr.mxu0 0.0
    %1662 = vmatpush1.msra.mxu0 0.0
    %1663 = vmatprep.subr.mxu0 0.0
    %1664 = vmatpush1.msra.mxu0 0.0
    %1665 = vmatprep.subr.mxu0 0.0
    %1666 = vmatpush1.msra.mxu0 0.0
    %1667 = vmatprep.subr.mxu0 0.0
    %1668 = vmatpush1.msra.mxu0 0.0
    %1669 = vmatprep.subr.mxu0 0.0
    %1670 = vmatpush1.msra.mxu0 0.0
    %1671 = vmatprep.subr.mxu0 0.0
    %1672 = vmatpush1.msra.mxu0 0.0
    %1673 = vmatprep.subr.mxu0 0.0
    %1674 = vmatpush1.msra.mxu0 0.0
    %1675 = vmatprep.subr.mxu0 0.0
    %1676 = vmatpush1.msra.mxu0 0.0
    %1677 = vmatprep.subr.mxu0 0.0
    %1678 = vmatpush1.msra.mxu0 0.0
    %1679 = vmatprep.subr.mxu0 0.0
    %1680 = vmatpush1.msra.mxu0 0.0
    %1681 = vmatprep.subr.mxu0 0.0
    %1682 = vmatpush1.msra.mxu0 0.0
    %1683 = vmatprep.mubr.f32.mxu0 0.0
    %1684 = vmatmul.mubr.f32.gmra.mrb[0].mxu0 %v1543
    %v1685 = vpop.f32.mrb[0].mxu0
    %v1686 = vadd.f32 %v674, %v1685
    %v1687 = vpop.f32.mrb[0].mxu0
    %1688 = vdwg.mxu0
    %v1689 = vadd.f32 %v1545, %v1615
    %v1690 = vxor.u32 %v1689, 2147483648
    %v1691 = vmul.f32 %v1690, 1.442695
    %v1692 = vpow.pop %v1691
    %v1693 = vadd.f32 %v1692, 1.0
    %v1694 = vrcp.pop %v1693
    %v1695 = vmul.f32 1.0, %v1694
    %v1696 = vadd.f32 %v1546, %v1617
    %v1697 = vxor.u32 %v1696, 2147483648
    %v1698 = vmul.f32 %v1697, 1.442695
    %v1699 = vpow.pop %v1698
    %v1700 = vadd.f32 %v1699, 1.0
    %v1701 = vrcp.pop %v1700
    %v1702 = vmul.f32 1.0, %v1701
    %v1703 = vmul.f32 %v1695, %v1686
    %v1704 = vadd.f32 %v1547, %v1703
    %v1705 = vtanh.pop %v1704
    %v1706 = vsub.f32 1.0, %v1702
    %v1707 = vmul.f32 %v1706, %v1705
    %v1708 = vmul.f32 %v1702, %v1543
    %v1709 = vadd.f32 %v1707, %v1708
    %v1710 = vstv %s1544
    %vm1711 = vcmp.lt.s32.totalorder %v1710, %v607
    %v1712 = vsel %vm1711, 1, 0
    %1713 = vset.pattern.permute.xlu0 0
    %1714 = vperm.xlu0 %1713, %v1712
    %v1715 = vpop.permute.xlu0 %1714
    %vm1716 = vcmp.eq.s32.totalorder %v1715, 1
    %v1717 = vsel %vm1716, %v1709, %v1543
    %s1718 = sadd.s32 %s609, 6
    %v1719 = vld [vmem:[#allocation3 + $0x90] sm:$0xff]
    %v1720 = vld [vmem:[#allocation3 + $0x98] sm:$0xff]
    %v1721 = vld [vmem:[#allocation3 + $0xa0] sm:$0xff]
    %1722 = vmatprep.subr.mxu0 %v614
    %1723 = vmatpush1.msra.mxu0 %v613
    %1724 = vmatprep.subr.mxu0 %v617
    %1725 = vmatpush1.msra.mxu0 %v616
    %1726 = vmatprep.subr.mxu0 %v620
    %1727 = vmatpush1.msra.mxu0 %v619
    %1728 = vmatprep.subr.mxu0 %v623
    %1729 = vmatpush1.msra.mxu0 %v622
    %1730 = vmatprep.subr.mxu0 %v626
    %1731 = vmatpush1.msra.mxu0 %v625
    %1732 = vmatprep.subr.mxu0 %v629
    %1733 = vmatpush1.msra.mxu0 %v628
    %1734 = vmatprep.subr.mxu0 %v632
    %1735 = vmatpush1.msra.mxu0 %v631
    %1736 = vmatprep.subr.mxu0 %v635
    %1737 = vmatpush1.msra.mxu0 %v634
    %1738 = vmatprep.subr.mxu0 %v638
    %1739 = vmatpush1.msra.mxu0 %v637
    %1740 = vmatprep.subr.mxu0 %v641
    %1741 = vmatpush1.msra.mxu0 %v640
    %1742 = vmatprep.subr.mxu0 %v644
    %1743 = vmatpush1.msra.mxu0 %v643
    %1744 = vmatprep.subr.mxu0 %v647
    %1745 = vmatpush1.msra.mxu0 %v646
    %1746 = vmatprep.subr.mxu0 %v650
    %1747 = vmatpush1.msra.mxu0 %v649
    %1748 = vmatprep.subr.mxu0 %v653
    %1749 = vmatpush1.msra.mxu0 %v652
    %1750 = vmatprep.subr.mxu0 %v656
    %1751 = vmatpush1.msra.mxu0 %v655
    %1752 = vmatprep.subr.mxu0 %v659
    %1753 = vmatpush1.msra.mxu0 %v658
    %1754 = vmatprep.subr.mxu0 0.0
    %1755 = vmatpush1.msra.mxu0 0.0
    %1756 = vmatprep.subr.mxu0 0.0
    %1757 = vmatpush1.msra.mxu0 0.0
    %1758 = vmatprep.subr.mxu0 0.0
    %1759 = vmatpush1.msra.mxu0 0.0
    %1760 = vmatprep.subr.mxu0 0.0
    %1761 = vmatpush1.msra.mxu0 0.0
    %1762 = vmatprep.subr.mxu0 0.0
    %1763 = vmatpush1.msra.mxu0 0.0
    %1764 = vmatprep.subr.mxu0 0.0
    %1765 = vmatpush1.msra.mxu0 0.0
    %1766 = vmatprep.subr.mxu0 0.0
    %1767 = vmatpush1.msra.mxu0 0.0
    %1768 = vmatprep.subr.mxu0 0.0
    %1769 = vmatpush1.msra.mxu0 0.0
    %1770 = vmatprep.subr.mxu0 0.0
    %1771 = vmatpush1.msra.mxu0 0.0
    %1772 = vmatprep.subr.mxu0 0.0
    %1773 = vmatpush1.msra.mxu0 0.0
    %1774 = vmatprep.subr.mxu0 0.0
    %1775 = vmatpush1.msra.mxu0 0.0
    %1776 = vmatprep.subr.mxu0 0.0
    %1777 = vmatpush1.msra.mxu0 0.0
    %1778 = vmatprep.subr.mxu0 0.0
    %1779 = vmatpush1.msra.mxu0 0.0
    %1780 = vmatprep.subr.mxu0 0.0
    %1781 = vmatpush1.msra.mxu0 0.0
    %1782 = vmatprep.subr.mxu0 0.0
    %1783 = vmatpush1.msra.mxu0 0.0
    %1784 = vmatprep.subr.mxu0 0.0
    %1785 = vmatpush1.msra.mxu0 0.0
    %1786 = vmatprep.mubr.f32.mxu0 0.0
    %1787 = vmatmul.mubr.f32.gmra.mrb[0].mxu0 %v1717
    %v1788 = vpop.f32.mrb[0].mxu0
    %v1789 = vadd.f32 %v666, %v1788
    %v1790 = vpop.f32.mrb[0].mxu0
    %v1791 = vadd.f32 %v670, %v1790
    %1792 = vdwg.mxu0
    %1793 = vmatprep.subr.mxu0 0.0
    %1794 = vmatpush1.msra.mxu0 %v615
    %1795 = vmatprep.subr.mxu0 0.0
    %1796 = vmatpush1.msra.mxu0 %v618
    %1797 = vmatprep.subr.mxu0 0.0
    %1798 = vmatpush1.msra.mxu0 %v621
    %1799 = vmatprep.subr.mxu0 0.0
    %1800 = vmatpush1.msra.mxu0 %v624
    %1801 = vmatprep.subr.mxu0 0.0
    %1802 = vmatpush1.msra.mxu0 %v627
    %1803 = vmatprep.subr.mxu0 0.0
    %1804 = vmatpush1.msra.mxu0 %v630
    %1805 = vmatprep.subr.mxu0 0.0
    %1806 = vmatpush1.msra.mxu0 %v633
    %1807 = vmatprep.subr.mxu0 0.0
    %1808 = vmatpush1.msra.mxu0 %v636
    %1809 = vmatprep.subr.mxu0 0.0
    %1810 = vmatpush1.msra.mxu0 %v639
    %1811 = vmatprep.subr.mxu0 0.0
    %1812 = vmatpush1.msra.mxu0 %v642
    %1813 = vmatprep.subr.mxu0 0.0
    %1814 = vmatpush1.msra.mxu0 %v645
    %1815 = vmatprep.subr.mxu0 0.0
    %1816 = vmatpush1.msra.mxu0 %v648
    %1817 = vmatprep.subr.mxu0 0.0
    %1818 = vmatpush1.msra.mxu0 %v651
    %1819 = vmatprep.subr.mxu0 0.0
    %1820 = vmatpush1.msra.mxu0 %v654
    %1821 = vmatprep.subr.mxu0 0.0
    %1822 = vmatpush1.msra.mxu0 %v657
    %1823 = vmatprep.subr.mxu0 0.0
    %1824 = vmatpush1.msra.mxu0 %v660
    %1825 = vmatprep.subr.mxu0 0.0
    %1826 = vmatpush1.msra.mxu0 0.0
    %1827 = vmatprep.subr.mxu0 0.0
    %1828 = vmatpush1.msra.mxu0 0.0
    %1829 = vmatprep.subr.mxu0 0.0
    %1830 = vmatpush1.msra.mxu0 0.0
    %1831 = vmatprep.subr.mxu0 0.0
    %1832 = vmatpush1.msra.mxu0 0.0
    %1833 = vmatprep.subr.mxu0 0.0
    %1834 = vmatpush1.msra.mxu0 0.0
    %1835 = vmatprep.subr.mxu0 0.0
    %1836 = vmatpush1.msra.mxu0 0.0
    %1837 = vmatprep.subr.mxu0 0.0
    %1838 = vmatpush1.msra.mxu0 0.0
    %1839 = vmatprep.subr.mxu0 0.0
    %1840 = vmatpush1.msra.mxu0 0.0
    %1841 = vmatprep.subr.mxu0 0.0
    %1842 = vmatpush1.msra.mxu0 0.0
    %1843 = vmatprep.subr.mxu0 0.0
    %1844 = vmatpush1.msra.mxu0 0.0
    %1845 = vmatprep.subr.mxu0 0.0
    %1846 = vmatpush1.msra.mxu0 0.0
    %1847 = vmatprep.subr.mxu0 0.0
    %1848 = vmatpush1.msra.mxu0 0.0
    %1849 = vmatprep.subr.mxu0 0.0
    %1850 = vmatpush1.msra.mxu0 0.0
    %1851 = vmatprep.subr.mxu0 0.0
    %1852 = vmatpush1.msra.mxu0 0.0
    %1853 = vmatprep.subr.mxu0 0.0
    %1854 = vmatpush1.msra.mxu0 0.0
    %1855 = vmatprep.subr.mxu0 0.0
    %1856 = vmatpush1.msra.mxu0 0.0
    %1857 = vmatprep.mubr.f32.mxu0 0.0
    %1858 = vmatmul.mubr.f32.gmra.mrb[0].mxu0 %v1717
    %v1859 = vpop.f32.mrb[0].mxu0
    %v1860 = vadd.f32 %v674, %v1859
    %v1861 = vpop.f32.mrb[0].mxu0
    %1862 = vdwg.mxu0
    %v1863 = vadd.f32 %v1719, %v1789
    %v1864 = vxor.u32 %v1863, 2147483648
    %v1865 = vmul.f32 %v1864, 1.442695
    %v1866 = vpow.pop %v1865
    %v1867 = vadd.f32 %v1866, 1.0
    %v1868 = vrcp.pop %v1867
    %v1869 = vmul.f32 1.0, %v1868
    %v1870 = vadd.f32 %v1720, %v1791
    %v1871 = vxor.u32 %v1870, 2147483648
    %v1872 = vmul.f32 %v1871, 1.442695
    %v1873 = vpow.pop %v1872
    %v1874 = vadd.f32 %v1873, 1.0
    %v1875 = vrcp.pop %v1874
    %v1876 = vmul.f32 1.0, %v1875
    %v1877 = vmul.f32 %v1869, %v1860
    %v1878 = vadd.f32 %v1721, %v1877
    %v1879 = vtanh.pop %v1878
    %v1880 = vsub.f32 1.0, %v1876
    %v1881 = vmul.f32 %v1880, %v1879
    %v1882 = vmul.f32 %v1876, %v1717
    %v1883 = vadd.f32 %v1881, %v1882
    %v1884 = vstv %s1718
    %vm1885 = vcmp.lt.s32.totalorder %v1884, %v607
    %v1886 = vsel %vm1885, 1, 0
    %1887 = vset.pattern.permute.xlu0 0
    %1888 = vperm.xlu0 %1887, %v1886
    %v1889 = vpop.permute.xlu0 %1888
    %vm1890 = vcmp.eq.s32.totalorder %v1889, 1
    %v1891 = vsel %vm1890, %v1883, %v1717
    %s1892 = sadd.s32 %s609, 7
    %v1893 = vld [vmem:[#allocation3 + $0xa8] sm:$0xff]
    %v1894 = vld [vmem:[#allocation3 + $0xb0] sm:$0xff]
    %v1895 = vld [vmem:[#allocation3 + $0xb8] sm:$0xff]
    %1896 = vmatprep.subr.mxu0 %v614
    %1897 = vmatpush1.msra.mxu0 %v613
    %1898 = vmatprep.subr.mxu0 %v617
    %1899 = vmatpush1.msra.mxu0 %v616
    %1900 = vmatprep.subr.mxu0 %v620
    %1901 = vmatpush1.msra.mxu0 %v619
    %1902 = vmatprep.subr.mxu0 %v623
    %1903 = vmatpush1.msra.mxu0 %v622
    %1904 = vmatprep.subr.mxu0 %v626
    %1905 = vmatpush1.msra.mxu0 %v625
    %1906 = vmatprep.subr.mxu0 %v629
    %1907 = vmatpush1.msra.mxu0 %v628
    %1908 = vmatprep.subr.mxu0 %v632
    %1909 = vmatpush1.msra.mxu0 %v631
    %1910 = vmatprep.subr.mxu0 %v635
    %1911 = vmatpush1.msra.mxu0 %v634
    %1912 = vmatprep.subr.mxu0 %v638
    %1913 = vmatpush1.msra.mxu0 %v637
    %1914 = vmatprep.subr.mxu0 %v641
    %1915 = vmatpush1.msra.mxu0 %v640
    %1916 = vmatprep.subr.mxu0 %v644
    %1917 = vmatpush1.msra.mxu0 %v643
    %1918 = vmatprep.subr.mxu0 %v647
    %1919 = vmatpush1.msra.mxu0 %v646
    %1920 = vmatprep.subr.mxu0 %v650
    %1921 = vmatpush1.msra.mxu0 %v649
    %1922 = vmatprep.subr.mxu0 %v653
    %1923 = vmatpush1.msra.mxu0 %v652
    %1924 = vmatprep.subr.mxu0 %v656
    %1925 = vmatpush1.msra.mxu0 %v655
    %1926 = vmatprep.subr.mxu0 %v659
    %1927 = vmatpush1.msra.mxu0 %v658
    %1928 = vmatprep.subr.mxu0 0.0
    %1929 = vmatpush1.msra.mxu0 0.0
    %1930 = vmatprep.subr.mxu0 0.0
    %1931 = vmatpush1.msra.mxu0 0.0
    %1932 = vmatprep.subr.mxu0 0.0
    %1933 = vmatpush1.msra.mxu0 0.0
    %1934 = vmatprep.subr.mxu0 0.0
    %1935 = vmatpush1.msra.mxu0 0.0
    %1936 = vmatprep.subr.mxu0 0.0
    %1937 = vmatpush1.msra.mxu0 0.0
    %1938 = vmatprep.subr.mxu0 0.0
    %1939 = vmatpush1.msra.mxu0 0.0
    %1940 = vmatprep.subr.mxu0 0.0
    %1941 = vmatpush1.msra.mxu0 0.0
    %1942 = vmatprep.subr.mxu0 0.0
    %1943 = vmatpush1.msra.mxu0 0.0
    %1944 = vmatprep.subr.mxu0 0.0
    %1945 = vmatpush1.msra.mxu0 0.0
    %1946 = vmatprep.subr.mxu0 0.0
    %1947 = vmatpush1.msra.mxu0 0.0
    %1948 = vmatprep.subr.mxu0 0.0
    %1949 = vmatpush1.msra.mxu0 0.0
    %1950 = vmatprep.subr.mxu0 0.0
    %1951 = vmatpush1.msra.mxu0 0.0
    %1952 = vmatprep.subr.mxu0 0.0
    %1953 = vmatpush1.msra.mxu0 0.0
    %1954 = vmatprep.subr.mxu0 0.0
    %1955 = vmatpush1.msra.mxu0 0.0
    %1956 = vmatprep.subr.mxu0 0.0
    %1957 = vmatpush1.msra.mxu0 0.0
    %1958 = vmatprep.subr.mxu0 0.0
    %1959 = vmatpush1.msra.mxu0 0.0
    %1960 = vmatprep.mubr.f32.mxu0 0.0
    %1961 = vmatmul.mubr.f32.gmra.mrb[0].mxu0 %v1891
    %v1962 = vpop.f32.mrb[0].mxu0
    %v1963 = vadd.f32 %v666, %v1962
    %v1964 = vpop.f32.mrb[0].mxu0
    %v1965 = vadd.f32 %v670, %v1964
    %1966 = vdwg.mxu0
    %1967 = vmatprep.subr.mxu0 0.0
    %1968 = vmatpush1.msra.mxu0 %v615
    %1969 = vmatprep.subr.mxu0 0.0
    %1970 = vmatpush1.msra.mxu0 %v618
    %1971 = vmatprep.subr.mxu0 0.0
    %1972 = vmatpush1.msra.mxu0 %v621
    %1973 = vmatprep.subr.mxu0 0.0
    %1974 = vmatpush1.msra.mxu0 %v624
    %1975 = vmatprep.subr.mxu0 0.0
    %1976 = vmatpush1.msra.mxu0 %v627
    %1977 = vmatprep.subr.mxu0 0.0
    %1978 = vmatpush1.msra.mxu0 %v630
    %1979 = vmatprep.subr.mxu0 0.0
    %1980 = vmatpush1.msra.mxu0 %v633
    %1981 = vmatprep.subr.mxu0 0.0
    %1982 = vmatpush1.msra.mxu0 %v636
    %1983 = vmatprep.subr.mxu0 0.0
    %1984 = vmatpush1.msra.mxu0 %v639
    %1985 = vmatprep.subr.mxu0 0.0
    %1986 = vmatpush1.msra.mxu0 %v642
    %1987 = vmatprep.subr.mxu0 0.0
    %1988 = vmatpush1.msra.mxu0 %v645
    %1989 = vmatprep.subr.mxu0 0.0
    %1990 = vmatpush1.msra.mxu0 %v648
    %1991 = vmatprep.subr.mxu0 0.0
    %1992 = vmatpush1.msra.mxu0 %v651
    %1993 = vmatprep.subr.mxu0 0.0
    %1994 = vmatpush1.msra.mxu0 %v654
    %1995 = vmatprep.subr.mxu0 0.0
    %1996 = vmatpush1.msra.mxu0 %v657
    %1997 = vmatprep.subr.mxu0 0.0
    %1998 = vmatpush1.msra.mxu0 %v660
    %1999 = vmatprep.subr.mxu0 0.0
    %2000 = vmatpush1.msra.mxu0 0.0
    %2001 = vmatprep.subr.mxu0 0.0
    %2002 = vmatpush1.msra.mxu0 0.0
    %2003 = vmatprep.subr.mxu0 0.0
    %2004 = vmatpush1.msra.mxu0 0.0
    %2005 = vmatprep.subr.mxu0 0.0
    %2006 = vmatpush1.msra.mxu0 0.0
    %2007 = vmatprep.subr.mxu0 0.0
    %2008 = vmatpush1.msra.mxu0 0.0
    %2009 = vmatprep.subr.mxu0 0.0
    %2010 = vmatpush1.msra.mxu0 0.0
    %2011 = vmatprep.subr.mxu0 0.0
    %2012 = vmatpush1.msra.mxu0 0.0
    %2013 = vmatprep.subr.mxu0 0.0
    %2014 = vmatpush1.msra.mxu0 0.0
    %2015 = vmatprep.subr.mxu0 0.0
    %2016 = vmatpush1.msra.mxu0 0.0
    %2017 = vmatprep.subr.mxu0 0.0
    %2018 = vmatpush1.msra.mxu0 0.0
    %2019 = vmatprep.subr.mxu0 0.0
    %2020 = vmatpush1.msra.mxu0 0.0
    %2021 = vmatprep.subr.mxu0 0.0
    %2022 = vmatpush1.msra.mxu0 0.0
    %2023 = vmatprep.subr.mxu0 0.0
    %2024 = vmatpush1.msra.mxu0 0.0
    %2025 = vmatprep.subr.mxu0 0.0
    %2026 = vmatpush1.msra.mxu0 0.0
    %2027 = vmatprep.subr.mxu0 0.0
    %2028 = vmatpush1.msra.mxu0 0.0
    %2029 = vmatprep.subr.mxu0 0.0
    %2030 = vmatpush1.msra.mxu0 0.0
    %2031 = vmatprep.mubr.f32.mxu0 0.0
    %2032 = vmatmul.mubr.f32.gmra.mrb[0].mxu0 %v1891
    %v2033 = vpop.f32.mrb[0].mxu0
    %v2034 = vadd.f32 %v674, %v2033
    %v2035 = vpop.f32.mrb[0].mxu0
    %2036 = vdwg.mxu0
    %v2037 = vadd.f32 %v1893, %v1963
    %v2038 = vxor.u32 %v2037, 2147483648
    %v2039 = vmul.f32 %v2038, 1.442695
    %v2040 = vpow.pop %v2039
    %v2041 = vadd.f32 %v2040, 1.0
    %v2042 = vrcp.pop %v2041
    %v2043 = vmul.f32 1.0, %v2042
    %v2044 = vadd.f32 %v1894, %v1965
    %v2045 = vxor.u32 %v2044, 2147483648
    %v2046 = vmul.f32 %v2045, 1.442695
    %v2047 = vpow.pop %v2046
    %v2048 = vadd.f32 %v2047, 1.0
    %v2049 = vrcp.pop %v2048
    %v2050 = vmul.f32 1.0, %v2049
    %v2051 = vmul.f32 %v2043, %v2034
    %v2052 = vadd.f32 %v1895, %v2051
    %v2053 = vtanh.pop %v2052
    %v2054 = vsub.f32 1.0, %v2050
    %v2055 = vmul.f32 %v2054, %v2053
    %v2056 = vmul.f32 %v2050, %v1891
    %v2057 = vadd.f32 %v2055, %v2056
    %v2058 = vstv %s1892
    %vm2059 = vcmp.lt.s32.totalorder %v2058, %v607
    %v2060 = vsel %vm2059, 1, 0
    %2061 = vset.pattern.permute.xlu0 0
    %2062 = vperm.xlu0 %2061, %v2060
    %v2063 = vpop.permute.xlu0 %2062
    %vm2064 = vcmp.eq.s32.totalorder %v2063, 1
    %v2065 = vsel %vm2064, %v2057, %v1891
    %s2066 = sadd.s32 %s609, 8
    %v2067 = vld [vmem:[#allocation3 + $0xc0] sm:$0xff]
    %v2068 = vld [vmem:[#allocation3 + $0xc8] sm:$0xff]
    %v2069 = vld [vmem:[#allocation3 + $0xd0] sm:$0xff]
    %2070 = vmatprep.subr.mxu0 %v614
    %2071 = vmatpush1.msra.mxu0 %v613
    %2072 = vmatprep.subr.mxu0 %v617
    %2073 = vmatpush1.msra.mxu0 %v616
    %2074 = vmatprep.subr.mxu0 %v620
    %2075 = vmatpush1.msra.mxu0 %v619
    %2076 = vmatprep.subr.mxu0 %v623
    %2077 = vmatpush1.msra.mxu0 %v622
    %2078 = vmatprep.subr.mxu0 %v626
    %2079 = vmatpush1.msra.mxu0 %v625
    %2080 = vmatprep.subr.mxu0 %v629
    %2081 = vmatpush1.msra.mxu0 %v628
    %2082 = vmatprep.subr.mxu0 %v632
    %2083 = vmatpush1.msra.mxu0 %v631
    %2084 = vmatprep.subr.mxu0 %v635
    %2085 = vmatpush1.msra.mxu0 %v634
    %2086 = vmatprep.subr.mxu0 %v638
    %2087 = vmatpush1.msra.mxu0 %v637
    %2088 = vmatprep.subr.mxu0 %v641
    %2089 = vmatpush1.msra.mxu0 %v640
    %2090 = vmatprep.subr.mxu0 %v644
    %2091 = vmatpush1.msra.mxu0 %v643
    %2092 = vmatprep.subr.mxu0 %v647
    %2093 = vmatpush1.msra.mxu0 %v646
    %2094 = vmatprep.subr.mxu0 %v650
    %2095 = vmatpush1.msra.mxu0 %v649
    %2096 = vmatprep.subr.mxu0 %v653
    %2097 = vmatpush1.msra.mxu0 %v652
    %2098 = vmatprep.subr.mxu0 %v656
    %2099 = vmatpush1.msra.mxu0 %v655
    %2100 = vmatprep.subr.mxu0 %v659
    %2101 = vmatpush1.msra.mxu0 %v658
    %2102 = vmatprep.subr.mxu0 0.0
    %2103 = vmatpush1.msra.mxu0 0.0
    %2104 = vmatprep.subr.mxu0 0.0
    %2105 = vmatpush1.msra.mxu0 0.0
    %2106 = vmatprep.subr.mxu0 0.0
    %2107 = vmatpush1.msra.mxu0 0.0
    %2108 = vmatprep.subr.mxu0 0.0
    %2109 = vmatpush1.msra.mxu0 0.0
    %2110 = vmatprep.subr.mxu0 0.0
    %2111 = vmatpush1.msra.mxu0 0.0
    %2112 = vmatprep.subr.mxu0 0.0
    %2113 = vmatpush1.msra.mxu0 0.0
    %2114 = vmatprep.subr.mxu0 0.0
    %2115 = vmatpush1.msra.mxu0 0.0
    %2116 = vmatprep.subr.mxu0 0.0
    %2117 = vmatpush1.msra.mxu0 0.0
    %2118 = vmatprep.subr.mxu0 0.0
    %2119 = vmatpush1.msra.mxu0 0.0
    %2120 = vmatprep.subr.mxu0 0.0
    %2121 = vmatpush1.msra.mxu0 0.0
    %2122 = vmatprep.subr.mxu0 0.0
    %2123 = vmatpush1.msra.mxu0 0.0
    %2124 = vmatprep.subr.mxu0 0.0
    %2125 = vmatpush1.msra.mxu0 0.0
    %2126 = vmatprep.subr.mxu0 0.0
    %2127 = vmatpush1.msra.mxu0 0.0
    %2128 = vmatprep.subr.mxu0 0.0
    %2129 = vmatpush1.msra.mxu0 0.0
    %2130 = vmatprep.subr.mxu0 0.0
    %2131 = vmatpush1.msra.mxu0 0.0
    %2132 = vmatprep.subr.mxu0 0.0
    %2133 = vmatpush1.msra.mxu0 0.0
    %2134 = vmatprep.mubr.f32.mxu0 0.0
    %2135 = vmatmul.mubr.f32.gmra.mrb[0].mxu0 %v2065
    %v2136 = vpop.f32.mrb[0].mxu0
    %v2137 = vadd.f32 %v666, %v2136
    %v2138 = vpop.f32.mrb[0].mxu0
    %v2139 = vadd.f32 %v670, %v2138
    %2140 = vdwg.mxu0
    %2141 = vmatprep.subr.mxu0 0.0
    %2142 = vmatpush1.msra.mxu0 %v615
    %2143 = vmatprep.subr.mxu0 0.0
    %2144 = vmatpush1.msra.mxu0 %v618
    %2145 = vmatprep.subr.mxu0 0.0
    %2146 = vmatpush1.msra.mxu0 %v621
    %2147 = vmatprep.subr.mxu0 0.0
    %2148 = vmatpush1.msra.mxu0 %v624
    %2149 = vmatprep.subr.mxu0 0.0
    %2150 = vmatpush1.msra.mxu0 %v627
    %2151 = vmatprep.subr.mxu0 0.0
    %2152 = vmatpush1.msra.mxu0 %v630
    %2153 = vmatprep.subr.mxu0 0.0
    %2154 = vmatpush1.msra.mxu0 %v633
    %2155 = vmatprep.subr.mxu0 0.0
    %2156 = vmatpush1.msra.mxu0 %v636
    %2157 = vmatprep.subr.mxu0 0.0
    %2158 = vmatpush1.msra.mxu0 %v639
    %2159 = vmatprep.subr.mxu0 0.0
    %2160 = vmatpush1.msra.mxu0 %v642
    %2161 = vmatprep.subr.mxu0 0.0
    %2162 = vmatpush1.msra.mxu0 %v645
    %2163 = vmatprep.subr.mxu0 0.0
    %2164 = vmatpush1.msra.mxu0 %v648
    %2165 = vmatprep.subr.mxu0 0.0
    %2166 = vmatpush1.msra.mxu0 %v651
    %2167 = vmatprep.subr.mxu0 0.0
    %2168 = vmatpush1.msra.mxu0 %v654
    %2169 = vmatprep.subr.mxu0 0.0
    %2170 = vmatpush1.msra.mxu0 %v657
    %2171 = vmatprep.subr.mxu0 0.0
    %2172 = vmatpush1.msra.mxu0 %v660
    %2173 = vmatprep.subr.mxu0 0.0
    %2174 = vmatpush1.msra.mxu0 0.0
    %2175 = vmatprep.subr.mxu0 0.0
    %2176 = vmatpush1.msra.mxu0 0.0
    %2177 = vmatprep.subr.mxu0 0.0
    %2178 = vmatpush1.msra.mxu0 0.0
    %2179 = vmatprep.subr.mxu0 0.0
    %2180 = vmatpush1.msra.mxu0 0.0
    %2181 = vmatprep.subr.mxu0 0.0
    %2182 = vmatpush1.msra.mxu0 0.0
    %2183 = vmatprep.subr.mxu0 0.0
    %2184 = vmatpush1.msra.mxu0 0.0
    %2185 = vmatprep.subr.mxu0 0.0
    %2186 = vmatpush1.msra.mxu0 0.0
    %2187 = vmatprep.subr.mxu0 0.0
    %2188 = vmatpush1.msra.mxu0 0.0
    %2189 = vmatprep.subr.mxu0 0.0
    %2190 = vmatpush1.msra.mxu0 0.0
    %2191 = vmatprep.subr.mxu0 0.0
    %2192 = vmatpush1.msra.mxu0 0.0
    %2193 = vmatprep.subr.mxu0 0.0
    %2194 = vmatpush1.msra.mxu0 0.0
    %2195 = vmatprep.subr.mxu0 0.0
    %2196 = vmatpush1.msra.mxu0 0.0
    %2197 = vmatprep.subr.mxu0 0.0
    %2198 = vmatpush1.msra.mxu0 0.0
    %2199 = vmatprep.subr.mxu0 0.0
    %2200 = vmatpush1.msra.mxu0 0.0
    %2201 = vmatprep.subr.mxu0 0.0
    %2202 = vmatpush1.msra.mxu0 0.0
    %2203 = vmatprep.subr.mxu0 0.0
    %2204 = vmatpush1.msra.mxu0 0.0
    %2205 = vmatprep.mubr.f32.mxu0 0.0
    %2206 = vmatmul.mubr.f32.gmra.mrb[0].mxu0 %v2065
    %v2207 = vpop.f32.mrb[0].mxu0
    %v2208 = vadd.f32 %v674, %v2207
    %v2209 = vpop.f32.mrb[0].mxu0
    %2210 = vdwg.mxu0
    %v2211 = vadd.f32 %v2067, %v2137
    %v2212 = vxor.u32 %v2211, 2147483648
    %v2213 = vmul.f32 %v2212, 1.442695
    %v2214 = vpow.pop %v2213
    %v2215 = vadd.f32 %v2214, 1.0
    %v2216 = vrcp.pop %v2215
    %v2217 = vmul.f32 1.0, %v2216
    %v2218 = vadd.f32 %v2068, %v2139
    %v2219 = vxor.u32 %v2218, 2147483648
    %v2220 = vmul.f32 %v2219, 1.442695
    %v2221 = vpow.pop %v2220
    %v2222 = vadd.f32 %v2221, 1.0
    %v2223 = vrcp.pop %v2222
    %v2224 = vmul.f32 1.0, %v2223
    %v2225 = vmul.f32 %v2217, %v2208
    %v2226 = vadd.f32 %v2069, %v2225
    %v2227 = vtanh.pop %v2226
    %v2228 = vsub.f32 1.0, %v2224
    %v2229 = vmul.f32 %v2228, %v2227
    %v2230 = vmul.f32 %v2224, %v2065
    %v2231 = vadd.f32 %v2229, %v2230
    %v2232 = vstv %s2066
    %vm2233 = vcmp.lt.s32.totalorder %v2232, %v607
    %v2234 = vsel %vm2233, 1, 0
    %2235 = vset.pattern.permute.xlu0 0
    %2236 = vperm.xlu0 %2235, %v2234
    %v2237 = vpop.permute.xlu0 %2236
    %vm2238 = vcmp.eq.s32.totalorder %v2237, 1
    %v2239 = vsel %vm2238, %v2231, %v2065
    %s2240 = sadd.s32 %s609, 9
    %v2241 = vld [vmem:[#allocation3 + $0xd8] sm:$0xff]
    %v2242 = vld [vmem:[#allocation3 + $0xe0] sm:$0xff]
    %v2243 = vld [vmem:[#allocation3 + $0xe8] sm:$0xff]
    %2244 = vmatprep.subr.mxu0 %v614
    %2245 = vmatpush1.msra.mxu0 %v613
    %2246 = vmatprep.subr.mxu0 %v617
    %2247 = vmatpush1.msra.mxu0 %v616
    %2248 = vmatprep.subr.mxu0 %v620
    %2249 = vmatpush1.msra.mxu0 %v619
    %2250 = vmatprep.subr.mxu0 %v623
    %2251 = vmatpush1.msra.mxu0 %v622
    %2252 = vmatprep.subr.mxu0 %v626
    %2253 = vmatpush1.msra.mxu0 %v625
    %2254 = vmatprep.subr.mxu0 %v629
    %2255 = vmatpush1.msra.mxu0 %v628
    %2256 = vmatprep.subr.mxu0 %v632
    %2257 = vmatpush1.msra.mxu0 %v631
    %2258 = vmatprep.subr.mxu0 %v635
    %2259 = vmatpush1.msra.mxu0 %v634
    %2260 = vmatprep.subr.mxu0 %v638
    %2261 = vmatpush1.msra.mxu0 %v637
    %2262 = vmatprep.subr.mxu0 %v641
    %2263 = vmatpush1.msra.mxu0 %v640
    %2264 = vmatprep.subr.mxu0 %v644
    %2265 = vmatpush1.msra.mxu0 %v643
    %2266 = vmatprep.subr.mxu0 %v647
    %2267 = vmatpush1.msra.mxu0 %v646
    %2268 = vmatprep.subr.mxu0 %v650
    %2269 = vmatpush1.msra.mxu0 %v649
    %2270 = vmatprep.subr.mxu0 %v653
    %2271 = vmatpush1.msra.mxu0 %v652
    %2272 = vmatprep.subr.mxu0 %v656
    %2273 = vmatpush1.msra.mxu0 %v655
    %2274 = vmatprep.subr.mxu0 %v659
    %2275 = vmatpush1.msra.mxu0 %v658
    %2276 = vmatprep.subr.mxu0 0.0
    %2277 = vmatpush1.msra.mxu0 0.0
    %2278 = vmatprep.subr.mxu0 0.0
    %2279 = vmatpush1.msra.mxu0 0.0
    %2280 = vmatprep.subr.mxu0 0.0
    %2281 = vmatpush1.msra.mxu0 0.0
    %2282 = vmatprep.subr.mxu0 0.0
    %2283 = vmatpush1.msra.mxu0 0.0
    %2284 = vmatprep.subr.mxu0 0.0
    %2285 = vmatpush1.msra.mxu0 0.0
    %2286 = vmatprep.subr.mxu0 0.0
    %2287 = vmatpush1.msra.mxu0 0.0
    %2288 = vmatprep.subr.mxu0 0.0
    %2289 = vmatpush1.msra.mxu0 0.0
    %2290 = vmatprep.subr.mxu0 0.0
    %2291 = vmatpush1.msra.mxu0 0.0
    %2292 = vmatprep.subr.mxu0 0.0
    %2293 = vmatpush1.msra.mxu0 0.0
    %2294 = vmatprep.subr.mxu0 0.0
    %2295 = vmatpush1.msra.mxu0 0.0
    %2296 = vmatprep.subr.mxu0 0.0
    %2297 = vmatpush1.msra.mxu0 0.0
    %2298 = vmatprep.subr.mxu0 0.0
    %2299 = vmatpush1.msra.mxu0 0.0
    %2300 = vmatprep.subr.mxu0 0.0
    %2301 = vmatpush1.msra.mxu0 0.0
    %2302 = vmatprep.subr.mxu0 0.0
    %2303 = vmatpush1.msra.mxu0 0.0
    %2304 = vmatprep.subr.mxu0 0.0
    %2305 = vmatpush1.msra.mxu0 0.0
    %2306 = vmatprep.subr.mxu0 0.0
    %2307 = vmatpush1.msra.mxu0 0.0
    %2308 = vmatprep.mubr.f32.mxu0 0.0
    %2309 = vmatmul.mubr.f32.gmra.mrb[0].mxu0 %v2239
    %v2310 = vpop.f32.mrb[0].mxu0
    %v2311 = vadd.f32 %v666, %v2310
    %v2312 = vpop.f32.mrb[0].mxu0
    %v2313 = vadd.f32 %v670, %v2312
    %2314 = vdwg.mxu0
    %2315 = vmatprep.subr.mxu0 0.0
    %2316 = vmatpush1.msra.mxu0 %v615
    %2317 = vmatprep.subr.mxu0 0.0
    %2318 = vmatpush1.msra.mxu0 %v618
    %2319 = vmatprep.subr.mxu0 0.0
    %2320 = vmatpush1.msra.mxu0 %v621
    %2321 = vmatprep.subr.mxu0 0.0
    %2322 = vmatpush1.msra.mxu0 %v624
    %2323 = vmatprep.subr.mxu0 0.0
    %2324 = vmatpush1.msra.mxu0 %v627
    %2325 = vmatprep.subr.mxu0 0.0
    %2326 = vmatpush1.msra.mxu0 %v630
    %2327 = vmatprep.subr.mxu0 0.0
    %2328 = vmatpush1.msra.mxu0 %v633
    %2329 = vmatprep.subr.mxu0 0.0
    %2330 = vmatpush1.msra.mxu0 %v636
    %2331 = vmatprep.subr.mxu0 0.0
    %2332 = vmatpush1.msra.mxu0 %v639
    %2333 = vmatprep.subr.mxu0 0.0
    %2334 = vmatpush1.msra.mxu0 %v642
    %2335 = vmatprep.subr.mxu0 0.0
    %2336 = vmatpush1.msra.mxu0 %v645
    %2337 = vmatprep.subr.mxu0 0.0
    %2338 = vmatpush1.msra.mxu0 %v648
    %2339 = vmatprep.subr.mxu0 0.0
    %2340 = vmatpush1.msra.mxu0 %v651
    %2341 = vmatprep.subr.mxu0 0.0
    %2342 = vmatpush1.msra.mxu0 %v654
    %2343 = vmatprep.subr.mxu0 0.0
    %2344 = vmatpush1.msra.mxu0 %v657
    %2345 = vmatprep.subr.mxu0 0.0
    %2346 = vmatpush1.msra.mxu0 %v660
    %2347 = vmatprep.subr.mxu0 0.0
    %2348 = vmatpush1.msra.mxu0 0.0
    %2349 = vmatprep.subr.mxu0 0.0
    %2350 = vmatpush1.msra.mxu0 0.0
    %2351 = vmatprep.subr.mxu0 0.0
    %2352 = vmatpush1.msra.mxu0 0.0
    %2353 = vmatprep.subr.mxu0 0.0
    %2354 = vmatpush1.msra.mxu0 0.0
    %2355 = vmatprep.subr.mxu0 0.0
    %2356 = vmatpush1.msra.mxu0 0.0
    %2357 = vmatprep.subr.mxu0 0.0
    %2358 = vmatpush1.msra.mxu0 0.0
    %2359 = vmatprep.subr.mxu0 0.0
    %2360 = vmatpush1.msra.mxu0 0.0
    %2361 = vmatprep.subr.mxu0 0.0
    %2362 = vmatpush1.msra.mxu0 0.0
    %2363 = vmatprep.subr.mxu0 0.0
    %2364 = vmatpush1.msra.mxu0 0.0
    %2365 = vmatprep.subr.mxu0 0.0
    %2366 = vmatpush1.msra.mxu0 0.0
    %2367 = vmatprep.subr.mxu0 0.0
    %2368 = vmatpush1.msra.mxu0 0.0
    %2369 = vmatprep.subr.mxu0 0.0
    %2370 = vmatpush1.msra.mxu0 0.0
    %2371 = vmatprep.subr.mxu0 0.0
    %2372 = vmatpush1.msra.mxu0 0.0
    %2373 = vmatprep.subr.mxu0 0.0
    %2374 = vmatpush1.msra.mxu0 0.0
    %2375 = vmatprep.subr.mxu0 0.0
    %2376 = vmatpush1.msra.mxu0 0.0
    %2377 = vmatprep.subr.mxu0 0.0
    %2378 = vmatpush1.msra.mxu0 0.0
    %2379 = vmatprep.mubr.f32.mxu0 0.0
    %2380 = vmatmul.mubr.f32.gmra.mrb[0].mxu0 %v2239
    %v2381 = vpop.f32.mrb[0].mxu0
    %v2382 = vadd.f32 %v674, %v2381
    %v2383 = vpop.f32.mrb[0].mxu0
    %2384 = vdwg.mxu0
    %v2385 = vadd.f32 %v2241, %v2311
    %v2386 = vxor.u32 %v2385, 2147483648
    %v2387 = vmul.f32 %v2386, 1.442695
    %v2388 = vpow.pop %v2387
    %v2389 = vadd.f32 %v2388, 1.0
    %v2390 = vrcp.pop %v2389
    %v2391 = vmul.f32 1.0, %v2390
    %v2392 = vadd.f32 %v2242, %v2313
    %v2393 = vxor.u32 %v2392, 2147483648
    %v2394 = vmul.f32 %v2393, 1.442695
    %v2395 = vpow.pop %v2394
    %v2396 = vadd.f32 %v2395, 1.0
    %v2397 = vrcp.pop %v2396
    %v2398 = vmul.f32 1.0, %v2397
    %v2399 = vmul.f32 %v2391, %v2382
    %v2400 = vadd.f32 %v2243, %v2399
    %v2401 = vtanh.pop %v2400
    %v2402 = vsub.f32 1.0, %v2398
    %v2403 = vmul.f32 %v2402, %v2401
    %v2404 = vmul.f32 %v2398, %v2239
    %v2405 = vadd.f32 %v2403, %v2404
    %v2406 = vstv %s2240
    %vm2407 = vcmp.lt.s32.totalorder %v2406, %v607
    %v2408 = vsel %vm2407, 1, 0
    %2409 = vset.pattern.permute.xlu0 0
    %2410 = vperm.xlu0 %2409, %v2408
    %v2411 = vpop.permute.xlu0 %2410
    %vm2412 = vcmp.eq.s32.totalorder %v2411, 1
    %v2413 = vsel %vm2412, %v2405, %v2239
    %s2414 = sadd.s32 %s609, 10
    %v2415 = vld [vmem:[#allocation3 + $0xf0] sm:$0xff]
    %v2416 = vld [vmem:[#allocation3 + $0xf8] sm:$0xff]
    %v2417 = vld [vmem:[#allocation3 + $0x100] sm:$0xff]
    %2418 = vmatprep.subr.mxu0 %v614
    %2419 = vmatpush1.msra.mxu0 %v613
    %2420 = vmatprep.subr.mxu0 %v617
    %2421 = vmatpush1.msra.mxu0 %v616
    %2422 = vmatprep.subr.mxu0 %v620
    %2423 = vmatpush1.msra.mxu0 %v619
    %2424 = vmatprep.subr.mxu0 %v623
    %2425 = vmatpush1.msra.mxu0 %v622
    %2426 = vmatprep.subr.mxu0 %v626
    %2427 = vmatpush1.msra.mxu0 %v625
    %2428 = vmatprep.subr.mxu0 %v629
    %2429 = vmatpush1.msra.mxu0 %v628
    %2430 = vmatprep.subr.mxu0 %v632
    %2431 = vmatpush1.msra.mxu0 %v631
    %2432 = vmatprep.subr.mxu0 %v635
    %2433 = vmatpush1.msra.mxu0 %v634
    %2434 = vmatprep.subr.mxu0 %v638
    %2435 = vmatpush1.msra.mxu0 %v637
    %2436 = vmatprep.subr.mxu0 %v641
    %2437 = vmatpush1.msra.mxu0 %v640
    %2438 = vmatprep.subr.mxu0 %v644
    %2439 = vmatpush1.msra.mxu0 %v643
    %2440 = vmatprep.subr.mxu0 %v647
    %2441 = vmatpush1.msra.mxu0 %v646
    %2442 = vmatprep.subr.mxu0 %v650
    %2443 = vmatpush1.msra.mxu0 %v649
    %2444 = vmatprep.subr.mxu0 %v653
    %2445 = vmatpush1.msra.mxu0 %v652
    %2446 = vmatprep.subr.mxu0 %v656
    %2447 = vmatpush1.msra.mxu0 %v655
    %2448 = vmatprep.subr.mxu0 %v659
    %2449 = vmatpush1.msra.mxu0 %v658
    %2450 = vmatprep.subr.mxu0 0.0
    %2451 = vmatpush1.msra.mxu0 0.0
    %2452 = vmatprep.subr.mxu0 0.0
    %2453 = vmatpush1.msra.mxu0 0.0
    %2454 = vmatprep.subr.mxu0 0.0
    %2455 = vmatpush1.msra.mxu0 0.0
    %2456 = vmatprep.subr.mxu0 0.0
    %2457 = vmatpush1.msra.mxu0 0.0
    %2458 = vmatprep.subr.mxu0 0.0
    %2459 = vmatpush1.msra.mxu0 0.0
    %2460 = vmatprep.subr.mxu0 0.0
    %2461 = vmatpush1.msra.mxu0 0.0
    %2462 = vmatprep.subr.mxu0 0.0
    %2463 = vmatpush1.msra.mxu0 0.0
    %2464 = vmatprep.subr.mxu0 0.0
    %2465 = vmatpush1.msra.mxu0 0.0
    %2466 = vmatprep.subr.mxu0 0.0
    %2467 = vmatpush1.msra.mxu0 0.0
    %2468 = vmatprep.subr.mxu0 0.0
    %2469 = vmatpush1.msra.mxu0 0.0
    %2470 = vmatprep.subr.mxu0 0.0
    %2471 = vmatpush1.msra.mxu0 0.0
    %2472 = vmatprep.subr.mxu0 0.0
    %2473 = vmatpush1.msra.mxu0 0.0
    %2474 = vmatprep.subr.mxu0 0.0
    %2475 = vmatpush1.msra.mxu0 0.0
    %2476 = vmatprep.subr.mxu0 0.0
    %2477 = vmatpush1.msra.mxu0 0.0
    %2478 = vmatprep.subr.mxu0 0.0
    %2479 = vmatpush1.msra.mxu0 0.0
    %2480 = vmatprep.subr.mxu0 0.0
    %2481 = vmatpush1.msra.mxu0 0.0
    %2482 = vmatprep.mubr.f32.mxu0 0.0
    %2483 = vmatmul.mubr.f32.gmra.mrb[0].mxu0 %v2413
    %v2484 = vpop.f32.mrb[0].mxu0
    %v2485 = vadd.f32 %v666, %v2484
    %v2486 = vpop.f32.mrb[0].mxu0
    %v2487 = vadd.f32 %v670, %v2486
    %2488 = vdwg.mxu0
    %2489 = vmatprep.subr.mxu0 0.0
    %2490 = vmatpush1.msra.mxu0 %v615
    %2491 = vmatprep.subr.mxu0 0.0
    %2492 = vmatpush1.msra.mxu0 %v618
    %2493 = vmatprep.subr.mxu0 0.0
    %2494 = vmatpush1.msra.mxu0 %v621
    %2495 = vmatprep.subr.mxu0 0.0
    %2496 = vmatpush1.msra.mxu0 %v624
    %2497 = vmatprep.subr.mxu0 0.0
    %2498 = vmatpush1.msra.mxu0 %v627
    %2499 = vmatprep.subr.mxu0 0.0
    %2500 = vmatpush1.msra.mxu0 %v630
    %2501 = vmatprep.subr.mxu0 0.0
    %2502 = vmatpush1.msra.mxu0 %v633
    %2503 = vmatprep.subr.mxu0 0.0
    %2504 = vmatpush1.msra.mxu0 %v636
    %2505 = vmatprep.subr.mxu0 0.0
    %2506 = vmatpush1.msra.mxu0 %v639
    %2507 = vmatprep.subr.mxu0 0.0
    %2508 = vmatpush1.msra.mxu0 %v642
    %2509 = vmatprep.subr.mxu0 0.0
    %2510 = vmatpush1.msra.mxu0 %v645
    %2511 = vmatprep.subr.mxu0 0.0
    %2512 = vmatpush1.msra.mxu0 %v648
    %2513 = vmatprep.subr.mxu0 0.0
    %2514 = vmatpush1.msra.mxu0 %v651
    %2515 = vmatprep.subr.mxu0 0.0
    %2516 = vmatpush1.msra.mxu0 %v654
    %2517 = vmatprep.subr.mxu0 0.0
    %2518 = vmatpush1.msra.mxu0 %v657
    %2519 = vmatprep.subr.mxu0 0.0
    %2520 = vmatpush1.msra.mxu0 %v660
    %2521 = vmatprep.subr.mxu0 0.0
    %2522 = vmatpush1.msra.mxu0 0.0
    %2523 = vmatprep.subr.mxu0 0.0
    %2524 = vmatpush1.msra.mxu0 0.0
    %2525 = vmatprep.subr.mxu0 0.0
    %2526 = vmatpush1.msra.mxu0 0.0
    %2527 = vmatprep.subr.mxu0 0.0
    %2528 = vmatpush1.msra.mxu0 0.0
    %2529 = vmatprep.subr.mxu0 0.0
    %2530 = vmatpush1.msra.mxu0 0.0
    %2531 = vmatprep.subr.mxu0 0.0
    %2532 = vmatpush1.msra.mxu0 0.0
    %2533 = vmatprep.subr.mxu0 0.0
    %2534 = vmatpush1.msra.mxu0 0.0
    %2535 = vmatprep.subr.mxu0 0.0
    %2536 = vmatpush1.msra.mxu0 0.0
    %2537 = vmatprep.subr.mxu0 0.0
    %2538 = vmatpush1.msra.mxu0 0.0
    %2539 = vmatprep.subr.mxu0 0.0
    %2540 = vmatpush1.msra.mxu0 0.0
    %2541 = vmatprep.subr.mxu0 0.0
    %2542 = vmatpush1.msra.mxu0 0.0
    %2543 = vmatprep.subr.mxu0 0.0
    %2544 = vmatpush1.msra.mxu0 0.0
    %2545 = vmatprep.subr.mxu0 0.0
    %2546 = vmatpush1.msra.mxu0 0.0
    %2547 = vmatprep.subr.mxu0 0.0
    %2548 = vmatpush1.msra.mxu0 0.0
    %2549 = vmatprep.subr.mxu0 0.0
    %2550 = vmatpush1.msra.mxu0 0.0
    %2551 = vmatprep.subr.mxu0 0.0
    %2552 = vmatpush1.msra.mxu0 0.0
    %2553 = vmatprep.mubr.f32.mxu0 0.0
    %2554 = vmatmul.mubr.f32.gmra.mrb[0].mxu0 %v2413
    %v2555 = vpop.f32.mrb[0].mxu0
    %v2556 = vadd.f32 %v674, %v2555
    %v2557 = vpop.f32.mrb[0].mxu0
    %2558 = vdwg.mxu0
    %v2559 = vadd.f32 %v2415, %v2485
    %v2560 = vxor.u32 %v2559, 2147483648
    %v2561 = vmul.f32 %v2560, 1.442695
    %v2562 = vpow.pop %v2561
    %v2563 = vadd.f32 %v2562, 1.0
    %v2564 = vrcp.pop %v2563
    %v2565 = vmul.f32 1.0, %v2564
    %v2566 = vadd.f32 %v2416, %v2487
    %v2567 = vxor.u32 %v2566, 2147483648
    %v2568 = vmul.f32 %v2567, 1.442695
    %v2569 = vpow.pop %v2568
    %v2570 = vadd.f32 %v2569, 1.0
    %v2571 = vrcp.pop %v2570
    %v2572 = vmul.f32 1.0, %v2571
    %v2573 = vmul.f32 %v2565, %v2556
    %v2574 = vadd.f32 %v2417, %v2573
    %v2575 = vtanh.pop %v2574
    %v2576 = vsub.f32 1.0, %v2572
    %v2577 = vmul.f32 %v2576, %v2575
    %v2578 = vmul.f32 %v2572, %v2413
    %v2579 = vadd.f32 %v2577, %v2578
    %v2580 = vstv %s2414
    %vm2581 = vcmp.lt.s32.totalorder %v2580, %v607
    %v2582 = vsel %vm2581, 1, 0
    %2583 = vset.pattern.permute.xlu0 0
    %2584 = vperm.xlu0 %2583, %v2582
    %v2585 = vpop.permute.xlu0 %2584
    %vm2586 = vcmp.eq.s32.totalorder %v2585, 1
    %v2587 = vsel %vm2586, %v2579, %v2413
    %s2588 = sadd.s32 %s609, 11
    %v2589 = vld [vmem:[#allocation3 + $0x108] sm:$0xff]
    %v2590 = vld [vmem:[#allocation3 + $0x110] sm:$0xff]
    %v2591 = vld [vmem:[#allocation3 + $0x118] sm:$0xff]
    %2592 = vmatprep.subr.mxu0 %v614
    %2593 = vmatpush1.msra.mxu0 %v613
    %2594 = vmatprep.subr.mxu0 %v617
    %2595 = vmatpush1.msra.mxu0 %v616
    %2596 = vmatprep.subr.mxu0 %v620
    %2597 = vmatpush1.msra.mxu0 %v619
    %2598 = vmatprep.subr.mxu0 %v623
    %2599 = vmatpush1.msra.mxu0 %v622
    %2600 = vmatprep.subr.mxu0 %v626
    %2601 = vmatpush1.msra.mxu0 %v625
    %2602 = vmatprep.subr.mxu0 %v629
    %2603 = vmatpush1.msra.mxu0 %v628
    %2604 = vmatprep.subr.mxu0 %v632
    %2605 = vmatpush1.msra.mxu0 %v631
    %2606 = vmatprep.subr.mxu0 %v635
    %2607 = vmatpush1.msra.mxu0 %v634
    %2608 = vmatprep.subr.mxu0 %v638
    %2609 = vmatpush1.msra.mxu0 %v637
    %2610 = vmatprep.subr.mxu0 %v641
    %2611 = vmatpush1.msra.mxu0 %v640
    %2612 = vmatprep.subr.mxu0 %v644
    %2613 = vmatpush1.msra.mxu0 %v643
    %2614 = vmatprep.subr.mxu0 %v647
    %2615 = vmatpush1.msra.mxu0 %v646
    %2616 = vmatprep.subr.mxu0 %v650
    %2617 = vmatpush1.msra.mxu0 %v649
    %2618 = vmatprep.subr.mxu0 %v653
    %2619 = vmatpush1.msra.mxu0 %v652
    %2620 = vmatprep.subr.mxu0 %v656
    %2621 = vmatpush1.msra.mxu0 %v655
    %2622 = vmatprep.subr.mxu0 %v659
    %2623 = vmatpush1.msra.mxu0 %v658
    %2624 = vmatprep.subr.mxu0 0.0
    %2625 = vmatpush1.msra.mxu0 0.0
    %2626 = vmatprep.subr.mxu0 0.0
    %2627 = vmatpush1.msra.mxu0 0.0
    %2628 = vmatprep.subr.mxu0 0.0
    %2629 = vmatpush1.msra.mxu0 0.0
    %2630 = vmatprep.subr.mxu0 0.0
    %2631 = vmatpush1.msra.mxu0 0.0
    %2632 = vmatprep.subr.mxu0 0.0
    %2633 = vmatpush1.msra.mxu0 0.0
    %2634 = vmatprep.subr.mxu0 0.0
    %2635 = vmatpush1.msra.mxu0 0.0
    %2636 = vmatprep.subr.mxu0 0.0
    %2637 = vmatpush1.msra.mxu0 0.0
    %2638 = vmatprep.subr.mxu0 0.0
    %2639 = vmatpush1.msra.mxu0 0.0
    %2640 = vmatprep.subr.mxu0 0.0
    %2641 = vmatpush1.msra.mxu0 0.0
    %2642 = vmatprep.subr.mxu0 0.0
    %2643 = vmatpush1.msra.mxu0 0.0
    %2644 = vmatprep.subr.mxu0 0.0
    %2645 = vmatpush1.msra.mxu0 0.0
    %2646 = vmatprep.subr.mxu0 0.0
    %2647 = vmatpush1.msra.mxu0 0.0
    %2648 = vmatprep.subr.mxu0 0.0
    %2649 = vmatpush1.msra.mxu0 0.0
    %2650 = vmatprep.subr.mxu0 0.0
    %2651 = vmatpush1.msra.mxu0 0.0
    %2652 = vmatprep.subr.mxu0 0.0
    %2653 = vmatpush1.msra.mxu0 0.0
    %2654 = vmatprep.subr.mxu0 0.0
    %2655 = vmatpush1.msra.mxu0 0.0
    %2656 = vmatprep.mubr.f32.mxu0 0.0
    %2657 = vmatmul.mubr.f32.gmra.mrb[0].mxu0 %v2587
    %v2658 = vpop.f32.mrb[0].mxu0
    %v2659 = vadd.f32 %v666, %v2658
    %v2660 = vpop.f32.mrb[0].mxu0
    %v2661 = vadd.f32 %v670, %v2660
    %2662 = vdwg.mxu0
    %2663 = vmatprep.subr.mxu0 0.0
    %2664 = vmatpush1.msra.mxu0 %v615
    %2665 = vmatprep.subr.mxu0 0.0
    %2666 = vmatpush1.msra.mxu0 %v618
    %2667 = vmatprep.subr.mxu0 0.0
    %2668 = vmatpush1.msra.mxu0 %v621
    %2669 = vmatprep.subr.mxu0 0.0
    %2670 = vmatpush1.msra.mxu0 %v624
    %2671 = vmatprep.subr.mxu0 0.0
    %2672 = vmatpush1.msra.mxu0 %v627
    %2673 = vmatprep.subr.mxu0 0.0
    %2674 = vmatpush1.msra.mxu0 %v630
    %2675 = vmatprep.subr.mxu0 0.0
    %2676 = vmatpush1.msra.mxu0 %v633
    %2677 = vmatprep.subr.mxu0 0.0
    %2678 = vmatpush1.msra.mxu0 %v636
    %2679 = vmatprep.subr.mxu0 0.0
    %2680 = vmatpush1.msra.mxu0 %v639
    %2681 = vmatprep.subr.mxu0 0.0
    %2682 = vmatpush1.msra.mxu0 %v642
    %2683 = vmatprep.subr.mxu0 0.0
    %2684 = vmatpush1.msra.mxu0 %v645
    %2685 = vmatprep.subr.mxu0 0.0
    %2686 = vmatpush1.msra.mxu0 %v648
    %2687 = vmatprep.subr.mxu0 0.0
    %2688 = vmatpush1.msra.mxu0 %v651
    %2689 = vmatprep.subr.mxu0 0.0
    %2690 = vmatpush1.msra.mxu0 %v654
    %2691 = vmatprep.subr.mxu0 0.0
    %2692 = vmatpush1.msra.mxu0 %v657
    %2693 = vmatprep.subr.mxu0 0.0
    %2694 = vmatpush1.msra.mxu0 %v660
    %2695 = vmatprep.subr.mxu0 0.0
    %2696 = vmatpush1.msra.mxu0 0.0
    %2697 = vmatprep.subr.mxu0 0.0
    %2698 = vmatpush1.msra.mxu0 0.0
    %2699 = vmatprep.subr.mxu0 0.0
    %2700 = vmatpush1.msra.mxu0 0.0
    %2701 = vmatprep.subr.mxu0 0.0
    %2702 = vmatpush1.msra.mxu0 0.0
    %2703 = vmatprep.subr.mxu0 0.0
    %2704 = vmatpush1.msra.mxu0 0.0
    %2705 = vmatprep.subr.mxu0 0.0
    %2706 = vmatpush1.msra.mxu0 0.0
    %2707 = vmatprep.subr.mxu0 0.0
    %2708 = vmatpush1.msra.mxu0 0.0
    %2709 = vmatprep.subr.mxu0 0.0
    %2710 = vmatpush1.msra.mxu0 0.0
    %2711 = vmatprep.subr.mxu0 0.0
    %2712 = vmatpush1.msra.mxu0 0.0
    %2713 = vmatprep.subr.mxu0 0.0
    %2714 = vmatpush1.msra.mxu0 0.0
    %2715 = vmatprep.subr.mxu0 0.0
    %2716 = vmatpush1.msra.mxu0 0.0
    %2717 = vmatprep.subr.mxu0 0.0
    %2718 = vmatpush1.msra.mxu0 0.0
    %2719 = vmatprep.subr.mxu0 0.0
    %2720 = vmatpush1.msra.mxu0 0.0
    %2721 = vmatprep.subr.mxu0 0.0
    %2722 = vmatpush1.msra.mxu0 0.0
    %2723 = vmatprep.subr.mxu0 0.0
    %2724 = vmatpush1.msra.mxu0 0.0
    %2725 = vmatprep.subr.mxu0 0.0
    %2726 = vmatpush1.msra.mxu0 0.0
    %2727 = vmatprep.mubr.f32.mxu0 0.0
    %2728 = vmatmul.mubr.f32.gmra.mrb[0].mxu0 %v2587
    %v2729 = vpop.f32.mrb[0].mxu0
    %v2730 = vadd.f32 %v674, %v2729
    %v2731 = vpop.f32.mrb[0].mxu0
    %2732 = vdwg.mxu0
    %v2733 = vadd.f32 %v2589, %v2659
    %v2734 = vxor.u32 %v2733, 2147483648
    %v2735 = vmul.f32 %v2734, 1.442695
    %v2736 = vpow.pop %v2735
    %v2737 = vadd.f32 %v2736, 1.0
    %v2738 = vrcp.pop %v2737
    %v2739 = vmul.f32 1.0, %v2738
    %v2740 = vadd.f32 %v2590, %v2661
    %v2741 = vxor.u32 %v2740, 2147483648
    %v2742 = vmul.f32 %v2741, 1.442695
    %v2743 = vpow.pop %v2742
    %v2744 = vadd.f32 %v2743, 1.0
    %v2745 = vrcp.pop %v2744
    %v2746 = vmul.f32 1.0, %v2745
    %v2747 = vmul.f32 %v2739, %v2730
    %v2748 = vadd.f32 %v2591, %v2747
    %v2749 = vtanh.pop %v2748
    %v2750 = vsub.f32 1.0, %v2746
    %v2751 = vmul.f32 %v2750, %v2749
    %v2752 = vmul.f32 %v2746, %v2587
    %v2753 = vadd.f32 %v2751, %v2752
    %v2754 = vstv %s2588
    %vm2755 = vcmp.lt.s32.totalorder %v2754, %v607
    %v2756 = vsel %vm2755, 1, 0
    %2757 = vset.pattern.permute.xlu0 0
    %2758 = vperm.xlu0 %2757, %v2756
    %v2759 = vpop.permute.xlu0 %2758
    %vm2760 = vcmp.eq.s32.totalorder %v2759, 1
    %v2761 = vsel %vm2760, %v2753, %v2587
    %s2762 = sadd.s32 %s609, 12
    %v2763 = vld [vmem:[#allocation3 + $0x120] sm:$0xff]
    %v2764 = vld [vmem:[#allocation3 + $0x128] sm:$0xff]
    %v2765 = vld [vmem:[#allocation3 + $0x130] sm:$0xff]
    %2766 = vmatprep.subr.mxu0 %v614
    %2767 = vmatpush1.msra.mxu0 %v613
    %2768 = vmatprep.subr.mxu0 %v617
    %2769 = vmatpush1.msra.mxu0 %v616
    %2770 = vmatprep.subr.mxu0 %v620
    %2771 = vmatpush1.msra.mxu0 %v619
    %2772 = vmatprep.subr.mxu0 %v623
    %2773 = vmatpush1.msra.mxu0 %v622
    %2774 = vmatprep.subr.mxu0 %v626
    %2775 = vmatpush1.msra.mxu0 %v625
    %2776 = vmatprep.subr.mxu0 %v629
    %2777 = vmatpush1.msra.mxu0 %v628
    %2778 = vmatprep.subr.mxu0 %v632
    %2779 = vmatpush1.msra.mxu0 %v631
    %2780 = vmatprep.subr.mxu0 %v635
    %2781 = vmatpush1.msra.mxu0 %v634
    %2782 = vmatprep.subr.mxu0 %v638
    %2783 = vmatpush1.msra.mxu0 %v637
    %2784 = vmatprep.subr.mxu0 %v641
    %2785 = vmatpush1.msra.mxu0 %v640
    %2786 = vmatprep.subr.mxu0 %v644
    %2787 = vmatpush1.msra.mxu0 %v643
    %2788 = vmatprep.subr.mxu0 %v647
    %2789 = vmatpush1.msra.mxu0 %v646
    %2790 = vmatprep.subr.mxu0 %v650
    %2791 = vmatpush1.msra.mxu0 %v649
    %2792 = vmatprep.subr.mxu0 %v653
    %2793 = vmatpush1.msra.mxu0 %v652
    %2794 = vmatprep.subr.mxu0 %v656
    %2795 = vmatpush1.msra.mxu0 %v655
    %2796 = vmatprep.subr.mxu0 %v659
    %2797 = vmatpush1.msra.mxu0 %v658
    %2798 = vmatprep.subr.mxu0 0.0
    %2799 = vmatpush1.msra.mxu0 0.0
    %2800 = vmatprep.subr.mxu0 0.0
    %2801 = vmatpush1.msra.mxu0 0.0
    %2802 = vmatprep.subr.mxu0 0.0
    %2803 = vmatpush1.msra.mxu0 0.0
    %2804 = vmatprep.subr.mxu0 0.0
    %2805 = vmatpush1.msra.mxu0 0.0
    %2806 = vmatprep.subr.mxu0 0.0
    %2807 = vmatpush1.msra.mxu0 0.0
    %2808 = vmatprep.subr.mxu0 0.0
    %2809 = vmatpush1.msra.mxu0 0.0
    %2810 = vmatprep.subr.mxu0 0.0
    %2811 = vmatpush1.msra.mxu0 0.0
    %2812 = vmatprep.subr.mxu0 0.0
    %2813 = vmatpush1.msra.mxu0 0.0
    %2814 = vmatprep.subr.mxu0 0.0
    %2815 = vmatpush1.msra.mxu0 0.0
    %2816 = vmatprep.subr.mxu0 0.0
    %2817 = vmatpush1.msra.mxu0 0.0
    %2818 = vmatprep.subr.mxu0 0.0
    %2819 = vmatpush1.msra.mxu0 0.0
    %2820 = vmatprep.subr.mxu0 0.0
    %2821 = vmatpush1.msra.mxu0 0.0
    %2822 = vmatprep.subr.mxu0 0.0
    %2823 = vmatpush1.msra.mxu0 0.0
    %2824 = vmatprep.subr.mxu0 0.0
    %2825 = vmatpush1.msra.mxu0 0.0
    %2826 = vmatprep.subr.mxu0 0.0
    %2827 = vmatpush1.msra.mxu0 0.0
    %2828 = vmatprep.subr.mxu0 0.0
    %2829 = vmatpush1.msra.mxu0 0.0
    %2830 = vmatprep.mubr.f32.mxu0 0.0
    %2831 = vmatmul.mubr.f32.gmra.mrb[0].mxu0 %v2761
    %v2832 = vpop.f32.mrb[0].mxu0
    %v2833 = vadd.f32 %v666, %v2832
    %v2834 = vpop.f32.mrb[0].mxu0
    %v2835 = vadd.f32 %v670, %v2834
    %2836 = vdwg.mxu0
    %2837 = vmatprep.subr.mxu0 0.0
    %2838 = vmatpush1.msra.mxu0 %v615
    %2839 = vmatprep.subr.mxu0 0.0
    %2840 = vmatpush1.msra.mxu0 %v618
    %2841 = vmatprep.subr.mxu0 0.0
    %2842 = vmatpush1.msra.mxu0 %v621
    %2843 = vmatprep.subr.mxu0 0.0
    %2844 = vmatpush1.msra.mxu0 %v624
    %2845 = vmatprep.subr.mxu0 0.0
    %2846 = vmatpush1.msra.mxu0 %v627
    %2847 = vmatprep.subr.mxu0 0.0
    %2848 = vmatpush1.msra.mxu0 %v630
    %2849 = vmatprep.subr.mxu0 0.0
    %2850 = vmatpush1.msra.mxu0 %v633
    %2851 = vmatprep.subr.mxu0 0.0
    %2852 = vmatpush1.msra.mxu0 %v636
    %2853 = vmatprep.subr.mxu0 0.0
    %2854 = vmatpush1.msra.mxu0 %v639
    %2855 = vmatprep.subr.mxu0 0.0
    %2856 = vmatpush1.msra.mxu0 %v642
    %2857 = vmatprep.subr.mxu0 0.0
    %2858 = vmatpush1.msra.mxu0 %v645
    %2859 = vmatprep.subr.mxu0 0.0
    %2860 = vmatpush1.msra.mxu0 %v648
    %2861 = vmatprep.subr.mxu0 0.0
    %2862 = vmatpush1.msra.mxu0 %v651
    %2863 = vmatprep.subr.mxu0 0.0
    %2864 = vmatpush1.msra.mxu0 %v654
    %2865 = vmatprep.subr.mxu0 0.0
    %2866 = vmatpush1.msra.mxu0 %v657
    %2867 = vmatprep.subr.mxu0 0.0
    %2868 = vmatpush1.msra.mxu0 %v660
    %2869 = vmatprep.subr.mxu0 0.0
    %2870 = vmatpush1.msra.mxu0 0.0
    %2871 = vmatprep.subr.mxu0 0.0
    %2872 = vmatpush1.msra.mxu0 0.0
    %2873 = vmatprep.subr.mxu0 0.0
    %2874 = vmatpush1.msra.mxu0 0.0
    %2875 = vmatprep.subr.mxu0 0.0
    %2876 = vmatpush1.msra.mxu0 0.0
    %2877 = vmatprep.subr.mxu0 0.0
    %2878 = vmatpush1.msra.mxu0 0.0
    %2879 = vmatprep.subr.mxu0 0.0
    %2880 = vmatpush1.msra.mxu0 0.0
    %2881 = vmatprep.subr.mxu0 0.0
    %2882 = vmatpush1.msra.mxu0 0.0
    %2883 = vmatprep.subr.mxu0 0.0
    %2884 = vmatpush1.msra.mxu0 0.0
    %2885 = vmatprep.subr.mxu0 0.0
    %2886 = vmatpush1.msra.mxu0 0.0
    %2887 = vmatprep.subr.mxu0 0.0
    %2888 = vmatpush1.msra.mxu0 0.0
    %2889 = vmatprep.subr.mxu0 0.0
    %2890 = vmatpush1.msra.mxu0 0.0
    %2891 = vmatprep.subr.mxu0 0.0
    %2892 = vmatpush1.msra.mxu0 0.0
    %2893 = vmatprep.subr.mxu0 0.0
    %2894 = vmatpush1.msra.mxu0 0.0
    %2895 = vmatprep.subr.mxu0 0.0
    %2896 = vmatpush1.msra.mxu0 0.0
    %2897 = vmatprep.subr.mxu0 0.0
    %2898 = vmatpush1.msra.mxu0 0.0
    %2899 = vmatprep.subr.mxu0 0.0
    %2900 = vmatpush1.msra.mxu0 0.0
    %2901 = vmatprep.mubr.f32.mxu0 0.0
    %2902 = vmatmul.mubr.f32.gmra.mrb[0].mxu0 %v2761
    %v2903 = vpop.f32.mrb[0].mxu0
    %v2904 = vadd.f32 %v674, %v2903
    %v2905 = vpop.f32.mrb[0].mxu0
    %2906 = vdwg.mxu0
    %v2907 = vadd.f32 %v2763, %v2833
    %v2908 = vxor.u32 %v2907, 2147483648
    %v2909 = vmul.f32 %v2908, 1.442695
    %v2910 = vpow.pop %v2909
    %v2911 = vadd.f32 %v2910, 1.0
    %v2912 = vrcp.pop %v2911
    %v2913 = vmul.f32 1.0, %v2912
    %v2914 = vadd.f32 %v2764, %v2835
    %v2915 = vxor.u32 %v2914, 2147483648
    %v2916 = vmul.f32 %v2915, 1.442695
    %v2917 = vpow.pop %v2916
    %v2918 = vadd.f32 %v2917, 1.0
    %v2919 = vrcp.pop %v2918
    %v2920 = vmul.f32 1.0, %v2919
    %v2921 = vmul.f32 %v2913, %v2904
    %v2922 = vadd.f32 %v2765, %v2921
    %v2923 = vtanh.pop %v2922
    %v2924 = vsub.f32 1.0, %v2920
    %v2925 = vmul.f32 %v2924, %v2923
    %v2926 = vmul.f32 %v2920, %v2761
    %v2927 = vadd.f32 %v2925, %v2926
    %v2928 = vstv %s2762
    %vm2929 = vcmp.lt.s32.totalorder %v2928, %v607
    %v2930 = vsel %vm2929, 1, 0
    %2931 = vset.pattern.permute.xlu0 0
    %2932 = vperm.xlu0 %2931, %v2930
    %v2933 = vpop.permute.xlu0 %2932
    %vm2934 = vcmp.eq.s32.totalorder %v2933, 1
    %v2935 = vsel %vm2934, %v2927, %v2761
    %s2936 = sadd.s32 %s609, 13
    %v2937 = vld [vmem:[#allocation3 + $0x138] sm:$0xff]
    %v2938 = vld [vmem:[#allocation3 + $0x140] sm:$0xff]
    %v2939 = vld [vmem:[#allocation3 + $0x148] sm:$0xff]
    %2940 = vmatprep.subr.mxu0 %v614
    %2941 = vmatpush1.msra.mxu0 %v613
    %2942 = vmatprep.subr.mxu0 %v617
    %2943 = vmatpush1.msra.mxu0 %v616
    %2944 = vmatprep.subr.mxu0 %v620
    %2945 = vmatpush1.msra.mxu0 %v619
    %2946 = vmatprep.subr.mxu0 %v623
    %2947 = vmatpush1.msra.mxu0 %v622
    %2948 = vmatprep.subr.mxu0 %v626
    %2949 = vmatpush1.msra.mxu0 %v625
    %2950 = vmatprep.subr.mxu0 %v629
    %2951 = vmatpush1.msra.mxu0 %v628
    %2952 = vmatprep.subr.mxu0 %v632
    %2953 = vmatpush1.msra.mxu0 %v631
    %2954 = vmatprep.subr.mxu0 %v635
    %2955 = vmatpush1.msra.mxu0 %v634
    %2956 = vmatprep.subr.mxu0 %v638
    %2957 = vmatpush1.msra.mxu0 %v637
    %2958 = vmatprep.subr.mxu0 %v641
    %2959 = vmatpush1.msra.mxu0 %v640
    %2960 = vmatprep.subr.mxu0 %v644
    %2961 = vmatpush1.msra.mxu0 %v643
    %2962 = vmatprep.subr.mxu0 %v647
    %2963 = vmatpush1.msra.mxu0 %v646
    %2964 = vmatprep.subr.mxu0 %v650
    %2965 = vmatpush1.msra.mxu0 %v649
    %2966 = vmatprep.subr.mxu0 %v653
    %2967 = vmatpush1.msra.mxu0 %v652
    %2968 = vmatprep.subr.mxu0 %v656
    %2969 = vmatpush1.msra.mxu0 %v655
    %2970 = vmatprep.subr.mxu0 %v659
    %2971 = vmatpush1.msra.mxu0 %v658
    %2972 = vmatprep.subr.mxu0 0.0
    %2973 = vmatpush1.msra.mxu0 0.0
    %2974 = vmatprep.subr.mxu0 0.0
    %2975 = vmatpush1.msra.mxu0 0.0
    %2976 = vmatprep.subr.mxu0 0.0
    %2977 = vmatpush1.msra.mxu0 0.0
    %2978 = vmatprep.subr.mxu0 0.0
    %2979 = vmatpush1.msra.mxu0 0.0
    %2980 = vmatprep.subr.mxu0 0.0
    %2981 = vmatpush1.msra.mxu0 0.0
    %2982 = vmatprep.subr.mxu0 0.0
    %2983 = vmatpush1.msra.mxu0 0.0
    %2984 = vmatprep.subr.mxu0 0.0
    %2985 = vmatpush1.msra.mxu0 0.0
    %2986 = vmatprep.subr.mxu0 0.0
    %2987 = vmatpush1.msra.mxu0 0.0
    %2988 = vmatprep.subr.mxu0 0.0
    %2989 = vmatpush1.msra.mxu0 0.0
    %2990 = vmatprep.subr.mxu0 0.0
    %2991 = vmatpush1.msra.mxu0 0.0
    %2992 = vmatprep.subr.mxu0 0.0
    %2993 = vmatpush1.msra.mxu0 0.0
    %2994 = vmatprep.subr.mxu0 0.0
    %2995 = vmatpush1.msra.mxu0 0.0
    %2996 = vmatprep.subr.mxu0 0.0
    %2997 = vmatpush1.msra.mxu0 0.0
    %2998 = vmatprep.subr.mxu0 0.0
    %2999 = vmatpush1.msra.mxu0 0.0
    %3000 = vmatprep.subr.mxu0 0.0
    %3001 = vmatpush1.msra.mxu0 0.0
    %3002 = vmatprep.subr.mxu0 0.0
    %3003 = vmatpush1.msra.mxu0 0.0
    %3004 = vmatprep.mubr.f32.mxu0 0.0
    %3005 = vmatmul.mubr.f32.gmra.mrb[0].mxu0 %v2935
    %v3006 = vpop.f32.mrb[0].mxu0
    %v3007 = vadd.f32 %v666, %v3006
    %v3008 = vpop.f32.mrb[0].mxu0
    %v3009 = vadd.f32 %v670, %v3008
    %3010 = vdwg.mxu0
    %3011 = vmatprep.subr.mxu0 0.0
    %3012 = vmatpush1.msra.mxu0 %v615
    %3013 = vmatprep.subr.mxu0 0.0
    %3014 = vmatpush1.msra.mxu0 %v618
    %3015 = vmatprep.subr.mxu0 0.0
    %3016 = vmatpush1.msra.mxu0 %v621
    %3017 = vmatprep.subr.mxu0 0.0
    %3018 = vmatpush1.msra.mxu0 %v624
    %3019 = vmatprep.subr.mxu0 0.0
    %3020 = vmatpush1.msra.mxu0 %v627
    %3021 = vmatprep.subr.mxu0 0.0
    %3022 = vmatpush1.msra.mxu0 %v630
    %3023 = vmatprep.subr.mxu0 0.0
    %3024 = vmatpush1.msra.mxu0 %v633
    %3025 = vmatprep.subr.mxu0 0.0
    %3026 = vmatpush1.msra.mxu0 %v636
    %3027 = vmatprep.subr.mxu0 0.0
    %3028 = vmatpush1.msra.mxu0 %v639
    %3029 = vmatprep.subr.mxu0 0.0
    %3030 = vmatpush1.msra.mxu0 %v642
    %3031 = vmatprep.subr.mxu0 0.0
    %3032 = vmatpush1.msra.mxu0 %v645
    %3033 = vmatprep.subr.mxu0 0.0
    %3034 = vmatpush1.msra.mxu0 %v648
    %3035 = vmatprep.subr.mxu0 0.0
    %3036 = vmatpush1.msra.mxu0 %v651
    %3037 = vmatprep.subr.mxu0 0.0
    %3038 = vmatpush1.msra.mxu0 %v654
    %3039 = vmatprep.subr.mxu0 0.0
    %3040 = vmatpush1.msra.mxu0 %v657
    %3041 = vmatprep.subr.mxu0 0.0
    %3042 = vmatpush1.msra.mxu0 %v660
    %3043 = vmatprep.subr.mxu0 0.0
    %3044 = vmatpush1.msra.mxu0 0.0
    %3045 = vmatprep.subr.mxu0 0.0
    %3046 = vmatpush1.msra.mxu0 0.0
    %3047 = vmatprep.subr.mxu0 0.0
    %3048 = vmatpush1.msra.mxu0 0.0
    %3049 = vmatprep.subr.mxu0 0.0
    %3050 = vmatpush1.msra.mxu0 0.0
    %3051 = vmatprep.subr.mxu0 0.0
    %3052 = vmatpush1.msra.mxu0 0.0
    %3053 = vmatprep.subr.mxu0 0.0
    %3054 = vmatpush1.msra.mxu0 0.0
    %3055 = vmatprep.subr.mxu0 0.0
    %3056 = vmatpush1.msra.mxu0 0.0
    %3057 = vmatprep.subr.mxu0 0.0
    %3058 = vmatpush1.msra.mxu0 0.0
    %3059 = vmatprep.subr.mxu0 0.0
    %3060 = vmatpush1.msra.mxu0 0.0
    %3061 = vmatprep.subr.mxu0 0.0
    %3062 = vmatpush1.msra.mxu0 0.0
    %3063 = vmatprep.subr.mxu0 0.0
    %3064 = vmatpush1.msra.mxu0 0.0
    %3065 = vmatprep.subr.mxu0 0.0
    %3066 = vmatpush1.msra.mxu0 0.0
    %3067 = vmatprep.subr.mxu0 0.0
    %3068 = vmatpush1.msra.mxu0 0.0
    %3069 = vmatprep.subr.mxu0 0.0
    %3070 = vmatpush1.msra.mxu0 0.0
    %3071 = vmatprep.subr.mxu0 0.0
    %3072 = vmatpush1.msra.mxu0 0.0
    %3073 = vmatprep.subr.mxu0 0.0
    %3074 = vmatpush1.msra.mxu0 0.0
    %3075 = vmatprep.mubr.f32.mxu0 0.0
    %3076 = vmatmul.mubr.f32.gmra.mrb[0].mxu0 %v2935
    %v3077 = vpop.f32.mrb[0].mxu0
    %v3078 = vadd.f32 %v674, %v3077
    %v3079 = vpop.f32.mrb[0].mxu0
    %3080 = vdwg.mxu0
    %v3081 = vadd.f32 %v2937, %v3007
    %v3082 = vxor.u32 %v3081, 2147483648
    %v3083 = vmul.f32 %v3082, 1.442695
    %v3084 = vpow.pop %v3083
    %v3085 = vadd.f32 %v3084, 1.0
    %v3086 = vrcp.pop %v3085
    %v3087 = vmul.f32 1.0, %v3086
    %v3088 = vadd.f32 %v2938, %v3009
    %v3089 = vxor.u32 %v3088, 2147483648
    %v3090 = vmul.f32 %v3089, 1.442695
    %v3091 = vpow.pop %v3090
    %v3092 = vadd.f32 %v3091, 1.0
    %v3093 = vrcp.pop %v3092
    %v3094 = vmul.f32 1.0, %v3093
    %v3095 = vmul.f32 %v3087, %v3078
    %v3096 = vadd.f32 %v2939, %v3095
    %v3097 = vtanh.pop %v3096
    %v3098 = vsub.f32 1.0, %v3094
    %v3099 = vmul.f32 %v3098, %v3097
    %v3100 = vmul.f32 %v3094, %v2935
    %v3101 = vadd.f32 %v3099, %v3100
    %v3102 = vstv %s2936
    %vm3103 = vcmp.lt.s32.totalorder %v3102, %v607
    %v3104 = vsel %vm3103, 1, 0
    %3105 = vset.pattern.permute.xlu0 0
    %3106 = vperm.xlu0 %3105, %v3104
    %v3107 = vpop.permute.xlu0 %3106
    %vm3108 = vcmp.eq.s32.totalorder %v3107, 1
    %v3109 = vsel %vm3108, %v3101, %v2935
    %s3110 = sadd.s32 %s609, 14
    %v3111 = vld [vmem:[#allocation3 + $0x150] sm:$0xff]
    %v3112 = vld [vmem:[#allocation3 + $0x158] sm:$0xff]
    %v3113 = vld [vmem:[#allocation3 + $0x160] sm:$0xff]
    %3114 = vmatprep.subr.mxu0 %v614
    %3115 = vmatpush1.msra.mxu0 %v613
    %3116 = vmatprep.subr.mxu0 %v617
    %3117 = vmatpush1.msra.mxu0 %v616
    %3118 = vmatprep.subr.mxu0 %v620
    %3119 = vmatpush1.msra.mxu0 %v619
    %3120 = vmatprep.subr.mxu0 %v623
    %3121 = vmatpush1.msra.mxu0 %v622
    %3122 = vmatprep.subr.mxu0 %v626
    %3123 = vmatpush1.msra.mxu0 %v625
    %3124 = vmatprep.subr.mxu0 %v629
    %3125 = vmatpush1.msra.mxu0 %v628
    %3126 = vmatprep.subr.mxu0 %v632
    %3127 = vmatpush1.msra.mxu0 %v631
    %3128 = vmatprep.subr.mxu0 %v635
    %3129 = vmatpush1.msra.mxu0 %v634
    %3130 = vmatprep.subr.mxu0 %v638
    %3131 = vmatpush1.msra.mxu0 %v637
    %3132 = vmatprep.subr.mxu0 %v641
    %3133 = vmatpush1.msra.mxu0 %v640
    %3134 = vmatprep.subr.mxu0 %v644
    %3135 = vmatpush1.msra.mxu0 %v643
    %3136 = vmatprep.subr.mxu0 %v647
    %3137 = vmatpush1.msra.mxu0 %v646
    %3138 = vmatprep.subr.mxu0 %v650
    %3139 = vmatpush1.msra.mxu0 %v649
    %3140 = vmatprep.subr.mxu0 %v653
    %3141 = vmatpush1.msra.mxu0 %v652
    %3142 = vmatprep.subr.mxu0 %v656
    %3143 = vmatpush1.msra.mxu0 %v655
    %3144 = vmatprep.subr.mxu0 %v659
    %3145 = vmatpush1.msra.mxu0 %v658
    %3146 = vmatprep.subr.mxu0 0.0
    %3147 = vmatpush1.msra.mxu0 0.0
    %3148 = vmatprep.subr.mxu0 0.0
    %3149 = vmatpush1.msra.mxu0 0.0
    %3150 = vmatprep.subr.mxu0 0.0
    %3151 = vmatpush1.msra.mxu0 0.0
    %3152 = vmatprep.subr.mxu0 0.0
    %3153 = vmatpush1.msra.mxu0 0.0
    %3154 = vmatprep.subr.mxu0 0.0
    %3155 = vmatpush1.msra.mxu0 0.0
    %3156 = vmatprep.subr.mxu0 0.0
    %3157 = vmatpush1.msra.mxu0 0.0
    %3158 = vmatprep.subr.mxu0 0.0
    %3159 = vmatpush1.msra.mxu0 0.0
    %3160 = vmatprep.subr.mxu0 0.0
    %3161 = vmatpush1.msra.mxu0 0.0
    %3162 = vmatprep.subr.mxu0 0.0
    %3163 = vmatpush1.msra.mxu0 0.0
    %3164 = vmatprep.subr.mxu0 0.0
    %3165 = vmatpush1.msra.mxu0 0.0
    %3166 = vmatprep.subr.mxu0 0.0
    %3167 = vmatpush1.msra.mxu0 0.0
    %3168 = vmatprep.subr.mxu0 0.0
    %3169 = vmatpush1.msra.mxu0 0.0
    %3170 = vmatprep.subr.mxu0 0.0
    %3171 = vmatpush1.msra.mxu0 0.0
    %3172 = vmatprep.subr.mxu0 0.0
    %3173 = vmatpush1.msra.mxu0 0.0
    %3174 = vmatprep.subr.mxu0 0.0
    %3175 = vmatpush1.msra.mxu0 0.0
    %3176 = vmatprep.subr.mxu0 0.0
    %3177 = vmatpush1.msra.mxu0 0.0
    %3178 = vmatprep.mubr.f32.mxu0 0.0
    %3179 = vmatmul.mubr.f32.gmra.mrb[0].mxu0 %v3109
    %v3180 = vpop.f32.mrb[0].mxu0
    %v3181 = vadd.f32 %v666, %v3180
    %v3182 = vpop.f32.mrb[0].mxu0
    %v3183 = vadd.f32 %v670, %v3182
    %3184 = vdwg.mxu0
    %3185 = vmatprep.subr.mxu0 0.0
    %3186 = vmatpush1.msra.mxu0 %v615
    %3187 = vmatprep.subr.mxu0 0.0
    %3188 = vmatpush1.msra.mxu0 %v618
    %3189 = vmatprep.subr.mxu0 0.0
    %3190 = vmatpush1.msra.mxu0 %v621
    %3191 = vmatprep.subr.mxu0 0.0
    %3192 = vmatpush1.msra.mxu0 %v624
    %3193 = vmatprep.subr.mxu0 0.0
    %3194 = vmatpush1.msra.mxu0 %v627
    %3195 = vmatprep.subr.mxu0 0.0
    %3196 = vmatpush1.msra.mxu0 %v630
    %3197 = vmatprep.subr.mxu0 0.0
    %3198 = vmatpush1.msra.mxu0 %v633
    %3199 = vmatprep.subr.mxu0 0.0
    %3200 = vmatpush1.msra.mxu0 %v636
    %3201 = vmatprep.subr.mxu0 0.0
    %3202 = vmatpush1.msra.mxu0 %v639
    %3203 = vmatprep.subr.mxu0 0.0
    %3204 = vmatpush1.msra.mxu0 %v642
    %3205 = vmatprep.subr.mxu0 0.0
    %3206 = vmatpush1.msra.mxu0 %v645
    %3207 = vmatprep.subr.mxu0 0.0
    %3208 = vmatpush1.msra.mxu0 %v648
    %3209 = vmatprep.subr.mxu0 0.0
    %3210 = vmatpush1.msra.mxu0 %v651
    %3211 = vmatprep.subr.mxu0 0.0
    %3212 = vmatpush1.msra.mxu0 %v654
    %3213 = vmatprep.subr.mxu0 0.0
    %3214 = vmatpush1.msra.mxu0 %v657
    %3215 = vmatprep.subr.mxu0 0.0
    %3216 = vmatpush1.msra.mxu0 %v660
    %3217 = vmatprep.subr.mxu0 0.0
    %3218 = vmatpush1.msra.mxu0 0.0
    %3219 = vmatprep.subr.mxu0 0.0
    %3220 = vmatpush1.msra.mxu0 0.0
    %3221 = vmatprep.subr.mxu0 0.0
    %3222 = vmatpush1.msra.mxu0 0.0
    %3223 = vmatprep.subr.mxu0 0.0
    %3224 = vmatpush1.msra.mxu0 0.0
    %3225 = vmatprep.subr.mxu0 0.0
    %3226 = vmatpush1.msra.mxu0 0.0
    %3227 = vmatprep.subr.mxu0 0.0
    %3228 = vmatpush1.msra.mxu0 0.0
    %3229 = vmatprep.subr.mxu0 0.0
    %3230 = vmatpush1.msra.mxu0 0.0
    %3231 = vmatprep.subr.mxu0 0.0
    %3232 = vmatpush1.msra.mxu0 0.0
    %3233 = vmatprep.subr.mxu0 0.0
    %3234 = vmatpush1.msra.mxu0 0.0
    %3235 = vmatprep.subr.mxu0 0.0
    %3236 = vmatpush1.msra.mxu0 0.0
    %3237 = vmatprep.subr.mxu0 0.0
    %3238 = vmatpush1.msra.mxu0 0.0
    %3239 = vmatprep.subr.mxu0 0.0
    %3240 = vmatpush1.msra.mxu0 0.0
    %3241 = vmatprep.subr.mxu0 0.0
    %3242 = vmatpush1.msra.mxu0 0.0
    %3243 = vmatprep.subr.mxu0 0.0
    %3244 = vmatpush1.msra.mxu0 0.0
    %3245 = vmatprep.subr.mxu0 0.0
    %3246 = vmatpush1.msra.mxu0 0.0
    %3247 = vmatprep.subr.mxu0 0.0
    %3248 = vmatpush1.msra.mxu0 0.0
    %3249 = vmatprep.mubr.f32.mxu0 0.0
    %3250 = vmatmul.mubr.f32.gmra.mrb[0].mxu0 %v3109
    %v3251 = vpop.f32.mrb[0].mxu0
    %v3252 = vadd.f32 %v674, %v3251
    %v3253 = vpop.f32.mrb[0].mxu0
    %3254 = vdwg.mxu0
    %v3255 = vadd.f32 %v3111, %v3181
    %v3256 = vxor.u32 %v3255, 2147483648
    %v3257 = vmul.f32 %v3256, 1.442695
    %v3258 = vpow.pop %v3257
    %v3259 = vadd.f32 %v3258, 1.0
    %v3260 = vrcp.pop %v3259
    %v3261 = vmul.f32 1.0, %v3260
    %v3262 = vadd.f32 %v3112, %v3183
    %v3263 = vxor.u32 %v3262, 2147483648
    %v3264 = vmul.f32 %v3263, 1.442695
    %v3265 = vpow.pop %v3264
    %v3266 = vadd.f32 %v3265, 1.0
    %v3267 = vrcp.pop %v3266
    %v3268 = vmul.f32 1.0, %v3267
    %v3269 = vmul.f32 %v3261, %v3252
    %v3270 = vadd.f32 %v3113, %v3269
    %v3271 = vtanh.pop %v3270
    %v3272 = vsub.f32 1.0, %v3268
    %v3273 = vmul.f32 %v3272, %v3271
    %v3274 = vmul.f32 %v3268, %v3109
    %v3275 = vadd.f32 %v3273, %v3274
    %v3276 = vstv %s3110
    %vm3277 = vcmp.lt.s32.totalorder %v3276, %v607
    %v3278 = vsel %vm3277, 1, 0
    %3279 = vset.pattern.permute.xlu0 0
    %3280 = vperm.xlu0 %3279, %v3278
    %v3281 = vpop.permute.xlu0 %3280
    %vm3282 = vcmp.eq.s32.totalorder %v3281, 1
    %v3283 = vsel %vm3282, %v3275, %v3109
    %s3284 = sadd.s32 %s609, 15
    %v3285 = vld [vmem:[#allocation3 + $0x168] sm:$0xff]
    %v3286 = vld [vmem:[#allocation3 + $0x170] sm:$0xff]
    %v3287 = vld [vmem:[#allocation3 + $0x178] sm:$0xff]
    %3288 = vmatprep.subr.mxu0 %v614
    %3289 = vmatpush1.msra.mxu0 %v613
    %3290 = vmatprep.subr.mxu0 %v617
    %3291 = vmatpush1.msra.mxu0 %v616
    %3292 = vmatprep.subr.mxu0 %v620
    %3293 = vmatpush1.msra.mxu0 %v619
    %3294 = vmatprep.subr.mxu0 %v623
    %3295 = vmatpush1.msra.mxu0 %v622
    %3296 = vmatprep.subr.mxu0 %v626
    %3297 = vmatpush1.msra.mxu0 %v625
    %3298 = vmatprep.subr.mxu0 %v629
    %3299 = vmatpush1.msra.mxu0 %v628
    %3300 = vmatprep.subr.mxu0 %v632
    %3301 = vmatpush1.msra.mxu0 %v631
    %3302 = vmatprep.subr.mxu0 %v635
    %3303 = vmatpush1.msra.mxu0 %v634
    %3304 = vmatprep.subr.mxu0 %v638
    %3305 = vmatpush1.msra.mxu0 %v637
    %3306 = vmatprep.subr.mxu0 %v641
    %3307 = vmatpush1.msra.mxu0 %v640
    %3308 = vmatprep.subr.mxu0 %v644
    %3309 = vmatpush1.msra.mxu0 %v643
    %3310 = vmatprep.subr.mxu0 %v647
    %3311 = vmatpush1.msra.mxu0 %v646
    %3312 = vmatprep.subr.mxu0 %v650
    %3313 = vmatpush1.msra.mxu0 %v649
    %3314 = vmatprep.subr.mxu0 %v653
    %3315 = vmatpush1.msra.mxu0 %v652
    %3316 = vmatprep.subr.mxu0 %v656
    %3317 = vmatpush1.msra.mxu0 %v655
    %3318 = vmatprep.subr.mxu0 %v659
    %3319 = vmatpush1.msra.mxu0 %v658
    %3320 = vmatprep.subr.mxu0 0.0
    %3321 = vmatpush1.msra.mxu0 0.0
    %3322 = vmatprep.subr.mxu0 0.0
    %3323 = vmatpush1.msra.mxu0 0.0
    %3324 = vmatprep.subr.mxu0 0.0
    %3325 = vmatpush1.msra.mxu0 0.0
    %3326 = vmatprep.subr.mxu0 0.0
    %3327 = vmatpush1.msra.mxu0 0.0
    %3328 = vmatprep.subr.mxu0 0.0
    %3329 = vmatpush1.msra.mxu0 0.0
    %3330 = vmatprep.subr.mxu0 0.0
    %3331 = vmatpush1.msra.mxu0 0.0
    %3332 = vmatprep.subr.mxu0 0.0
    %3333 = vmatpush1.msra.mxu0 0.0
    %3334 = vmatprep.subr.mxu0 0.0
    %3335 = vmatpush1.msra.mxu0 0.0
    %3336 = vmatprep.subr.mxu0 0.0
    %3337 = vmatpush1.msra.mxu0 0.0
    %3338 = vmatprep.subr.mxu0 0.0
    %3339 = vmatpush1.msra.mxu0 0.0
    %3340 = vmatprep.subr.mxu0 0.0
    %3341 = vmatpush1.msra.mxu0 0.0
    %3342 = vmatprep.subr.mxu0 0.0
    %3343 = vmatpush1.msra.mxu0 0.0
    %3344 = vmatprep.subr.mxu0 0.0
    %3345 = vmatpush1.msra.mxu0 0.0
    %3346 = vmatprep.subr.mxu0 0.0
    %3347 = vmatpush1.msra.mxu0 0.0
    %3348 = vmatprep.subr.mxu0 0.0
    %3349 = vmatpush1.msra.mxu0 0.0
    %3350 = vmatprep.subr.mxu0 0.0
    %3351 = vmatpush1.msra.mxu0 0.0
    %3352 = vmatprep.mubr.f32.mxu0 0.0
    %3353 = vmatmul.mubr.f32.gmra.mrb[0].mxu0 %v3283
    %v3354 = vpop.f32.mrb[0].mxu0
    %v3355 = vadd.f32 %v666, %v3354
    %v3356 = vpop.f32.mrb[0].mxu0
    %v3357 = vadd.f32 %v670, %v3356
    %3358 = vdwg.mxu0
    %3359 = vmatprep.subr.mxu0 0.0
    %3360 = vmatpush1.msra.mxu0 %v615
    %3361 = vmatprep.subr.mxu0 0.0
    %3362 = vmatpush1.msra.mxu0 %v618
    %3363 = vmatprep.subr.mxu0 0.0
    %3364 = vmatpush1.msra.mxu0 %v621
    %3365 = vmatprep.subr.mxu0 0.0
    %3366 = vmatpush1.msra.mxu0 %v624
    %3367 = vmatprep.subr.mxu0 0.0
    %3368 = vmatpush1.msra.mxu0 %v627
    %3369 = vmatprep.subr.mxu0 0.0
    %3370 = vmatpush1.msra.mxu0 %v630
    %3371 = vmatprep.subr.mxu0 0.0
    %3372 = vmatpush1.msra.mxu0 %v633
    %3373 = vmatprep.subr.mxu0 0.0
    %3374 = vmatpush1.msra.mxu0 %v636
    %3375 = vmatprep.subr.mxu0 0.0
    %3376 = vmatpush1.msra.mxu0 %v639
    %3377 = vmatprep.subr.mxu0 0.0
    %3378 = vmatpush1.msra.mxu0 %v642
    %3379 = vmatprep.subr.mxu0 0.0
    %3380 = vmatpush1.msra.mxu0 %v645
    %3381 = vmatprep.subr.mxu0 0.0
    %3382 = vmatpush1.msra.mxu0 %v648
    %3383 = vmatprep.subr.mxu0 0.0
    %3384 = vmatpush1.msra.mxu0 %v651
    %3385 = vmatprep.subr.mxu0 0.0
    %3386 = vmatpush1.msra.mxu0 %v654
    %3387 = vmatprep.subr.mxu0 0.0
    %3388 = vmatpush1.msra.mxu0 %v657
    %3389 = vmatprep.subr.mxu0 0.0
    %3390 = vmatpush1.msra.mxu0 %v660
    %3391 = vmatprep.subr.mxu0 0.0
    %3392 = vmatpush1.msra.mxu0 0.0
    %3393 = vmatprep.subr.mxu0 0.0
    %3394 = vmatpush1.msra.mxu0 0.0
    %3395 = vmatprep.subr.mxu0 0.0
    %3396 = vmatpush1.msra.mxu0 0.0
    %3397 = vmatprep.subr.mxu0 0.0
    %3398 = vmatpush1.msra.mxu0 0.0
    %3399 = vmatprep.subr.mxu0 0.0
    %3400 = vmatpush1.msra.mxu0 0.0
    %3401 = vmatprep.subr.mxu0 0.0
    %3402 = vmatpush1.msra.mxu0 0.0
    %3403 = vmatprep.subr.mxu0 0.0
    %3404 = vmatpush1.msra.mxu0 0.0
    %3405 = vmatprep.subr.mxu0 0.0
    %3406 = vmatpush1.msra.mxu0 0.0
    %3407 = vmatprep.subr.mxu0 0.0
    %3408 = vmatpush1.msra.mxu0 0.0
    %3409 = vmatprep.subr.mxu0 0.0
    %3410 = vmatpush1.msra.mxu0 0.0
    %3411 = vmatprep.subr.mxu0 0.0
    %3412 = vmatpush1.msra.mxu0 0.0
    %3413 = vmatprep.subr.mxu0 0.0
    %3414 = vmatpush1.msra.mxu0 0.0
    %3415 = vmatprep.subr.mxu0 0.0
    %3416 = vmatpush1.msra.mxu0 0.0
    %3417 = vmatprep.subr.mxu0 0.0
    %3418 = vmatpush1.msra.mxu0 0.0
    %3419 = vmatprep.subr.mxu0 0.0
    %3420 = vmatpush1.msra.mxu0 0.0
    %3421 = vmatprep.subr.mxu0 0.0
    %3422 = vmatpush1.msra.mxu0 0.0
    %3423 = vmatprep.mubr.f32.mxu0 0.0
    %3424 = vmatmul.mubr.f32.gmra.mrb[0].mxu0 %v3283
    %v3425 = vpop.f32.mrb[0].mxu0
    %v3426 = vadd.f32 %v674, %v3425
    %v3427 = vpop.f32.mrb[0].mxu0
    %3428 = vdwg.mxu0
    %v3429 = vadd.f32 %v3285, %v3355
    %v3430 = vxor.u32 %v3429, 2147483648
    %v3431 = vmul.f32 %v3430, 1.442695
    %v3432 = vpow.pop %v3431
    %v3433 = vadd.f32 %v3432, 1.0
    %v3434 = vrcp.pop %v3433
    %v3435 = vmul.f32 1.0, %v3434
    %v3436 = vadd.f32 %v3286, %v3357
    %v3437 = vxor.u32 %v3436, 2147483648
    %v3438 = vmul.f32 %v3437, 1.442695
    %v3439 = vpow.pop %v3438
    %v3440 = vadd.f32 %v3439, 1.0
    %v3441 = vrcp.pop %v3440
    %v3442 = vmul.f32 1.0, %v3441
    %v3443 = vmul.f32 %v3435, %v3426
    %v3444 = vadd.f32 %v3287, %v3443
    %v3445 = vtanh.pop %v3444
    %v3446 = vsub.f32 1.0, %v3442
    %v3447 = vmul.f32 %v3446, %v3445
    %v3448 = vmul.f32 %v3442, %v3283
    %v3449 = vadd.f32 %v3447, %v3448
    %v3450 = vstv %s3284
    %vm3451 = vcmp.lt.s32.totalorder %v3450, %v607
    %v3452 = vsel %vm3451, 1, 0
    %3453 = vset.pattern.permute.xlu0 0
    %3454 = vperm.xlu0 %3453, %v3452
    %v3455 = vpop.permute.xlu0 %3454
    %vm3456 = vcmp.eq.s32.totalorder %v3455, 1
    %v3457 = vsel %vm3456, %v3449, %v3283
    %3458 = vst [vmem:[#allocation2] sm:$0xff] %v3457
    // Predicated region
    $region94: #{tpu_custom_call.1} parent=1 // pred_check
      %p3459 = pneg %p167
    $region95: #{tpu_custom_call.1} parent=1 // pred_check_branch
      %3461 = sbr.rel (%p3459) target = $region97
    $region96: #{tpu_custom_call.1} parent=1 // pred_region
      %v3462 = vld [vmem:[#allocation2] sm:$0xff]
      %v3463 = vld [vmem:[#allocation15] sm:$0xff]
      %v3464 = vld [vmem:[#allocation15 + $0x8] sm:$0xff]
      %v3465 = vld [vmem:[#allocation15 + $0x10] sm:$0xff]
      %v3466 = vld [vmem:[#allocation15 + $0x18] sm:$0xff]
      %v3467 = vld [vmem:[#allocation15 + $0x20] sm:$0xff]
      %v3468 = vld [vmem:[#allocation15 + $0x28] sm:$0xff]
      %v3469 = vld [vmem:[#allocation15 + $0x30] sm:$0xff]
      %v3470 = vld [vmem:[#allocation15 + $0x38] sm:$0xff]
      %v3471 = vld [vmem:[#allocation15 + $0x40] sm:$0xff]
      %v3472 = vld [vmem:[#allocation15 + $0x48] sm:$0xff]
      %v3473 = vld [vmem:[#allocation15 + $0x50] sm:$0xff]
      %v3474 = vld [vmem:[#allocation15 + $0x58] sm:$0xff]
      %v3475 = vld [vmem:[#allocation15 + $0x60] sm:$0xff]
      %v3476 = vld [vmem:[#allocation15 + $0x68] sm:$0xff]
      %v3477 = vld [vmem:[#allocation15 + $0x70] sm:$0xff]
      %v3478 = vld [vmem:[#allocation15 + $0x78] sm:$0xff]
      %v3479 = vld [vmem:[#allocation15 + $0x80] sm:$0xff]
      %v3480 = vld [vmem:[#allocation15 + $0x88] sm:$0xff]
      %v3481 = vld [vmem:[#allocation15 + $0x90] sm:$0xff]
      %v3482 = vld [vmem:[#allocation15 + $0x98] sm:$0xff]
      %v3483 = vld [vmem:[#allocation15 + $0xa0] sm:$0xff]
      %v3484 = vld [vmem:[#allocation15 + $0xa8] sm:$0xff]
      %v3485 = vld [vmem:[#allocation15 + $0xb0] sm:$0xff]
      %v3486 = vld [vmem:[#allocation15 + $0xb8] sm:$0xff]
      %v3487 = vld [vmem:[#allocation15 + $0xc0] sm:$0xff]
      %v3488 = vld [vmem:[#allocation15 + $0xc8] sm:$0xff]
      %v3489 = vld [vmem:[#allocation15 + $0xd0] sm:$0xff]
      %v3490 = vld [vmem:[#allocation15 + $0xd8] sm:$0xff]
      %v3491 = vld [vmem:[#allocation15 + $0xe0] sm:$0xff]
      %v3492 = vld [vmem:[#allocation15 + $0xe8] sm:$0xff]
      %v3493 = vld [vmem:[#allocation15 + $0xf0] sm:$0xff]
      %v3494 = vld [vmem:[#allocation15 + $0xf8] sm:$0xff]
      %v3495 = vld [vmem:[#allocation15 + $0x100] sm:$0xff]
      %v3496 = vld [vmem:[#allocation15 + $0x108] sm:$0xff]
      %v3497 = vld [vmem:[#allocation15 + $0x110] sm:$0xff]
      %v3498 = vld [vmem:[#allocation15 + $0x118] sm:$0xff]
      %v3499 = vld [vmem:[#allocation15 + $0x120] sm:$0xff]
      %v3500 = vld [vmem:[#allocation15 + $0x128] sm:$0xff]
      %v3501 = vld [vmem:[#allocation15 + $0x130] sm:$0xff]
      %v3502 = vld [vmem:[#allocation15 + $0x138] sm:$0xff]
      %v3503 = vld [vmem:[#allocation15 + $0x140] sm:$0xff]
      %v3504 = vld [vmem:[#allocation15 + $0x148] sm:$0xff]
      %v3505 = vld [vmem:[#allocation15 + $0x150] sm:$0xff]
      %v3506 = vld [vmem:[#allocation15 + $0x158] sm:$0xff]
      %v3507 = vld [vmem:[#allocation15 + $0x160] sm:$0xff]
      %v3508 = vld [vmem:[#allocation15 + $0x168] sm:$0xff]
      %v3509 = vld [vmem:[#allocation15 + $0x170] sm:$0xff]
      %v3510 = vld [vmem:[#allocation15 + $0x178] sm:$0xff]
      %v3511 = vld [vmem:[#allocation15 + $0x180] sm:$0xff]
      %v3512 = vld [vmem:[#allocation15 + $0x188] sm:$0xff]
      %v3513 = vld [vmem:[#allocation15 + $0x190] sm:$0xff]
      %v3514 = vld [vmem:[#allocation15 + $0x198] sm:$0xff]
      %v3515 = vld [vmem:[#allocation15 + $0x1a0] sm:$0xff]
      %v3516 = vld [vmem:[#allocation15 + $0x1a8] sm:$0xff]
      %v3517 = vld [vmem:[#allocation15 + $0x1b0] sm:$0xff]
      %v3518 = vld [vmem:[#allocation15 + $0x1b8] sm:$0xff]
      %v3519 = vld [vmem:[#allocation15 + $0x1c0] sm:$0xff]
      %v3520 = vld [vmem:[#allocation15 + $0x1c8] sm:$0xff]
      %v3521 = vld [vmem:[#allocation15 + $0x1d0] sm:$0xff]
      %v3522 = vld [vmem:[#allocation15 + $0x1d8] sm:$0xff]
      %v3523 = vld [vmem:[#allocation15 + $0x1e0] sm:$0xff]
      %v3524 = vld [vmem:[#allocation15 + $0x1e8] sm:$0xff]
      %v3525 = vld [vmem:[#allocation15 + $0x1f0] sm:$0xff]
      %v3526 = vld [vmem:[#allocation15 + $0x1f8] sm:$0xff]
      %v3527 = vld [vmem:[#allocation15 + $0x200] sm:$0xff]
      %v3528 = vld [vmem:[#allocation15 + $0x208] sm:$0xff]
      %v3529 = vld [vmem:[#allocation15 + $0x210] sm:$0xff]
      %v3530 = vld [vmem:[#allocation15 + $0x218] sm:$0xff]
      %v3531 = vld [vmem:[#allocation15 + $0x220] sm:$0xff]
      %v3532 = vld [vmem:[#allocation15 + $0x228] sm:$0xff]
      %v3533 = vld [vmem:[#allocation15 + $0x230] sm:$0xff]
      %v3534 = vld [vmem:[#allocation15 + $0x238] sm:$0xff]
      %v3535 = vld [vmem:[#allocation15 + $0x240] sm:$0xff]
      %v3536 = vld [vmem:[#allocation15 + $0x248] sm:$0xff]
      %v3537 = vld [vmem:[#allocation15 + $0x250] sm:$0xff]
      %v3538 = vld [vmem:[#allocation15 + $0x258] sm:$0xff]
      %v3539 = vld [vmem:[#allocation15 + $0x260] sm:$0xff]
      %v3540 = vld [vmem:[#allocation15 + $0x268] sm:$0xff]
      %v3541 = vld [vmem:[#allocation15 + $0x270] sm:$0xff]
      %v3542 = vld [vmem:[#allocation15 + $0x278] sm:$0xff]
      %v3543 = vld [vmem:[#allocation15 + $0x280] sm:$0xff]
      %v3544 = vld [vmem:[#allocation15 + $0x288] sm:$0xff]
      %v3545 = vld [vmem:[#allocation15 + $0x290] sm:$0xff]
      %v3546 = vld [vmem:[#allocation15 + $0x298] sm:$0xff]
      %v3547 = vld [vmem:[#allocation15 + $0x2a0] sm:$0xff]
      %v3548 = vld [vmem:[#allocation15 + $0x2a8] sm:$0xff]
      %v3549 = vld [vmem:[#allocation15 + $0x2b0] sm:$0xff]
      %v3550 = vld [vmem:[#allocation15 + $0x2b8] sm:$0xff]
      %v3551 = vld [vmem:[#allocation15 + $0x2c0] sm:$0xff]
      %v3552 = vld [vmem:[#allocation15 + $0x2c8] sm:$0xff]
      %v3553 = vld [vmem:[#allocation15 + $0x2d0] sm:$0xff]
      %v3554 = vld [vmem:[#allocation15 + $0x2d8] sm:$0xff]
      %v3555 = vld [vmem:[#allocation15 + $0x2e0] sm:$0xff]
      %v3556 = vld [vmem:[#allocation15 + $0x2e8] sm:$0xff]
      %v3557 = vld [vmem:[#allocation15 + $0x2f0] sm:$0xff]
      %v3558 = vld [vmem:[#allocation15 + $0x2f8] sm:$0xff]
      %v3559 = vld [vmem:[#allocation15 + $0x300] sm:$0xff]
      %v3560 = vld [vmem:[#allocation15 + $0x308] sm:$0xff]
      %v3561 = vld [vmem:[#allocation15 + $0x310] sm:$0xff]
      %v3562 = vld [vmem:[#allocation15 + $0x318] sm:$0xff]
      %v3563 = vld [vmem:[#allocation15 + $0x320] sm:$0xff]
      %v3564 = vld [vmem:[#allocation15 + $0x328] sm:$0xff]
      %v3565 = vld [vmem:[#allocation15 + $0x330] sm:$0xff]
      %v3566 = vld [vmem:[#allocation15 + $0x338] sm:$0xff]
      %v3567 = vld [vmem:[#allocation15 + $0x340] sm:$0xff]
      %v3568 = vld [vmem:[#allocation15 + $0x348] sm:$0xff]
      %v3569 = vld [vmem:[#allocation15 + $0x350] sm:$0xff]
      %v3570 = vld [vmem:[#allocation15 + $0x358] sm:$0xff]
      %v3571 = vld [vmem:[#allocation15 + $0x360] sm:$0xff]
      %v3572 = vld [vmem:[#allocation15 + $0x368] sm:$0xff]
      %v3573 = vld [vmem:[#allocation15 + $0x370] sm:$0xff]
      %v3574 = vld [vmem:[#allocation15 + $0x378] sm:$0xff]
      %v3575 = vld [vmem:[#allocation15 + $0x380] sm:$0xff]
      %v3576 = vld [vmem:[#allocation15 + $0x388] sm:$0xff]
      %v3577 = vld [vmem:[#allocation15 + $0x390] sm:$0xff]
      %v3578 = vld [vmem:[#allocation15 + $0x398] sm:$0xff]
      %v3579 = vld [vmem:[#allocation15 + $0x3a0] sm:$0xff]
      %v3580 = vld [vmem:[#allocation15 + $0x3a8] sm:$0xff]
      %v3581 = vld [vmem:[#allocation15 + $0x3b0] sm:$0xff]
      %v3582 = vld [vmem:[#allocation15 + $0x3b8] sm:$0xff]
      %v3583 = vld [vmem:[#allocation15 + $0x3c0] sm:$0xff]
      %v3584 = vld [vmem:[#allocation15 + $0x3c8] sm:$0xff]
      %v3585 = vld [vmem:[#allocation15 + $0x3d0] sm:$0xff]
      %v3586 = vld [vmem:[#allocation15 + $0x3d8] sm:$0xff]
      %v3587 = vld [vmem:[#allocation15 + $0x3e0] sm:$0xff]
      %v3588 = vld [vmem:[#allocation15 + $0x3e8] sm:$0xff]
      %v3589 = vld [vmem:[#allocation15 + $0x3f0] sm:$0xff]
      %v3590 = vld [vmem:[#allocation15 + $0x3f8] sm:$0xff]
      %v3591 = vld [vmem:[#allocation16] sm:$0xff]
      %v3592 = vld [vmem:[#allocation16 + $0x8] sm:$0xff]
      %v3593 = vld [vmem:[#allocation16 + $0x10] sm:$0xff]
      %v3594 = vld [vmem:[#allocation16 + $0x18] sm:$0xff]
      %v3595 = vld [vmem:[#allocation16 + $0x20] sm:$0xff]
      %v3596 = vld [vmem:[#allocation16 + $0x28] sm:$0xff]
      %v3597 = vld [vmem:[#allocation16 + $0x30] sm:$0xff]
      %v3598 = vld [vmem:[#allocation16 + $0x38] sm:$0xff]
      %v3599 = vld [vmem:[#allocation16 + $0x40] sm:$0xff]
      %v3600 = vld [vmem:[#allocation16 + $0x48] sm:$0xff]
      %v3601 = vld [vmem:[#allocation16 + $0x50] sm:$0xff]
      %v3602 = vld [vmem:[#allocation16 + $0x58] sm:$0xff]
      %v3603 = vld [vmem:[#allocation16 + $0x60] sm:$0xff]
      %v3604 = vld [vmem:[#allocation16 + $0x68] sm:$0xff]
      %v3605 = vld [vmem:[#allocation16 + $0x70] sm:$0xff]
      %v3606 = vld [vmem:[#allocation16 + $0x78] sm:$0xff]
      %v3607 = vld [vmem:[#allocation16 + $0x80] sm:$0xff]
      %v3608 = vld [vmem:[#allocation16 + $0x88] sm:$0xff]
      %v3609 = vld [vmem:[#allocation16 + $0x90] sm:$0xff]
      %v3610 = vld [vmem:[#allocation16 + $0x98] sm:$0xff]
      %v3611 = vld [vmem:[#allocation16 + $0xa0] sm:$0xff]
      %v3612 = vld [vmem:[#allocation16 + $0xa8] sm:$0xff]
      %v3613 = vld [vmem:[#allocation16 + $0xb0] sm:$0xff]
      %v3614 = vld [vmem:[#allocation16 + $0xb8] sm:$0xff]
      %v3615 = vld [vmem:[#allocation16 + $0xc0] sm:$0xff]
      %v3616 = vld [vmem:[#allocation16 + $0xc8] sm:$0xff]
      %v3617 = vld [vmem:[#allocation16 + $0xd0] sm:$0xff]
      %v3618 = vld [vmem:[#allocation16 + $0xd8] sm:$0xff]
      %v3619 = vld [vmem:[#allocation16 + $0xe0] sm:$0xff]
      %v3620 = vld [vmem:[#allocation16 + $0xe8] sm:$0xff]
      %v3621 = vld [vmem:[#allocation16 + $0xf0] sm:$0xff]
      %v3622 = vld [vmem:[#allocation16 + $0xf8] sm:$0xff]
      %v3623 = vld [vmem:[#allocation16 + $0x100] sm:$0xff]
      %v3624 = vld [vmem:[#allocation16 + $0x108] sm:$0xff]
      %v3625 = vld [vmem:[#allocation16 + $0x110] sm:$0xff]
      %v3626 = vld [vmem:[#allocation16 + $0x118] sm:$0xff]
      %v3627 = vld [vmem:[#allocation16 + $0x120] sm:$0xff]
      %v3628 = vld [vmem:[#allocation16 + $0x128] sm:$0xff]
      %v3629 = vld [vmem:[#allocation16 + $0x130] sm:$0xff]
      %v3630 = vld [vmem:[#allocation16 + $0x138] sm:$0xff]
      %v3631 = vld [vmem:[#allocation16 + $0x140] sm:$0xff]
      %v3632 = vld [vmem:[#allocation16 + $0x148] sm:$0xff]
      %v3633 = vld [vmem:[#allocation16 + $0x150] sm:$0xff]
      %v3634 = vld [vmem:[#allocation16 + $0x158] sm:$0xff]
      %v3635 = vld [vmem:[#allocation16 + $0x160] sm:$0xff]
      %v3636 = vld [vmem:[#allocation16 + $0x168] sm:$0xff]
      %v3637 = vld [vmem:[#allocation16 + $0x170] sm:$0xff]
      %v3638 = vld [vmem:[#allocation16 + $0x178] sm:$0xff]
      %v3639 = vld [vmem:[#allocation16 + $0x180] sm:$0xff]
      %v3640 = vld [vmem:[#allocation16 + $0x188] sm:$0xff]
      %v3641 = vld [vmem:[#allocation16 + $0x190] sm:$0xff]
      %v3642 = vld [vmem:[#allocation16 + $0x198] sm:$0xff]
      %v3643 = vld [vmem:[#allocation16 + $0x1a0] sm:$0xff]
      %v3644 = vld [vmem:[#allocation16 + $0x1a8] sm:$0xff]
      %v3645 = vld [vmem:[#allocation16 + $0x1b0] sm:$0xff]
      %v3646 = vld [vmem:[#allocation16 + $0x1b8] sm:$0xff]
      %v3647 = vld [vmem:[#allocation16 + $0x1c0] sm:$0xff]
      %v3648 = vld [vmem:[#allocation16 + $0x1c8] sm:$0xff]
      %v3649 = vld [vmem:[#allocation16 + $0x1d0] sm:$0xff]
      %v3650 = vld [vmem:[#allocation16 + $0x1d8] sm:$0xff]
      %v3651 = vld [vmem:[#allocation16 + $0x1e0] sm:$0xff]
      %v3652 = vld [vmem:[#allocation16 + $0x1e8] sm:$0xff]
      %v3653 = vld [vmem:[#allocation16 + $0x1f0] sm:$0xff]
      %v3654 = vld [vmem:[#allocation16 + $0x1f8] sm:$0xff]
      %v3655 = vld [vmem:[#allocation16 + $0x200] sm:$0xff]
      %v3656 = vld [vmem:[#allocation16 + $0x208] sm:$0xff]
      %v3657 = vld [vmem:[#allocation16 + $0x210] sm:$0xff]
      %v3658 = vld [vmem:[#allocation16 + $0x218] sm:$0xff]
      %v3659 = vld [vmem:[#allocation16 + $0x220] sm:$0xff]
      %v3660 = vld [vmem:[#allocation16 + $0x228] sm:$0xff]
      %v3661 = vld [vmem:[#allocation16 + $0x230] sm:$0xff]
      %v3662 = vld [vmem:[#allocation16 + $0x238] sm:$0xff]
      %v3663 = vld [vmem:[#allocation16 + $0x240] sm:$0xff]
      %v3664 = vld [vmem:[#allocation16 + $0x248] sm:$0xff]
      %v3665 = vld [vmem:[#allocation16 + $0x250] sm:$0xff]
      %v3666 = vld [vmem:[#allocation16 + $0x258] sm:$0xff]
      %v3667 = vld [vmem:[#allocation16 + $0x260] sm:$0xff]
      %v3668 = vld [vmem:[#allocation16 + $0x268] sm:$0xff]
      %v3669 = vld [vmem:[#allocation16 + $0x270] sm:$0xff]
      %v3670 = vld [vmem:[#allocation16 + $0x278] sm:$0xff]
      %v3671 = vld [vmem:[#allocation16 + $0x280] sm:$0xff]
      %v3672 = vld [vmem:[#allocation16 + $0x288] sm:$0xff]
      %v3673 = vld [vmem:[#allocation16 + $0x290] sm:$0xff]
      %v3674 = vld [vmem:[#allocation16 + $0x298] sm:$0xff]
      %v3675 = vld [vmem:[#allocation16 + $0x2a0] sm:$0xff]
      %v3676 = vld [vmem:[#allocation16 + $0x2a8] sm:$0xff]
      %v3677 = vld [vmem:[#allocation16 + $0x2b0] sm:$0xff]
      %v3678 = vld [vmem:[#allocation16 + $0x2b8] sm:$0xff]
      %v3679 = vld [vmem:[#allocation16 + $0x2c0] sm:$0xff]
      %v3680 = vld [vmem:[#allocation16 + $0x2c8] sm:$0xff]
      %v3681 = vld [vmem:[#allocation16 + $0x2d0] sm:$0xff]
      %v3682 = vld [vmem:[#allocation16 + $0x2d8] sm:$0xff]
      %v3683 = vld [vmem:[#allocation16 + $0x2e0] sm:$0xff]
      %v3684 = vld [vmem:[#allocation16 + $0x2e8] sm:$0xff]
      %v3685 = vld [vmem:[#allocation16 + $0x2f0] sm:$0xff]
      %v3686 = vld [vmem:[#allocation16 + $0x2f8] sm:$0xff]
      %v3687 = vld [vmem:[#allocation16 + $0x300] sm:$0xff]
      %v3688 = vld [vmem:[#allocation16 + $0x308] sm:$0xff]
      %v3689 = vld [vmem:[#allocation16 + $0x310] sm:$0xff]
      %v3690 = vld [vmem:[#allocation16 + $0x318] sm:$0xff]
      %v3691 = vld [vmem:[#allocation16 + $0x320] sm:$0xff]
      %v3692 = vld [vmem:[#allocation16 + $0x328] sm:$0xff]
      %v3693 = vld [vmem:[#allocation16 + $0x330] sm:$0xff]
      %v3694 = vld [vmem:[#allocation16 + $0x338] sm:$0xff]
      %v3695 = vld [vmem:[#allocation16 + $0x340] sm:$0xff]
      %v3696 = vld [vmem:[#allocation16 + $0x348] sm:$0xff]
      %v3697 = vld [vmem:[#allocation16 + $0x350] sm:$0xff]
      %v3698 = vld [vmem:[#allocation16 + $0x358] sm:$0xff]
      %v3699 = vld [vmem:[#allocation16 + $0x360] sm:$0xff]
      %v3700 = vld [vmem:[#allocation16 + $0x368] sm:$0xff]
      %v3701 = vld [vmem:[#allocation16 + $0x370] sm:$0xff]
      %v3702 = vld [vmem:[#allocation16 + $0x378] sm:$0xff]
      %v3703 = vld [vmem:[#allocation16 + $0x380] sm:$0xff]
      %v3704 = vld [vmem:[#allocation16 + $0x388] sm:$0xff]
      %v3705 = vld [vmem:[#allocation16 + $0x390] sm:$0xff]
      %v3706 = vld [vmem:[#allocation16 + $0x398] sm:$0xff]
      %v3707 = vld [vmem:[#allocation16 + $0x3a0] sm:$0xff]
      %v3708 = vld [vmem:[#allocation16 + $0x3a8] sm:$0xff]
      %v3709 = vld [vmem:[#allocation16 + $0x3b0] sm:$0xff]
      %v3710 = vld [vmem:[#allocation16 + $0x3b8] sm:$0xff]
      %v3711 = vld [vmem:[#allocation16 + $0x3c0] sm:$0xff]
      %v3712 = vld [vmem:[#allocation16 + $0x3c8] sm:$0xff]
      %v3713 = vld [vmem:[#allocation16 + $0x3d0] sm:$0xff]
      %v3714 = vld [vmem:[#allocation16 + $0x3d8] sm:$0xff]
      %v3715 = vld [vmem:[#allocation16 + $0x3e0] sm:$0xff]
      %v3716 = vld [vmem:[#allocation16 + $0x3e8] sm:$0xff]
      %v3717 = vld [vmem:[#allocation16 + $0x3f0] sm:$0xff]
      %v3718 = vld [vmem:[#allocation16 + $0x3f8] sm:$0xff]
      %v3719 = vld [vmem:[#allocation18] sm:$0xff]
      %v3720 = vld [vmem:[#allocation18 + $0x8] sm:$0xff]
      %v3721 = vld [vmem:[#allocation18 + $0x10] sm:$0xff]
      %v3722 = vld [vmem:[#allocation18 + $0x18] sm:$0xff]
      %v3723 = vld [vmem:[#allocation18 + $0x20] sm:$0xff]
      %v3724 = vld [vmem:[#allocation18 + $0x28] sm:$0xff]
      %v3725 = vld [vmem:[#allocation18 + $0x30] sm:$0xff]
      %v3726 = vld [vmem:[#allocation18 + $0x38] sm:$0xff]
      %v3727 = vld [vmem:[#allocation18 + $0x40] sm:$0xff]
      %v3728 = vld [vmem:[#allocation18 + $0x48] sm:$0xff]
      %v3729 = vld [vmem:[#allocation18 + $0x50] sm:$0xff]
      %v3730 = vld [vmem:[#allocation18 + $0x58] sm:$0xff]
      %v3731 = vld [vmem:[#allocation18 + $0x60] sm:$0xff]
      %v3732 = vld [vmem:[#allocation18 + $0x68] sm:$0xff]
      %v3733 = vld [vmem:[#allocation18 + $0x70] sm:$0xff]
      %v3734 = vld [vmem:[#allocation18 + $0x78] sm:$0xff]
      %v3735 = vld [vmem:[#allocation18 + $0x80] sm:$0xff]
      %v3736 = vld [vmem:[#allocation18 + $0x88] sm:$0xff]
      %v3737 = vld [vmem:[#allocation18 + $0x90] sm:$0xff]
      %v3738 = vld [vmem:[#allocation18 + $0x98] sm:$0xff]
      %v3739 = vld [vmem:[#allocation18 + $0xa0] sm:$0xff]
      %v3740 = vld [vmem:[#allocation18 + $0xa8] sm:$0xff]
      %v3741 = vld [vmem:[#allocation18 + $0xb0] sm:$0xff]
      %v3742 = vld [vmem:[#allocation18 + $0xb8] sm:$0xff]
      %v3743 = vld [vmem:[#allocation18 + $0xc0] sm:$0xff]
      %v3744 = vld [vmem:[#allocation18 + $0xc8] sm:$0xff]
      %v3745 = vld [vmem:[#allocation18 + $0xd0] sm:$0xff]
      %v3746 = vld [vmem:[#allocation18 + $0xd8] sm:$0xff]
      %v3747 = vld [vmem:[#allocation18 + $0xe0] sm:$0xff]
      %v3748 = vld [vmem:[#allocation18 + $0xe8] sm:$0xff]
      %v3749 = vld [vmem:[#allocation18 + $0xf0] sm:$0xff]
      %v3750 = vld [vmem:[#allocation18 + $0xf8] sm:$0xff]
      %v3751 = vld [vmem:[#allocation18 + $0x100] sm:$0xff]
      %v3752 = vld [vmem:[#allocation18 + $0x108] sm:$0xff]
      %v3753 = vld [vmem:[#allocation18 + $0x110] sm:$0xff]
      %v3754 = vld [vmem:[#allocation18 + $0x118] sm:$0xff]
      %v3755 = vld [vmem:[#allocation18 + $0x120] sm:$0xff]
      %v3756 = vld [vmem:[#allocation18 + $0x128] sm:$0xff]
      %v3757 = vld [vmem:[#allocation18 + $0x130] sm:$0xff]
      %v3758 = vld [vmem:[#allocation18 + $0x138] sm:$0xff]
      %v3759 = vld [vmem:[#allocation18 + $0x140] sm:$0xff]
      %v3760 = vld [vmem:[#allocation18 + $0x148] sm:$0xff]
      %v3761 = vld [vmem:[#allocation18 + $0x150] sm:$0xff]
      %v3762 = vld [vmem:[#allocation18 + $0x158] sm:$0xff]
      %v3763 = vld [vmem:[#allocation18 + $0x160] sm:$0xff]
      %v3764 = vld [vmem:[#allocation18 + $0x168] sm:$0xff]
      %v3765 = vld [vmem:[#allocation18 + $0x170] sm:$0xff]
      %v3766 = vld [vmem:[#allocation18 + $0x178] sm:$0xff]
      %v3767 = vld [vmem:[#allocation18 + $0x180] sm:$0xff]
      %v3768 = vld [vmem:[#allocation18 + $0x188] sm:$0xff]
      %v3769 = vld [vmem:[#allocation18 + $0x190] sm:$0xff]
      %v3770 = vld [vmem:[#allocation18 + $0x198] sm:$0xff]
      %v3771 = vld [vmem:[#allocation18 + $0x1a0] sm:$0xff]
      %v3772 = vld [vmem:[#allocation18 + $0x1a8] sm:$0xff]
      %v3773 = vld [vmem:[#allocation18 + $0x1b0] sm:$0xff]
      %v3774 = vld [vmem:[#allocation18 + $0x1b8] sm:$0xff]
      %v3775 = vld [vmem:[#allocation18 + $0x1c0] sm:$0xff]
      %v3776 = vld [vmem:[#allocation18 + $0x1c8] sm:$0xff]
      %v3777 = vld [vmem:[#allocation18 + $0x1d0] sm:$0xff]
      %v3778 = vld [vmem:[#allocation18 + $0x1d8] sm:$0xff]
      %v3779 = vld [vmem:[#allocation18 + $0x1e0] sm:$0xff]
      %v3780 = vld [vmem:[#allocation18 + $0x1e8] sm:$0xff]
      %v3781 = vld [vmem:[#allocation18 + $0x1f0] sm:$0xff]
      %v3782 = vld [vmem:[#allocation18 + $0x1f8] sm:$0xff]
      %v3783 = vld [vmem:[#allocation18 + $0x200] sm:$0xff]
      %v3784 = vld [vmem:[#allocation18 + $0x208] sm:$0xff]
      %v3785 = vld [vmem:[#allocation18 + $0x210] sm:$0xff]
      %v3786 = vld [vmem:[#allocation18 + $0x218] sm:$0xff]
      %v3787 = vld [vmem:[#allocation18 + $0x220] sm:$0xff]
      %v3788 = vld [vmem:[#allocation18 + $0x228] sm:$0xff]
      %v3789 = vld [vmem:[#allocation18 + $0x230] sm:$0xff]
      %v3790 = vld [vmem:[#allocation18 + $0x238] sm:$0xff]
      %v3791 = vld [vmem:[#allocation18 + $0x240] sm:$0xff]
      %v3792 = vld [vmem:[#allocation18 + $0x248] sm:$0xff]
      %v3793 = vld [vmem:[#allocation18 + $0x250] sm:$0xff]
      %v3794 = vld [vmem:[#allocation18 + $0x258] sm:$0xff]
      %v3795 = vld [vmem:[#allocation18 + $0x260] sm:$0xff]
      %v3796 = vld [vmem:[#allocation18 + $0x268] sm:$0xff]
      %v3797 = vld [vmem:[#allocation18 + $0x270] sm:$0xff]
      %v3798 = vld [vmem:[#allocation18 + $0x278] sm:$0xff]
      %v3799 = vld [vmem:[#allocation18 + $0x280] sm:$0xff]
      %v3800 = vld [vmem:[#allocation18 + $0x288] sm:$0xff]
      %v3801 = vld [vmem:[#allocation18 + $0x290] sm:$0xff]
      %v3802 = vld [vmem:[#allocation18 + $0x298] sm:$0xff]
      %v3803 = vld [vmem:[#allocation18 + $0x2a0] sm:$0xff]
      %v3804 = vld [vmem:[#allocation18 + $0x2a8] sm:$0xff]
      %v3805 = vld [vmem:[#allocation18 + $0x2b0] sm:$0xff]
      %v3806 = vld [vmem:[#allocation18 + $0x2b8] sm:$0xff]
      %v3807 = vld [vmem:[#allocation18 + $0x2c0] sm:$0xff]
      %v3808 = vld [vmem:[#allocation18 + $0x2c8] sm:$0xff]
      %v3809 = vld [vmem:[#allocation18 + $0x2d0] sm:$0xff]
      %v3810 = vld [vmem:[#allocation18 + $0x2d8] sm:$0xff]
      %v3811 = vld [vmem:[#allocation18 + $0x2e0] sm:$0xff]
      %v3812 = vld [vmem:[#allocation18 + $0x2e8] sm:$0xff]
      %v3813 = vld [vmem:[#allocation18 + $0x2f0] sm:$0xff]
      %v3814 = vld [vmem:[#allocation18 + $0x2f8] sm:$0xff]
      %v3815 = vld [vmem:[#allocation18 + $0x300] sm:$0xff]
      %v3816 = vld [vmem:[#allocation18 + $0x308] sm:$0xff]
      %v3817 = vld [vmem:[#allocation18 + $0x310] sm:$0xff]
      %v3818 = vld [vmem:[#allocation18 + $0x318] sm:$0xff]
      %v3819 = vld [vmem:[#allocation18 + $0x320] sm:$0xff]
      %v3820 = vld [vmem:[#allocation18 + $0x328] sm:$0xff]
      %v3821 = vld [vmem:[#allocation18 + $0x330] sm:$0xff]
      %v3822 = vld [vmem:[#allocation18 + $0x338] sm:$0xff]
      %v3823 = vld [vmem:[#allocation18 + $0x340] sm:$0xff]
      %v3824 = vld [vmem:[#allocation18 + $0x348] sm:$0xff]
      %v3825 = vld [vmem:[#allocation18 + $0x350] sm:$0xff]
      %v3826 = vld [vmem:[#allocation18 + $0x358] sm:$0xff]
      %v3827 = vld [vmem:[#allocation18 + $0x360] sm:$0xff]
      %v3828 = vld [vmem:[#allocation18 + $0x368] sm:$0xff]
      %v3829 = vld [vmem:[#allocation18 + $0x370] sm:$0xff]
      %v3830 = vld [vmem:[#allocation18 + $0x378] sm:$0xff]
      %v3831 = vld [vmem:[#allocation18 + $0x380] sm:$0xff]
      %v3832 = vld [vmem:[#allocation18 + $0x388] sm:$0xff]
      %v3833 = vld [vmem:[#allocation18 + $0x390] sm:$0xff]
      %v3834 = vld [vmem:[#allocation18 + $0x398] sm:$0xff]
      %v3835 = vld [vmem:[#allocation18 + $0x3a0] sm:$0xff]
      %v3836 = vld [vmem:[#allocation18 + $0x3a8] sm:$0xff]
      %v3837 = vld [vmem:[#allocation18 + $0x3b0] sm:$0xff]
      %v3838 = vld [vmem:[#allocation18 + $0x3b8] sm:$0xff]
      %v3839 = vld [vmem:[#allocation18 + $0x3c0] sm:$0xff]
      %v3840 = vld [vmem:[#allocation18 + $0x3c8] sm:$0xff]
      %v3841 = vld [vmem:[#allocation18 + $0x3d0] sm:$0xff]
      %v3842 = vld [vmem:[#allocation18 + $0x3d8] sm:$0xff]
      %v3843 = vld [vmem:[#allocation18 + $0x3e0] sm:$0xff]
      %v3844 = vld [vmem:[#allocation18 + $0x3e8] sm:$0xff]
      %v3845 = vld [vmem:[#allocation18 + $0x3f0] sm:$0xff]
      %v3846 = vld [vmem:[#allocation18 + $0x3f8] sm:$0xff]
      %v3847 = vld [vmem:[%s12] sm:$0xff]
      %v3848 = vlaneseq
      %v3849 = vand.u32 %v3848, 127
      %vm3850 = vcmp.lt.s32.totalorder %v3849, 8
      %v3851 = vld [vmem:[#allocation10] sm:$0xff]
      %v3852 = vld [vmem:[#allocation10 + $0x8] sm:$0xff]
      %v3853 = vld [vmem:[#allocation10 + $0x10] sm:$0xff]
      %v3854 = vld [vmem:[#allocation10 + $0x18] sm:$0xff]
      %v3855 = vld [vmem:[#allocation10 + $0x20] sm:$0xff]
      %v3856 = vld [vmem:[#allocation10 + $0x28] sm:$0xff]
      %v3857 = vld [vmem:[#allocation10 + $0x30] sm:$0xff]
      %v3858 = vld [vmem:[#allocation10 + $0x38] sm:$0xff]
      %v3859 = vld [vmem:[#allocation10 + $0x40] sm:$0xff]
      %v3860 = vld [vmem:[#allocation10 + $0x48] sm:$0xff]
      %v3861 = vld [vmem:[#allocation10 + $0x50] sm:$0xff]
      %v3862 = vld [vmem:[#allocation10 + $0x58] sm:$0xff]
      %v3863 = vld [vmem:[#allocation10 + $0x60] sm:$0xff]
      %v3864 = vld [vmem:[#allocation10 + $0x68] sm:$0xff]
      %v3865 = vld [vmem:[#allocation10 + $0x70] sm:$0xff]
      %v3866 = vld [vmem:[#allocation10 + $0x78] sm:$0xff]
      %3867 = vmatprep.subr.mxu0 0.0
      %3868 = vmatpush1.msra.mxu0 %v3851
      %3869 = vmatprep.subr.mxu0 0.0
      %3870 = vmatpush1.msra.mxu0 %v3852
      %3871 = vmatprep.subr.mxu0 0.0
      %3872 = vmatpush1.msra.mxu0 %v3853
      %3873 = vmatprep.subr.mxu0 0.0
      %3874 = vmatpush1.msra.mxu0 %v3854
      %3875 = vmatprep.subr.mxu0 0.0
      %3876 = vmatpush1.msra.mxu0 %v3855
      %3877 = vmatprep.subr.mxu0 0.0
      %3878 = vmatpush1.msra.mxu0 %v3856
      %3879 = vmatprep.subr.mxu0 0.0
      %3880 = vmatpush1.msra.mxu0 %v3857
      %3881 = vmatprep.subr.mxu0 0.0
      %3882 = vmatpush1.msra.mxu0 %v3858
      %3883 = vmatprep.subr.mxu0 0.0
      %3884 = vmatpush1.msra.mxu0 %v3859
      %3885 = vmatprep.subr.mxu0 0.0
      %3886 = vmatpush1.msra.mxu0 %v3860
      %3887 = vmatprep.subr.mxu0 0.0
      %3888 = vmatpush1.msra.mxu0 %v3861
      %3889 = vmatprep.subr.mxu0 0.0
      %3890 = vmatpush1.msra.mxu0 %v3862
      %3891 = vmatprep.subr.mxu0 0.0
      %3892 = vmatpush1.msra.mxu0 %v3863
      %3893 = vmatprep.subr.mxu0 0.0
      %3894 = vmatpush1.msra.mxu0 %v3864
      %3895 = vmatprep.subr.mxu0 0.0
      %3896 = vmatpush1.msra.mxu0 %v3865
      %3897 = vmatprep.subr.mxu0 0.0
      %3898 = vmatpush1.msra.mxu0 %v3866
      %3899 = vmatprep.subr.mxu0 0.0
      %3900 = vmatpush1.msra.mxu0 0.0
      %3901 = vmatprep.subr.mxu0 0.0
      %3902 = vmatpush1.msra.mxu0 0.0
      %3903 = vmatprep.subr.mxu0 0.0
      %3904 = vmatpush1.msra.mxu0 0.0
      %3905 = vmatprep.subr.mxu0 0.0
      %3906 = vmatpush1.msra.mxu0 0.0
      %3907 = vmatprep.subr.mxu0 0.0
      %3908 = vmatpush1.msra.mxu0 0.0
      %3909 = vmatprep.subr.mxu0 0.0
      %3910 = vmatpush1.msra.mxu0 0.0
      %3911 = vmatprep.subr.mxu0 0.0
      %3912 = vmatpush1.msra.mxu0 0.0
      %3913 = vmatprep.subr.mxu0 0.0
      %3914 = vmatpush1.msra.mxu0 0.0
      %3915 = vmatprep.subr.mxu0 0.0
      %3916 = vmatpush1.msra.mxu0 0.0
      %3917 = vmatprep.subr.mxu0 0.0
      %3918 = vmatpush1.msra.mxu0 0.0
      %3919 = vmatprep.subr.mxu0 0.0
      %3920 = vmatpush1.msra.mxu0 0.0
      %3921 = vmatprep.subr.mxu0 0.0
      %3922 = vmatpush1.msra.mxu0 0.0
      %3923 = vmatprep.subr.mxu0 0.0
      %3924 = vmatpush1.msra.mxu0 0.0
      %3925 = vmatprep.subr.mxu0 0.0
      %3926 = vmatpush1.msra.mxu0 0.0
      %3927 = vmatprep.subr.mxu0 0.0
      %3928 = vmatpush1.msra.mxu0 0.0
      %3929 = vmatprep.subr.mxu0 0.0
      %3930 = vmatpush1.msra.mxu0 0.0
      %3931 = vmatprep.mubr.f32.mxu0 0.0
      %3932 = vmatmul.mubr.f32.gmra.mrb[0].mxu0 %v3462
      %v3933 = vpop.f32.mrb[0].mxu0
      %v3934 = vadd.f32 0.0, %v3933
      %v3935 = vpop.f32.mrb[0].mxu0
      %3936 = vdwg.mxu0
      %v3938 = vcombine.high %v3934, %v3934
      %v3940 = vunpack.c.l.s4 1966171168
      %v3941 = vunpack.c.0.s8 %v3940
      %v3942 = vlaneseq
      %v3943 = vshrl.u32 %v3942, 7
      %v3944 = vsub.s32 %v3941, %v3943
      %v3945 = vrot.slane %v3934, %v3944
      %v3947 = vunpack.c.l.s4 1966171168
      %v3948 = vunpack.c.0.s8 %v3947
      %v3949 = vlaneseq
      %v3950 = vshrl.u32 %v3949, 7
      %v3951 = vsub.s32 %v3948, %v3950
      %v3952 = vrot.slane %v3938, %v3951
      %v3953 = vcombine.high %v3945, %v3945
      %v3954 = vcombine.high %v3952, %v3952
      %v3956 = vunpack.c.l.s4 1966171168
      %v3957 = vunpack.c.0.s8 %v3956
      %v3958 = vlaneseq
      %v3959 = vshrl.u32 %v3958, 7
      %v3960 = vsub.s32 %v3957, %v3959
      %v3961 = vrot.slane %v3945, %v3960
      %v3963 = vunpack.c.l.s4 1966171168
      %v3964 = vunpack.c.0.s8 %v3963
      %v3965 = vlaneseq
      %v3966 = vshrl.u32 %v3965, 7
      %v3967 = vsub.s32 %v3964, %v3966
      %v3968 = vrot.slane %v3952, %v3967
      %v3970 = vunpack.c.l.s4 1966171168
      %v3971 = vunpack.c.0.s8 %v3970
      %v3972 = vlaneseq
      %v3973 = vshrl.u32 %v3972, 7
      %v3974 = vsub.s32 %v3971, %v3973
      %v3975 = vrot.slane %v3953, %v3974
      %v3977 = vunpack.c.l.s4 1966171168
      %v3978 = vunpack.c.0.s8 %v3977
      %v3979 = vlaneseq
      %v3980 = vshrl.u32 %v3979, 7
      %v3981 = vsub.s32 %v3978, %v3980
      %v3982 = vrot.slane %v3954, %v3981
      %v3983 = vcombine.high %v3961, %v3961
      %v3984 = vcombine.high %v3968, %v3968
      %v3985 = vcombine.high %v3975, %v3975
      %v3986 = vcombine.high %v3982, %v3982
      %3995 = vmatprep.subr.mxu0 0.0
      %3996 = vmatpush1.msra.mxu0 %v3463
      %3997 = vmatprep.subr.mxu0 0.0
      %3998 = vmatpush1.msra.mxu0 %v3464
      %3999 = vmatprep.subr.mxu0 0.0
      %4000 = vmatpush1.msra.mxu0 %v3465
      %4001 = vmatprep.subr.mxu0 0.0
      %4002 = vmatpush1.msra.mxu0 %v3466
      %4003 = vmatprep.subr.mxu0 0.0
      %4004 = vmatpush1.msra.mxu0 %v3467
      %4005 = vmatprep.subr.mxu0 0.0
      %4006 = vmatpush1.msra.mxu0 %v3468
      %4007 = vmatprep.subr.mxu0 0.0
      %4008 = vmatpush1.msra.mxu0 %v3469
      %4009 = vmatprep.subr.mxu0 0.0
      %4010 = vmatpush1.msra.mxu0 %v3470
      %4011 = vmatprep.subr.mxu0 0.0
      %4012 = vmatpush1.msra.mxu0 %v3471
      %4013 = vmatprep.subr.mxu0 0.0
      %4014 = vmatpush1.msra.mxu0 %v3472
      %4015 = vmatprep.subr.mxu0 0.0
      %4016 = vmatpush1.msra.mxu0 %v3473
      %4017 = vmatprep.subr.mxu0 0.0
      %4018 = vmatpush1.msra.mxu0 %v3474
      %4019 = vmatprep.subr.mxu0 0.0
      %4020 = vmatpush1.msra.mxu0 %v3475
      %4021 = vmatprep.subr.mxu0 0.0
      %4022 = vmatpush1.msra.mxu0 %v3476
      %4023 = vmatprep.subr.mxu0 0.0
      %4024 = vmatpush1.msra.mxu0 %v3477
      %4025 = vmatprep.subr.mxu0 0.0
      %4026 = vmatpush1.msra.mxu0 %v3478
      %4027 = vmatprep.subr.mxu0 0.0
      %4028 = vmatpush1.msra.mxu0 0.0
      %4029 = vmatprep.subr.mxu0 0.0
      %4030 = vmatpush1.msra.mxu0 0.0
      %4031 = vmatprep.subr.mxu0 0.0
      %4032 = vmatpush1.msra.mxu0 0.0
      %4033 = vmatprep.subr.mxu0 0.0
      %4034 = vmatpush1.msra.mxu0 0.0
      %4035 = vmatprep.subr.mxu0 0.0
      %4036 = vmatpush1.msra.mxu0 0.0
      %4037 = vmatprep.subr.mxu0 0.0
      %4038 = vmatpush1.msra.mxu0 0.0
      %4039 = vmatprep.subr.mxu0 0.0
      %4040 = vmatpush1.msra.mxu0 0.0
      %4041 = vmatprep.subr.mxu0 0.0
      %4042 = vmatpush1.msra.mxu0 0.0
      %4043 = vmatprep.subr.mxu0 0.0
      %4044 = vmatpush1.msra.mxu0 0.0
      %4045 = vmatprep.subr.mxu0 0.0
      %4046 = vmatpush1.msra.mxu0 0.0
      %4047 = vmatprep.subr.mxu0 0.0
      %4048 = vmatpush1.msra.mxu0 0.0
      %4049 = vmatprep.subr.mxu0 0.0
      %4050 = vmatpush1.msra.mxu0 0.0
      %4051 = vmatprep.subr.mxu0 0.0
      %4052 = vmatpush1.msra.mxu0 0.0
      %4053 = vmatprep.subr.mxu0 0.0
      %4054 = vmatpush1.msra.mxu0 0.0
      %4055 = vmatprep.subr.mxu0 0.0
      %4056 = vmatpush1.msra.mxu0 0.0
      %4057 = vmatprep.subr.mxu0 0.0
      %4058 = vmatpush1.msra.mxu0 0.0
      %4059 = vmatprep.mubr.f32.mxu0 0.0
      %4060 = vmatmul.mubr.f32.gmra.mrb[0].mxu0 %v3961
      %v4061 = vpop.f32.mrb[0].mxu0
      %v4062 = vadd.f32 0.0, %v4061
      %v4063 = vpop.f32.mrb[0].mxu0
      %4064 = vdwg.mxu0
      %4065 = vmatprep.subr.mxu0 0.0
      %4066 = vmatpush1.msra.mxu0 %v3479
      %4067 = vmatprep.subr.mxu0 0.0
      %4068 = vmatpush1.msra.mxu0 %v3480
      %4069 = vmatprep.subr.mxu0 0.0
      %4070 = vmatpush1.msra.mxu0 %v3481
      %4071 = vmatprep.subr.mxu0 0.0
      %4072 = vmatpush1.msra.mxu0 %v3482
      %4073 = vmatprep.subr.mxu0 0.0
      %4074 = vmatpush1.msra.mxu0 %v3483
      %4075 = vmatprep.subr.mxu0 0.0
      %4076 = vmatpush1.msra.mxu0 %v3484
      %4077 = vmatprep.subr.mxu0 0.0
      %4078 = vmatpush1.msra.mxu0 %v3485
      %4079 = vmatprep.subr.mxu0 0.0
      %4080 = vmatpush1.msra.mxu0 %v3486
      %4081 = vmatprep.subr.mxu0 0.0
      %4082 = vmatpush1.msra.mxu0 %v3487
      %4083 = vmatprep.subr.mxu0 0.0
      %4084 = vmatpush1.msra.mxu0 %v3488
      %4085 = vmatprep.subr.mxu0 0.0
      %4086 = vmatpush1.msra.mxu0 %v3489
      %4087 = vmatprep.subr.mxu0 0.0
      %4088 = vmatpush1.msra.mxu0 %v3490
      %4089 = vmatprep.subr.mxu0 0.0
      %4090 = vmatpush1.msra.mxu0 %v3491
      %4091 = vmatprep.subr.mxu0 0.0
      %4092 = vmatpush1.msra.mxu0 %v3492
      %4093 = vmatprep.subr.mxu0 0.0
      %4094 = vmatpush1.msra.mxu0 %v3493
      %4095 = vmatprep.subr.mxu0 0.0
      %4096 = vmatpush1.msra.mxu0 %v3494
      %4097 = vmatprep.subr.mxu0 0.0
      %4098 = vmatpush1.msra.mxu0 0.0
      %4099 = vmatprep.subr.mxu0 0.0
      %4100 = vmatpush1.msra.mxu0 0.0
      %4101 = vmatprep.subr.mxu0 0.0
      %4102 = vmatpush1.msra.mxu0 0.0
      %4103 = vmatprep.subr.mxu0 0.0
      %4104 = vmatpush1.msra.mxu0 0.0
      %4105 = vmatprep.subr.mxu0 0.0
      %4106 = vmatpush1.msra.mxu0 0.0
      %4107 = vmatprep.subr.mxu0 0.0
      %4108 = vmatpush1.msra.mxu0 0.0
      %4109 = vmatprep.subr.mxu0 0.0
      %4110 = vmatpush1.msra.mxu0 0.0
      %4111 = vmatprep.subr.mxu0 0.0
      %4112 = vmatpush1.msra.mxu0 0.0
      %4113 = vmatprep.subr.mxu0 0.0
      %4114 = vmatpush1.msra.mxu0 0.0
      %4115 = vmatprep.subr.mxu0 0.0
      %4116 = vmatpush1.msra.mxu0 0.0
      %4117 = vmatprep.subr.mxu0 0.0
      %4118 = vmatpush1.msra.mxu0 0.0
      %4119 = vmatprep.subr.mxu0 0.0
      %4120 = vmatpush1.msra.mxu0 0.0
      %4121 = vmatprep.subr.mxu0 0.0
      %4122 = vmatpush1.msra.mxu0 0.0
      %4123 = vmatprep.subr.mxu0 0.0
      %4124 = vmatpush1.msra.mxu0 0.0
      %4125 = vmatprep.subr.mxu0 0.0
      %4126 = vmatpush1.msra.mxu0 0.0
      %4127 = vmatprep.subr.mxu0 0.0
      %4128 = vmatpush1.msra.mxu0 0.0
      %4129 = vmatprep.mubr.f32.mxu0 0.0
      %4130 = vmatmul.mubr.f32.gmra.mrb[0].mxu0 %v3975
      %v4131 = vpop.f32.mrb[0].mxu0
      %v4132 = vadd.f32 0.0, %v4131
      %v4133 = vpop.f32.mrb[0].mxu0
      %4134 = vdwg.mxu0
      %4135 = vmatprep.subr.mxu0 0.0
      %4136 = vmatpush1.msra.mxu0 %v3495
      %4137 = vmatprep.subr.mxu0 0.0
      %4138 = vmatpush1.msra.mxu0 %v3496
      %4139 = vmatprep.subr.mxu0 0.0
      %4140 = vmatpush1.msra.mxu0 %v3497
      %4141 = vmatprep.subr.mxu0 0.0
      %4142 = vmatpush1.msra.mxu0 %v3498
      %4143 = vmatprep.subr.mxu0 0.0
      %4144 = vmatpush1.msra.mxu0 %v3499
      %4145 = vmatprep.subr.mxu0 0.0
      %4146 = vmatpush1.msra.mxu0 %v3500
      %4147 = vmatprep.subr.mxu0 0.0
      %4148 = vmatpush1.msra.mxu0 %v3501
      %4149 = vmatprep.subr.mxu0 0.0
      %4150 = vmatpush1.msra.mxu0 %v3502
      %4151 = vmatprep.subr.mxu0 0.0
      %4152 = vmatpush1.msra.mxu0 %v3503
      %4153 = vmatprep.subr.mxu0 0.0
      %4154 = vmatpush1.msra.mxu0 %v3504
      %4155 = vmatprep.subr.mxu0 0.0
      %4156 = vmatpush1.msra.mxu0 %v3505
      %4157 = vmatprep.subr.mxu0 0.0
      %4158 = vmatpush1.msra.mxu0 %v3506
      %4159 = vmatprep.subr.mxu0 0.0
      %4160 = vmatpush1.msra.mxu0 %v3507
      %4161 = vmatprep.subr.mxu0 0.0
      %4162 = vmatpush1.msra.mxu0 %v3508
      %4163 = vmatprep.subr.mxu0 0.0
      %4164 = vmatpush1.msra.mxu0 %v3509
      %4165 = vmatprep.subr.mxu0 0.0
      %4166 = vmatpush1.msra.mxu0 %v3510
      %4167 = vmatprep.subr.mxu0 0.0
      %4168 = vmatpush1.msra.mxu0 0.0
      %4169 = vmatprep.subr.mxu0 0.0
      %4170 = vmatpush1.msra.mxu0 0.0
      %4171 = vmatprep.subr.mxu0 0.0
      %4172 = vmatpush1.msra.mxu0 0.0
      %4173 = vmatprep.subr.mxu0 0.0
      %4174 = vmatpush1.msra.mxu0 0.0
      %4175 = vmatprep.subr.mxu0 0.0
      %4176 = vmatpush1.msra.mxu0 0.0
      %4177 = vmatprep.subr.mxu0 0.0
      %4178 = vmatpush1.msra.mxu0 0.0
      %4179 = vmatprep.subr.mxu0 0.0
      %4180 = vmatpush1.msra.mxu0 0.0
      %4181 = vmatprep.subr.mxu0 0.0
      %4182 = vmatpush1.msra.mxu0 0.0
      %4183 = vmatprep.subr.mxu0 0.0
      %4184 = vmatpush1.msra.mxu0 0.0
      %4185 = vmatprep.subr.mxu0 0.0
      %4186 = vmatpush1.msra.mxu0 0.0
      %4187 = vmatprep.subr.mxu0 0.0
      %4188 = vmatpush1.msra.mxu0 0.0
      %4189 = vmatprep.subr.mxu0 0.0
      %4190 = vmatpush1.msra.mxu0 0.0
      %4191 = vmatprep.subr.mxu0 0.0
      %4192 = vmatpush1.msra.mxu0 0.0
      %4193 = vmatprep.subr.mxu0 0.0
      %4194 = vmatpush1.msra.mxu0 0.0
      %4195 = vmatprep.subr.mxu0 0.0
      %4196 = vmatpush1.msra.mxu0 0.0
      %4197 = vmatprep.subr.mxu0 0.0
      %4198 = vmatpush1.msra.mxu0 0.0
      %4199 = vmatprep.mubr.f32.mxu0 0.0
      %4200 = vmatmul.mubr.f32.gmra.mrb[0].mxu0 %v3983
      %v4201 = vpop.f32.mrb[0].mxu0
      %v4202 = vadd.f32 0.0, %v4201
      %v4203 = vpop.f32.mrb[0].mxu0
      %4204 = vdwg.mxu0
      %4205 = vmatprep.subr.mxu0 0.0
      %4206 = vmatpush1.msra.mxu0 %v3511
      %4207 = vmatprep.subr.mxu0 0.0
      %4208 = vmatpush1.msra.mxu0 %v3512
      %4209 = vmatprep.subr.mxu0 0.0
      %4210 = vmatpush1.msra.mxu0 %v3513
      %4211 = vmatprep.subr.mxu0 0.0
      %4212 = vmatpush1.msra.mxu0 %v3514
      %4213 = vmatprep.subr.mxu0 0.0
      %4214 = vmatpush1.msra.mxu0 %v3515
      %4215 = vmatprep.subr.mxu0 0.0
      %4216 = vmatpush1.msra.mxu0 %v3516
      %4217 = vmatprep.subr.mxu0 0.0
      %4218 = vmatpush1.msra.mxu0 %v3517
      %4219 = vmatprep.subr.mxu0 0.0
      %4220 = vmatpush1.msra.mxu0 %v3518
      %4221 = vmatprep.subr.mxu0 0.0
      %4222 = vmatpush1.msra.mxu0 %v3519
      %4223 = vmatprep.subr.mxu0 0.0
      %4224 = vmatpush1.msra.mxu0 %v3520
      %4225 = vmatprep.subr.mxu0 0.0
      %4226 = vmatpush1.msra.mxu0 %v3521
      %4227 = vmatprep.subr.mxu0 0.0
      %4228 = vmatpush1.msra.mxu0 %v3522
      %4229 = vmatprep.subr.mxu0 0.0
      %4230 = vmatpush1.msra.mxu0 %v3523
      %4231 = vmatprep.subr.mxu0 0.0
      %4232 = vmatpush1.msra.mxu0 %v3524
      %4233 = vmatprep.subr.mxu0 0.0
      %4234 = vmatpush1.msra.mxu0 %v3525
      %4235 = vmatprep.subr.mxu0 0.0
      %4236 = vmatpush1.msra.mxu0 %v3526
      %4237 = vmatprep.subr.mxu0 0.0
      %4238 = vmatpush1.msra.mxu0 0.0
      %4239 = vmatprep.subr.mxu0 0.0
      %4240 = vmatpush1.msra.mxu0 0.0
      %4241 = vmatprep.subr.mxu0 0.0
      %4242 = vmatpush1.msra.mxu0 0.0
      %4243 = vmatprep.subr.mxu0 0.0
      %4244 = vmatpush1.msra.mxu0 0.0
      %4245 = vmatprep.subr.mxu0 0.0
      %4246 = vmatpush1.msra.mxu0 0.0
      %4247 = vmatprep.subr.mxu0 0.0
      %4248 = vmatpush1.msra.mxu0 0.0
      %4249 = vmatprep.subr.mxu0 0.0
      %4250 = vmatpush1.msra.mxu0 0.0
      %4251 = vmatprep.subr.mxu0 0.0
      %4252 = vmatpush1.msra.mxu0 0.0
      %4253 = vmatprep.subr.mxu0 0.0
      %4254 = vmatpush1.msra.mxu0 0.0
      %4255 = vmatprep.subr.mxu0 0.0
      %4256 = vmatpush1.msra.mxu0 0.0
      %4257 = vmatprep.subr.mxu0 0.0
      %4258 = vmatpush1.msra.mxu0 0.0
      %4259 = vmatprep.subr.mxu0 0.0
      %4260 = vmatpush1.msra.mxu0 0.0
      %4261 = vmatprep.subr.mxu0 0.0
      %4262 = vmatpush1.msra.mxu0 0.0
      %4263 = vmatprep.subr.mxu0 0.0
      %4264 = vmatpush1.msra.mxu0 0.0
      %4265 = vmatprep.subr.mxu0 0.0
      %4266 = vmatpush1.msra.mxu0 0.0
      %4267 = vmatprep.subr.mxu0 0.0
      %4268 = vmatpush1.msra.mxu0 0.0
      %4269 = vmatprep.mubr.f32.mxu0 0.0
      %4270 = vmatmul.mubr.f32.gmra.mrb[0].mxu0 %v3985
      %v4271 = vpop.f32.mrb[0].mxu0
      %v4272 = vadd.f32 0.0, %v4271
      %v4273 = vpop.f32.mrb[0].mxu0
      %4274 = vdwg.mxu0
      %4275 = vmatprep.subr.mxu0 0.0
      %4276 = vmatpush1.msra.mxu0 %v3527
      %4277 = vmatprep.subr.mxu0 0.0
      %4278 = vmatpush1.msra.mxu0 %v3528
      %4279 = vmatprep.subr.mxu0 0.0
      %4280 = vmatpush1.msra.mxu0 %v3529
      %4281 = vmatprep.subr.mxu0 0.0
      %4282 = vmatpush1.msra.mxu0 %v3530
      %4283 = vmatprep.subr.mxu0 0.0
      %4284 = vmatpush1.msra.mxu0 %v3531
      %4285 = vmatprep.subr.mxu0 0.0
      %4286 = vmatpush1.msra.mxu0 %v3532
      %4287 = vmatprep.subr.mxu0 0.0
      %4288 = vmatpush1.msra.mxu0 %v3533
      %4289 = vmatprep.subr.mxu0 0.0
      %4290 = vmatpush1.msra.mxu0 %v3534
      %4291 = vmatprep.subr.mxu0 0.0
      %4292 = vmatpush1.msra.mxu0 %v3535
      %4293 = vmatprep.subr.mxu0 0.0
      %4294 = vmatpush1.msra.mxu0 %v3536
      %4295 = vmatprep.subr.mxu0 0.0
      %4296 = vmatpush1.msra.mxu0 %v3537
      %4297 = vmatprep.subr.mxu0 0.0
      %4298 = vmatpush1.msra.mxu0 %v3538
      %4299 = vmatprep.subr.mxu0 0.0
      %4300 = vmatpush1.msra.mxu0 %v3539
      %4301 = vmatprep.subr.mxu0 0.0
      %4302 = vmatpush1.msra.mxu0 %v3540
      %4303 = vmatprep.subr.mxu0 0.0
      %4304 = vmatpush1.msra.mxu0 %v3541
      %4305 = vmatprep.subr.mxu0 0.0
      %4306 = vmatpush1.msra.mxu0 %v3542
      %4307 = vmatprep.subr.mxu0 0.0
      %4308 = vmatpush1.msra.mxu0 0.0
      %4309 = vmatprep.subr.mxu0 0.0
      %4310 = vmatpush1.msra.mxu0 0.0
      %4311 = vmatprep.subr.mxu0 0.0
      %4312 = vmatpush1.msra.mxu0 0.0
      %4313 = vmatprep.subr.mxu0 0.0
      %4314 = vmatpush1.msra.mxu0 0.0
      %4315 = vmatprep.subr.mxu0 0.0
      %4316 = vmatpush1.msra.mxu0 0.0
      %4317 = vmatprep.subr.mxu0 0.0
      %4318 = vmatpush1.msra.mxu0 0.0
      %4319 = vmatprep.subr.mxu0 0.0
      %4320 = vmatpush1.msra.mxu0 0.0
      %4321 = vmatprep.subr.mxu0 0.0
      %4322 = vmatpush1.msra.mxu0 0.0
      %4323 = vmatprep.subr.mxu0 0.0
      %4324 = vmatpush1.msra.mxu0 0.0
      %4325 = vmatprep.subr.mxu0 0.0
      %4326 = vmatpush1.msra.mxu0 0.0
      %4327 = vmatprep.subr.mxu0 0.0
      %4328 = vmatpush1.msra.mxu0 0.0
      %4329 = vmatprep.subr.mxu0 0.0
      %4330 = vmatpush1.msra.mxu0 0.0
      %4331 = vmatprep.subr.mxu0 0.0
      %4332 = vmatpush1.msra.mxu0 0.0
      %4333 = vmatprep.subr.mxu0 0.0
      %4334 = vmatpush1.msra.mxu0 0.0
      %4335 = vmatprep.subr.mxu0 0.0
      %4336 = vmatpush1.msra.mxu0 0.0
      %4337 = vmatprep.subr.mxu0 0.0
      %4338 = vmatpush1.msra.mxu0 0.0
      %4339 = vmatprep.mubr.f32.mxu0 0.0
      %4340 = vmatmul.mubr.f32.gmra.mrb[0].mxu0 %v3968
      %v4341 = vpop.f32.mrb[0].mxu0
      %v4342 = vadd.f32 0.0, %v4341
      %v4343 = vpop.f32.mrb[0].mxu0
      %4344 = vdwg.mxu0
      %4345 = vmatprep.subr.mxu0 0.0
      %4346 = vmatpush1.msra.mxu0 %v3543
      %4347 = vmatprep.subr.mxu0 0.0
      %4348 = vmatpush1.msra.mxu0 %v3544
      %4349 = vmatprep.subr.mxu0 0.0
      %4350 = vmatpush1.msra.mxu0 %v3545
      %4351 = vmatprep.subr.mxu0 0.0
      %4352 = vmatpush1.msra.mxu0 %v3546
      %4353 = vmatprep.subr.mxu0 0.0
      %4354 = vmatpush1.msra.mxu0 %v3547
      %4355 = vmatprep.subr.mxu0 0.0
      %4356 = vmatpush1.msra.mxu0 %v3548
      %4357 = vmatprep.subr.mxu0 0.0
      %4358 = vmatpush1.msra.mxu0 %v3549
      %4359 = vmatprep.subr.mxu0 0.0
      %4360 = vmatpush1.msra.mxu0 %v3550
      %4361 = vmatprep.subr.mxu0 0.0
      %4362 = vmatpush1.msra.mxu0 %v3551
      %4363 = vmatprep.subr.mxu0 0.0
      %4364 = vmatpush1.msra.mxu0 %v3552
      %4365 = vmatprep.subr.mxu0 0.0
      %4366 = vmatpush1.msra.mxu0 %v3553
      %4367 = vmatprep.subr.mxu0 0.0
      %4368 = vmatpush1.msra.mxu0 %v3554
      %4369 = vmatprep.subr.mxu0 0.0
      %4370 = vmatpush1.msra.mxu0 %v3555
      %4371 = vmatprep.subr.mxu0 0.0
      %4372 = vmatpush1.msra.mxu0 %v3556
      %4373 = vmatprep.subr.mxu0 0.0
      %4374 = vmatpush1.msra.mxu0 %v3557
      %4375 = vmatprep.subr.mxu0 0.0
      %4376 = vmatpush1.msra.mxu0 %v3558
      %4377 = vmatprep.subr.mxu0 0.0
      %4378 = vmatpush1.msra.mxu0 0.0
      %4379 = vmatprep.subr.mxu0 0.0
      %4380 = vmatpush1.msra.mxu0 0.0
      %4381 = vmatprep.subr.mxu0 0.0
      %4382 = vmatpush1.msra.mxu0 0.0
      %4383 = vmatprep.subr.mxu0 0.0
      %4384 = vmatpush1.msra.mxu0 0.0
      %4385 = vmatprep.subr.mxu0 0.0
      %4386 = vmatpush1.msra.mxu0 0.0
      %4387 = vmatprep.subr.mxu0 0.0
      %4388 = vmatpush1.msra.mxu0 0.0
      %4389 = vmatprep.subr.mxu0 0.0
      %4390 = vmatpush1.msra.mxu0 0.0
      %4391 = vmatprep.subr.mxu0 0.0
      %4392 = vmatpush1.msra.mxu0 0.0
      %4393 = vmatprep.subr.mxu0 0.0
      %4394 = vmatpush1.msra.mxu0 0.0
      %4395 = vmatprep.subr.mxu0 0.0
      %4396 = vmatpush1.msra.mxu0 0.0
      %4397 = vmatprep.subr.mxu0 0.0
      %4398 = vmatpush1.msra.mxu0 0.0
      %4399 = vmatprep.subr.mxu0 0.0
      %4400 = vmatpush1.msra.mxu0 0.0
      %4401 = vmatprep.subr.mxu0 0.0
      %4402 = vmatpush1.msra.mxu0 0.0
      %4403 = vmatprep.subr.mxu0 0.0
      %4404 = vmatpush1.msra.mxu0 0.0
      %4405 = vmatprep.subr.mxu0 0.0
      %4406 = vmatpush1.msra.mxu0 0.0
      %4407 = vmatprep.subr.mxu0 0.0
      %4408 = vmatpush1.msra.mxu0 0.0
      %4409 = vmatprep.mubr.f32.mxu0 0.0
      %4410 = vmatmul.mubr.f32.gmra.mrb[0].mxu0 %v3982
      %v4411 = vpop.f32.mrb[0].mxu0
      %v4412 = vadd.f32 0.0, %v4411
      %v4413 = vpop.f32.mrb[0].mxu0
      %4414 = vdwg.mxu0
      %4415 = vmatprep.subr.mxu0 0.0
      %4416 = vmatpush1.msra.mxu0 %v3559
      %4417 = vmatprep.subr.mxu0 0.0
      %4418 = vmatpush1.msra.mxu0 %v3560
      %4419 = vmatprep.subr.mxu0 0.0
      %4420 = vmatpush1.msra.mxu0 %v3561
      %4421 = vmatprep.subr.mxu0 0.0
      %4422 = vmatpush1.msra.mxu0 %v3562
      %4423 = vmatprep.subr.mxu0 0.0
      %4424 = vmatpush1.msra.mxu0 %v3563
      %4425 = vmatprep.subr.mxu0 0.0
      %4426 = vmatpush1.msra.mxu0 %v3564
      %4427 = vmatprep.subr.mxu0 0.0
      %4428 = vmatpush1.msra.mxu0 %v3565
      %4429 = vmatprep.subr.mxu0 0.0
      %4430 = vmatpush1.msra.mxu0 %v3566
      %4431 = vmatprep.subr.mxu0 0.0
      %4432 = vmatpush1.msra.mxu0 %v3567
      %4433 = vmatprep.subr.mxu0 0.0
      %4434 = vmatpush1.msra.mxu0 %v3568
      %4435 = vmatprep.subr.mxu0 0.0
      %4436 = vmatpush1.msra.mxu0 %v3569
      %4437 = vmatprep.subr.mxu0 0.0
      %4438 = vmatpush1.msra.mxu0 %v3570
      %4439 = vmatprep.subr.mxu0 0.0
      %4440 = vmatpush1.msra.mxu0 %v3571
      %4441 = vmatprep.subr.mxu0 0.0
      %4442 = vmatpush1.msra.mxu0 %v3572
      %4443 = vmatprep.subr.mxu0 0.0
      %4444 = vmatpush1.msra.mxu0 %v3573
      %4445 = vmatprep.subr.mxu0 0.0
      %4446 = vmatpush1.msra.mxu0 %v3574
      %4447 = vmatprep.subr.mxu0 0.0
      %4448 = vmatpush1.msra.mxu0 0.0
      %4449 = vmatprep.subr.mxu0 0.0
      %4450 = vmatpush1.msra.mxu0 0.0
      %4451 = vmatprep.subr.mxu0 0.0
      %4452 = vmatpush1.msra.mxu0 0.0
      %4453 = vmatprep.subr.mxu0 0.0
      %4454 = vmatpush1.msra.mxu0 0.0
      %4455 = vmatprep.subr.mxu0 0.0
      %4456 = vmatpush1.msra.mxu0 0.0
      %4457 = vmatprep.subr.mxu0 0.0
      %4458 = vmatpush1.msra.mxu0 0.0
      %4459 = vmatprep.subr.mxu0 0.0
      %4460 = vmatpush1.msra.mxu0 0.0
      %4461 = vmatprep.subr.mxu0 0.0
      %4462 = vmatpush1.msra.mxu0 0.0
      %4463 = vmatprep.subr.mxu0 0.0
      %4464 = vmatpush1.msra.mxu0 0.0
      %4465 = vmatprep.subr.mxu0 0.0
      %4466 = vmatpush1.msra.mxu0 0.0
      %4467 = vmatprep.subr.mxu0 0.0
      %4468 = vmatpush1.msra.mxu0 0.0
      %4469 = vmatprep.subr.mxu0 0.0
      %4470 = vmatpush1.msra.mxu0 0.0
      %4471 = vmatprep.subr.mxu0 0.0
      %4472 = vmatpush1.msra.mxu0 0.0
      %4473 = vmatprep.subr.mxu0 0.0
      %4474 = vmatpush1.msra.mxu0 0.0
      %4475 = vmatprep.subr.mxu0 0.0
      %4476 = vmatpush1.msra.mxu0 0.0
      %4477 = vmatprep.subr.mxu0 0.0
      %4478 = vmatpush1.msra.mxu0 0.0
      %4479 = vmatprep.mubr.f32.mxu0 0.0
      %4480 = vmatmul.mubr.f32.gmra.mrb[0].mxu0 %v3984
      %v4481 = vpop.f32.mrb[0].mxu0
      %v4482 = vadd.f32 0.0, %v4481
      %v4483 = vpop.f32.mrb[0].mxu0
      %4484 = vdwg.mxu0
      %4485 = vmatprep.subr.mxu0 0.0
      %4486 = vmatpush1.msra.mxu0 %v3575
      %4487 = vmatprep.subr.mxu0 0.0
      %4488 = vmatpush1.msra.mxu0 %v3576
      %4489 = vmatprep.subr.mxu0 0.0
      %4490 = vmatpush1.msra.mxu0 %v3577
      %4491 = vmatprep.subr.mxu0 0.0
      %4492 = vmatpush1.msra.mxu0 %v3578
      %4493 = vmatprep.subr.mxu0 0.0
      %4494 = vmatpush1.msra.mxu0 %v3579
      %4495 = vmatprep.subr.mxu0 0.0
      %4496 = vmatpush1.msra.mxu0 %v3580
      %4497 = vmatprep.subr.mxu0 0.0
      %4498 = vmatpush1.msra.mxu0 %v3581
      %4499 = vmatprep.subr.mxu0 0.0
      %4500 = vmatpush1.msra.mxu0 %v3582
      %4501 = vmatprep.subr.mxu0 0.0
      %4502 = vmatpush1.msra.mxu0 %v3583
      %4503 = vmatprep.subr.mxu0 0.0
      %4504 = vmatpush1.msra.mxu0 %v3584
      %4505 = vmatprep.subr.mxu0 0.0
      %4506 = vmatpush1.msra.mxu0 %v3585
      %4507 = vmatprep.subr.mxu0 0.0
      %4508 = vmatpush1.msra.mxu0 %v3586
      %4509 = vmatprep.subr.mxu0 0.0
      %4510 = vmatpush1.msra.mxu0 %v3587
      %4511 = vmatprep.subr.mxu0 0.0
      %4512 = vmatpush1.msra.mxu0 %v3588
      %4513 = vmatprep.subr.mxu0 0.0
      %4514 = vmatpush1.msra.mxu0 %v3589
      %4515 = vmatprep.subr.mxu0 0.0
      %4516 = vmatpush1.msra.mxu0 %v3590
      %4517 = vmatprep.subr.mxu0 0.0
      %4518 = vmatpush1.msra.mxu0 0.0
      %4519 = vmatprep.subr.mxu0 0.0
      %4520 = vmatpush1.msra.mxu0 0.0
      %4521 = vmatprep.subr.mxu0 0.0
      %4522 = vmatpush1.msra.mxu0 0.0
      %4523 = vmatprep.subr.mxu0 0.0
      %4524 = vmatpush1.msra.mxu0 0.0
      %4525 = vmatprep.subr.mxu0 0.0
      %4526 = vmatpush1.msra.mxu0 0.0
      %4527 = vmatprep.subr.mxu0 0.0
      %4528 = vmatpush1.msra.mxu0 0.0
      %4529 = vmatprep.subr.mxu0 0.0
      %4530 = vmatpush1.msra.mxu0 0.0
      %4531 = vmatprep.subr.mxu0 0.0
      %4532 = vmatpush1.msra.mxu0 0.0
      %4533 = vmatprep.subr.mxu0 0.0
      %4534 = vmatpush1.msra.mxu0 0.0
      %4535 = vmatprep.subr.mxu0 0.0
      %4536 = vmatpush1.msra.mxu0 0.0
      %4537 = vmatprep.subr.mxu0 0.0
      %4538 = vmatpush1.msra.mxu0 0.0
      %4539 = vmatprep.subr.mxu0 0.0
      %4540 = vmatpush1.msra.mxu0 0.0
      %4541 = vmatprep.subr.mxu0 0.0
      %4542 = vmatpush1.msra.mxu0 0.0
      %4543 = vmatprep.subr.mxu0 0.0
      %4544 = vmatpush1.msra.mxu0 0.0
      %4545 = vmatprep.subr.mxu0 0.0
      %4546 = vmatpush1.msra.mxu0 0.0
      %4547 = vmatprep.subr.mxu0 0.0
      %4548 = vmatpush1.msra.mxu0 0.0
      %4549 = vmatprep.mubr.f32.mxu0 0.0
      %4550 = vmatmul.mubr.f32.gmra.mrb[0].mxu0 %v3986
      %v4551 = vpop.f32.mrb[0].mxu0
      %v4552 = vadd.f32 0.0, %v4551
      %v4553 = vpop.f32.mrb[0].mxu0
      %4554 = vdwg.mxu0
      %v4563 = vrot.slane %v4132, 7
      %vm4564 = vcmask 1041409
      %v4565 = vsel %vm4564, %v4563, %v4062
      %v4566 = vrot.slane %v4202, 6
      %vm4567 = vcmask 1042434
      %v4568 = vsel %vm4567, %v4566, %v4565
      %v4569 = vrot.slane %v4272, 5
      %vm4570 = vcmask 1043459
      %v4571 = vsel %vm4570, %v4569, %v4568
      %v4572 = vrot.slane %v4342, 4
      %vm4573 = vcmask 1044484
      %v4574 = vsel %vm4573, %v4572, %v4571
      %v4575 = vrot.slane %v4412, 3
      %vm4576 = vcmask 1045509
      %v4577 = vsel %vm4576, %v4575, %v4574
      %v4578 = vrot.slane %v4482, 2
      %vm4579 = vcmask 1046534
      %v4580 = vsel %vm4579, %v4578, %v4577
      %v4581 = vrot.slane %v4552, 1
      %vm4582 = vcmask 1047559
      %v4583 = vsel %vm4582, %v4581, %v4580
      %v4585 = vsel %vm3850, %v4583, -1e+30
      %4586 = vmax.xlane.f32.xlu0 %v4585
      %v4587 = vpop.xlane.xlu0 %4586
      %v4588 = vsub.f32 %v4585, %v4587
      %v4589 = vmul.f32 %v4588, 1.442695
      %v4590 = vpow.pop %v4589
      %4591 = vadd.xlane.f32.xlu0 %v4590
      %v4592 = vpop.xlane.xlu0 %4591
      %v4593 = vrcp.pop %v4592
      %v4594 = vmul.f32 %v4590, %v4593
      %v4595 = vmul.f32 %v4594, %v3847
      %v4597 = vcombine.high %v4595, %v4595
      %v4599 = vunpack.c.l.s4 1966171168
      %v4600 = vunpack.c.0.s8 %v4599
      %v4601 = vlaneseq
      %v4602 = vshrl.u32 %v4601, 7
      %v4603 = vsub.s32 %v4600, %v4602
      %v4604 = vrot.slane %v4595, %v4603
      %v4606 = vunpack.c.l.s4 1966171168
      %v4607 = vunpack.c.0.s8 %v4606
      %v4608 = vlaneseq
      %v4609 = vshrl.u32 %v4608, 7
      %v4610 = vsub.s32 %v4607, %v4609
      %v4611 = vrot.slane %v4597, %v4610
      %v4612 = vcombine.high %v4604, %v4604
      %v4613 = vcombine.high %v4611, %v4611
      %v4615 = vunpack.c.l.s4 1966171168
      %v4616 = vunpack.c.0.s8 %v4615
      %v4617 = vlaneseq
      %v4618 = vshrl.u32 %v4617, 7
      %v4619 = vsub.s32 %v4616, %v4618
      %v4620 = vrot.slane %v4604, %v4619
      %v4622 = vunpack.c.l.s4 1966171168
      %v4623 = vunpack.c.0.s8 %v4622
      %v4624 = vlaneseq
      %v4625 = vshrl.u32 %v4624, 7
      %v4626 = vsub.s32 %v4623, %v4625
      %v4627 = vrot.slane %v4611, %v4626
      %v4629 = vunpack.c.l.s4 1966171168
      %v4630 = vunpack.c.0.s8 %v4629
      %v4631 = vlaneseq
      %v4632 = vshrl.u32 %v4631, 7
      %v4633 = vsub.s32 %v4630, %v4632
      %v4634 = vrot.slane %v4612, %v4633
      %v4636 = vunpack.c.l.s4 1966171168
      %v4637 = vunpack.c.0.s8 %v4636
      %v4638 = vlaneseq
      %v4639 = vshrl.u32 %v4638, 7
      %v4640 = vsub.s32 %v4637, %v4639
      %v4641 = vrot.slane %v4613, %v4640
      %v4642 = vcombine.high %v4620, %v4620
      %v4643 = vcombine.high %v4627, %v4627
      %v4644 = vcombine.high %v4634, %v4634
      %v4645 = vcombine.high %v4641, %v4641
      %4654 = vmatprep.subr.mxu0 0.0
      %4655 = vmatpush1.msra.mxu0 %v3591
      %4656 = vmatprep.subr.mxu0 0.0
      %4657 = vmatpush1.msra.mxu0 %v3592
      %4658 = vmatprep.subr.mxu0 0.0
      %4659 = vmatpush1.msra.mxu0 %v3593
      %4660 = vmatprep.subr.mxu0 0.0
      %4661 = vmatpush1.msra.mxu0 %v3594
      %4662 = vmatprep.subr.mxu0 0.0
      %4663 = vmatpush1.msra.mxu0 %v3595
      %4664 = vmatprep.subr.mxu0 0.0
      %4665 = vmatpush1.msra.mxu0 %v3596
      %4666 = vmatprep.subr.mxu0 0.0
      %4667 = vmatpush1.msra.mxu0 %v3597
      %4668 = vmatprep.subr.mxu0 0.0
      %4669 = vmatpush1.msra.mxu0 %v3598
      %4670 = vmatprep.subr.mxu0 0.0
      %4671 = vmatpush1.msra.mxu0 %v3599
      %4672 = vmatprep.subr.mxu0 0.0
      %4673 = vmatpush1.msra.mxu0 %v3600
      %4674 = vmatprep.subr.mxu0 0.0
      %4675 = vmatpush1.msra.mxu0 %v3601
      %4676 = vmatprep.subr.mxu0 0.0
      %4677 = vmatpush1.msra.mxu0 %v3602
      %4678 = vmatprep.subr.mxu0 0.0
      %4679 = vmatpush1.msra.mxu0 %v3603
      %4680 = vmatprep.subr.mxu0 0.0
      %4681 = vmatpush1.msra.mxu0 %v3604
      %4682 = vmatprep.subr.mxu0 0.0
      %4683 = vmatpush1.msra.mxu0 %v3605
      %4684 = vmatprep.subr.mxu0 0.0
      %4685 = vmatpush1.msra.mxu0 %v3606
      %4686 = vmatprep.subr.mxu0 0.0
      %4687 = vmatpush1.msra.mxu0 0.0
      %4688 = vmatprep.subr.mxu0 0.0
      %4689 = vmatpush1.msra.mxu0 0.0
      %4690 = vmatprep.subr.mxu0 0.0
      %4691 = vmatpush1.msra.mxu0 0.0
      %4692 = vmatprep.subr.mxu0 0.0
      %4693 = vmatpush1.msra.mxu0 0.0
      %4694 = vmatprep.subr.mxu0 0.0
      %4695 = vmatpush1.msra.mxu0 0.0
      %4696 = vmatprep.subr.mxu0 0.0
      %4697 = vmatpush1.msra.mxu0 0.0
      %4698 = vmatprep.subr.mxu0 0.0
      %4699 = vmatpush1.msra.mxu0 0.0
      %4700 = vmatprep.subr.mxu0 0.0
      %4701 = vmatpush1.msra.mxu0 0.0
      %4702 = vmatprep.subr.mxu0 0.0
      %4703 = vmatpush1.msra.mxu0 0.0
      %4704 = vmatprep.subr.mxu0 0.0
      %4705 = vmatpush1.msra.mxu0 0.0
      %4706 = vmatprep.subr.mxu0 0.0
      %4707 = vmatpush1.msra.mxu0 0.0
      %4708 = vmatprep.subr.mxu0 0.0
      %4709 = vmatpush1.msra.mxu0 0.0
      %4710 = vmatprep.subr.mxu0 0.0
      %4711 = vmatpush1.msra.mxu0 0.0
      %4712 = vmatprep.subr.mxu0 0.0
      %4713 = vmatpush1.msra.mxu0 0.0
      %4714 = vmatprep.subr.mxu0 0.0
      %4715 = vmatpush1.msra.mxu0 0.0
      %4716 = vmatprep.subr.mxu0 0.0
      %4717 = vmatpush1.msra.mxu0 0.0
      %4718 = vmatprep.mubr.f32.mxu0 0.0
      %4719 = vmatmul.mubr.f32.gmra.mrb[0].mxu0 %v4620
      %v4720 = vpop.f32.mrb[0].mxu0
      %v4721 = vadd.f32 0.0, %v4720
      %v4722 = vpop.f32.mrb[0].mxu0
      %4723 = vdwg.mxu0
      %4724 = vmatprep.subr.mxu0 0.0
      %4725 = vmatpush1.msra.mxu0 %v3607
      %4726 = vmatprep.subr.mxu0 0.0
      %4727 = vmatpush1.msra.mxu0 %v3608
      %4728 = vmatprep.subr.mxu0 0.0
      %4729 = vmatpush1.msra.mxu0 %v3609
      %4730 = vmatprep.subr.mxu0 0.0
      %4731 = vmatpush1.msra.mxu0 %v3610
      %4732 = vmatprep.subr.mxu0 0.0
      %4733 = vmatpush1.msra.mxu0 %v3611
      %4734 = vmatprep.subr.mxu0 0.0
      %4735 = vmatpush1.msra.mxu0 %v3612
      %4736 = vmatprep.subr.mxu0 0.0
      %4737 = vmatpush1.msra.mxu0 %v3613
      %4738 = vmatprep.subr.mxu0 0.0
      %4739 = vmatpush1.msra.mxu0 %v3614
      %4740 = vmatprep.subr.mxu0 0.0
      %4741 = vmatpush1.msra.mxu0 %v3615
      %4742 = vmatprep.subr.mxu0 0.0
      %4743 = vmatpush1.msra.mxu0 %v3616
      %4744 = vmatprep.subr.mxu0 0.0
      %4745 = vmatpush1.msra.mxu0 %v3617
      %4746 = vmatprep.subr.mxu0 0.0
      %4747 = vmatpush1.msra.mxu0 %v3618
      %4748 = vmatprep.subr.mxu0 0.0
      %4749 = vmatpush1.msra.mxu0 %v3619
      %4750 = vmatprep.subr.mxu0 0.0
      %4751 = vmatpush1.msra.mxu0 %v3620
      %4752 = vmatprep.subr.mxu0 0.0
      %4753 = vmatpush1.msra.mxu0 %v3621
      %4754 = vmatprep.subr.mxu0 0.0
      %4755 = vmatpush1.msra.mxu0 %v3622
      %4756 = vmatprep.subr.mxu0 0.0
      %4757 = vmatpush1.msra.mxu0 0.0
      %4758 = vmatprep.subr.mxu0 0.0
      %4759 = vmatpush1.msra.mxu0 0.0
      %4760 = vmatprep.subr.mxu0 0.0
      %4761 = vmatpush1.msra.mxu0 0.0
      %4762 = vmatprep.subr.mxu0 0.0
      %4763 = vmatpush1.msra.mxu0 0.0
      %4764 = vmatprep.subr.mxu0 0.0
      %4765 = vmatpush1.msra.mxu0 0.0
      %4766 = vmatprep.subr.mxu0 0.0
      %4767 = vmatpush1.msra.mxu0 0.0
      %4768 = vmatprep.subr.mxu0 0.0
      %4769 = vmatpush1.msra.mxu0 0.0
      %4770 = vmatprep.subr.mxu0 0.0
      %4771 = vmatpush1.msra.mxu0 0.0
      %4772 = vmatprep.subr.mxu0 0.0
      %4773 = vmatpush1.msra.mxu0 0.0
      %4774 = vmatprep.subr.mxu0 0.0
      %4775 = vmatpush1.msra.mxu0 0.0
      %4776 = vmatprep.subr.mxu0 0.0
      %4777 = vmatpush1.msra.mxu0 0.0
      %4778 = vmatprep.subr.mxu0 0.0
      %4779 = vmatpush1.msra.mxu0 0.0
      %4780 = vmatprep.subr.mxu0 0.0
      %4781 = vmatpush1.msra.mxu0 0.0
      %4782 = vmatprep.subr.mxu0 0.0
      %4783 = vmatpush1.msra.mxu0 0.0
      %4784 = vmatprep.subr.mxu0 0.0
      %4785 = vmatpush1.msra.mxu0 0.0
      %4786 = vmatprep.subr.mxu0 0.0
      %4787 = vmatpush1.msra.mxu0 0.0
      %4788 = vmatprep.mubr.f32.mxu0 0.0
      %4789 = vmatmul.mubr.f32.gmra.mrb[0].mxu0 %v4634
      %v4790 = vpop.f32.mrb[0].mxu0
      %v4791 = vadd.f32 0.0, %v4790
      %v4792 = vpop.f32.mrb[0].mxu0
      %4793 = vdwg.mxu0
      %4794 = vmatprep.subr.mxu0 0.0
      %4795 = vmatpush1.msra.mxu0 %v3623
      %4796 = vmatprep.subr.mxu0 0.0
      %4797 = vmatpush1.msra.mxu0 %v3624
      %4798 = vmatprep.subr.mxu0 0.0
      %4799 = vmatpush1.msra.mxu0 %v3625
      %4800 = vmatprep.subr.mxu0 0.0
      %4801 = vmatpush1.msra.mxu0 %v3626
      %4802 = vmatprep.subr.mxu0 0.0
      %4803 = vmatpush1.msra.mxu0 %v3627
      %4804 = vmatprep.subr.mxu0 0.0
      %4805 = vmatpush1.msra.mxu0 %v3628
      %4806 = vmatprep.subr.mxu0 0.0
      %4807 = vmatpush1.msra.mxu0 %v3629
      %4808 = vmatprep.subr.mxu0 0.0
      %4809 = vmatpush1.msra.mxu0 %v3630
      %4810 = vmatprep.subr.mxu0 0.0
      %4811 = vmatpush1.msra.mxu0 %v3631
      %4812 = vmatprep.subr.mxu0 0.0
      %4813 = vmatpush1.msra.mxu0 %v3632
      %4814 = vmatprep.subr.mxu0 0.0
      %4815 = vmatpush1.msra.mxu0 %v3633
      %4816 = vmatprep.subr.mxu0 0.0
      %4817 = vmatpush1.msra.mxu0 %v3634
      %4818 = vmatprep.subr.mxu0 0.0
      %4819 = vmatpush1.msra.mxu0 %v3635
      %4820 = vmatprep.subr.mxu0 0.0
      %4821 = vmatpush1.msra.mxu0 %v3636
      %4822 = vmatprep.subr.mxu0 0.0
      %4823 = vmatpush1.msra.mxu0 %v3637
      %4824 = vmatprep.subr.mxu0 0.0
      %4825 = vmatpush1.msra.mxu0 %v3638
      %4826 = vmatprep.subr.mxu0 0.0
      %4827 = vmatpush1.msra.mxu0 0.0
      %4828 = vmatprep.subr.mxu0 0.0
      %4829 = vmatpush1.msra.mxu0 0.0
      %4830 = vmatprep.subr.mxu0 0.0
      %4831 = vmatpush1.msra.mxu0 0.0
      %4832 = vmatprep.subr.mxu0 0.0
      %4833 = vmatpush1.msra.mxu0 0.0
      %4834 = vmatprep.subr.mxu0 0.0
      %4835 = vmatpush1.msra.mxu0 0.0
      %4836 = vmatprep.subr.mxu0 0.0
      %4837 = vmatpush1.msra.mxu0 0.0
      %4838 = vmatprep.subr.mxu0 0.0
      %4839 = vmatpush1.msra.mxu0 0.0
      %4840 = vmatprep.subr.mxu0 0.0
      %4841 = vmatpush1.msra.mxu0 0.0
      %4842 = vmatprep.subr.mxu0 0.0
      %4843 = vmatpush1.msra.mxu0 0.0
      %4844 = vmatprep.subr.mxu0 0.0
      %4845 = vmatpush1.msra.mxu0 0.0
      %4846 = vmatprep.subr.mxu0 0.0
      %4847 = vmatpush1.msra.mxu0 0.0
      %4848 = vmatprep.subr.mxu0 0.0
      %4849 = vmatpush1.msra.mxu0 0.0
      %4850 = vmatprep.subr.mxu0 0.0
      %4851 = vmatpush1.msra.mxu0 0.0
      %4852 = vmatprep.subr.mxu0 0.0
      %4853 = vmatpush1.msra.mxu0 0.0
      %4854 = vmatprep.subr.mxu0 0.0
      %4855 = vmatpush1.msra.mxu0 0.0
      %4856 = vmatprep.subr.mxu0 0.0
      %4857 = vmatpush1.msra.mxu0 0.0
      %4858 = vmatprep.mubr.f32.mxu0 0.0
      %4859 = vmatmul.mubr.f32.gmra.mrb[0].mxu0 %v4642
      %v4860 = vpop.f32.mrb[0].mxu0
      %v4861 = vadd.f32 0.0, %v4860
      %v4862 = vpop.f32.mrb[0].mxu0
      %4863 = vdwg.mxu0
      %4864 = vmatprep.subr.mxu0 0.0
      %4865 = vmatpush1.msra.mxu0 %v3639
      %4866 = vmatprep.subr.mxu0 0.0
      %4867 = vmatpush1.msra.mxu0 %v3640
      %4868 = vmatprep.subr.mxu0 0.0
      %4869 = vmatpush1.msra.mxu0 %v3641
      %4870 = vmatprep.subr.mxu0 0.0
      %4871 = vmatpush1.msra.mxu0 %v3642
      %4872 = vmatprep.subr.mxu0 0.0
      %4873 = vmatpush1.msra.mxu0 %v3643
      %4874 = vmatprep.subr.mxu0 0.0
      %4875 = vmatpush1.msra.mxu0 %v3644
      %4876 = vmatprep.subr.mxu0 0.0
      %4877 = vmatpush1.msra.mxu0 %v3645
      %4878 = vmatprep.subr.mxu0 0.0
      %4879 = vmatpush1.msra.mxu0 %v3646
      %4880 = vmatprep.subr.mxu0 0.0
      %4881 = vmatpush1.msra.mxu0 %v3647
      %4882 = vmatprep.subr.mxu0 0.0
      %4883 = vmatpush1.msra.mxu0 %v3648
      %4884 = vmatprep.subr.mxu0 0.0
      %4885 = vmatpush1.msra.mxu0 %v3649
      %4886 = vmatprep.subr.mxu0 0.0
      %4887 = vmatpush1.msra.mxu0 %v3650
      %4888 = vmatprep.subr.mxu0 0.0
      %4889 = vmatpush1.msra.mxu0 %v3651
      %4890 = vmatprep.subr.mxu0 0.0
      %4891 = vmatpush1.msra.mxu0 %v3652
      %4892 = vmatprep.subr.mxu0 0.0
      %4893 = vmatpush1.msra.mxu0 %v3653
      %4894 = vmatprep.subr.mxu0 0.0
      %4895 = vmatpush1.msra.mxu0 %v3654
      %4896 = vmatprep.subr.mxu0 0.0
      %4897 = vmatpush1.msra.mxu0 0.0
      %4898 = vmatprep.subr.mxu0 0.0
      %4899 = vmatpush1.msra.mxu0 0.0
      %4900 = vmatprep.subr.mxu0 0.0
      %4901 = vmatpush1.msra.mxu0 0.0
      %4902 = vmatprep.subr.mxu0 0.0
      %4903 = vmatpush1.msra.mxu0 0.0
      %4904 = vmatprep.subr.mxu0 0.0
      %4905 = vmatpush1.msra.mxu0 0.0
      %4906 = vmatprep.subr.mxu0 0.0
      %4907 = vmatpush1.msra.mxu0 0.0
      %4908 = vmatprep.subr.mxu0 0.0
      %4909 = vmatpush1.msra.mxu0 0.0
      %4910 = vmatprep.subr.mxu0 0.0
      %4911 = vmatpush1.msra.mxu0 0.0
      %4912 = vmatprep.subr.mxu0 0.0
      %4913 = vmatpush1.msra.mxu0 0.0
      %4914 = vmatprep.subr.mxu0 0.0
      %4915 = vmatpush1.msra.mxu0 0.0
      %4916 = vmatprep.subr.mxu0 0.0
      %4917 = vmatpush1.msra.mxu0 0.0
      %4918 = vmatprep.subr.mxu0 0.0
      %4919 = vmatpush1.msra.mxu0 0.0
      %4920 = vmatprep.subr.mxu0 0.0
      %4921 = vmatpush1.msra.mxu0 0.0
      %4922 = vmatprep.subr.mxu0 0.0
      %4923 = vmatpush1.msra.mxu0 0.0
      %4924 = vmatprep.subr.mxu0 0.0
      %4925 = vmatpush1.msra.mxu0 0.0
      %4926 = vmatprep.subr.mxu0 0.0
      %4927 = vmatpush1.msra.mxu0 0.0
      %4928 = vmatprep.mubr.f32.mxu0 0.0
      %4929 = vmatmul.mubr.f32.gmra.mrb[0].mxu0 %v4644
      %v4930 = vpop.f32.mrb[0].mxu0
      %v4931 = vadd.f32 0.0, %v4930
      %v4932 = vpop.f32.mrb[0].mxu0
      %4933 = vdwg.mxu0
      %4934 = vmatprep.subr.mxu0 0.0
      %4935 = vmatpush1.msra.mxu0 %v3655
      %4936 = vmatprep.subr.mxu0 0.0
      %4937 = vmatpush1.msra.mxu0 %v3656
      %4938 = vmatprep.subr.mxu0 0.0
      %4939 = vmatpush1.msra.mxu0 %v3657
      %4940 = vmatprep.subr.mxu0 0.0
      %4941 = vmatpush1.msra.mxu0 %v3658
      %4942 = vmatprep.subr.mxu0 0.0
      %4943 = vmatpush1.msra.mxu0 %v3659
      %4944 = vmatprep.subr.mxu0 0.0
      %4945 = vmatpush1.msra.mxu0 %v3660
      %4946 = vmatprep.subr.mxu0 0.0
      %4947 = vmatpush1.msra.mxu0 %v3661
      %4948 = vmatprep.subr.mxu0 0.0
      %4949 = vmatpush1.msra.mxu0 %v3662
      %4950 = vmatprep.subr.mxu0 0.0
      %4951 = vmatpush1.msra.mxu0 %v3663
      %4952 = vmatprep.subr.mxu0 0.0
      %4953 = vmatpush1.msra.mxu0 %v3664
      %4954 = vmatprep.subr.mxu0 0.0
      %4955 = vmatpush1.msra.mxu0 %v3665
      %4956 = vmatprep.subr.mxu0 0.0
      %4957 = vmatpush1.msra.mxu0 %v3666
      %4958 = vmatprep.subr.mxu0 0.0
      %4959 = vmatpush1.msra.mxu0 %v3667
      %4960 = vmatprep.subr.mxu0 0.0
      %4961 = vmatpush1.msra.mxu0 %v3668
      %4962 = vmatprep.subr.mxu0 0.0
      %4963 = vmatpush1.msra.mxu0 %v3669
      %4964 = vmatprep.subr.mxu0 0.0
      %4965 = vmatpush1.msra.mxu0 %v3670
      %4966 = vmatprep.subr.mxu0 0.0
      %4967 = vmatpush1.msra.mxu0 0.0
      %4968 = vmatprep.subr.mxu0 0.0
      %4969 = vmatpush1.msra.mxu0 0.0
      %4970 = vmatprep.subr.mxu0 0.0
      %4971 = vmatpush1.msra.mxu0 0.0
      %4972 = vmatprep.subr.mxu0 0.0
      %4973 = vmatpush1.msra.mxu0 0.0
      %4974 = vmatprep.subr.mxu0 0.0
      %4975 = vmatpush1.msra.mxu0 0.0
      %4976 = vmatprep.subr.mxu0 0.0
      %4977 = vmatpush1.msra.mxu0 0.0
      %4978 = vmatprep.subr.mxu0 0.0
      %4979 = vmatpush1.msra.mxu0 0.0
      %4980 = vmatprep.subr.mxu0 0.0
      %4981 = vmatpush1.msra.mxu0 0.0
      %4982 = vmatprep.subr.mxu0 0.0
      %4983 = vmatpush1.msra.mxu0 0.0
      %4984 = vmatprep.subr.mxu0 0.0
      %4985 = vmatpush1.msra.mxu0 0.0
      %4986 = vmatprep.subr.mxu0 0.0
      %4987 = vmatpush1.msra.mxu0 0.0
      %4988 = vmatprep.subr.mxu0 0.0
      %4989 = vmatpush1.msra.mxu0 0.0
      %4990 = vmatprep.subr.mxu0 0.0
      %4991 = vmatpush1.msra.mxu0 0.0
      %4992 = vmatprep.subr.mxu0 0.0
      %4993 = vmatpush1.msra.mxu0 0.0
      %4994 = vmatprep.subr.mxu0 0.0
      %4995 = vmatpush1.msra.mxu0 0.0
      %4996 = vmatprep.subr.mxu0 0.0
      %4997 = vmatpush1.msra.mxu0 0.0
      %4998 = vmatprep.mubr.f32.mxu0 0.0
      %4999 = vmatmul.mubr.f32.gmra.mrb[0].mxu0 %v4627
      %v5000 = vpop.f32.mrb[0].mxu0
      %v5001 = vadd.f32 0.0, %v5000
      %v5002 = vpop.f32.mrb[0].mxu0
      %5003 = vdwg.mxu0
      %5004 = vmatprep.subr.mxu0 0.0
      %5005 = vmatpush1.msra.mxu0 %v3671
      %5006 = vmatprep.subr.mxu0 0.0
      %5007 = vmatpush1.msra.mxu0 %v3672
      %5008 = vmatprep.subr.mxu0 0.0
      %5009 = vmatpush1.msra.mxu0 %v3673
      %5010 = vmatprep.subr.mxu0 0.0
      %5011 = vmatpush1.msra.mxu0 %v3674
      %5012 = vmatprep.subr.mxu0 0.0
      %5013 = vmatpush1.msra.mxu0 %v3675
      %5014 = vmatprep.subr.mxu0 0.0
      %5015 = vmatpush1.msra.mxu0 %v3676
      %5016 = vmatprep.subr.mxu0 0.0
      %5017 = vmatpush1.msra.mxu0 %v3677
      %5018 = vmatprep.subr.mxu0 0.0
      %5019 = vmatpush1.msra.mxu0 %v3678
      %5020 = vmatprep.subr.mxu0 0.0
      %5021 = vmatpush1.msra.mxu0 %v3679
      %5022 = vmatprep.subr.mxu0 0.0
      %5023 = vmatpush1.msra.mxu0 %v3680
      %5024 = vmatprep.subr.mxu0 0.0
      %5025 = vmatpush1.msra.mxu0 %v3681
      %5026 = vmatprep.subr.mxu0 0.0
      %5027 = vmatpush1.msra.mxu0 %v3682
      %5028 = vmatprep.subr.mxu0 0.0
      %5029 = vmatpush1.msra.mxu0 %v3683
      %5030 = vmatprep.subr.mxu0 0.0
      %5031 = vmatpush1.msra.mxu0 %v3684
      %5032 = vmatprep.subr.mxu0 0.0
      %5033 = vmatpush1.msra.mxu0 %v3685
      %5034 = vmatprep.subr.mxu0 0.0
      %5035 = vmatpush1.msra.mxu0 %v3686
      %5036 = vmatprep.subr.mxu0 0.0
      %5037 = vmatpush1.msra.mxu0 0.0
      %5038 = vmatprep.subr.mxu0 0.0
      %5039 = vmatpush1.msra.mxu0 0.0
      %5040 = vmatprep.subr.mxu0 0.0
      %5041 = vmatpush1.msra.mxu0 0.0
      %5042 = vmatprep.subr.mxu0 0.0
      %5043 = vmatpush1.msra.mxu0 0.0
      %5044 = vmatprep.subr.mxu0 0.0
      %5045 = vmatpush1.msra.mxu0 0.0
      %5046 = vmatprep.subr.mxu0 0.0
      %5047 = vmatpush1.msra.mxu0 0.0
      %5048 = vmatprep.subr.mxu0 0.0
      %5049 = vmatpush1.msra.mxu0 0.0
      %5050 = vmatprep.subr.mxu0 0.0
      %5051 = vmatpush1.msra.mxu0 0.0
      %5052 = vmatprep.subr.mxu0 0.0
      %5053 = vmatpush1.msra.mxu0 0.0
      %5054 = vmatprep.subr.mxu0 0.0
      %5055 = vmatpush1.msra.mxu0 0.0
      %5056 = vmatprep.subr.mxu0 0.0
      %5057 = vmatpush1.msra.mxu0 0.0
      %5058 = vmatprep.subr.mxu0 0.0
      %5059 = vmatpush1.msra.mxu0 0.0
      %5060 = vmatprep.subr.mxu0 0.0
      %5061 = vmatpush1.msra.mxu0 0.0
      %5062 = vmatprep.subr.mxu0 0.0
      %5063 = vmatpush1.msra.mxu0 0.0
      %5064 = vmatprep.subr.mxu0 0.0
      %5065 = vmatpush1.msra.mxu0 0.0
      %5066 = vmatprep.subr.mxu0 0.0
      %5067 = vmatpush1.msra.mxu0 0.0
      %5068 = vmatprep.mubr.f32.mxu0 0.0
      %5069 = vmatmul.mubr.f32.gmra.mrb[0].mxu0 %v4641
      %v5070 = vpop.f32.mrb[0].mxu0
      %v5071 = vadd.f32 0.0, %v5070
      %v5072 = vpop.f32.mrb[0].mxu0
      %5073 = vdwg.mxu0
      %5074 = vmatprep.subr.mxu0 0.0
      %5075 = vmatpush1.msra.mxu0 %v3687
      %5076 = vmatprep.subr.mxu0 0.0
      %5077 = vmatpush1.msra.mxu0 %v3688
      %5078 = vmatprep.subr.mxu0 0.0
      %5079 = vmatpush1.msra.mxu0 %v3689
      %5080 = vmatprep.subr.mxu0 0.0
      %5081 = vmatpush1.msra.mxu0 %v3690
      %5082 = vmatprep.subr.mxu0 0.0
      %5083 = vmatpush1.msra.mxu0 %v3691
      %5084 = vmatprep.subr.mxu0 0.0
      %5085 = vmatpush1.msra.mxu0 %v3692
      %5086 = vmatprep.subr.mxu0 0.0
      %5087 = vmatpush1.msra.mxu0 %v3693
      %5088 = vmatprep.subr.mxu0 0.0
      %5089 = vmatpush1.msra.mxu0 %v3694
      %5090 = vmatprep.subr.mxu0 0.0
      %5091 = vmatpush1.msra.mxu0 %v3695
      %5092 = vmatprep.subr.mxu0 0.0
      %5093 = vmatpush1.msra.mxu0 %v3696
      %5094 = vmatprep.subr.mxu0 0.0
      %5095 = vmatpush1.msra.mxu0 %v3697
      %5096 = vmatprep.subr.mxu0 0.0
      %5097 = vmatpush1.msra.mxu0 %v3698
      %5098 = vmatprep.subr.mxu0 0.0
      %5099 = vmatpush1.msra.mxu0 %v3699
      %5100 = vmatprep.subr.mxu0 0.0
      %5101 = vmatpush1.msra.mxu0 %v3700
      %5102 = vmatprep.subr.mxu0 0.0
      %5103 = vmatpush1.msra.mxu0 %v3701
      %5104 = vmatprep.subr.mxu0 0.0
      %5105 = vmatpush1.msra.mxu0 %v3702
      %5106 = vmatprep.subr.mxu0 0.0
      %5107 = vmatpush1.msra.mxu0 0.0
      %5108 = vmatprep.subr.mxu0 0.0
      %5109 = vmatpush1.msra.mxu0 0.0
      %5110 = vmatprep.subr.mxu0 0.0
      %5111 = vmatpush1.msra.mxu0 0.0
      %5112 = vmatprep.subr.mxu0 0.0
      %5113 = vmatpush1.msra.mxu0 0.0
      %5114 = vmatprep.subr.mxu0 0.0
      %5115 = vmatpush1.msra.mxu0 0.0
      %5116 = vmatprep.subr.mxu0 0.0
      %5117 = vmatpush1.msra.mxu0 0.0
      %5118 = vmatprep.subr.mxu0 0.0
      %5119 = vmatpush1.msra.mxu0 0.0
      %5120 = vmatprep.subr.mxu0 0.0
      %5121 = vmatpush1.msra.mxu0 0.0
      %5122 = vmatprep.subr.mxu0 0.0
      %5123 = vmatpush1.msra.mxu0 0.0
      %5124 = vmatprep.subr.mxu0 0.0
      %5125 = vmatpush1.msra.mxu0 0.0
      %5126 = vmatprep.subr.mxu0 0.0
      %5127 = vmatpush1.msra.mxu0 0.0
      %5128 = vmatprep.subr.mxu0 0.0
      %5129 = vmatpush1.msra.mxu0 0.0
      %5130 = vmatprep.subr.mxu0 0.0
      %5131 = vmatpush1.msra.mxu0 0.0
      %5132 = vmatprep.subr.mxu0 0.0
      %5133 = vmatpush1.msra.mxu0 0.0
      %5134 = vmatprep.subr.mxu0 0.0
      %5135 = vmatpush1.msra.mxu0 0.0
      %5136 = vmatprep.subr.mxu0 0.0
      %5137 = vmatpush1.msra.mxu0 0.0
      %5138 = vmatprep.mubr.f32.mxu0 0.0
      %5139 = vmatmul.mubr.f32.gmra.mrb[0].mxu0 %v4643
      %v5140 = vpop.f32.mrb[0].mxu0
      %v5141 = vadd.f32 0.0, %v5140
      %v5142 = vpop.f32.mrb[0].mxu0
      %5143 = vdwg.mxu0
      %5144 = vmatprep.subr.mxu0 0.0
      %5145 = vmatpush1.msra.mxu0 %v3703
      %5146 = vmatprep.subr.mxu0 0.0
      %5147 = vmatpush1.msra.mxu0 %v3704
      %5148 = vmatprep.subr.mxu0 0.0
      %5149 = vmatpush1.msra.mxu0 %v3705
      %5150 = vmatprep.subr.mxu0 0.0
      %5151 = vmatpush1.msra.mxu0 %v3706
      %5152 = vmatprep.subr.mxu0 0.0
      %5153 = vmatpush1.msra.mxu0 %v3707
      %5154 = vmatprep.subr.mxu0 0.0
      %5155 = vmatpush1.msra.mxu0 %v3708
      %5156 = vmatprep.subr.mxu0 0.0
      %5157 = vmatpush1.msra.mxu0 %v3709
      %5158 = vmatprep.subr.mxu0 0.0
      %5159 = vmatpush1.msra.mxu0 %v3710
      %5160 = vmatprep.subr.mxu0 0.0
      %5161 = vmatpush1.msra.mxu0 %v3711
      %5162 = vmatprep.subr.mxu0 0.0
      %5163 = vmatpush1.msra.mxu0 %v3712
      %5164 = vmatprep.subr.mxu0 0.0
      %5165 = vmatpush1.msra.mxu0 %v3713
      %5166 = vmatprep.subr.mxu0 0.0
      %5167 = vmatpush1.msra.mxu0 %v3714
      %5168 = vmatprep.subr.mxu0 0.0
      %5169 = vmatpush1.msra.mxu0 %v3715
      %5170 = vmatprep.subr.mxu0 0.0
      %5171 = vmatpush1.msra.mxu0 %v3716
      %5172 = vmatprep.subr.mxu0 0.0
      %5173 = vmatpush1.msra.mxu0 %v3717
      %5174 = vmatprep.subr.mxu0 0.0
      %5175 = vmatpush1.msra.mxu0 %v3718
      %5176 = vmatprep.subr.mxu0 0.0
      %5177 = vmatpush1.msra.mxu0 0.0
      %5178 = vmatprep.subr.mxu0 0.0
      %5179 = vmatpush1.msra.mxu0 0.0
      %5180 = vmatprep.subr.mxu0 0.0
      %5181 = vmatpush1.msra.mxu0 0.0
      %5182 = vmatprep.subr.mxu0 0.0
      %5183 = vmatpush1.msra.mxu0 0.0
      %5184 = vmatprep.subr.mxu0 0.0
      %5185 = vmatpush1.msra.mxu0 0.0
      %5186 = vmatprep.subr.mxu0 0.0
      %5187 = vmatpush1.msra.mxu0 0.0
      %5188 = vmatprep.subr.mxu0 0.0
      %5189 = vmatpush1.msra.mxu0 0.0
      %5190 = vmatprep.subr.mxu0 0.0
      %5191 = vmatpush1.msra.mxu0 0.0
      %5192 = vmatprep.subr.mxu0 0.0
      %5193 = vmatpush1.msra.mxu0 0.0
      %5194 = vmatprep.subr.mxu0 0.0
      %5195 = vmatpush1.msra.mxu0 0.0
      %5196 = vmatprep.subr.mxu0 0.0
      %5197 = vmatpush1.msra.mxu0 0.0
      %5198 = vmatprep.subr.mxu0 0.0
      %5199 = vmatpush1.msra.mxu0 0.0
      %5200 = vmatprep.subr.mxu0 0.0
      %5201 = vmatpush1.msra.mxu0 0.0
      %5202 = vmatprep.subr.mxu0 0.0
      %5203 = vmatpush1.msra.mxu0 0.0
      %5204 = vmatprep.subr.mxu0 0.0
      %5205 = vmatpush1.msra.mxu0 0.0
      %5206 = vmatprep.subr.mxu0 0.0
      %5207 = vmatpush1.msra.mxu0 0.0
      %5208 = vmatprep.mubr.f32.mxu0 0.0
      %5209 = vmatmul.mubr.f32.gmra.mrb[0].mxu0 %v4645
      %v5210 = vpop.f32.mrb[0].mxu0
      %v5211 = vadd.f32 0.0, %v5210
      %v5212 = vpop.f32.mrb[0].mxu0
      %5213 = vdwg.mxu0
      %v5214 = vld [vmem:[#allocation12] sm:$0xff]
      %v5215 = vld [vmem:[#allocation12 + $0x8] sm:$0xff]
      %v5216 = vld [vmem:[#allocation12 + $0x10] sm:$0xff]
      %v5217 = vld [vmem:[#allocation12 + $0x18] sm:$0xff]
      %v5218 = vld [vmem:[#allocation12 + $0x20] sm:$0xff]
      %v5219 = vld [vmem:[#allocation12 + $0x28] sm:$0xff]
      %v5220 = vld [vmem:[#allocation12 + $0x30] sm:$0xff]
      %v5221 = vld [vmem:[#allocation12 + $0x38] sm:$0xff]
      %v5222 = vld [vmem:[#allocation12 + $0x40] sm:$0xff]
      %v5223 = vld [vmem:[#allocation12 + $0x48] sm:$0xff]
      %v5224 = vld [vmem:[#allocation12 + $0x50] sm:$0xff]
      %v5225 = vld [vmem:[#allocation12 + $0x58] sm:$0xff]
      %v5226 = vld [vmem:[#allocation12 + $0x60] sm:$0xff]
      %v5227 = vld [vmem:[#allocation12 + $0x68] sm:$0xff]
      %v5228 = vld [vmem:[#allocation12 + $0x70] sm:$0xff]
      %v5229 = vld [vmem:[#allocation12 + $0x78] sm:$0xff]
      %v5238 = vrot.slane %v4791, 7
      %v5239 = vsel %vm4564, %v5238, %v4721
      %v5240 = vrot.slane %v4861, 6
      %v5241 = vsel %vm4567, %v5240, %v5239
      %v5242 = vrot.slane %v4931, 5
      %v5243 = vsel %vm4570, %v5242, %v5241
      %v5244 = vrot.slane %v5001, 4
      %v5245 = vsel %vm4573, %v5244, %v5243
      %v5246 = vrot.slane %v5071, 3
      %v5247 = vsel %vm4576, %v5246, %v5245
      %v5248 = vrot.slane %v5141, 2
      %v5249 = vsel %vm4579, %v5248, %v5247
      %v5250 = vrot.slane %v5211, 1
      %v5251 = vsel %vm4582, %v5250, %v5249
      %5253 = vmatprep.subr.mxu0 0.0
      %5254 = vmatpush1.msra.mxu0 %v5214
      %5255 = vmatprep.subr.mxu0 0.0
      %5256 = vmatpush1.msra.mxu0 %v5215
      %5257 = vmatprep.subr.mxu0 0.0
      %5258 = vmatpush1.msra.mxu0 %v5216
      %5259 = vmatprep.subr.mxu0 0.0
      %5260 = vmatpush1.msra.mxu0 %v5217
      %5261 = vmatprep.subr.mxu0 0.0
      %5262 = vmatpush1.msra.mxu0 %v5218
      %5263 = vmatprep.subr.mxu0 0.0
      %5264 = vmatpush1.msra.mxu0 %v5219
      %5265 = vmatprep.subr.mxu0 0.0
      %5266 = vmatpush1.msra.mxu0 %v5220
      %5267 = vmatprep.subr.mxu0 0.0
      %5268 = vmatpush1.msra.mxu0 %v5221
      %5269 = vmatprep.subr.mxu0 0.0
      %5270 = vmatpush1.msra.mxu0 %v5222
      %5271 = vmatprep.subr.mxu0 0.0
      %5272 = vmatpush1.msra.mxu0 %v5223
      %5273 = vmatprep.subr.mxu0 0.0
      %5274 = vmatpush1.msra.mxu0 %v5224
      %5275 = vmatprep.subr.mxu0 0.0
      %5276 = vmatpush1.msra.mxu0 %v5225
      %5277 = vmatprep.subr.mxu0 0.0
      %5278 = vmatpush1.msra.mxu0 %v5226
      %5279 = vmatprep.subr.mxu0 0.0
      %5280 = vmatpush1.msra.mxu0 %v5227
      %5281 = vmatprep.subr.mxu0 0.0
      %5282 = vmatpush1.msra.mxu0 %v5228
      %5283 = vmatprep.subr.mxu0 0.0
      %5284 = vmatpush1.msra.mxu0 %v5229
      %5285 = vmatprep.subr.mxu0 0.0
      %5286 = vmatpush1.msra.mxu0 0.0
      %5287 = vmatprep.subr.mxu0 0.0
      %5288 = vmatpush1.msra.mxu0 0.0
      %5289 = vmatprep.subr.mxu0 0.0
      %5290 = vmatpush1.msra.mxu0 0.0
      %5291 = vmatprep.subr.mxu0 0.0
      %5292 = vmatpush1.msra.mxu0 0.0
      %5293 = vmatprep.subr.mxu0 0.0
      %5294 = vmatpush1.msra.mxu0 0.0
      %5295 = vmatprep.subr.mxu0 0.0
      %5296 = vmatpush1.msra.mxu0 0.0
      %5297 = vmatprep.subr.mxu0 0.0
      %5298 = vmatpush1.msra.mxu0 0.0
      %5299 = vmatprep.subr.mxu0 0.0
      %5300 = vmatpush1.msra.mxu0 0.0
      %5301 = vmatprep.subr.mxu0 0.0
      %5302 = vmatpush1.msra.mxu0 0.0
      %5303 = vmatprep.subr.mxu0 0.0
      %5304 = vmatpush1.msra.mxu0 0.0
      %5305 = vmatprep.subr.mxu0 0.0
      %5306 = vmatpush1.msra.mxu0 0.0
      %5307 = vmatprep.subr.mxu0 0.0
      %5308 = vmatpush1.msra.mxu0 0.0
      %5309 = vmatprep.subr.mxu0 0.0
      %5310 = vmatpush1.msra.mxu0 0.0
      %5311 = vmatprep.subr.mxu0 0.0
      %5312 = vmatpush1.msra.mxu0 0.0
      %5313 = vmatprep.subr.mxu0 0.0
      %5314 = vmatpush1.msra.mxu0 0.0
      %5315 = vmatprep.subr.mxu0 0.0
      %5316 = vmatpush1.msra.mxu0 0.0
      %5317 = vmatprep.mubr.f32.mxu0 0.0
      %5318 = vmatmul.mubr.f32.gmra.mrb[0].mxu0 %v5251
      %v5319 = vpop.f32.mrb[0].mxu0
      %v5320 = vadd.f32 0.0, %v5319
      %v5321 = vpop.f32.mrb[0].mxu0
      %5322 = vdwg.mxu0
      %v5323 = vadd.f32 %v3462, %v5320
      %v5324 = vld [vmem:[#allocation13] sm:$0xff]
      %v5325 = vld [vmem:[#allocation13 + $0x8] sm:$0xff]
      %v5326 = vld [vmem:[#allocation13 + $0x10] sm:$0xff]
      %v5327 = vld [vmem:[#allocation13 + $0x18] sm:$0xff]
      %v5328 = vld [vmem:[#allocation13 + $0x20] sm:$0xff]
      %v5329 = vld [vmem:[#allocation13 + $0x28] sm:$0xff]
      %v5330 = vld [vmem:[#allocation13 + $0x30] sm:$0xff]
      %v5331 = vld [vmem:[#allocation13 + $0x38] sm:$0xff]
      %v5332 = vld [vmem:[#allocation13 + $0x40] sm:$0xff]
      %v5333 = vld [vmem:[#allocation13 + $0x48] sm:$0xff]
      %v5334 = vld [vmem:[#allocation13 + $0x50] sm:$0xff]
      %v5335 = vld [vmem:[#allocation13 + $0x58] sm:$0xff]
      %v5336 = vld [vmem:[#allocation13 + $0x60] sm:$0xff]
      %v5337 = vld [vmem:[#allocation13 + $0x68] sm:$0xff]
      %v5338 = vld [vmem:[#allocation13 + $0x70] sm:$0xff]
      %v5339 = vld [vmem:[#allocation13 + $0x78] sm:$0xff]
      %5340 = vmatprep.subr.mxu0 0.0
      %5341 = vmatpush1.msra.mxu0 %v5324
      %5342 = vmatprep.subr.mxu0 0.0
      %5343 = vmatpush1.msra.mxu0 %v5325
      %5344 = vmatprep.subr.mxu0 0.0
      %5345 = vmatpush1.msra.mxu0 %v5326
      %5346 = vmatprep.subr.mxu0 0.0
      %5347 = vmatpush1.msra.mxu0 %v5327
      %5348 = vmatprep.subr.mxu0 0.0
      %5349 = vmatpush1.msra.mxu0 %v5328
      %5350 = vmatprep.subr.mxu0 0.0
      %5351 = vmatpush1.msra.mxu0 %v5329
      %5352 = vmatprep.subr.mxu0 0.0
      %5353 = vmatpush1.msra.mxu0 %v5330
      %5354 = vmatprep.subr.mxu0 0.0
      %5355 = vmatpush1.msra.mxu0 %v5331
      %5356 = vmatprep.subr.mxu0 0.0
      %5357 = vmatpush1.msra.mxu0 %v5332
      %5358 = vmatprep.subr.mxu0 0.0
      %5359 = vmatpush1.msra.mxu0 %v5333
      %5360 = vmatprep.subr.mxu0 0.0
      %5361 = vmatpush1.msra.mxu0 %v5334
      %5362 = vmatprep.subr.mxu0 0.0
      %5363 = vmatpush1.msra.mxu0 %v5335
      %5364 = vmatprep.subr.mxu0 0.0
      %5365 = vmatpush1.msra.mxu0 %v5336
      %5366 = vmatprep.subr.mxu0 0.0
      %5367 = vmatpush1.msra.mxu0 %v5337
      %5368 = vmatprep.subr.mxu0 0.0
      %5369 = vmatpush1.msra.mxu0 %v5338
      %5370 = vmatprep.subr.mxu0 0.0
      %5371 = vmatpush1.msra.mxu0 %v5339
      %5372 = vmatprep.subr.mxu0 0.0
      %5373 = vmatpush1.msra.mxu0 0.0
      %5374 = vmatprep.subr.mxu0 0.0
      %5375 = vmatpush1.msra.mxu0 0.0
      %5376 = vmatprep.subr.mxu0 0.0
      %5377 = vmatpush1.msra.mxu0 0.0
      %5378 = vmatprep.subr.mxu0 0.0
      %5379 = vmatpush1.msra.mxu0 0.0
      %5380 = vmatprep.subr.mxu0 0.0
      %5381 = vmatpush1.msra.mxu0 0.0
      %5382 = vmatprep.subr.mxu0 0.0
      %5383 = vmatpush1.msra.mxu0 0.0
      %5384 = vmatprep.subr.mxu0 0.0
      %5385 = vmatpush1.msra.mxu0 0.0
      %5386 = vmatprep.subr.mxu0 0.0
      %5387 = vmatpush1.msra.mxu0 0.0
      %5388 = vmatprep.subr.mxu0 0.0
      %5389 = vmatpush1.msra.mxu0 0.0
      %5390 = vmatprep.subr.mxu0 0.0
      %5391 = vmatpush1.msra.mxu0 0.0
      %5392 = vmatprep.subr.mxu0 0.0
      %5393 = vmatpush1.msra.mxu0 0.0
      %5394 = vmatprep.subr.mxu0 0.0
      %5395 = vmatpush1.msra.mxu0 0.0
      %5396 = vmatprep.subr.mxu0 0.0
      %5397 = vmatpush1.msra.mxu0 0.0
      %5398 = vmatprep.subr.mxu0 0.0
      %5399 = vmatpush1.msra.mxu0 0.0
      %5400 = vmatprep.subr.mxu0 0.0
      %5401 = vmatpush1.msra.mxu0 0.0
      %5402 = vmatprep.subr.mxu0 0.0
      %5403 = vmatpush1.msra.mxu0 0.0
      %5404 = vmatprep.mubr.f32.mxu0 0.0
      %5405 = vmatmul.mubr.f32.gmra.mrb[0].mxu0 %v5323
      %v5406 = vpop.f32.mrb[0].mxu0
      %v5407 = vadd.f32 0.0, %v5406
      %v5408 = vpop.f32.mrb[0].mxu0
      %5409 = vdwg.mxu0
      %v5411 = vcombine.high %v5407, %v5407
      %v5413 = vunpack.c.l.s4 1966171168
      %v5414 = vunpack.c.0.s8 %v5413
      %v5415 = vlaneseq
      %v5416 = vshrl.u32 %v5415, 7
      %v5417 = vsub.s32 %v5414, %v5416
      %v5418 = vrot.slane %v5407, %v5417
      %v5420 = vunpack.c.l.s4 1966171168
      %v5421 = vunpack.c.0.s8 %v5420
      %v5422 = vlaneseq
      %v5423 = vshrl.u32 %v5422, 7
      %v5424 = vsub.s32 %v5421, %v5423
      %v5425 = vrot.slane %v5411, %v5424
      %v5426 = vcombine.high %v5418, %v5418
      %v5427 = vcombine.high %v5425, %v5425
      %v5429 = vunpack.c.l.s4 1966171168
      %v5430 = vunpack.c.0.s8 %v5429
      %v5431 = vlaneseq
      %v5432 = vshrl.u32 %v5431, 7
      %v5433 = vsub.s32 %v5430, %v5432
      %v5434 = vrot.slane %v5418, %v5433
      %v5436 = vunpack.c.l.s4 1966171168
      %v5437 = vunpack.c.0.s8 %v5436
      %v5438 = vlaneseq
      %v5439 = vshrl.u32 %v5438, 7
      %v5440 = vsub.s32 %v5437, %v5439
      %v5441 = vrot.slane %v5425, %v5440
      %v5443 = vunpack.c.l.s4 1966171168
      %v5444 = vunpack.c.0.s8 %v5443
      %v5445 = vlaneseq
      %v5446 = vshrl.u32 %v5445, 7
      %v5447 = vsub.s32 %v5444, %v5446
      %v5448 = vrot.slane %v5426, %v5447
      %v5450 = vunpack.c.l.s4 1966171168
      %v5451 = vunpack.c.0.s8 %v5450
      %v5452 = vlaneseq
      %v5453 = vshrl.u32 %v5452, 7
      %v5454 = vsub.s32 %v5451, %v5453
      %v5455 = vrot.slane %v5427, %v5454
      %v5456 = vcombine.high %v5434, %v5434
      %v5457 = vcombine.high %v5441, %v5441
      %v5458 = vcombine.high %v5448, %v5448
      %v5459 = vcombine.high %v5455, %v5455
      %5468 = vmatprep.subr.mxu0 0.0
      %5469 = vmatpush1.msra.mxu0 %v3719
      %5470 = vmatprep.subr.mxu0 0.0
      %5471 = vmatpush1.msra.mxu0 %v3720
      %5472 = vmatprep.subr.mxu0 0.0
      %5473 = vmatpush1.msra.mxu0 %v3721
      %5474 = vmatprep.subr.mxu0 0.0
      %5475 = vmatpush1.msra.mxu0 %v3722
      %5476 = vmatprep.subr.mxu0 0.0
      %5477 = vmatpush1.msra.mxu0 %v3723
      %5478 = vmatprep.subr.mxu0 0.0
      %5479 = vmatpush1.msra.mxu0 %v3724
      %5480 = vmatprep.subr.mxu0 0.0
      %5481 = vmatpush1.msra.mxu0 %v3725
      %5482 = vmatprep.subr.mxu0 0.0
      %5483 = vmatpush1.msra.mxu0 %v3726
      %5484 = vmatprep.subr.mxu0 0.0
      %5485 = vmatpush1.msra.mxu0 %v3727
      %5486 = vmatprep.subr.mxu0 0.0
      %5487 = vmatpush1.msra.mxu0 %v3728
      %5488 = vmatprep.subr.mxu0 0.0
      %5489 = vmatpush1.msra.mxu0 %v3729
      %5490 = vmatprep.subr.mxu0 0.0
      %5491 = vmatpush1.msra.mxu0 %v3730
      %5492 = vmatprep.subr.mxu0 0.0
      %5493 = vmatpush1.msra.mxu0 %v3731
      %5494 = vmatprep.subr.mxu0 0.0
      %5495 = vmatpush1.msra.mxu0 %v3732
      %5496 = vmatprep.subr.mxu0 0.0
      %5497 = vmatpush1.msra.mxu0 %v3733
      %5498 = vmatprep.subr.mxu0 0.0
      %5499 = vmatpush1.msra.mxu0 %v3734
      %5500 = vmatprep.subr.mxu0 0.0
      %5501 = vmatpush1.msra.mxu0 0.0
      %5502 = vmatprep.subr.mxu0 0.0
      %5503 = vmatpush1.msra.mxu0 0.0
      %5504 = vmatprep.subr.mxu0 0.0
      %5505 = vmatpush1.msra.mxu0 0.0
      %5506 = vmatprep.subr.mxu0 0.0
      %5507 = vmatpush1.msra.mxu0 0.0
      %5508 = vmatprep.subr.mxu0 0.0
      %5509 = vmatpush1.msra.mxu0 0.0
      %5510 = vmatprep.subr.mxu0 0.0
      %5511 = vmatpush1.msra.mxu0 0.0
      %5512 = vmatprep.subr.mxu0 0.0
      %5513 = vmatpush1.msra.mxu0 0.0
      %5514 = vmatprep.subr.mxu0 0.0
      %5515 = vmatpush1.msra.mxu0 0.0
      %5516 = vmatprep.subr.mxu0 0.0
      %5517 = vmatpush1.msra.mxu0 0.0
      %5518 = vmatprep.subr.mxu0 0.0
      %5519 = vmatpush1.msra.mxu0 0.0
      %5520 = vmatprep.subr.mxu0 0.0
      %5521 = vmatpush1.msra.mxu0 0.0
      %5522 = vmatprep.subr.mxu0 0.0
      %5523 = vmatpush1.msra.mxu0 0.0
      %5524 = vmatprep.subr.mxu0 0.0
      %5525 = vmatpush1.msra.mxu0 0.0
      %5526 = vmatprep.subr.mxu0 0.0
      %5527 = vmatpush1.msra.mxu0 0.0
      %5528 = vmatprep.subr.mxu0 0.0
      %5529 = vmatpush1.msra.mxu0 0.0
      %5530 = vmatprep.subr.mxu0 0.0
      %5531 = vmatpush1.msra.mxu0 0.0
      %5532 = vmatprep.mubr.f32.mxu0 0.0
      %5533 = vmatmul.mubr.f32.gmra.mrb[0].mxu0 %v5434
      %v5534 = vpop.f32.mrb[0].mxu0
      %v5535 = vadd.f32 0.0, %v5534
      %v5536 = vpop.f32.mrb[0].mxu0
      %5537 = vdwg.mxu0
      %5538 = vmatprep.subr.mxu0 0.0
      %5539 = vmatpush1.msra.mxu0 %v3735
      %5540 = vmatprep.subr.mxu0 0.0
      %5541 = vmatpush1.msra.mxu0 %v3736
      %5542 = vmatprep.subr.mxu0 0.0
      %5543 = vmatpush1.msra.mxu0 %v3737
      %5544 = vmatprep.subr.mxu0 0.0
      %5545 = vmatpush1.msra.mxu0 %v3738
      %5546 = vmatprep.subr.mxu0 0.0
      %5547 = vmatpush1.msra.mxu0 %v3739
      %5548 = vmatprep.subr.mxu0 0.0
      %5549 = vmatpush1.msra.mxu0 %v3740
      %5550 = vmatprep.subr.mxu0 0.0
      %5551 = vmatpush1.msra.mxu0 %v3741
      %5552 = vmatprep.subr.mxu0 0.0
      %5553 = vmatpush1.msra.mxu0 %v3742
      %5554 = vmatprep.subr.mxu0 0.0
      %5555 = vmatpush1.msra.mxu0 %v3743
      %5556 = vmatprep.subr.mxu0 0.0
      %5557 = vmatpush1.msra.mxu0 %v3744
      %5558 = vmatprep.subr.mxu0 0.0
      %5559 = vmatpush1.msra.mxu0 %v3745
      %5560 = vmatprep.subr.mxu0 0.0
      %5561 = vmatpush1.msra.mxu0 %v3746
      %5562 = vmatprep.subr.mxu0 0.0
      %5563 = vmatpush1.msra.mxu0 %v3747
      %5564 = vmatprep.subr.mxu0 0.0
      %5565 = vmatpush1.msra.mxu0 %v3748
      %5566 = vmatprep.subr.mxu0 0.0
      %5567 = vmatpush1.msra.mxu0 %v3749
      %5568 = vmatprep.subr.mxu0 0.0
      %5569 = vmatpush1.msra.mxu0 %v3750
      %5570 = vmatprep.subr.mxu0 0.0
      %5571 = vmatpush1.msra.mxu0 0.0
      %5572 = vmatprep.subr.mxu0 0.0
      %5573 = vmatpush1.msra.mxu0 0.0
      %5574 = vmatprep.subr.mxu0 0.0
      %5575 = vmatpush1.msra.mxu0 0.0
      %5576 = vmatprep.subr.mxu0 0.0
      %5577 = vmatpush1.msra.mxu0 0.0
      %5578 = vmatprep.subr.mxu0 0.0
      %5579 = vmatpush1.msra.mxu0 0.0
      %5580 = vmatprep.subr.mxu0 0.0
      %5581 = vmatpush1.msra.mxu0 0.0
      %5582 = vmatprep.subr.mxu0 0.0
      %5583 = vmatpush1.msra.mxu0 0.0
      %5584 = vmatprep.subr.mxu0 0.0
      %5585 = vmatpush1.msra.mxu0 0.0
      %5586 = vmatprep.subr.mxu0 0.0
      %5587 = vmatpush1.msra.mxu0 0.0
      %5588 = vmatprep.subr.mxu0 0.0
      %5589 = vmatpush1.msra.mxu0 0.0
      %5590 = vmatprep.subr.mxu0 0.0
      %5591 = vmatpush1.msra.mxu0 0.0
      %5592 = vmatprep.subr.mxu0 0.0
      %5593 = vmatpush1.msra.mxu0 0.0
      %5594 = vmatprep.subr.mxu0 0.0
      %5595 = vmatpush1.msra.mxu0 0.0
      %5596 = vmatprep.subr.mxu0 0.0
      %5597 = vmatpush1.msra.mxu0 0.0
      %5598 = vmatprep.subr.mxu0 0.0
      %5599 = vmatpush1.msra.mxu0 0.0
      %5600 = vmatprep.subr.mxu0 0.0
      %5601 = vmatpush1.msra.mxu0 0.0
      %5602 = vmatprep.mubr.f32.mxu0 0.0
      %5603 = vmatmul.mubr.f32.gmra.mrb[0].mxu0 %v5448
      %v5604 = vpop.f32.mrb[0].mxu0
      %v5605 = vadd.f32 0.0, %v5604
      %v5606 = vpop.f32.mrb[0].mxu0
      %5607 = vdwg.mxu0
      %5608 = vmatprep.subr.mxu0 0.0
      %5609 = vmatpush1.msra.mxu0 %v3751
      %5610 = vmatprep.subr.mxu0 0.0
      %5611 = vmatpush1.msra.mxu0 %v3752
      %5612 = vmatprep.subr.mxu0 0.0
      %5613 = vmatpush1.msra.mxu0 %v3753
      %5614 = vmatprep.subr.mxu0 0.0
      %5615 = vmatpush1.msra.mxu0 %v3754
      %5616 = vmatprep.subr.mxu0 0.0
      %5617 = vmatpush1.msra.mxu0 %v3755
      %5618 = vmatprep.subr.mxu0 0.0
      %5619 = vmatpush1.msra.mxu0 %v3756
      %5620 = vmatprep.subr.mxu0 0.0
      %5621 = vmatpush1.msra.mxu0 %v3757
      %5622 = vmatprep.subr.mxu0 0.0
      %5623 = vmatpush1.msra.mxu0 %v3758
      %5624 = vmatprep.subr.mxu0 0.0
      %5625 = vmatpush1.msra.mxu0 %v3759
      %5626 = vmatprep.subr.mxu0 0.0
      %5627 = vmatpush1.msra.mxu0 %v3760
      %5628 = vmatprep.subr.mxu0 0.0
      %5629 = vmatpush1.msra.mxu0 %v3761
      %5630 = vmatprep.subr.mxu0 0.0
      %5631 = vmatpush1.msra.mxu0 %v3762
      %5632 = vmatprep.subr.mxu0 0.0
      %5633 = vmatpush1.msra.mxu0 %v3763
      %5634 = vmatprep.subr.mxu0 0.0
      %5635 = vmatpush1.msra.mxu0 %v3764
      %5636 = vmatprep.subr.mxu0 0.0
      %5637 = vmatpush1.msra.mxu0 %v3765
      %5638 = vmatprep.subr.mxu0 0.0
      %5639 = vmatpush1.msra.mxu0 %v3766
      %5640 = vmatprep.subr.mxu0 0.0
      %5641 = vmatpush1.msra.mxu0 0.0
      %5642 = vmatprep.subr.mxu0 0.0
      %5643 = vmatpush1.msra.mxu0 0.0
      %5644 = vmatprep.subr.mxu0 0.0
      %5645 = vmatpush1.msra.mxu0 0.0
      %5646 = vmatprep.subr.mxu0 0.0
      %5647 = vmatpush1.msra.mxu0 0.0
      %5648 = vmatprep.subr.mxu0 0.0
      %5649 = vmatpush1.msra.mxu0 0.0
      %5650 = vmatprep.subr.mxu0 0.0
      %5651 = vmatpush1.msra.mxu0 0.0
      %5652 = vmatprep.subr.mxu0 0.0
      %5653 = vmatpush1.msra.mxu0 0.0
      %5654 = vmatprep.subr.mxu0 0.0
      %5655 = vmatpush1.msra.mxu0 0.0
      %5656 = vmatprep.subr.mxu0 0.0
      %5657 = vmatpush1.msra.mxu0 0.0
      %5658 = vmatprep.subr.mxu0 0.0
      %5659 = vmatpush1.msra.mxu0 0.0
      %5660 = vmatprep.subr.mxu0 0.0
      %5661 = vmatpush1.msra.mxu0 0.0
      %5662 = vmatprep.subr.mxu0 0.0
      %5663 = vmatpush1.msra.mxu0 0.0
      %5664 = vmatprep.subr.mxu0 0.0
      %5665 = vmatpush1.msra.mxu0 0.0
      %5666 = vmatprep.subr.mxu0 0.0
      %5667 = vmatpush1.msra.mxu0 0.0
      %5668 = vmatprep.subr.mxu0 0.0
      %5669 = vmatpush1.msra.mxu0 0.0
      %5670 = vmatprep.subr.mxu0 0.0
      %5671 = vmatpush1.msra.mxu0 0.0
      %5672 = vmatprep.mubr.f32.mxu0 0.0
      %5673 = vmatmul.mubr.f32.gmra.mrb[0].mxu0 %v5456
      %v5674 = vpop.f32.mrb[0].mxu0
      %v5675 = vadd.f32 0.0, %v5674
      %v5676 = vpop.f32.mrb[0].mxu0
      %5677 = vdwg.mxu0
      %5678 = vmatprep.subr.mxu0 0.0
      %5679 = vmatpush1.msra.mxu0 %v3767
      %5680 = vmatprep.subr.mxu0 0.0
      %5681 = vmatpush1.msra.mxu0 %v3768
      %5682 = vmatprep.subr.mxu0 0.0
      %5683 = vmatpush1.msra.mxu0 %v3769
      %5684 = vmatprep.subr.mxu0 0.0
      %5685 = vmatpush1.msra.mxu0 %v3770
      %5686 = vmatprep.subr.mxu0 0.0
      %5687 = vmatpush1.msra.mxu0 %v3771
      %5688 = vmatprep.subr.mxu0 0.0
      %5689 = vmatpush1.msra.mxu0 %v3772
      %5690 = vmatprep.subr.mxu0 0.0
      %5691 = vmatpush1.msra.mxu0 %v3773
      %5692 = vmatprep.subr.mxu0 0.0
      %5693 = vmatpush1.msra.mxu0 %v3774
      %5694 = vmatprep.subr.mxu0 0.0
      %5695 = vmatpush1.msra.mxu0 %v3775
      %5696 = vmatprep.subr.mxu0 0.0
      %5697 = vmatpush1.msra.mxu0 %v3776
      %5698 = vmatprep.subr.mxu0 0.0
      %5699 = vmatpush1.msra.mxu0 %v3777
      %5700 = vmatprep.subr.mxu0 0.0
      %5701 = vmatpush1.msra.mxu0 %v3778
      %5702 = vmatprep.subr.mxu0 0.0
      %5703 = vmatpush1.msra.mxu0 %v3779
      %5704 = vmatprep.subr.mxu0 0.0
      %5705 = vmatpush1.msra.mxu0 %v3780
      %5706 = vmatprep.subr.mxu0 0.0
      %5707 = vmatpush1.msra.mxu0 %v3781
      %5708 = vmatprep.subr.mxu0 0.0
      %5709 = vmatpush1.msra.mxu0 %v3782
      %5710 = vmatprep.subr.mxu0 0.0
      %5711 = vmatpush1.msra.mxu0 0.0
      %5712 = vmatprep.subr.mxu0 0.0
      %5713 = vmatpush1.msra.mxu0 0.0
      %5714 = vmatprep.subr.mxu0 0.0
      %5715 = vmatpush1.msra.mxu0 0.0
      %5716 = vmatprep.subr.mxu0 0.0
      %5717 = vmatpush1.msra.mxu0 0.0
      %5718 = vmatprep.subr.mxu0 0.0
      %5719 = vmatpush1.msra.mxu0 0.0
      %5720 = vmatprep.subr.mxu0 0.0
      %5721 = vmatpush1.msra.mxu0 0.0
      %5722 = vmatprep.subr.mxu0 0.0
      %5723 = vmatpush1.msra.mxu0 0.0
      %5724 = vmatprep.subr.mxu0 0.0
      %5725 = vmatpush1.msra.mxu0 0.0
      %5726 = vmatprep.subr.mxu0 0.0
      %5727 = vmatpush1.msra.mxu0 0.0
      %5728 = vmatprep.subr.mxu0 0.0
      %5729 = vmatpush1.msra.mxu0 0.0
      %5730 = vmatprep.subr.mxu0 0.0
      %5731 = vmatpush1.msra.mxu0 0.0
      %5732 = vmatprep.subr.mxu0 0.0
      %5733 = vmatpush1.msra.mxu0 0.0
      %5734 = vmatprep.subr.mxu0 0.0
      %5735 = vmatpush1.msra.mxu0 0.0
      %5736 = vmatprep.subr.mxu0 0.0
      %5737 = vmatpush1.msra.mxu0 0.0
      %5738 = vmatprep.subr.mxu0 0.0
      %5739 = vmatpush1.msra.mxu0 0.0
      %5740 = vmatprep.subr.mxu0 0.0
      %5741 = vmatpush1.msra.mxu0 0.0
      %5742 = vmatprep.mubr.f32.mxu0 0.0
      %5743 = vmatmul.mubr.f32.gmra.mrb[0].mxu0 %v5458
      %v5744 = vpop.f32.mrb[0].mxu0
      %v5745 = vadd.f32 0.0, %v5744
      %v5746 = vpop.f32.mrb[0].mxu0
      %5747 = vdwg.mxu0
      %5748 = vmatprep.subr.mxu0 0.0
      %5749 = vmatpush1.msra.mxu0 %v3783
      %5750 = vmatprep.subr.mxu0 0.0
      %5751 = vmatpush1.msra.mxu0 %v3784
      %5752 = vmatprep.subr.mxu0 0.0
      %5753 = vmatpush1.msra.mxu0 %v3785
      %5754 = vmatprep.subr.mxu0 0.0
      %5755 = vmatpush1.msra.mxu0 %v3786
      %5756 = vmatprep.subr.mxu0 0.0
      %5757 = vmatpush1.msra.mxu0 %v3787
      %5758 = vmatprep.subr.mxu0 0.0
      %5759 = vmatpush1.msra.mxu0 %v3788
      %5760 = vmatprep.subr.mxu0 0.0
      %5761 = vmatpush1.msra.mxu0 %v3789
      %5762 = vmatprep.subr.mxu0 0.0
      %5763 = vmatpush1.msra.mxu0 %v3790
      %5764 = vmatprep.subr.mxu0 0.0
      %5765 = vmatpush1.msra.mxu0 %v3791
      %5766 = vmatprep.subr.mxu0 0.0
      %5767 = vmatpush1.msra.mxu0 %v3792
      %5768 = vmatprep.subr.mxu0 0.0
      %5769 = vmatpush1.msra.mxu0 %v3793
      %5770 = vmatprep.subr.mxu0 0.0
      %5771 = vmatpush1.msra.mxu0 %v3794
      %5772 = vmatprep.subr.mxu0 0.0
      %5773 = vmatpush1.msra.mxu0 %v3795
      %5774 = vmatprep.subr.mxu0 0.0
      %5775 = vmatpush1.msra.mxu0 %v3796
      %5776 = vmatprep.subr.mxu0 0.0
      %5777 = vmatpush1.msra.mxu0 %v3797
      %5778 = vmatprep.subr.mxu0 0.0
      %5779 = vmatpush1.msra.mxu0 %v3798
      %5780 = vmatprep.subr.mxu0 0.0
      %5781 = vmatpush1.msra.mxu0 0.0
      %5782 = vmatprep.subr.mxu0 0.0
      %5783 = vmatpush1.msra.mxu0 0.0
      %5784 = vmatprep.subr.mxu0 0.0
      %5785 = vmatpush1.msra.mxu0 0.0
      %5786 = vmatprep.subr.mxu0 0.0
      %5787 = vmatpush1.msra.mxu0 0.0
      %5788 = vmatprep.subr.mxu0 0.0
      %5789 = vmatpush1.msra.mxu0 0.0
      %5790 = vmatprep.subr.mxu0 0.0
      %5791 = vmatpush1.msra.mxu0 0.0
      %5792 = vmatprep.subr.mxu0 0.0
      %5793 = vmatpush1.msra.mxu0 0.0
      %5794 = vmatprep.subr.mxu0 0.0
      %5795 = vmatpush1.msra.mxu0 0.0
      %5796 = vmatprep.subr.mxu0 0.0
      %5797 = vmatpush1.msra.mxu0 0.0
      %5798 = vmatprep.subr.mxu0 0.0
      %5799 = vmatpush1.msra.mxu0 0.0
      %5800 = vmatprep.subr.mxu0 0.0
      %5801 = vmatpush1.msra.mxu0 0.0
      %5802 = vmatprep.subr.mxu0 0.0
      %5803 = vmatpush1.msra.mxu0 0.0
      %5804 = vmatprep.subr.mxu0 0.0
      %5805 = vmatpush1.msra.mxu0 0.0
      %5806 = vmatprep.subr.mxu0 0.0
      %5807 = vmatpush1.msra.mxu0 0.0
      %5808 = vmatprep.subr.mxu0 0.0
      %5809 = vmatpush1.msra.mxu0 0.0
      %5810 = vmatprep.subr.mxu0 0.0
      %5811 = vmatpush1.msra.mxu0 0.0
      %5812 = vmatprep.mubr.f32.mxu0 0.0
      %5813 = vmatmul.mubr.f32.gmra.mrb[0].mxu0 %v5441
      %v5814 = vpop.f32.mrb[0].mxu0
      %v5815 = vadd.f32 0.0, %v5814
      %v5816 = vpop.f32.mrb[0].mxu0
      %5817 = vdwg.mxu0
      %5818 = vmatprep.subr.mxu0 0.0
      %5819 = vmatpush1.msra.mxu0 %v3799
      %5820 = vmatprep.subr.mxu0 0.0
      %5821 = vmatpush1.msra.mxu0 %v3800
      %5822 = vmatprep.subr.mxu0 0.0
      %5823 = vmatpush1.msra.mxu0 %v3801
      %5824 = vmatprep.subr.mxu0 0.0
      %5825 = vmatpush1.msra.mxu0 %v3802
      %5826 = vmatprep.subr.mxu0 0.0
      %5827 = vmatpush1.msra.mxu0 %v3803
      %5828 = vmatprep.subr.mxu0 0.0
      %5829 = vmatpush1.msra.mxu0 %v3804
      %5830 = vmatprep.subr.mxu0 0.0
      %5831 = vmatpush1.msra.mxu0 %v3805
      %5832 = vmatprep.subr.mxu0 0.0
      %5833 = vmatpush1.msra.mxu0 %v3806
      %5834 = vmatprep.subr.mxu0 0.0
      %5835 = vmatpush1.msra.mxu0 %v3807
      %5836 = vmatprep.subr.mxu0 0.0
      %5837 = vmatpush1.msra.mxu0 %v3808
      %5838 = vmatprep.subr.mxu0 0.0
      %5839 = vmatpush1.msra.mxu0 %v3809
      %5840 = vmatprep.subr.mxu0 0.0
      %5841 = vmatpush1.msra.mxu0 %v3810
      %5842 = vmatprep.subr.mxu0 0.0
      %5843 = vmatpush1.msra.mxu0 %v3811
      %5844 = vmatprep.subr.mxu0 0.0
      %5845 = vmatpush1.msra.mxu0 %v3812
      %5846 = vmatprep.subr.mxu0 0.0
      %5847 = vmatpush1.msra.mxu0 %v3813
      %5848 = vmatprep.subr.mxu0 0.0
      %5849 = vmatpush1.msra.mxu0 %v3814
      %5850 = vmatprep.subr.mxu0 0.0
      %5851 = vmatpush1.msra.mxu0 0.0
      %5852 = vmatprep.subr.mxu0 0.0
      %5853 = vmatpush1.msra.mxu0 0.0
      %5854 = vmatprep.subr.mxu0 0.0
      %5855 = vmatpush1.msra.mxu0 0.0
      %5856 = vmatprep.subr.mxu0 0.0
      %5857 = vmatpush1.msra.mxu0 0.0
      %5858 = vmatprep.subr.mxu0 0.0
      %5859 = vmatpush1.msra.mxu0 0.0
      %5860 = vmatprep.subr.mxu0 0.0
      %5861 = vmatpush1.msra.mxu0 0.0
      %5862 = vmatprep.subr.mxu0 0.0
      %5863 = vmatpush1.msra.mxu0 0.0
      %5864 = vmatprep.subr.mxu0 0.0
      %5865 = vmatpush1.msra.mxu0 0.0
      %5866 = vmatprep.subr.mxu0 0.0
      %5867 = vmatpush1.msra.mxu0 0.0
      %5868 = vmatprep.subr.mxu0 0.0
      %5869 = vmatpush1.msra.mxu0 0.0
      %5870 = vmatprep.subr.mxu0 0.0
      %5871 = vmatpush1.msra.mxu0 0.0
      %5872 = vmatprep.subr.mxu0 0.0
      %5873 = vmatpush1.msra.mxu0 0.0
      %5874 = vmatprep.subr.mxu0 0.0
      %5875 = vmatpush1.msra.mxu0 0.0
      %5876 = vmatprep.subr.mxu0 0.0
      %5877 = vmatpush1.msra.mxu0 0.0
      %5878 = vmatprep.subr.mxu0 0.0
      %5879 = vmatpush1.msra.mxu0 0.0
      %5880 = vmatprep.subr.mxu0 0.0
      %5881 = vmatpush1.msra.mxu0 0.0
      %5882 = vmatprep.mubr.f32.mxu0 0.0
      %5883 = vmatmul.mubr.f32.gmra.mrb[0].mxu0 %v5455
      %v5884 = vpop.f32.mrb[0].mxu0
      %v5885 = vadd.f32 0.0, %v5884
      %v5886 = vpop.f32.mrb[0].mxu0
      %5887 = vdwg.mxu0
      %5888 = vmatprep.subr.mxu0 0.0
      %5889 = vmatpush1.msra.mxu0 %v3815
      %5890 = vmatprep.subr.mxu0 0.0
      %5891 = vmatpush1.msra.mxu0 %v3816
      %5892 = vmatprep.subr.mxu0 0.0
      %5893 = vmatpush1.msra.mxu0 %v3817
      %5894 = vmatprep.subr.mxu0 0.0
      %5895 = vmatpush1.msra.mxu0 %v3818
      %5896 = vmatprep.subr.mxu0 0.0
      %5897 = vmatpush1.msra.mxu0 %v3819
      %5898 = vmatprep.subr.mxu0 0.0
      %5899 = vmatpush1.msra.mxu0 %v3820
      %5900 = vmatprep.subr.mxu0 0.0
      %5901 = vmatpush1.msra.mxu0 %v3821
      %5902 = vmatprep.subr.mxu0 0.0
      %5903 = vmatpush1.msra.mxu0 %v3822
      %5904 = vmatprep.subr.mxu0 0.0
      %5905 = vmatpush1.msra.mxu0 %v3823
      %5906 = vmatprep.subr.mxu0 0.0
      %5907 = vmatpush1.msra.mxu0 %v3824
      %5908 = vmatprep.subr.mxu0 0.0
      %5909 = vmatpush1.msra.mxu0 %v3825
      %5910 = vmatprep.subr.mxu0 0.0
      %5911 = vmatpush1.msra.mxu0 %v3826
      %5912 = vmatprep.subr.mxu0 0.0
      %5913 = vmatpush1.msra.mxu0 %v3827
      %5914 = vmatprep.subr.mxu0 0.0
      %5915 = vmatpush1.msra.mxu0 %v3828
      %5916 = vmatprep.subr.mxu0 0.0
      %5917 = vmatpush1.msra.mxu0 %v3829
      %5918 = vmatprep.subr.mxu0 0.0
      %5919 = vmatpush1.msra.mxu0 %v3830
      %5920 = vmatprep.subr.mxu0 0.0
      %5921 = vmatpush1.msra.mxu0 0.0
      %5922 = vmatprep.subr.mxu0 0.0
      %5923 = vmatpush1.msra.mxu0 0.0
      %5924 = vmatprep.subr.mxu0 0.0
      %5925 = vmatpush1.msra.mxu0 0.0
      %5926 = vmatprep.subr.mxu0 0.0
      %5927 = vmatpush1.msra.mxu0 0.0
      %5928 = vmatprep.subr.mxu0 0.0
      %5929 = vmatpush1.msra.mxu0 0.0
      %5930 = vmatprep.subr.mxu0 0.0
      %5931 = vmatpush1.msra.mxu0 0.0
      %5932 = vmatprep.subr.mxu0 0.0
      %5933 = vmatpush1.msra.mxu0 0.0
      %5934 = vmatprep.subr.mxu0 0.0
      %5935 = vmatpush1.msra.mxu0 0.0
      %5936 = vmatprep.subr.mxu0 0.0
      %5937 = vmatpush1.msra.mxu0 0.0
      %5938 = vmatprep.subr.mxu0 0.0
      %5939 = vmatpush1.msra.mxu0 0.0
      %5940 = vmatprep.subr.mxu0 0.0
      %5941 = vmatpush1.msra.mxu0 0.0
      %5942 = vmatprep.subr.mxu0 0.0
      %5943 = vmatpush1.msra.mxu0 0.0
      %5944 = vmatprep.subr.mxu0 0.0
      %5945 = vmatpush1.msra.mxu0 0.0
      %5946 = vmatprep.subr.mxu0 0.0
      %5947 = vmatpush1.msra.mxu0 0.0
      %5948 = vmatprep.subr.mxu0 0.0
      %5949 = vmatpush1.msra.mxu0 0.0
      %5950 = vmatprep.subr.mxu0 0.0
      %5951 = vmatpush1.msra.mxu0 0.0
      %5952 = vmatprep.mubr.f32.mxu0 0.0
      %5953 = vmatmul.mubr.f32.gmra.mrb[0].mxu0 %v5457
      %v5954 = vpop.f32.mrb[0].mxu0
      %v5955 = vadd.f32 0.0, %v5954
      %v5956 = vpop.f32.mrb[0].mxu0
      %5957 = vdwg.mxu0
      %5958 = vmatprep.subr.mxu0 0.0
      %5959 = vmatpush1.msra.mxu0 %v3831
      %5960 = vmatprep.subr.mxu0 0.0
      %5961 = vmatpush1.msra.mxu0 %v3832
      %5962 = vmatprep.subr.mxu0 0.0
      %5963 = vmatpush1.msra.mxu0 %v3833
      %5964 = vmatprep.subr.mxu0 0.0
      %5965 = vmatpush1.msra.mxu0 %v3834
      %5966 = vmatprep.subr.mxu0 0.0
      %5967 = vmatpush1.msra.mxu0 %v3835
      %5968 = vmatprep.subr.mxu0 0.0
      %5969 = vmatpush1.msra.mxu0 %v3836
      %5970 = vmatprep.subr.mxu0 0.0
      %5971 = vmatpush1.msra.mxu0 %v3837
      %5972 = vmatprep.subr.mxu0 0.0
      %5973 = vmatpush1.msra.mxu0 %v3838
      %5974 = vmatprep.subr.mxu0 0.0
      %5975 = vmatpush1.msra.mxu0 %v3839
      %5976 = vmatprep.subr.mxu0 0.0
      %5977 = vmatpush1.msra.mxu0 %v3840
      %5978 = vmatprep.subr.mxu0 0.0
      %5979 = vmatpush1.msra.mxu0 %v3841
      %5980 = vmatprep.subr.mxu0 0.0
      %5981 = vmatpush1.msra.mxu0 %v3842
      %5982 = vmatprep.subr.mxu0 0.0
      %5983 = vmatpush1.msra.mxu0 %v3843
      %5984 = vmatprep.subr.mxu0 0.0
      %5985 = vmatpush1.msra.mxu0 %v3844
      %5986 = vmatprep.subr.mxu0 0.0
      %5987 = vmatpush1.msra.mxu0 %v3845
      %5988 = vmatprep.subr.mxu0 0.0
      %5989 = vmatpush1.msra.mxu0 %v3846
      %5990 = vmatprep.subr.mxu0 0.0
      %5991 = vmatpush1.msra.mxu0 0.0
      %5992 = vmatprep.subr.mxu0 0.0
      %5993 = vmatpush1.msra.mxu0 0.0
      %5994 = vmatprep.subr.mxu0 0.0
      %5995 = vmatpush1.msra.mxu0 0.0
      %5996 = vmatprep.subr.mxu0 0.0
      %5997 = vmatpush1.msra.mxu0 0.0
      %5998 = vmatprep.subr.mxu0 0.0
      %5999 = vmatpush1.msra.mxu0 0.0
      %6000 = vmatprep.subr.mxu0 0.0
      %6001 = vmatpush1.msra.mxu0 0.0
      %6002 = vmatprep.subr.mxu0 0.0
      %6003 = vmatpush1.msra.mxu0 0.0
      %6004 = vmatprep.subr.mxu0 0.0
      %6005 = vmatpush1.msra.mxu0 0.0
      %6006 = vmatprep.subr.mxu0 0.0
      %6007 = vmatpush1.msra.mxu0 0.0
      %6008 = vmatprep.subr.mxu0 0.0
      %6009 = vmatpush1.msra.mxu0 0.0
      %6010 = vmatprep.subr.mxu0 0.0
      %6011 = vmatpush1.msra.mxu0 0.0
      %6012 = vmatprep.subr.mxu0 0.0
      %6013 = vmatpush1.msra.mxu0 0.0
      %6014 = vmatprep.subr.mxu0 0.0
      %6015 = vmatpush1.msra.mxu0 0.0
      %6016 = vmatprep.subr.mxu0 0.0
      %6017 = vmatpush1.msra.mxu0 0.0
      %6018 = vmatprep.subr.mxu0 0.0
      %6019 = vmatpush1.msra.mxu0 0.0
      %6020 = vmatprep.subr.mxu0 0.0
      %6021 = vmatpush1.msra.mxu0 0.0
      %6022 = vmatprep.mubr.f32.mxu0 0.0
      %6023 = vmatmul.mubr.f32.gmra.mrb[0].mxu0 %v5459
      %v6024 = vpop.f32.mrb[0].mxu0
      %v6025 = vadd.f32 0.0, %v6024
      %v6026 = vpop.f32.mrb[0].mxu0
      %6027 = vdwg.mxu0
      %v6028 = vxor.u32 %v5535, 2147483648
      %v6029 = vxor.u32 %v5605, 2147483648
      %v6030 = vxor.u32 %v5675, 2147483648
      %v6031 = vxor.u32 %v5745, 2147483648
      %v6032 = vxor.u32 %v5815, 2147483648
      %v6033 = vxor.u32 %v5885, 2147483648
      %v6034 = vxor.u32 %v5955, 2147483648
      %v6035 = vxor.u32 %v6025, 2147483648
      %v6036 = vmul.f32 %v6028, 1.442695
      %v6037 = vpow.pop %v6036
      %v6038 = vmul.f32 %v6029, 1.442695
      %v6039 = vpow.pop %v6038
      %v6040 = vmul.f32 %v6030, 1.442695
      %v6041 = vpow.pop %v6040
      %v6042 = vmul.f32 %v6031, 1.442695
      %v6043 = vpow.pop %v6042
      %v6044 = vmul.f32 %v6032, 1.442695
      %v6045 = vpow.pop %v6044
      %v6046 = vmul.f32 %v6033, 1.442695
      %v6047 = vpow.pop %v6046
      %v6048 = vmul.f32 %v6034, 1.442695
      %v6049 = vpow.pop %v6048
      %v6050 = vmul.f32 %v6035, 1.442695
      %v6051 = vpow.pop %v6050
      %v6052 = vadd.f32 %v6037, 1.0
      %v6053 = vadd.f32 %v6039, 1.0
      %v6054 = vadd.f32 %v6041, 1.0
      %v6055 = vadd.f32 %v6043, 1.0
      %v6056 = vadd.f32 %v6045, 1.0
      %v6057 = vadd.f32 %v6047, 1.0
      %v6058 = vadd.f32 %v6049, 1.0
      %v6059 = vadd.f32 %v6051, 1.0
      %v6060 = vrcp.pop %v6052
      %v6061 = vmul.f32 1.0, %v6060
      %v6062 = vrcp.pop %v6053
      %v6063 = vmul.f32 1.0, %v6062
      %v6064 = vrcp.pop %v6054
      %v6065 = vmul.f32 1.0, %v6064
      %v6066 = vrcp.pop %v6055
      %v6067 = vmul.f32 1.0, %v6066
      %v6068 = vrcp.pop %v6056
      %v6069 = vmul.f32 1.0, %v6068
      %v6070 = vrcp.pop %v6057
      %v6071 = vmul.f32 1.0, %v6070
      %v6072 = vrcp.pop %v6058
      %v6073 = vmul.f32 1.0, %v6072
      %v6074 = vrcp.pop %v6059
      %v6075 = vmul.f32 1.0, %v6074
      %v6077 = vrot.slane %v3847, 1
      %v6078 = vrot.slane %v3847, 2
      %v6079 = vrot.slane %v3847, 3
      %v6080 = vrot.slane %v3847, 4
      %v6081 = vrot.slane %v3847, 5
      %v6082 = vrot.slane %v3847, 6
      %v6083 = vrot.slane %v3847, 7
      %v6092 = vmul.f32 %v6061, %v3847
      %v6093 = vmul.f32 %v6063, %v6077
      %v6094 = vmul.f32 %v6065, %v6078
      %v6095 = vmul.f32 %v6067, %v6079
      %v6096 = vmul.f32 %v6069, %v6080
      %v6097 = vmul.f32 %v6071, %v6081
      %v6098 = vmul.f32 %v6073, %v6082
      %v6099 = vmul.f32 %v6075, %v6083
      %v6108 = vrot.slane %v6093, 7
      %v6109 = vsel %vm4564, %v6108, %v6092
      %v6110 = vrot.slane %v6094, 6
      %v6111 = vsel %vm4567, %v6110, %v6109
      %v6112 = vrot.slane %v6095, 5
      %v6113 = vsel %vm4570, %v6112, %v6111
      %v6114 = vrot.slane %v6096, 4
      %v6115 = vsel %vm4573, %v6114, %v6113
      %v6116 = vrot.slane %v6097, 3
      %v6117 = vsel %vm4576, %v6116, %v6115
      %v6118 = vrot.slane %v6098, 2
      %v6119 = vsel %vm4579, %v6118, %v6117
      %v6120 = vrot.slane %v6099, 1
      %v6121 = vsel %vm4582, %v6120, %v6119
      %6123 = vst [vmem:[#allocation19] sm:$0xff] %v6121
    $region97: #{tpu_custom_call.1} parent=1 // pred_fallthru
      _
    // Predicated region
    $region98: #{tpu_custom_call.1} parent=1 // pred_check
      _
    $region99: #{tpu_custom_call.1} parent=1 // pred_check_branch
      %6125 = sbr.rel (0) target = $region101
    $region100: #{tpu_custom_call.1} parent=1 // pred_region
      %s6127 = ssub.s32 128, 128
      %6128 = vsyncadd [#allocation6], %s6127
      %s6130 = sshll.u32 [#allocation19], 4
      %s6131 = int_to_ptr.vmem [resolvable:$true] %s6130
      %6133 = dma.vmem_to_hbm [thread:$0]  %s6131, 128, %s13, [#allocation6]
    $region101: #{tpu_custom_call.1} parent=1 // pred_fallthru
      _
    // Predicated region
    $region102: #{tpu_custom_call.1} parent=1 // pred_check
      _
    $region103: #{tpu_custom_call.1} parent=1 // pred_check_branch
      %6135 = sbr.rel (0) target = $region105
    $region104: #{tpu_custom_call.1} parent=1 // pred_region
      %6136 = dma.done [#allocation6], 128
    $region105: #{tpu_custom_call.1} parent=1 // pred_fallthru
      _
    %6137 = vsyncpa [#allocation5], 1
    %6138 = vsyncpa [#allocation8], 1
    %6139 = vsyncpa [#allocation11], 1
    %6140 = vsyncpa [#allocation14], 1
    %6141 = vsyncpa [#allocation17], 1
    %6142 = vsyncpa [#allocation6], 1

</llo_original>
